<compile_context>
chip_gen: v5e
topology: v5e:2x2
jax: 0.10.0
libtpu: 0.0.40
codegen_flags: <defaults>
</compile_context>

<pallas_src>
import functools

import jax
import jax.numpy as jnp
from jax.experimental import pallas as pl
from jax.experimental.pallas import tpu as pltpu

EPS = 1e-5
LANE = 128


def _round_up(x, m):
    return ((x + m - 1) // m) * m


# ----------------------------------------------------------------------------
# Fused per-layer kernel: BN1 -> ReLU -> 1x1 conv -> BN2 -> ReLU -> 3x3 conv,
# writing the g new channels straight into the running concat buffer.
#
#   x_ref   : (1, H, W, in_cols)  bf16  prefix channels of the concat buffer
#   s1/b1   : (1, in_cols)        f32   folded BN1 (zero beyond cin)
#   w1      : (in_cols, Cmid_p)   bf16  1x1 weight (zero rows/cols in padding)
#   s2/b2   : (1, Cmid_p)         f32   folded BN2 (zero in padded channels)
#   w2      : (9, Cmid_p, w_width)bf16  3x3 weight, taps ordered dh*3+dw, real
#                                       output columns placed at lane offset
#                                       (cin - wb) inside the write window
#   o_ref   : (1, H, W, w_width)  bf16  128-lane window of the (aliased) concat
#                                       buffer that receives the new features
#   midp_ref: (H+2, W+2, Cmid_p)  bf16  VMEM halo scratch for the 3x3 conv
# ----------------------------------------------------------------------------
def dense_layer_kernel(x_ref, s1_ref, b1_ref, w1_ref, s2_ref, b2_ref, w2_ref,
                       o_ref, midp_ref, *, H, W, cin, g, wb, cmid_p):
    in_cols = x_ref.shape[-1]
    w_width = o_ref.shape[-1]

    x2 = x_ref[0].reshape(H * W, in_cols)                      # bf16

    # ---- stage 1: BN1 -> ReLU -> 1x1 conv -> BN2 -> ReLU (all in VMEM) -----
    # Elementwise BN math in f32 (portable across v5e); MXU operands in bf16.
    a1 = jnp.maximum(x2.astype(jnp.float32) * s1_ref[...] + b1_ref[...], 0.0)
    y = jnp.dot(a1.astype(jnp.bfloat16), w1_ref[...],
                preferred_element_type=jnp.float32)
    mid = jnp.maximum(y * s2_ref[...] + b2_ref[...], 0.0).astype(jnp.bfloat16)

    # ---- 3x3 conv via a zero-bordered VMEM halo buffer (== Conv2d padding=1
    # applied to the post-activation tensor); `mid` never goes to HBM. --------
    midp_ref[...] = jnp.zeros_like(midp_ref)
    midp_ref[pl.ds(1, H), pl.ds(1, W), :] = mid.reshape(H, W, cmid_p)

    acc = jnp.zeros((H * W, w_width), jnp.float32)
    for dh in range(3):                       # 9 accumulated matmuls; no im2col
        for dw in range(3):
            tap = midp_ref[pl.ds(dh, H), pl.ds(dw, W), :]
            acc = acc + jnp.dot(tap.reshape(H * W, cmid_p),
                                w2_ref[dh * 3 + dw],
                                preferred_element_type=jnp.float32)

    # ---- blend: new features go to lanes [cin-wb, cin-wb+g) of the window;
    # every other lane keeps its previous (aliased) value. --------------------
    col = jax.lax.broadcasted_iota(jnp.int32, (1, w_width), 1)
    is_new = jnp.logical_and(col >= (cin - wb), col < (cin - wb + g))
    background = x2[:, wb:wb + w_width]                        # bf16
    out = jnp.where(is_new, acc.astype(jnp.bfloat16), background)
    o_ref[0] = out.reshape(H, W, w_width)


def _fused_dense_layer(cat, prep, cfg):
    """One dense layer: reads the channel prefix of `cat`, writes its new
    features in place (input_output_aliases) and returns the updated buffer."""
    cin, g, wb, w_width, cmid_p = cfg
    N, H, W, ctp = cat.shape
    in_cols = wb + w_width            # lane-aligned prefix read by this layer
    cb = wb // w_width                # channel block index of the write window

    kernel = functools.partial(dense_layer_kernel, H=H, W=W, cin=cin, g=g,
                               wb=wb, cmid_p=cmid_p)

    # TODO(synk): for very large H*W add an H-tile grid axis with a 1-row halo
    # (manual DMA) so the per-step block also fits v7x's 64 MiB VMEM; at
    # DenseNet-block sizes one image per grid step fits comfortably.
    return pl.pallas_call(
        kernel,
        out_shape=jax.ShapeDtypeStruct((N, H, W, ctp), jnp.bfloat16),
        grid=(N,),
        in_specs=[
            pl.BlockSpec((1, H, W, in_cols), lambda n: (n, 0, 0, 0)),
            pl.BlockSpec((1, in_cols), lambda n: (0, 0)),
            pl.BlockSpec((1, in_cols), lambda n: (0, 0)),
            pl.BlockSpec((in_cols, cmid_p), lambda n: (0, 0)),
            pl.BlockSpec((1, cmid_p), lambda n: (0, 0)),
            pl.BlockSpec((1, cmid_p), lambda n: (0, 0)),
            pl.BlockSpec((9, cmid_p, w_width), lambda n: (0, 0, 0)),
        ],
        out_specs=pl.BlockSpec((1, H, W, w_width), lambda n: (n, 0, 0, cb)),
        scratch_shapes=[pltpu.VMEM((H + 2, W + 2, cmid_p), jnp.bfloat16)],
        input_output_aliases={0: 0},          # cat buffer updated in place
        compiler_params=pltpu.CompilerParams(
            dimension_semantics=("parallel",),
            vmem_limit_bytes=48 * 1024 * 1024),
    )(cat, prep["s1"], prep["b1"], prep["w1"], prep["s2"], prep["b2"],
      prep["w2"])


# ----------------------------------------------------------------------------
# Parameter construction (deterministic, synthetic) and one-time preparation
# ----------------------------------------------------------------------------
def init_dense_block_params(key, num_layers, in_channels, growth_rate, bn_size):
    params = []
    cmid = bn_size * growth_rate
    for i in range(num_layers):
        cin = in_channels + i * growth_rate
        keys = jax.random.split(jax.random.fold_in(key, i), 10)
        layer = dict(
            bn1_gamma=1.0 + 0.1 * jax.random.normal(keys[0], (cin,), jnp.float32),
            bn1_beta=0.1 * jax.random.normal(keys[1], (cin,), jnp.float32),
            bn1_mean=0.1 * jax.random.normal(keys[2], (cin,), jnp.float32),
            bn1_var=jax.random.uniform(keys[3], (cin,), jnp.float32, 0.5, 1.5),
            w1=0.1 * jax.random.normal(keys[4], (cin, cmid), jnp.float32),
            bn2_gamma=1.0 + 0.1 * jax.random.normal(keys[5], (cmid,), jnp.float32),
            bn2_beta=0.1 * jax.random.normal(keys[6], (cmid,), jnp.float32),
            bn2_mean=0.1 * jax.random.normal(keys[7], (cmid,), jnp.float32),
            bn2_var=jax.random.uniform(keys[8], (cmid,), jnp.float32, 0.5, 1.5),
            # 3x3 conv weight stored (kh, kw, Cmid, G)
            w2=0.1 * jax.random.normal(keys[9], (3, 3, cmid, growth_rate),
                                       jnp.float32),
        )
        params.append(layer)
    return params


def prepare_params(params):
    """Fold BN into scale/shift, pad channels to lane multiples, cast weights
    to bf16.  Runs ONCE, outside the jitted forward."""
    last = params[-1]
    c_total = last["bn1_gamma"].shape[0] + last["w2"].shape[-1]
    c_total_p = _round_up(c_total, LANE)

    prepped, cfgs = [], []
    for layer in params:
        cin = layer["bn1_gamma"].shape[0]
        cmid = layer["bn2_gamma"].shape[0]
        g = layer["w2"].shape[-1]
        cmid_p = _round_up(cmid, LANE)

        # 128-lane window of the concat buffer that receives the new features.
        wb = (cin // LANE) * LANE
        w_width = LANE
        if cin + g > wb + LANE:
            # New channels straddle a lane boundary -> write full width instead.
            wb, w_width = 0, c_total_p
        in_cols = wb + w_width          # lane-aligned prefix read by the layer

        s1 = layer["bn1_gamma"] * jax.lax.rsqrt(layer["bn1_var"] + EPS)
        b1 = layer["bn1_beta"] - layer["bn1_mean"] * s1
        s2 = layer["bn2_gamma"] * jax.lax.rsqrt(layer["bn2_var"] + EPS)
        b2 = layer["bn2_beta"] - layer["bn2_mean"] * s2

        off = cin - wb                  # lane offset of new features in window
        w2 = layer["w2"].reshape(9, cmid, g)
        prep = dict(
            s1=jnp.pad(s1, (0, in_cols - cin)).reshape(1, in_cols),
            b1=jnp.pad(b1, (0, in_cols - cin)).reshape(1, in_cols),
            w1=jnp.pad(layer["w1"], ((0, in_cols - cin), (0, cmid_p - cmid))
                       ).astype(jnp.bfloat16),
            s2=jnp.pad(s2, (0, cmid_p - cmid)).reshape(1, cmid_p),
            b2=jnp.pad(b2, (0, cmid_p - cmid)).reshape(1, cmid_p),
            w2=jnp.pad(w2, ((0, 0), (0, cmid_p - cmid),
                            (off, w_width - off - g))).astype(jnp.bfloat16),
        )
        prepped.append(prep)
        cfgs.append((cin, g, wb, w_width, cmid_p))
    return prepped, tuple(cfgs), c_total, c_total_p


# ----------------------------------------------------------------------------
# Block forward
# ----------------------------------------------------------------------------
@functools.partial(jax.jit, static_argnums=(2, 3))
def dense2d_block_forward(x_nchw, prepped, cfgs, c_total_p):
    # PyTorch NCHW -> kernel NHWC; single lane-aligned bf16 concat buffer.
    x = jnp.transpose(x_nchw, (0, 2, 3, 1))
    N, H, W, c0 = x.shape
    cat = jnp.zeros((N, H, W, c_total_p), jnp.bfloat16)
    cat = cat.at[..., :c0].set(x.astype(jnp.bfloat16))

    for prep, cfg in zip(prepped, cfgs):
        cat = _fused_dense_layer(cat, prep, cfg)

    c_total = cfgs[-1][0] + cfgs[-1][1]          # last cin + last growth
    out = cat[..., :c_total].astype(jnp.float32)
    return jnp.transpose(out, (0, 3, 1, 2))      # back to NCHW


# ----------------------------------------------------------------------------
# Pure-JAX (f32, XLA) reference for a loose numerical check
# ----------------------------------------------------------------------------
def reference_forward(x_nchw, params):
    x = jnp.transpose(x_nchw, (0, 2, 3, 1)).astype(jnp.float32)
    N, H, W, _ = x.shape
    feats = x
    for layer in params:
        s1 = layer["bn1_gamma"] * jax.lax.rsqrt(layer["bn1_var"] + EPS)
        b1 = layer["bn1_beta"] - layer["bn1_mean"] * s1
        s2 = layer["bn2_gamma"] * jax.lax.rsqrt(layer["bn2_var"] + EPS)
        b2 = layer["bn2_beta"] - layer["bn2_mean"] * s2
        a = jnp.maximum(feats * s1 + b1, 0.0)
        y = jnp.einsum("nhwc,cm->nhwm", a, layer["w1"])
        mid = jnp.maximum(y * s2 + b2, 0.0)
        midp = jnp.pad(mid, ((0, 0), (1, 1), (1, 1), (0, 0)))
        g = layer["w2"].shape[-1]
        new = jnp.zeros((N, H, W, g), jnp.float32)
        for dh in range(3):
            for dw in range(3):
                new = new + jnp.einsum("nhwc,cg->nhwg",
                                       midp[:, dh:dh + H, dw:dw + W, :],
                                       layer["w2"][dh, dw])
        feats = jnp.concatenate([feats, new], axis=-1)
    return jnp.transpose(feats, (0, 3, 1, 2))


if __name__ == "__main__":
    key = jax.random.PRNGKey(0)
    k_x, k_p = jax.random.split(key)

    # Small shapes consistent with the module
    N, C0, H, W = 2, 4, 16, 16
    num_layers, growth_rate, bn_size = 2, 4, 2

    x = jax.random.normal(k_x, (N, C0, H, W), jnp.float32)
    params = init_dense_block_params(k_p, num_layers, C0, growth_rate, bn_size)
    prepped, cfgs, c_total, c_total_p = prepare_params(params)

    out = dense2d_block_forward(x, prepped, cfgs, c_total_p)
    out = jax.block_until_ready(out)

    assert out.shape == (N, c_total, H, W), out.shape
    assert bool(jnp.all(jnp.isfinite(out)))

    # Loose check vs. the f32 XLA reference (kernel stores / matmul operands
    # are bf16, so expect ~1e-2 relative error).
    ref = reference_forward(x, params)
    rel_err = float(jnp.max(jnp.abs(out - ref)) /
                    (jnp.max(jnp.abs(ref)) + 1e-6))
    assert rel_err < 5e-2, rel_err

    print("KERNEL_OK")
</pallas_src>

<mosaic_0001>
module attributes {stable_mosaic.version = 11 : i64} {
  func.func @dense_layer_kernel(%arg0: i32, %arg1: memref<1x16x16x128xbf16, #tpu.memory_space<vmem>>, %arg2: memref<1x128xf32, #tpu.memory_space<vmem>>, %arg3: memref<1x128xf32, #tpu.memory_space<vmem>>, %arg4: memref<128x128xbf16, #tpu.memory_space<vmem>>, %arg5: memref<1x128xf32, #tpu.memory_space<vmem>>, %arg6: memref<1x128xf32, #tpu.memory_space<vmem>>, %arg7: memref<9x128x128xbf16, #tpu.memory_space<vmem>>, %arg8: memref<1x16x16x128xbf16, #tpu.memory_space<vmem>>, %arg9: memref<18x18x128xbf16, #tpu.memory_space<vmem>>) attributes {dimension_semantics = [#tpu.dimension_semantics<parallel>], iteration_bounds = array<i64: 2>, scalar_prefetch = 0 : i64, scratch_operands = 1 : i64, tpu.core_type = #tpu.core_type<tc>, window_params = [{transform_indices = @transform_0, window_bounds = array<i64: 1, 16, 16, 128>}, {pipeline_mode = #tpu.pipeline_mode<synchronous>, transform_indices = @transform_1, window_bounds = array<i64: 1, 128>}, {pipeline_mode = #tpu.pipeline_mode<synchronous>, transform_indices = @transform_2, window_bounds = array<i64: 1, 128>}, {pipeline_mode = #tpu.pipeline_mode<synchronous>, transform_indices = @transform_3, window_bounds = array<i64: 128, 128>}, {pipeline_mode = #tpu.pipeline_mode<synchronous>, transform_indices = @transform_4, window_bounds = array<i64: 1, 128>}, {pipeline_mode = #tpu.pipeline_mode<synchronous>, transform_indices = @transform_5, window_bounds = array<i64: 1, 128>}, {pipeline_mode = #tpu.pipeline_mode<synchronous>, transform_indices = @transform_6, window_bounds = array<i64: 9, 128, 128>}, {transform_indices = @transform_7, window_bounds = array<i64: 1, 16, 16, 128>}]} {
    %c0 = arith.constant 0 : index
    %c0_0 = arith.constant 0 : index
    %c0_1 = arith.constant 0 : index
    %c0_2 = arith.constant 0 : index
    %0 = vector.load %arg1[%c0, %c0_0, %c0_1, %c0_2] : memref<1x16x16x128xbf16, #tpu.memory_space<vmem>>, vector<1x16x16x128xbf16>
    %1 = vector.shape_cast %0 : vector<1x16x16x128xbf16> to vector<16x16x128xbf16>
    %2 = vector.shape_cast %1 : vector<16x16x128xbf16> to vector<256x128xbf16>
    %3 = arith.extf %2 : vector<256x128xbf16> to vector<256x128xf32>
    %c0_3 = arith.constant 0 : index
    %c0_4 = arith.constant 0 : index
    %4 = vector.load %arg2[%c0_3, %c0_4] : memref<1x128xf32, #tpu.memory_space<vmem>>, vector<1x128xf32>
    %5 = vector.broadcast %4 : vector<1x128xf32> to vector<256x128xf32>
    %6 = arith.mulf %3, %5 : vector<256x128xf32>
    %c0_5 = arith.constant 0 : index
    %c0_6 = arith.constant 0 : index
    %7 = vector.load %arg3[%c0_5, %c0_6] : memref<1x128xf32, #tpu.memory_space<vmem>>, vector<1x128xf32>
    %8 = vector.broadcast %7 : vector<1x128xf32> to vector<256x128xf32>
    %9 = arith.addf %6, %8 : vector<256x128xf32>
    %cst = arith.constant 0.000000e+00 : f32
    %10 = vector.broadcast %cst : f32 to vector<256x128xf32>
    %11 = arith.maximumf %9, %10 : vector<256x128xf32>
    %12 = arith.truncf %11 : vector<256x128xf32> to vector<256x128xbf16>
    %c0_7 = arith.constant 0 : index
    %c0_8 = arith.constant 0 : index
    %13 = vector.load %arg4[%c0_7, %c0_8] : memref<128x128xbf16, #tpu.memory_space<vmem>>, vector<128x128xbf16>
    %cst_9 = arith.constant dense<0.000000e+00> : vector<256x128xf32>
    %14 = tpu.matmul %12, %13, %cst_9 {dimension_numbers = #tpu.dot_dimension_numbers<[1], [0], [0], [1], [0, 0, 1, 1], [], []>} : vector<256x128xbf16>, vector<128x128xbf16>, vector<256x128xf32> -> vector<256x128xf32>
    %c0_10 = arith.constant 0 : index
    %c0_11 = arith.constant 0 : index
    %15 = vector.load %arg5[%c0_10, %c0_11] : memref<1x128xf32, #tpu.memory_space<vmem>>, vector<1x128xf32>
    %16 = vector.broadcast %15 : vector<1x128xf32> to vector<256x128xf32>
    %17 = arith.mulf %14, %16 : vector<256x128xf32>
    %c0_12 = arith.constant 0 : index
    %c0_13 = arith.constant 0 : index
    %18 = vector.load %arg6[%c0_12, %c0_13] : memref<1x128xf32, #tpu.memory_space<vmem>>, vector<1x128xf32>
    %19 = vector.broadcast %18 : vector<1x128xf32> to vector<256x128xf32>
    %20 = arith.addf %17, %19 : vector<256x128xf32>
    %cst_14 = arith.constant 0.000000e+00 : f32
    %21 = vector.broadcast %cst_14 : f32 to vector<256x128xf32>
    %22 = arith.maximumf %20, %21 : vector<256x128xf32>
    %23 = arith.truncf %22 : vector<256x128xf32> to vector<256x128xbf16>
    %cst_15 = arith.constant 0.000000e+00 : bf16
    %24 = vector.broadcast %cst_15 : bf16 to vector<18x18x128xbf16>
    %c0_16 = arith.constant 0 : index
    %c0_17 = arith.constant 0 : index
    %c0_18 = arith.constant 0 : index
    %25 = vector.load %arg9[%c0_16, %c0_17, %c0_18] : memref<18x18x128xbf16, #tpu.memory_space<vmem>>, vector<18x18x128xbf16>
    tpu.vector_store %arg9[%c0_16, %c0_17, %c0_18], %24 {strides = array<i32>} : memref<18x18x128xbf16, #tpu.memory_space<vmem>>, vector<18x18x128xbf16>,
    %26 = vector.shape_cast %23 : vector<256x128xbf16> to vector<16x16x128xbf16>
    %c1 = arith.constant 1 : index
    %c1_19 = arith.constant 1 : index
    %c0_20 = arith.constant 0 : index
    %27 = vector.load %arg9[%c1, %c1_19, %c0_20] : memref<18x18x128xbf16, #tpu.memory_space<vmem>>, vector<16x16x128xbf16>
    tpu.vector_store %arg9[%c1, %c1_19, %c0_20], %26 {strides = array<i32>} : memref<18x18x128xbf16, #tpu.memory_space<vmem>>, vector<16x16x128xbf16>,
    %cst_21 = arith.constant 0.000000e+00 : f32
    %28 = vector.broadcast %cst_21 : f32 to vector<256x128xf32>
    %c0_22 = arith.constant 0 : index
    %c0_23 = arith.constant 0 : index
    %c0_24 = arith.constant 0 : index
    %29 = vector.load %arg9[%c0_22, %c0_23, %c0_24] : memref<18x18x128xbf16, #tpu.memory_space<vmem>>, vector<16x16x128xbf16>
    %30 = vector.shape_cast %29 : vector<16x16x128xbf16> to vector<256x128xbf16>
    %c0_25 = arith.constant 0 : index
    %c0_26 = arith.constant 0 : index
    %c0_27 = arith.constant 0 : index
    %31 = vector.load %arg7[%c0_25, %c0_26, %c0_27] : memref<9x128x128xbf16, #tpu.memory_space<vmem>>, vector<1x128x128xbf16>
    %32 = vector.shape_cast %31 : vector<1x128x128xbf16> to vector<128x128xbf16>
    %cst_28 = arith.constant dense<0.000000e+00> : vector<256x128xf32>
    %33 = tpu.matmul %30, %32, %cst_28 {dimension_numbers = #tpu.dot_dimension_numbers<[1], [0], [0], [1], [0, 0, 1, 1], [], []>} : vector<256x128xbf16>, vector<128x128xbf16>, vector<256x128xf32> -> vector<256x128xf32>
    %34 = arith.addf %28, %33 : vector<256x128xf32>
    %c0_29 = arith.constant 0 : index
    %c1_30 = arith.constant 1 : index
    %c0_31 = arith.constant 0 : index
    %35 = vector.load %arg9[%c0_29, %c1_30, %c0_31] : memref<18x18x128xbf16, #tpu.memory_space<vmem>>, vector<16x16x128xbf16>
    %36 = vector.shape_cast %35 : vector<16x16x128xbf16> to vector<256x128xbf16>
    %c1_32 = arith.constant 1 : index
    %c0_33 = arith.constant 0 : index
    %c0_34 = arith.constant 0 : index
    %37 = vector.load %arg7[%c1_32, %c0_33, %c0_34] : memref<9x128x128xbf16, #tpu.memory_space<vmem>>, vector<1x128x128xbf16>
    %38 = vector.shape_cast %37 : vector<1x128x128xbf16> to vector<128x128xbf16>
    %cst_35 = arith.constant dense<0.000000e+00> : vector<256x128xf32>
    %39 = tpu.matmul %36, %38, %cst_35 {dimension_numbers = #tpu.dot_dimension_numbers<[1], [0], [0], [1], [0, 0, 1, 1], [], []>} : vector<256x128xbf16>, vector<128x128xbf16>, vector<256x128xf32> -> vector<256x128xf32>
    %40 = arith.addf %34, %39 : vector<256x128xf32>
    %c0_36 = arith.constant 0 : index
    %c2 = arith.constant 2 : index
    %c0_37 = arith.constant 0 : index
    %41 = vector.load %arg9[%c0_36, %c2, %c0_37] : memref<18x18x128xbf16, #tpu.memory_space<vmem>>, vector<16x16x128xbf16>
    %42 = vector.shape_cast %41 : vector<16x16x128xbf16> to vector<256x128xbf16>
    %c2_38 = arith.constant 2 : index
    %c0_39 = arith.constant 0 : index
    %c0_40 = arith.constant 0 : index
    %43 = vector.load %arg7[%c2_38, %c0_39, %c0_40] : memref<9x128x128xbf16, #tpu.memory_space<vmem>>, vector<1x128x128xbf16>
    %44 = vector.shape_cast %43 : vector<1x128x128xbf16> to vector<128x128xbf16>
    %cst_41 = arith.constant dense<0.000000e+00> : vector<256x128xf32>
    %45 = tpu.matmul %42, %44, %cst_41 {dimension_numbers = #tpu.dot_dimension_numbers<[1], [0], [0], [1], [0, 0, 1, 1], [], []>} : vector<256x128xbf16>, vector<128x128xbf16>, vector<256x128xf32> -> vector<256x128xf32>
    %46 = arith.addf %40, %45 : vector<256x128xf32>
    %c1_42 = arith.constant 1 : index
    %c0_43 = arith.constant 0 : index
    %c0_44 = arith.constant 0 : index
    %47 = vector.load %arg9[%c1_42, %c0_43, %c0_44] : memref<18x18x128xbf16, #tpu.memory_space<vmem>>, vector<16x16x128xbf16>
    %48 = vector.shape_cast %47 : vector<16x16x128xbf16> to vector<256x128xbf16>
    %c3 = arith.constant 3 : index
    %c0_45 = arith.constant 0 : index
    %c0_46 = arith.constant 0 : index
    %49 = vector.load %arg7[%c3, %c0_45, %c0_46] : memref<9x128x128xbf16, #tpu.memory_space<vmem>>, vector<1x128x128xbf16>
    %50 = vector.shape_cast %49 : vector<1x128x128xbf16> to vector<128x128xbf16>
    %cst_47 = arith.constant dense<0.000000e+00> : vector<256x128xf32>
    %51 = tpu.matmul %48, %50, %cst_47 {dimension_numbers = #tpu.dot_dimension_numbers<[1], [0], [0], [1], [0, 0, 1, 1], [], []>} : vector<256x128xbf16>, vector<128x128xbf16>, vector<256x128xf32> -> vector<256x128xf32>
    %52 = arith.addf %46, %51 : vector<256x128xf32>
    %c1_48 = arith.constant 1 : index
    %c1_49 = arith.constant 1 : index
    %c0_50 = arith.constant 0 : index
    %53 = vector.load %arg9[%c1_48, %c1_49, %c0_50] : memref<18x18x128xbf16, #tpu.memory_space<vmem>>, vector<16x16x128xbf16>
    %54 = vector.shape_cast %53 : vector<16x16x128xbf16> to vector<256x128xbf16>
    %c4 = arith.constant 4 : index
    %c0_51 = arith.constant 0 : index
    %c0_52 = arith.constant 0 : index
    %55 = vector.load %arg7[%c4, %c0_51, %c0_52] : memref<9x128x128xbf16, #tpu.memory_space<vmem>>, vector<1x128x128xbf16>
    %56 = vector.shape_cast %55 : vector<1x128x128xbf16> to vector<128x128xbf16>
    %cst_53 = arith.constant dense<0.000000e+00> : vector<256x128xf32>
    %57 = tpu.matmul %54, %56, %cst_53 {dimension_numbers = #tpu.dot_dimension_numbers<[1], [0], [0], [1], [0, 0, 1, 1], [], []>} : vector<256x128xbf16>, vector<128x128xbf16>, vector<256x128xf32> -> vector<256x128xf32>
    %58 = arith.addf %52, %57 : vector<256x128xf32>
    %c1_54 = arith.constant 1 : index
    %c2_55 = arith.constant 2 : index
    %c0_56 = arith.constant 0 : index
    %59 = vector.load %arg9[%c1_54, %c2_55, %c0_56] : memref<18x18x128xbf16, #tpu.memory_space<vmem>>, vector<16x16x128xbf16>
    %60 = vector.shape_cast %59 : vector<16x16x128xbf16> to vector<256x128xbf16>
    %c5 = arith.constant 5 : index
    %c0_57 = arith.constant 0 : index
    %c0_58 = arith.constant 0 : index
    %61 = vector.load %arg7[%c5, %c0_57, %c0_58] : memref<9x128x128xbf16, #tpu.memory_space<vmem>>, vector<1x128x128xbf16>
    %62 = vector.shape_cast %61 : vector<1x128x128xbf16> to vector<128x128xbf16>
    %cst_59 = arith.constant dense<0.000000e+00> : vector<256x128xf32>
    %63 = tpu.matmul %60, %62, %cst_59 {dimension_numbers = #tpu.dot_dimension_numbers<[1], [0], [0], [1], [0, 0, 1, 1], [], []>} : vector<256x128xbf16>, vector<128x128xbf16>, vector<256x128xf32> -> vector<256x128xf32>
    %64 = arith.addf %58, %63 : vector<256x128xf32>
    %c2_60 = arith.constant 2 : index
    %c0_61 = arith.constant 0 : index
    %c0_62 = arith.constant 0 : index
    %65 = vector.load %arg9[%c2_60, %c0_61, %c0_62] : memref<18x18x128xbf16, #tpu.memory_space<vmem>>, vector<16x16x128xbf16>
    %66 = vector.shape_cast %65 : vector<16x16x128xbf16> to vector<256x128xbf16>
    %c6 = arith.constant 6 : index
    %c0_63 = arith.constant 0 : index
    %c0_64 = arith.constant 0 : index
    %67 = vector.load %arg7[%c6, %c0_63, %c0_64] : memref<9x128x128xbf16, #tpu.memory_space<vmem>>, vector<1x128x128xbf16>
    %68 = vector.shape_cast %67 : vector<1x128x128xbf16> to vector<128x128xbf16>
    %cst_65 = arith.constant dense<0.000000e+00> : vector<256x128xf32>
    %69 = tpu.matmul %66, %68, %cst_65 {dimension_numbers = #tpu.dot_dimension_numbers<[1], [0], [0], [1], [0, 0, 1, 1], [], []>} : vector<256x128xbf16>, vector<128x128xbf16>, vector<256x128xf32> -> vector<256x128xf32>
    %70 = arith.addf %64, %69 : vector<256x128xf32>
    %c2_66 = arith.constant 2 : index
    %c1_67 = arith.constant 1 : index
    %c0_68 = arith.constant 0 : index
    %71 = vector.load %arg9[%c2_66, %c1_67, %c0_68] : memref<18x18x128xbf16, #tpu.memory_space<vmem>>, vector<16x16x128xbf16>
    %72 = vector.shape_cast %71 : vector<16x16x128xbf16> to vector<256x128xbf16>
    %c7 = arith.constant 7 : index
    %c0_69 = arith.constant 0 : index
    %c0_70 = arith.constant 0 : index
    %73 = vector.load %arg7[%c7, %c0_69, %c0_70] : memref<9x128x128xbf16, #tpu.memory_space<vmem>>, vector<1x128x128xbf16>
    %74 = vector.shape_cast %73 : vector<1x128x128xbf16> to vector<128x128xbf16>
    %cst_71 = arith.constant dense<0.000000e+00> : vector<256x128xf32>
    %75 = tpu.matmul %72, %74, %cst_71 {dimension_numbers = #tpu.dot_dimension_numbers<[1], [0], [0], [1], [0, 0, 1, 1], [], []>} : vector<256x128xbf16>, vector<128x128xbf16>, vector<256x128xf32> -> vector<256x128xf32>
    %76 = arith.addf %70, %75 : vector<256x128xf32>
    %c2_72 = arith.constant 2 : index
    %c2_73 = arith.constant 2 : index
    %c0_74 = arith.constant 0 : index
    %77 = vector.load %arg9[%c2_72, %c2_73, %c0_74] : memref<18x18x128xbf16, #tpu.memory_space<vmem>>, vector<16x16x128xbf16>
    %78 = vector.shape_cast %77 : vector<16x16x128xbf16> to vector<256x128xbf16>
    %c8 = arith.constant 8 : index
    %c0_75 = arith.constant 0 : index
    %c0_76 = arith.constant 0 : index
    %79 = vector.load %arg7[%c8, %c0_75, %c0_76] : memref<9x128x128xbf16, #tpu.memory_space<vmem>>, vector<1x128x128xbf16>
    %80 = vector.shape_cast %79 : vector<1x128x128xbf16> to vector<128x128xbf16>
    %cst_77 = arith.constant dense<0.000000e+00> : vector<256x128xf32>
    %81 = tpu.matmul %78, %80, %cst_77 {dimension_numbers = #tpu.dot_dimension_numbers<[1], [0], [0], [1], [0, 0, 1, 1], [], []>} : vector<256x128xbf16>, vector<128x128xbf16>, vector<256x128xf32> -> vector<256x128xf32>
    %82 = arith.addf %76, %81 : vector<256x128xf32>
    %83 = tpu.iota {dimensions = array<i32: 1>} : vector<1x128xi32>
    %c4_i32 = arith.constant 4 : i32
    %84 = vector.broadcast %c4_i32 : i32 to vector<1x128xi32>
    %85 = arith.cmpi sge, %83, %84 : vector<1x128xi32>
    %c8_i32 = arith.constant 8 : i32
    %86 = vector.broadcast %c8_i32 : i32 to vector<1x128xi32>
    %87 = arith.cmpi slt, %83, %86 : vector<1x128xi32>
    %88 = arith.andi %85, %87 : vector<1x128xi1>
    %89 = arith.truncf %82 : vector<256x128xf32> to vector<256x128xbf16>
    %90 = vector.shape_cast %88 : vector<1x128xi1> to vector<1x128xi1>
    %91 = vector.broadcast %90 : vector<1x128xi1> to vector<256x128xi1>
    %92 = arith.select %91, %89, %2 : vector<256x128xi1>, vector<256x128xbf16>
    %93 = vector.shape_cast %92 : vector<256x128xbf16> to vector<16x16x128xbf16>
    %c0_78 = arith.constant 0 : index
    %c0_79 = arith.constant 0 : index
    %c0_80 = arith.constant 0 : index
    %c0_81 = arith.constant 0 : index
    %94 = vector.load %arg8[%c0_78, %c0_79, %c0_80, %c0_81] : memref<1x16x16x128xbf16, #tpu.memory_space<vmem>>, vector<1x16x16x128xbf16>
    %95 = vector.shape_cast %94 : vector<1x16x16x128xbf16> to vector<16x16x128xbf16>
    %96 = vector.shape_cast %93 : vector<16x16x128xbf16> to vector<1x16x16x128xbf16>
    tpu.vector_store %arg8[%c0_78, %c0_79, %c0_80, %c0_81], %96 {strides = array<i32>} : memref<1x16x16x128xbf16, #tpu.memory_space<vmem>>, vector<1x16x16x128xbf16>,
    return
  }
  func.func @transform_0(%arg0: i32) -> (i32, i32, i32, i32) {
    %c0_i32 = arith.constant 0 : i32
    %c0_i32_0 = arith.constant 0 : i32
    %c0_i32_1 = arith.constant 0 : i32
    %c0_i32_2 = arith.constant 0 : i32
    return %arg0, %c0_i32, %c0_i32_0, %c0_i32_1 : i32, i32, i32, i32
  }
  func.func @transform_1(%arg0: i32) -> (i32, i32) {
    %c0_i32 = arith.constant 0 : i32
    %c0_i32_0 = arith.constant 0 : i32
    %c0_i32_1 = arith.constant 0 : i32
    return %c0_i32, %c0_i32_0 : i32, i32
  }
  func.func @transform_2(%arg0: i32) -> (i32, i32) {
    %c0_i32 = arith.constant 0 : i32
    %c0_i32_0 = arith.constant 0 : i32
    %c0_i32_1 = arith.constant 0 : i32
    return %c0_i32, %c0_i32_0 : i32, i32
  }
  func.func @transform_3(%arg0: i32) -> (i32, i32) {
    %c0_i32 = arith.constant 0 : i32
    %c0_i32_0 = arith.constant 0 : i32
    %c0_i32_1 = arith.constant 0 : i32
    return %c0_i32, %c0_i32_0 : i32, i32
  }
  func.func @transform_4(%arg0: i32) -> (i32, i32) {
    %c0_i32 = arith.constant 0 : i32
    %c0_i32_0 = arith.constant 0 : i32
    %c0_i32_1 = arith.constant 0 : i32
    return %c0_i32, %c0_i32_0 : i32, i32
  }
  func.func @transform_5(%arg0: i32) -> (i32, i32) {
    %c0_i32 = arith.constant 0 : i32
    %c0_i32_0 = arith.constant 0 : i32
    %c0_i32_1 = arith.constant 0 : i32
    return %c0_i32, %c0_i32_0 : i32, i32
  }
  func.func @transform_6(%arg0: i32) -> (i32, i32, i32) {
    %c0_i32 = arith.constant 0 : i32
    %c0_i32_0 = arith.constant 0 : i32
    %c0_i32_1 = arith.constant 0 : i32
    %c0_i32_2 = arith.constant 0 : i32
    return %c0_i32, %c0_i32_0, %c0_i32_1 : i32, i32, i32
  }
  func.func @transform_7(%arg0: i32) -> (i32, i32, i32, i32) {
    %c0_i32 = arith.constant 0 : i32
    %c0_i32_0 = arith.constant 0 : i32
    %c0_i32_1 = arith.constant 0 : i32
    %c0_i32_2 = arith.constant 0 : i32
    return %arg0, %c0_i32, %c0_i32_0, %c0_i32_1 : i32, i32, i32, i32
  }
}

module attributes {stable_mosaic.version = 11 : i64} {
  func.func @dense_layer_kernel(%arg0: i32, %arg1: memref<1x16x16x128xbf16, #tpu.memory_space<vmem>>, %arg2: memref<1x128xf32, #tpu.memory_space<vmem>>, %arg3: memref<1x128xf32, #tpu.memory_space<vmem>>, %arg4: memref<128x128xbf16, #tpu.memory_space<vmem>>, %arg5: memref<1x128xf32, #tpu.memory_space<vmem>>, %arg6: memref<1x128xf32, #tpu.memory_space<vmem>>, %arg7: memref<9x128x128xbf16, #tpu.memory_space<vmem>>, %arg8: memref<1x16x16x128xbf16, #tpu.memory_space<vmem>>, %arg9: memref<18x18x128xbf16, #tpu.memory_space<vmem>>) attributes {dimension_semantics = [#tpu.dimension_semantics<parallel>], iteration_bounds = array<i64: 2>, scalar_prefetch = 0 : i64, scratch_operands = 1 : i64, tpu.core_type = #tpu.core_type<tc>, window_params = [{transform_indices = @transform_0, window_bounds = array<i64: 1, 16, 16, 128>}, {pipeline_mode = #tpu.pipeline_mode<synchronous>, transform_indices = @transform_1, window_bounds = array<i64: 1, 128>}, {pipeline_mode = #tpu.pipeline_mode<synchronous>, transform_indices = @transform_2, window_bounds = array<i64: 1, 128>}, {pipeline_mode = #tpu.pipeline_mode<synchronous>, transform_indices = @transform_3, window_bounds = array<i64: 128, 128>}, {pipeline_mode = #tpu.pipeline_mode<synchronous>, transform_indices = @transform_4, window_bounds = array<i64: 1, 128>}, {pipeline_mode = #tpu.pipeline_mode<synchronous>, transform_indices = @transform_5, window_bounds = array<i64: 1, 128>}, {pipeline_mode = #tpu.pipeline_mode<synchronous>, transform_indices = @transform_6, window_bounds = array<i64: 9, 128, 128>}, {transform_indices = @transform_7, window_bounds = array<i64: 1, 16, 16, 128>}]} {
    %c0 = arith.constant 0 : index
    %c0_0 = arith.constant 0 : index
    %c0_1 = arith.constant 0 : index
    %c0_2 = arith.constant 0 : index
    %0 = vector.load %arg1[%c0, %c0_0, %c0_1, %c0_2] : memref<1x16x16x128xbf16, #tpu.memory_space<vmem>>, vector<1x16x16x128xbf16>
    %1 = vector.shape_cast %0 : vector<1x16x16x128xbf16> to vector<16x16x128xbf16>
    %2 = vector.shape_cast %1 : vector<16x16x128xbf16> to vector<256x128xbf16>
    %3 = arith.extf %2 : vector<256x128xbf16> to vector<256x128xf32>
    %c0_3 = arith.constant 0 : index
    %c0_4 = arith.constant 0 : index
    %4 = vector.load %arg2[%c0_3, %c0_4] : memref<1x128xf32, #tpu.memory_space<vmem>>, vector<1x128xf32>
    %5 = vector.broadcast %4 : vector<1x128xf32> to vector<256x128xf32>
    %6 = arith.mulf %3, %5 : vector<256x128xf32>
    %c0_5 = arith.constant 0 : index
    %c0_6 = arith.constant 0 : index
    %7 = vector.load %arg3[%c0_5, %c0_6] : memref<1x128xf32, #tpu.memory_space<vmem>>, vector<1x128xf32>
    %8 = vector.broadcast %7 : vector<1x128xf32> to vector<256x128xf32>
    %9 = arith.addf %6, %8 : vector<256x128xf32>
    %cst = arith.constant 0.000000e+00 : f32
    %10 = vector.broadcast %cst : f32 to vector<256x128xf32>
    %11 = arith.maximumf %9, %10 : vector<256x128xf32>
    %12 = arith.truncf %11 : vector<256x128xf32> to vector<256x128xbf16>
    %c0_7 = arith.constant 0 : index
    %c0_8 = arith.constant 0 : index
    %13 = vector.load %arg4[%c0_7, %c0_8] : memref<128x128xbf16, #tpu.memory_space<vmem>>, vector<128x128xbf16>
    %cst_9 = arith.constant dense<0.000000e+00> : vector<256x128xf32>
    %14 = tpu.matmul %12, %13, %cst_9 {dimension_numbers = #tpu.dot_dimension_numbers<[1], [0], [0], [1], [0, 0, 1, 1], [], []>} : vector<256x128xbf16>, vector<128x128xbf16>, vector<256x128xf32> -> vector<256x128xf32>
    %c0_10 = arith.constant 0 : index
    %c0_11 = arith.constant 0 : index
    %15 = vector.load %arg5[%c0_10, %c0_11] : memref<1x128xf32, #tpu.memory_space<vmem>>, vector<1x128xf32>
    %16 = vector.broadcast %15 : vector<1x128xf32> to vector<256x128xf32>
    %17 = arith.mulf %14, %16 : vector<256x128xf32>
    %c0_12 = arith.constant 0 : index
    %c0_13 = arith.constant 0 : index
    %18 = vector.load %arg6[%c0_12, %c0_13] : memref<1x128xf32, #tpu.memory_space<vmem>>, vector<1x128xf32>
    %19 = vector.broadcast %18 : vector<1x128xf32> to vector<256x128xf32>
    %20 = arith.addf %17, %19 : vector<256x128xf32>
    %cst_14 = arith.constant 0.000000e+00 : f32
    %21 = vector.broadcast %cst_14 : f32 to vector<256x128xf32>
    %22 = arith.maximumf %20, %21 : vector<256x128xf32>
    %23 = arith.truncf %22 : vector<256x128xf32> to vector<256x128xbf16>
    %cst_15 = arith.constant 0.000000e+00 : bf16
    %24 = vector.broadcast %cst_15 : bf16 to vector<18x18x128xbf16>
    %c0_16 = arith.constant 0 : index
    %c0_17 = arith.constant 0 : index
    %c0_18 = arith.constant 0 : index
    %25 = vector.load %arg9[%c0_16, %c0_17, %c0_18] : memref<18x18x128xbf16, #tpu.memory_space<vmem>>, vector<18x18x128xbf16>
    tpu.vector_store %arg9[%c0_16, %c0_17, %c0_18], %24 {strides = array<i32>} : memref<18x18x128xbf16, #tpu.memory_space<vmem>>, vector<18x18x128xbf16>,
    %26 = vector.shape_cast %23 : vector<256x128xbf16> to vector<16x16x128xbf16>
    %c1 = arith.constant 1 : index
    %c1_19 = arith.constant 1 : index
    %c0_20 = arith.constant 0 : index
    %27 = vector.load %arg9[%c1, %c1_19, %c0_20] : memref<18x18x128xbf16, #tpu.memory_space<vmem>>, vector<16x16x128xbf16>
    tpu.vector_store %arg9[%c1, %c1_19, %c0_20], %26 {strides = array<i32>} : memref<18x18x128xbf16, #tpu.memory_space<vmem>>, vector<16x16x128xbf16>,
    %cst_21 = arith.constant 0.000000e+00 : f32
    %28 = vector.broadcast %cst_21 : f32 to vector<256x128xf32>
    %c0_22 = arith.constant 0 : index
    %c0_23 = arith.constant 0 : index
    %c0_24 = arith.constant 0 : index
    %29 = vector.load %arg9[%c0_22, %c0_23, %c0_24] : memref<18x18x128xbf16, #tpu.memory_space<vmem>>, vector<16x16x128xbf16>
    %30 = vector.shape_cast %29 : vector<16x16x128xbf16> to vector<256x128xbf16>
    %c0_25 = arith.constant 0 : index
    %c0_26 = arith.constant 0 : index
    %c0_27 = arith.constant 0 : index
    %31 = vector.load %arg7[%c0_25, %c0_26, %c0_27] : memref<9x128x128xbf16, #tpu.memory_space<vmem>>, vector<1x128x128xbf16>
    %32 = vector.shape_cast %31 : vector<1x128x128xbf16> to vector<128x128xbf16>
    %cst_28 = arith.constant dense<0.000000e+00> : vector<256x128xf32>
    %33 = tpu.matmul %30, %32, %cst_28 {dimension_numbers = #tpu.dot_dimension_numbers<[1], [0], [0], [1], [0, 0, 1, 1], [], []>} : vector<256x128xbf16>, vector<128x128xbf16>, vector<256x128xf32> -> vector<256x128xf32>
    %34 = arith.addf %28, %33 : vector<256x128xf32>
    %c0_29 = arith.constant 0 : index
    %c1_30 = arith.constant 1 : index
    %c0_31 = arith.constant 0 : index
    %35 = vector.load %arg9[%c0_29, %c1_30, %c0_31] : memref<18x18x128xbf16, #tpu.memory_space<vmem>>, vector<16x16x128xbf16>
    %36 = vector.shape_cast %35 : vector<16x16x128xbf16> to vector<256x128xbf16>
    %c1_32 = arith.constant 1 : index
    %c0_33 = arith.constant 0 : index
    %c0_34 = arith.constant 0 : index
    %37 = vector.load %arg7[%c1_32, %c0_33, %c0_34] : memref<9x128x128xbf16, #tpu.memory_space<vmem>>, vector<1x128x128xbf16>
    %38 = vector.shape_cast %37 : vector<1x128x128xbf16> to vector<128x128xbf16>
    %cst_35 = arith.constant dense<0.000000e+00> : vector<256x128xf32>
    %39 = tpu.matmul %36, %38, %cst_35 {dimension_numbers = #tpu.dot_dimension_numbers<[1], [0], [0], [1], [0, 0, 1, 1], [], []>} : vector<256x128xbf16>, vector<128x128xbf16>, vector<256x128xf32> -> vector<256x128xf32>
    %40 = arith.addf %34, %39 : vector<256x128xf32>
    %c0_36 = arith.constant 0 : index
    %c2 = arith.constant 2 : index
    %c0_37 = arith.constant 0 : index
    %41 = vector.load %arg9[%c0_36, %c2, %c0_37] : memref<18x18x128xbf16, #tpu.memory_space<vmem>>, vector<16x16x128xbf16>
    %42 = vector.shape_cast %41 : vector<16x16x128xbf16> to vector<256x128xbf16>
    %c2_38 = arith.constant 2 : index
    %c0_39 = arith.constant 0 : index
    %c0_40 = arith.constant 0 : index
    %43 = vector.load %arg7[%c2_38, %c0_39, %c0_40] : memref<9x128x128xbf16, #tpu.memory_space<vmem>>, vector<1x128x128xbf16>
    %44 = vector.shape_cast %43 : vector<1x128x128xbf16> to vector<128x128xbf16>
    %cst_41 = arith.constant dense<0.000000e+00> : vector<256x128xf32>
    %45 = tpu.matmul %42, %44, %cst_41 {dimension_numbers = #tpu.dot_dimension_numbers<[1], [0], [0], [1], [0, 0, 1, 1], [], []>} : vector<256x128xbf16>, vector<128x128xbf16>, vector<256x128xf32> -> vector<256x128xf32>
    %46 = arith.addf %40, %45 : vector<256x128xf32>
    %c1_42 = arith.constant 1 : index
    %c0_43 = arith.constant 0 : index
    %c0_44 = arith.constant 0 : index
    %47 = vector.load %arg9[%c1_42, %c0_43, %c0_44] : memref<18x18x128xbf16, #tpu.memory_space<vmem>>, vector<16x16x128xbf16>
    %48 = vector.shape_cast %47 : vector<16x16x128xbf16> to vector<256x128xbf16>
    %c3 = arith.constant 3 : index
    %c0_45 = arith.constant 0 : index
    %c0_46 = arith.constant 0 : index
    %49 = vector.load %arg7[%c3, %c0_45, %c0_46] : memref<9x128x128xbf16, #tpu.memory_space<vmem>>, vector<1x128x128xbf16>
    %50 = vector.shape_cast %49 : vector<1x128x128xbf16> to vector<128x128xbf16>
    %cst_47 = arith.constant dense<0.000000e+00> : vector<256x128xf32>
    %51 = tpu.matmul %48, %50, %cst_47 {dimension_numbers = #tpu.dot_dimension_numbers<[1], [0], [0], [1], [0, 0, 1, 1], [], []>} : vector<256x128xbf16>, vector<128x128xbf16>, vector<256x128xf32> -> vector<256x128xf32>
    %52 = arith.addf %46, %51 : vector<256x128xf32>
    %c1_48 = arith.constant 1 : index
    %c1_49 = arith.constant 1 : index
    %c0_50 = arith.constant 0 : index
    %53 = vector.load %arg9[%c1_48, %c1_49, %c0_50] : memref<18x18x128xbf16, #tpu.memory_space<vmem>>, vector<16x16x128xbf16>
    %54 = vector.shape_cast %53 : vector<16x16x128xbf16> to vector<256x128xbf16>
    %c4 = arith.constant 4 : index
    %c0_51 = arith.constant 0 : index
    %c0_52 = arith.constant 0 : index
    %55 = vector.load %arg7[%c4, %c0_51, %c0_52] : memref<9x128x128xbf16, #tpu.memory_space<vmem>>, vector<1x128x128xbf16>
    %56 = vector.shape_cast %55 : vector<1x128x128xbf16> to vector<128x128xbf16>
    %cst_53 = arith.constant dense<0.000000e+00> : vector<256x128xf32>
    %57 = tpu.matmul %54, %56, %cst_53 {dimension_numbers = #tpu.dot_dimension_numbers<[1], [0], [0], [1], [0, 0, 1, 1], [], []>} : vector<256x128xbf16>, vector<128x128xbf16>, vector<256x128xf32> -> vector<256x128xf32>
    %58 = arith.addf %52, %57 : vector<256x128xf32>
    %c1_54 = arith.constant 1 : index
    %c2_55 = arith.constant 2 : index
    %c0_56 = arith.constant 0 : index
    %59 = vector.load %arg9[%c1_54, %c2_55, %c0_56] : memref<18x18x128xbf16, #tpu.memory_space<vmem>>, vector<16x16x128xbf16>
    %60 = vector.shape_cast %59 : vector<16x16x128xbf16> to vector<256x128xbf16>
    %c5 = arith.constant 5 : index
    %c0_57 = arith.constant 0 : index
    %c0_58 = arith.constant 0 : index
    %61 = vector.load %arg7[%c5, %c0_57, %c0_58] : memref<9x128x128xbf16, #tpu.memory_space<vmem>>, vector<1x128x128xbf16>
    %62 = vector.shape_cast %61 : vector<1x128x128xbf16> to vector<128x128xbf16>
    %cst_59 = arith.constant dense<0.000000e+00> : vector<256x128xf32>
    %63 = tpu.matmul %60, %62, %cst_59 {dimension_numbers = #tpu.dot_dimension_numbers<[1], [0], [0], [1], [0, 0, 1, 1], [], []>} : vector<256x128xbf16>, vector<128x128xbf16>, vector<256x128xf32> -> vector<256x128xf32>
    %64 = arith.addf %58, %63 : vector<256x128xf32>
    %c2_60 = arith.constant 2 : index
    %c0_61 = arith.constant 0 : index
    %c0_62 = arith.constant 0 : index
    %65 = vector.load %arg9[%c2_60, %c0_61, %c0_62] : memref<18x18x128xbf16, #tpu.memory_space<vmem>>, vector<16x16x128xbf16>
    %66 = vector.shape_cast %65 : vector<16x16x128xbf16> to vector<256x128xbf16>
    %c6 = arith.constant 6 : index
    %c0_63 = arith.constant 0 : index
    %c0_64 = arith.constant 0 : index
    %67 = vector.load %arg7[%c6, %c0_63, %c0_64] : memref<9x128x128xbf16, #tpu.memory_space<vmem>>, vector<1x128x128xbf16>
    %68 = vector.shape_cast %67 : vector<1x128x128xbf16> to vector<128x128xbf16>
    %cst_65 = arith.constant dense<0.000000e+00> : vector<256x128xf32>
    %69 = tpu.matmul %66, %68, %cst_65 {dimension_numbers = #tpu.dot_dimension_numbers<[1], [0], [0], [1], [0, 0, 1, 1], [], []>} : vector<256x128xbf16>, vector<128x128xbf16>, vector<256x128xf32> -> vector<256x128xf32>
    %70 = arith.addf %64, %69 : vector<256x128xf32>
    %c2_66 = arith.constant 2 : index
    %c1_67 = arith.constant 1 : index
    %c0_68 = arith.constant 0 : index
    %71 = vector.load %arg9[%c2_66, %c1_67, %c0_68] : memref<18x18x128xbf16, #tpu.memory_space<vmem>>, vector<16x16x128xbf16>
    %72 = vector.shape_cast %71 : vector<16x16x128xbf16> to vector<256x128xbf16>
    %c7 = arith.constant 7 : index
    %c0_69 = arith.constant 0 : index
    %c0_70 = arith.constant 0 : index
    %73 = vector.load %arg7[%c7, %c0_69, %c0_70] : memref<9x128x128xbf16, #tpu.memory_space<vmem>>, vector<1x128x128xbf16>
    %74 = vector.shape_cast %73 : vector<1x128x128xbf16> to vector<128x128xbf16>
    %cst_71 = arith.constant dense<0.000000e+00> : vector<256x128xf32>
    %75 = tpu.matmul %72, %74, %cst_71 {dimension_numbers = #tpu.dot_dimension_numbers<[1], [0], [0], [1], [0, 0, 1, 1], [], []>} : vector<256x128xbf16>, vector<128x128xbf16>, vector<256x128xf32> -> vector<256x128xf32>
    %76 = arith.addf %70, %75 : vector<256x128xf32>
    %c2_72 = arith.constant 2 : index
    %c2_73 = arith.constant 2 : index
    %c0_74 = arith.constant 0 : index
    %77 = vector.load %arg9[%c2_72, %c2_73, %c0_74] : memref<18x18x128xbf16, #tpu.memory_space<vmem>>, vector<16x16x128xbf16>
    %78 = vector.shape_cast %77 : vector<16x16x128xbf16> to vector<256x128xbf16>
    %c8 = arith.constant 8 : index
    %c0_75 = arith.constant 0 : index
    %c0_76 = arith.constant 0 : index
    %79 = vector.load %arg7[%c8, %c0_75, %c0_76] : memref<9x128x128xbf16, #tpu.memory_space<vmem>>, vector<1x128x128xbf16>
    %80 = vector.shape_cast %79 : vector<1x128x128xbf16> to vector<128x128xbf16>
    %cst_77 = arith.constant dense<0.000000e+00> : vector<256x128xf32>
    %81 = tpu.matmul %78, %80, %cst_77 {dimension_numbers = #tpu.dot_dimension_numbers<[1], [0], [0], [1], [0, 0, 1, 1], [], []>} : vector<256x128xbf16>, vector<128x128xbf16>, vector<256x128xf32> -> vector<256x128xf32>
    %82 = arith.addf %76, %81 : vector<256x128xf32>
    %83 = tpu.iota {dimensions = array<i32: 1>} : vector<1x128xi32>
    %c8_i32 = arith.constant 8 : i32
    %84 = vector.broadcast %c8_i32 : i32 to vector<1x128xi32>
    %85 = arith.cmpi sge, %83, %84 : vector<1x128xi32>
    %c12_i32 = arith.constant 12 : i32
    %86 = vector.broadcast %c12_i32 : i32 to vector<1x128xi32>
    %87 = arith.cmpi slt, %83, %86 : vector<1x128xi32>
    %88 = arith.andi %85, %87 : vector<1x128xi1>
    %89 = arith.truncf %82 : vector<256x128xf32> to vector<256x128xbf16>
    %90 = vector.shape_cast %88 : vector<1x128xi1> to vector<1x128xi1>
    %91 = vector.broadcast %90 : vector<1x128xi1> to vector<256x128xi1>
    %92 = arith.select %91, %89, %2 : vector<256x128xi1>, vector<256x128xbf16>
    %93 = vector.shape_cast %92 : vector<256x128xbf16> to vector<16x16x128xbf16>
    %c0_78 = arith.constant 0 : index
    %c0_79 = arith.constant 0 : index
    %c0_80 = arith.constant 0 : index
    %c0_81 = arith.constant 0 : index
    %94 = vector.load %arg8[%c0_78, %c0_79, %c0_80, %c0_81] : memref<1x16x16x128xbf16, #tpu.memory_space<vmem>>, vector<1x16x16x128xbf16>
    %95 = vector.shape_cast %94 : vector<1x16x16x128xbf16> to vector<16x16x128xbf16>
    %96 = vector.shape_cast %93 : vector<16x16x128xbf16> to vector<1x16x16x128xbf16>
    tpu.vector_store %arg8[%c0_78, %c0_79, %c0_80, %c0_81], %96 {strides = array<i32>} : memref<1x16x16x128xbf16, #tpu.memory_space<vmem>>, vector<1x16x16x128xbf16>,
    return
  }
  func.func @transform_0(%arg0: i32) -> (i32, i32, i32, i32) {
    %c0_i32 = arith.constant 0 : i32
    %c0_i32_0 = arith.constant 0 : i32
    %c0_i32_1 = arith.constant 0 : i32
    %c0_i32_2 = arith.constant 0 : i32
    return %arg0, %c0_i32, %c0_i32_0, %c0_i32_1 : i32, i32, i32, i32
  }
  func.func @transform_1(%arg0: i32) -> (i32, i32) {
    %c0_i32 = arith.constant 0 : i32
    %c0_i32_0 = arith.constant 0 : i32
    %c0_i32_1 = arith.constant 0 : i32
    return %c0_i32, %c0_i32_0 : i32, i32
  }
  func.func @transform_2(%arg0: i32) -> (i32, i32) {
    %c0_i32 = arith.constant 0 : i32
    %c0_i32_0 = arith.constant 0 : i32
    %c0_i32_1 = arith.constant 0 : i32
    return %c0_i32, %c0_i32_0 : i32, i32
  }
  func.func @transform_3(%arg0: i32) -> (i32, i32) {
    %c0_i32 = arith.constant 0 : i32
    %c0_i32_0 = arith.constant 0 : i32
    %c0_i32_1 = arith.constant 0 : i32
    return %c0_i32, %c0_i32_0 : i32, i32
  }
  func.func @transform_4(%arg0: i32) -> (i32, i32) {
    %c0_i32 = arith.constant 0 : i32
    %c0_i32_0 = arith.constant 0 : i32
    %c0_i32_1 = arith.constant 0 : i32
    return %c0_i32, %c0_i32_0 : i32, i32
  }
  func.func @transform_5(%arg0: i32) -> (i32, i32) {
    %c0_i32 = arith.constant 0 : i32
    %c0_i32_0 = arith.constant 0 : i32
    %c0_i32_1 = arith.constant 0 : i32
    return %c0_i32, %c0_i32_0 : i32, i32
  }
  func.func @transform_6(%arg0: i32) -> (i32, i32, i32) {
    %c0_i32 = arith.constant 0 : i32
    %c0_i32_0 = arith.constant 0 : i32
    %c0_i32_1 = arith.constant 0 : i32
    %c0_i32_2 = arith.constant 0 : i32
    return %c0_i32, %c0_i32_0, %c0_i32_1 : i32, i32, i32
  }
  func.func @transform_7(%arg0: i32) -> (i32, i32, i32, i32) {
    %c0_i32 = arith.constant 0 : i32
    %c0_i32_0 = arith.constant 0 : i32
    %c0_i32_1 = arith.constant 0 : i32
    %c0_i32_2 = arith.constant 0 : i32
    return %arg0, %c0_i32, %c0_i32_0, %c0_i32_1 : i32, i32, i32, i32
  }
}

</mosaic_0001>

<llo_original>
// kernel: dense2d_block_forward.3
$region0: #{dense2d_block_forward.3}
  #allocation0 [shape = 'u32[]', space=smem, size = 0x4, offset = 0x4, fixed_abs, tag = 'smem constant byte address 0x4 - core index']
  #allocation1 [shape = 'u32[72,128]{1,0:T(1,128)}', space=vmem, size = 0x9000, scoped, tag = 'internal scratch']
  #allocation2 [shape = 'bf16[18,18,128]{2,1,0:T(8,128)(2,1)}', space=vmem, size = 0x1b000, scoped, tag = 'scratch operand']
  %s0 = inlined_call_operand.vmem [shape: bf16[2,16,16,128], index: 0, kind: input, shape index: {}, may-alias: {0,7}]
  %s1 = inlined_call_operand.vmem [shape: f32[1,128], index: 1, kind: input, shape index: {}]
  %s2 = inlined_call_operand.vmem [shape: f32[1,128], index: 2, kind: input, shape index: {}]
  %s3 = inlined_call_operand.vmem [shape: bf16[128,128], index: 3, kind: input, shape index: {}]
  %s4 = inlined_call_operand.vmem [shape: f32[1,128], index: 4, kind: input, shape index: {}]
  %s5 = inlined_call_operand.vmem [shape: f32[1,128], index: 5, kind: input, shape index: {}]
  %s6 = inlined_call_operand.hbm [shape: bf16[9,128,128], index: 6, kind: input, shape index: {}]
  %s7 = inlined_call_operand.vmem [shape: bf16[2,16,16,128], index: 7, kind: output, shape index: {}, may-alias: {0,7}]
  %s8 = sld [smem:[#allocation0]]
  $region65: #{dense2d_block_forward.3} parent=0
    _
  %s10 = ssub.s32 1, %s8
  %s11 = scalar_select 0, %s10, %s8
  $region1: #{dense2d_block_forward.3} parent=0
    #allocation3 [shape = 'u8[294912]{0}', space=vmem, size = 0x48000, scoped, tag = 'input window, operand 6, single buffered']
    #allocation4 [shape = 's32[2]{0}', space=sflag, size = 0x8, scoped, tag = 'scoped memory for dense2d_block_forward.3']
    %12 = vsyncpa [#allocation4], 0
    loop: start=0, step=1, limit=4
    $region2: #{dense2d_block_forward.3} parent=1 // loop_pre_header
      _
    $region3: #{dense2d_block_forward.3} parent=1 // loop_header
      %s14 = sphi 0, %s18
      %p15 = scmp.ge.s32.totalorder %s14, 4
      %s24 = sphi 0, %s26
      %s27 = sphi 0, %s24
      %s28 = sphi 0, %s27
      %s44 = sphi 0, %s28
      %s48 = sphi 0, %s48
      %s50 = sphi 0, %s48
      %s51 = sphi 0, %s50
      %s65 = sphi 0, %s51
      %s69 = sphi 0, %s69
      %s71 = sphi 0, %s69
      %s72 = sphi 0, %s71
      %s86 = sphi 0, %s72
      %s90 = sphi 0, %s90
      %s92 = sphi 0, %s90
      %s93 = sphi 0, %s92
      %s107 = sphi 0, %s93
      %s111 = sphi 0, %s111
      %s113 = sphi 0, %s111
      %s114 = sphi 0, %s113
      %s128 = sphi 0, %s114
      %s132 = sphi 0, %s132
      %s134 = sphi 0, %s132
      %s135 = sphi 0, %s134
      %s149 = sphi 0, %s135
      %s153 = sphi 0, %s153
      %s155 = sphi 0, %s153
      %s156 = sphi 0, %s155
      %s170 = sphi 0, %s156
      %s176 = sphi 0, %s178
      %s179 = sphi 0, %s176
      %s180 = sphi 0, %s179
      %s196 = sphi 0, %s180
    $region4: #{dense2d_block_forward.3} parent=1 // loop_header_branch
      %17 = sbr.rel (%p15) target = $region8
    $region5: #{dense2d_block_forward.3} parent=1 // loop_body
      %s19 = ssub.s32 %s14, 1
      %s20 = ssub.s32 %s14, 2
      %s21 = sadd.s32 %s14, 1
      %s22 = ssub.s32 %s14, %s21
      %p23 = scmp.eq.s32.totalorder %s22, 0
      %s25 = sadd.s32 %s24, 1
      %s26 = scalar_select %p23, %s24, %s25
      %p29 = pneg %p23
      %p30 = scmp.eq.s32.totalorder %s14, 1
      %p31 = por %p29, %p30
      %p32 = scmp.ne.s32.totalorder %s24, %s27
      %p33 = scmp.eq.s32.totalorder %s14, 0
      %p34 = por %p32, %p33
      %p35 = scmp.ne.s32.totalorder %s24, %s27
      %p36 = scmp.eq.s32.totalorder %s19, 1
      %p37 = por %p35, %p36
      %p38 = scmp.ne.s32.totalorder %s27, %s28
      %p39 = scmp.eq.s32.totalorder %s19, 0
      %p40 = por %p38, %p39
      %p41 = scmp.ne.s32.totalorder %s27, %s28
      %p42 = scmp.eq.s32.totalorder %s20, 1
      %p43 = por %p41, %p42
      %p45 = scmp.ne.s32.totalorder %s28, %s44
      %p46 = scmp.eq.s32.totalorder %s20, 0
      %p47 = por %p45, %p46
      %s49 = sadd.s32 %s48, 1
      %p52 = scmp.eq.s32.totalorder %s14, 1
      %p53 = scmp.ne.s32.totalorder %s48, %s50
      %p54 = scmp.eq.s32.totalorder %s14, 0
      %p55 = por %p53, %p54
      %p56 = scmp.ne.s32.totalorder %s48, %s50
      %p57 = scmp.eq.s32.totalorder %s19, 1
      %p58 = por %p56, %p57
      %p59 = scmp.ne.s32.totalorder %s50, %s51
      %p60 = scmp.eq.s32.totalorder %s19, 0
      %p61 = por %p59, %p60
      %p62 = scmp.ne.s32.totalorder %s50, %s51
      %p63 = scmp.eq.s32.totalorder %s20, 1
      %p64 = por %p62, %p63
      %p66 = scmp.ne.s32.totalorder %s51, %s65
      %p67 = scmp.eq.s32.totalorder %s20, 0
      %p68 = por %p66, %p67
      %s70 = sadd.s32 %s69, 1
      %p73 = scmp.eq.s32.totalorder %s14, 1
      %p74 = scmp.ne.s32.totalorder %s69, %s71
      %p75 = scmp.eq.s32.totalorder %s14, 0
      %p76 = por %p74, %p75
      %p77 = scmp.ne.s32.totalorder %s69, %s71
      %p78 = scmp.eq.s32.totalorder %s19, 1
      %p79 = por %p77, %p78
      %p80 = scmp.ne.s32.totalorder %s71, %s72
      %p81 = scmp.eq.s32.totalorder %s19, 0
      %p82 = por %p80, %p81
      %p83 = scmp.ne.s32.totalorder %s71, %s72
      %p84 = scmp.eq.s32.totalorder %s20, 1
      %p85 = por %p83, %p84
      %p87 = scmp.ne.s32.totalorder %s72, %s86
      %p88 = scmp.eq.s32.totalorder %s20, 0
      %p89 = por %p87, %p88
      %s91 = sadd.s32 %s90, 1
      %p94 = scmp.eq.s32.totalorder %s14, 1
      %p95 = scmp.ne.s32.totalorder %s90, %s92
      %p96 = scmp.eq.s32.totalorder %s14, 0
      %p97 = por %p95, %p96
      %p98 = scmp.ne.s32.totalorder %s90, %s92
      %p99 = scmp.eq.s32.totalorder %s19, 1
      %p100 = por %p98, %p99
      %p101 = scmp.ne.s32.totalorder %s92, %s93
      %p102 = scmp.eq.s32.totalorder %s19, 0
      %p103 = por %p101, %p102
      %p104 = scmp.ne.s32.totalorder %s92, %s93
      %p105 = scmp.eq.s32.totalorder %s20, 1
      %p106 = por %p104, %p105
      %p108 = scmp.ne.s32.totalorder %s93, %s107
      %p109 = scmp.eq.s32.totalorder %s20, 0
      %p110 = por %p108, %p109
      %s112 = sadd.s32 %s111, 1
      %p115 = scmp.eq.s32.totalorder %s14, 1
      %p116 = scmp.ne.s32.totalorder %s111, %s113
      %p117 = scmp.eq.s32.totalorder %s14, 0
      %p118 = por %p116, %p117
      %p119 = scmp.ne.s32.totalorder %s111, %s113
      %p120 = scmp.eq.s32.totalorder %s19, 1
      %p121 = por %p119, %p120
      %p122 = scmp.ne.s32.totalorder %s113, %s114
      %p123 = scmp.eq.s32.totalorder %s19, 0
      %p124 = por %p122, %p123
      %p125 = scmp.ne.s32.totalorder %s113, %s114
      %p126 = scmp.eq.s32.totalorder %s20, 1
      %p127 = por %p125, %p126
      %p129 = scmp.ne.s32.totalorder %s114, %s128
      %p130 = scmp.eq.s32.totalorder %s20, 0
      %p131 = por %p129, %p130
      %s133 = sadd.s32 %s132, 1
      %p136 = scmp.eq.s32.totalorder %s14, 1
      %p137 = scmp.ne.s32.totalorder %s132, %s134
      %p138 = scmp.eq.s32.totalorder %s14, 0
      %p139 = por %p137, %p138
      %p140 = scmp.ne.s32.totalorder %s132, %s134
      %p141 = scmp.eq.s32.totalorder %s19, 1
      %p142 = por %p140, %p141
      %p143 = scmp.ne.s32.totalorder %s134, %s135
      %p144 = scmp.eq.s32.totalorder %s19, 0
      %p145 = por %p143, %p144
      %p146 = scmp.ne.s32.totalorder %s134, %s135
      %p147 = scmp.eq.s32.totalorder %s20, 1
      %p148 = por %p146, %p147
      %p150 = scmp.ne.s32.totalorder %s135, %s149
      %p151 = scmp.eq.s32.totalorder %s20, 0
      %p152 = por %p150, %p151
      %s154 = sadd.s32 %s153, 1
      %p157 = scmp.eq.s32.totalorder %s14, 1
      %p158 = scmp.ne.s32.totalorder %s153, %s155
      %p159 = scmp.eq.s32.totalorder %s14, 0
      %p160 = por %p158, %p159
      %p161 = scmp.ne.s32.totalorder %s153, %s155
      %p162 = scmp.eq.s32.totalorder %s19, 1
      %p163 = por %p161, %p162
      %p164 = scmp.ne.s32.totalorder %s155, %s156
      %p165 = scmp.eq.s32.totalorder %s19, 0
      %p166 = por %p164, %p165
      %p167 = scmp.ne.s32.totalorder %s155, %s156
      %p168 = scmp.eq.s32.totalorder %s20, 1
      %p169 = por %p167, %p168
      %p171 = scmp.ne.s32.totalorder %s156, %s170
      %p172 = scmp.eq.s32.totalorder %s20, 0
      %p173 = por %p171, %p172
      %s174 = ssub.s32 %s14, %s21
      %p175 = scmp.eq.s32.totalorder %s174, 0
      %s177 = sadd.s32 %s176, 1
      %s178 = scalar_select %p175, %s176, %s177
      %p181 = pneg %p175
      %p182 = scmp.eq.s32.totalorder %s14, 1
      %p183 = por %p181, %p182
      %p184 = scmp.ne.s32.totalorder %s176, %s179
      %p185 = scmp.eq.s32.totalorder %s14, 0
      %p186 = por %p184, %p185
      %p187 = scmp.ne.s32.totalorder %s176, %s179
      %p188 = scmp.eq.s32.totalorder %s19, 1
      %p189 = por %p187, %p188
      %p190 = scmp.ne.s32.totalorder %s179, %s180
      %p191 = scmp.eq.s32.totalorder %s19, 0
      %p192 = por %p190, %p191
      %p193 = scmp.ne.s32.totalorder %s179, %s180
      %p194 = scmp.eq.s32.totalorder %s20, 1
      %p195 = por %p193, %p194
      %p197 = scmp.ne.s32.totalorder %s180, %s196
      %p198 = scmp.eq.s32.totalorder %s20, 0
      %p199 = por %p197, %p198
      %p200 = scmp.le.s32.totalorder 1, %s14
      %p201 = scmp.lt.s32.totalorder %s14, 3
      %p202 = pnand %p200, %p201
      %p203 = pneg %p202
      // Predicated region
      $region9: #{dense2d_block_forward.3} parent=5 // pred_check
        _
      $region10: #{dense2d_block_forward.3} parent=5 // pred_check_branch
        %205 = sbr.rel (%p202) target = $region12
      $region11: #{dense2d_block_forward.3} parent=5 // pred_region
        %s206 = ssub.s32 %s14, 1
        // Predicated region
        $region13: #{dense2d_block_forward.3} parent=11 // pred_check
          %p207 = pneg %p61
        $region14: #{dense2d_block_forward.3} parent=11 // pred_check_branch
          %209 = sbr.rel (%p207) target = $region16
        $region15: #{dense2d_block_forward.3} parent=11 // pred_region
          _
        $region16: #{dense2d_block_forward.3} parent=11 // pred_fallthru
          _
        // Predicated region
        $region17: #{dense2d_block_forward.3} parent=11 // pred_check
          %p210 = pneg %p82
        $region18: #{dense2d_block_forward.3} parent=11 // pred_check_branch
          %212 = sbr.rel (%p210) target = $region20
        $region19: #{dense2d_block_forward.3} parent=11 // pred_region
          _
        $region20: #{dense2d_block_forward.3} parent=11 // pred_fallthru
          _
        // Predicated region
        $region21: #{dense2d_block_forward.3} parent=11 // pred_check
          %p213 = pneg %p103
        $region22: #{dense2d_block_forward.3} parent=11 // pred_check_branch
          %215 = sbr.rel (%p213) target = $region24
        $region23: #{dense2d_block_forward.3} parent=11 // pred_region
          _
        $region24: #{dense2d_block_forward.3} parent=11 // pred_fallthru
          _
        // Predicated region
        $region25: #{dense2d_block_forward.3} parent=11 // pred_check
          %p216 = pneg %p124
        $region26: #{dense2d_block_forward.3} parent=11 // pred_check_branch
          %218 = sbr.rel (%p216) target = $region28
        $region27: #{dense2d_block_forward.3} parent=11 // pred_region
          _
        $region28: #{dense2d_block_forward.3} parent=11 // pred_fallthru
          _
        // Predicated region
        $region29: #{dense2d_block_forward.3} parent=11 // pred_check
          %p219 = pneg %p145
        $region30: #{dense2d_block_forward.3} parent=11 // pred_check_branch
          %221 = sbr.rel (%p219) target = $region32
        $region31: #{dense2d_block_forward.3} parent=11 // pred_region
          _
        $region32: #{dense2d_block_forward.3} parent=11 // pred_fallthru
          _
        // Predicated region
        $region33: #{dense2d_block_forward.3} parent=11 // pred_check
          %p222 = pneg %p166
        $region34: #{dense2d_block_forward.3} parent=11 // pred_check_branch
          %224 = sbr.rel (%p222) target = $region36
        $region35: #{dense2d_block_forward.3} parent=11 // pred_region
          %226 = vsyncadd [#allocation4], 0
          %s227 = sshll.u32 %s6, 4
          %s228 = int_to_ptr.hbm [resolvable:$true] %s227
          %s229 = sshll.u32 [#allocation3], 4
          %s230 = int_to_ptr.vmem [resolvable:$true] %s229
          %235 = dma.hbm_to_vmem [thread:$0]  %s228, 9216, %s230, [#allocation4], 64, 64, 4
        $region36: #{dense2d_block_forward.3} parent=11 // pred_fallthru
          _
      $region12: #{dense2d_block_forward.3} parent=5 // pred_fallthru
        _
      %p236 = scmp.lt.s32.totalorder %s14, 2
      // Predicated region
      $region37: #{dense2d_block_forward.3} parent=5 // pred_check
        %p237 = pneg %p236
      $region38: #{dense2d_block_forward.3} parent=5 // pred_check_branch
        %239 = sbr.rel (%p237) target = $region40
      $region39: #{dense2d_block_forward.3} parent=5 // pred_region
        // Predicated region
        $region41: #{dense2d_block_forward.3} parent=39 // pred_check
          %p240 = pneg %p34
        $region42: #{dense2d_block_forward.3} parent=39 // pred_check_branch
          %242 = sbr.rel (%p240) target = $region44
        $region43: #{dense2d_block_forward.3} parent=39 // pred_region
          %p243 = scmp.lt.s32.totalorder %s14, 1
          %s244 = scalar_select %p243, %s14, 1
          %s245 = smul.addr %s244, 32
          %s246 = smul.addr %s245, 4
          %s247 = scalar_lea.vmem %s0, %s246
        $region44: #{dense2d_block_forward.3} parent=39 // pred_fallthru
          _
      $region40: #{dense2d_block_forward.3} parent=5 // pred_fallthru
        _
      %p248 = scmp.le.s32.totalorder 1, %s14
      %p249 = scmp.lt.s32.totalorder %s14, 3
      %p250 = pnand %p248, %p249
      %p251 = pneg %p250
      // Predicated region
      $region45: #{dense2d_block_forward.3} parent=5 // pred_check
        _
      $region46: #{dense2d_block_forward.3} parent=5 // pred_check_branch
        %253 = sbr.rel (%p250) target = $region48
      $region47: #{dense2d_block_forward.3} parent=5 // pred_region
        %s254 = ssub.s32 %s14, 1
        // Predicated region
        $region49: #{dense2d_block_forward.3} parent=47 // pred_check
          %p255 = pneg %p166
        $region50: #{dense2d_block_forward.3} parent=47 // pred_check_branch
          %257 = sbr.rel (%p255) target = $region52
        $region51: #{dense2d_block_forward.3} parent=47 // pred_region
          %259 = dma.done [#allocation4], 9216
        $region52: #{dense2d_block_forward.3} parent=47 // pred_fallthru
          _
        %p260 = scmp.lt.s32.totalorder %s19, 1
        %s261 = scalar_select %p260, %s19, 1
        %s262 = smul.addr %s261, 32
        %s263 = smul.addr %s262, 4
        %s264 = scalar_lea.vmem %s0, %s263
        %p265 = pneg %p40
        %p266 = pneg %p37
        %p267 = pneg %p61
        %p268 = pneg %p58
        %p269 = pneg %p82
        %p270 = pneg %p79
        %p271 = pneg %p103
        %p272 = pneg %p100
        %p273 = pneg %p124
        %p274 = pneg %p121
        %p275 = pneg %p145
        %p276 = pneg %p142
        %p277 = pneg %p166
        %p278 = pneg %p163
        %p279 = pneg %p192
        %p280 = pneg %p189
        %p281 = scmp.lt.s32.totalorder %s19, 1
        %s282 = scalar_select %p281, %s19, 1
        %s283 = smul.addr %s282, 32
        %s284 = smul.addr %s283, 4
        %s285 = scalar_lea.vmem %s7, %s284
        %p286 = scmp.lt.s32.totalorder %s19, 1
        %s287 = scalar_select %p286, %s19, 1
        %s288 = smul.addr %s287, 32
        %s289 = smul.addr %s288, 4
        %s290 = scalar_lea.vmem %s0, %s289
        %p291 = scmp.lt.s32.totalorder %s19, 1
        %s292 = scalar_select %p291, %s19, 1
        %s293 = smul.addr %s292, 32
        %s294 = smul.addr %s293, 4
        %s295 = scalar_lea.vmem %s7, %s294
        %v297 = vld [vmem:[%s290] sm:$0xf]
        %v298 = vld [vmem:[%s290 + $0x4] sm:$0xf]
        %v299 = vld [vmem:[%s290 + $0x8] sm:$0xf]
        %v300 = vld [vmem:[%s290 + $0xc] sm:$0xf]
        %v301 = vld [vmem:[%s290 + $0x10] sm:$0xf]
        %v302 = vld [vmem:[%s290 + $0x14] sm:$0xf]
        %v303 = vld [vmem:[%s290 + $0x18] sm:$0xf]
        %v304 = vld [vmem:[%s290 + $0x1c] sm:$0xf]
        %v305 = vld [vmem:[%s290 + $0x20] sm:$0xf]
        %v306 = vld [vmem:[%s290 + $0x24] sm:$0xf]
        %v307 = vld [vmem:[%s290 + $0x28] sm:$0xf]
        %v308 = vld [vmem:[%s290 + $0x2c] sm:$0xf]
        %v309 = vld [vmem:[%s290 + $0x30] sm:$0xf]
        %v310 = vld [vmem:[%s290 + $0x34] sm:$0xf]
        %v311 = vld [vmem:[%s290 + $0x38] sm:$0xf]
        %v312 = vld [vmem:[%s290 + $0x3c] sm:$0xf]
        %v313 = vld [vmem:[%s290 + $0x40] sm:$0xf]
        %v314 = vld [vmem:[%s290 + $0x44] sm:$0xf]
        %v315 = vld [vmem:[%s290 + $0x48] sm:$0xf]
        %v316 = vld [vmem:[%s290 + $0x4c] sm:$0xf]
        %v317 = vld [vmem:[%s290 + $0x50] sm:$0xf]
        %v318 = vld [vmem:[%s290 + $0x54] sm:$0xf]
        %v319 = vld [vmem:[%s290 + $0x58] sm:$0xf]
        %v320 = vld [vmem:[%s290 + $0x5c] sm:$0xf]
        %v321 = vld [vmem:[%s290 + $0x60] sm:$0xf]
        %v322 = vld [vmem:[%s290 + $0x64] sm:$0xf]
        %v323 = vld [vmem:[%s290 + $0x68] sm:$0xf]
        %v324 = vld [vmem:[%s290 + $0x6c] sm:$0xf]
        %v325 = vld [vmem:[%s290 + $0x70] sm:$0xf]
        %v326 = vld [vmem:[%s290 + $0x74] sm:$0xf]
        %v327 = vld [vmem:[%s290 + $0x78] sm:$0xf]
        %v328 = vld [vmem:[%s290 + $0x7c] sm:$0xf]
        %v329 = vunpack.c.l.bf16 %v297
        %v330 = vunpack.c.l.bf16 %v298
        %v331 = vunpack.c.l.bf16 %v299
        %v332 = vunpack.c.l.bf16 %v300
        %v333 = vunpack.c.l.bf16 %v301
        %v334 = vunpack.c.l.bf16 %v302
        %v335 = vunpack.c.l.bf16 %v303
        %v336 = vunpack.c.l.bf16 %v304
        %v337 = vunpack.c.l.bf16 %v305
        %v338 = vunpack.c.l.bf16 %v306
        %v339 = vunpack.c.l.bf16 %v307
        %v340 = vunpack.c.l.bf16 %v308
        %v341 = vunpack.c.l.bf16 %v309
        %v342 = vunpack.c.l.bf16 %v310
        %v343 = vunpack.c.l.bf16 %v311
        %v344 = vunpack.c.l.bf16 %v312
        %v345 = vunpack.c.l.bf16 %v313
        %v346 = vunpack.c.l.bf16 %v314
        %v347 = vunpack.c.l.bf16 %v315
        %v348 = vunpack.c.l.bf16 %v316
        %v349 = vunpack.c.l.bf16 %v317
        %v350 = vunpack.c.l.bf16 %v318
        %v351 = vunpack.c.l.bf16 %v319
        %v352 = vunpack.c.l.bf16 %v320
        %v353 = vunpack.c.l.bf16 %v321
        %v354 = vunpack.c.l.bf16 %v322
        %v355 = vunpack.c.l.bf16 %v323
        %v356 = vunpack.c.l.bf16 %v324
        %v357 = vunpack.c.l.bf16 %v325
        %v358 = vunpack.c.l.bf16 %v326
        %v359 = vunpack.c.l.bf16 %v327
        %v360 = vunpack.c.l.bf16 %v328
        %v361 = vld [vmem:[%s1] sm:$0x1]
        %v363 = vperm.slane %v361, 0
        %v365 = vmul.f32 %v329, %v363
        %v366 = vmul.f32 %v330, %v363
        %v367 = vmul.f32 %v331, %v363
        %v368 = vmul.f32 %v332, %v363
        %v369 = vmul.f32 %v333, %v363
        %v370 = vmul.f32 %v334, %v363
        %v371 = vmul.f32 %v335, %v363
        %v372 = vmul.f32 %v336, %v363
        %v373 = vmul.f32 %v337, %v363
        %v374 = vmul.f32 %v338, %v363
        %v375 = vmul.f32 %v339, %v363
        %v376 = vmul.f32 %v340, %v363
        %v377 = vmul.f32 %v341, %v363
        %v378 = vmul.f32 %v342, %v363
        %v379 = vmul.f32 %v343, %v363
        %v380 = vmul.f32 %v344, %v363
        %v381 = vmul.f32 %v345, %v363
        %v382 = vmul.f32 %v346, %v363
        %v383 = vmul.f32 %v347, %v363
        %v384 = vmul.f32 %v348, %v363
        %v385 = vmul.f32 %v349, %v363
        %v386 = vmul.f32 %v350, %v363
        %v387 = vmul.f32 %v351, %v363
        %v388 = vmul.f32 %v352, %v363
        %v389 = vmul.f32 %v353, %v363
        %v390 = vmul.f32 %v354, %v363
        %v391 = vmul.f32 %v355, %v363
        %v392 = vmul.f32 %v356, %v363
        %v393 = vmul.f32 %v357, %v363
        %v394 = vmul.f32 %v358, %v363
        %v395 = vmul.f32 %v359, %v363
        %v396 = vmul.f32 %v360, %v363
        %v397 = vld [vmem:[%s2] sm:$0x1]
        %v399 = vperm.slane %v397, 0
        %v401 = vadd.f32 %v365, %v399
        %v402 = vadd.f32 %v366, %v399
        %v403 = vadd.f32 %v367, %v399
        %v404 = vadd.f32 %v368, %v399
        %v405 = vadd.f32 %v369, %v399
        %v406 = vadd.f32 %v370, %v399
        %v407 = vadd.f32 %v371, %v399
        %v408 = vadd.f32 %v372, %v399
        %v409 = vadd.f32 %v373, %v399
        %v410 = vadd.f32 %v374, %v399
        %v411 = vadd.f32 %v375, %v399
        %v412 = vadd.f32 %v376, %v399
        %v413 = vadd.f32 %v377, %v399
        %v414 = vadd.f32 %v378, %v399
        %v415 = vadd.f32 %v379, %v399
        %v416 = vadd.f32 %v380, %v399
        %v417 = vadd.f32 %v381, %v399
        %v418 = vadd.f32 %v382, %v399
        %v419 = vadd.f32 %v383, %v399
        %v420 = vadd.f32 %v384, %v399
        %v421 = vadd.f32 %v385, %v399
        %v422 = vadd.f32 %v386, %v399
        %v423 = vadd.f32 %v387, %v399
        %v424 = vadd.f32 %v388, %v399
        %v425 = vadd.f32 %v389, %v399
        %v426 = vadd.f32 %v390, %v399
        %v427 = vadd.f32 %v391, %v399
        %v428 = vadd.f32 %v392, %v399
        %v429 = vadd.f32 %v393, %v399
        %v430 = vadd.f32 %v394, %v399
        %v431 = vadd.f32 %v395, %v399
        %v432 = vadd.f32 %v396, %v399
        %v433 = vmax.f32 %v401, 0.0
        %v434 = vmax.f32 %v402, 0.0
        %v435 = vmax.f32 %v403, 0.0
        %v436 = vmax.f32 %v404, 0.0
        %v437 = vmax.f32 %v405, 0.0
        %v438 = vmax.f32 %v406, 0.0
        %v439 = vmax.f32 %v407, 0.0
        %v440 = vmax.f32 %v408, 0.0
        %v441 = vmax.f32 %v409, 0.0
        %v442 = vmax.f32 %v410, 0.0
        %v443 = vmax.f32 %v411, 0.0
        %v444 = vmax.f32 %v412, 0.0
        %v445 = vmax.f32 %v413, 0.0
        %v446 = vmax.f32 %v414, 0.0
        %v447 = vmax.f32 %v415, 0.0
        %v448 = vmax.f32 %v416, 0.0
        %v449 = vmax.f32 %v417, 0.0
        %v450 = vmax.f32 %v418, 0.0
        %v451 = vmax.f32 %v419, 0.0
        %v452 = vmax.f32 %v420, 0.0
        %v453 = vmax.f32 %v421, 0.0
        %v454 = vmax.f32 %v422, 0.0
        %v455 = vmax.f32 %v423, 0.0
        %v456 = vmax.f32 %v424, 0.0
        %v457 = vmax.f32 %v425, 0.0
        %v458 = vmax.f32 %v426, 0.0
        %v459 = vmax.f32 %v427, 0.0
        %v460 = vmax.f32 %v428, 0.0
        %v461 = vmax.f32 %v429, 0.0
        %v462 = vmax.f32 %v430, 0.0
        %v463 = vmax.f32 %v431, 0.0
        %v464 = vmax.f32 %v432, 0.0
        %v465 = vpack.c.bf16 %v434, %v433
        %v466 = vpack.c.bf16 %v436, %v435
        %v467 = vpack.c.bf16 %v438, %v437
        %v468 = vpack.c.bf16 %v440, %v439
        %v469 = vpack.c.bf16 %v442, %v441
        %v470 = vpack.c.bf16 %v444, %v443
        %v471 = vpack.c.bf16 %v446, %v445
        %v472 = vpack.c.bf16 %v448, %v447
        %v473 = vpack.c.bf16 %v450, %v449
        %v474 = vpack.c.bf16 %v452, %v451
        %v475 = vpack.c.bf16 %v454, %v453
        %v476 = vpack.c.bf16 %v456, %v455
        %v477 = vpack.c.bf16 %v458, %v457
        %v478 = vpack.c.bf16 %v460, %v459
        %v479 = vpack.c.bf16 %v462, %v461
        %v480 = vpack.c.bf16 %v464, %v463
        %v481 = vld [vmem:[%s3] sm:$0xf]
        %v482 = vld [vmem:[%s3 + $0x4] sm:$0xf]
        %v483 = vld [vmem:[%s3 + $0x8] sm:$0xf]
        %v484 = vld [vmem:[%s3 + $0xc] sm:$0xf]
        %v485 = vld [vmem:[%s3 + $0x10] sm:$0xf]
        %v486 = vld [vmem:[%s3 + $0x14] sm:$0xf]
        %v487 = vld [vmem:[%s3 + $0x18] sm:$0xf]
        %v488 = vld [vmem:[%s3 + $0x1c] sm:$0xf]
        %v489 = vld [vmem:[%s3 + $0x20] sm:$0xf]
        %v490 = vld [vmem:[%s3 + $0x24] sm:$0xf]
        %v491 = vld [vmem:[%s3 + $0x28] sm:$0xf]
        %v492 = vld [vmem:[%s3 + $0x2c] sm:$0xf]
        %v493 = vld [vmem:[%s3 + $0x30] sm:$0xf]
        %v494 = vld [vmem:[%s3 + $0x34] sm:$0xf]
        %v495 = vld [vmem:[%s3 + $0x38] sm:$0xf]
        %v496 = vld [vmem:[%s3 + $0x3c] sm:$0xf]
        %v513 = vunpack.c.l.b16 %v481
        %v514 = vunpack.c.l.b16 %v482
        %v515 = vunpack.c.l.b16 %v483
        %v516 = vunpack.c.l.b16 %v484
        %v517 = vunpack.c.l.b16 %v485
        %v518 = vunpack.c.l.b16 %v486
        %v519 = vunpack.c.l.b16 %v487
        %v520 = vunpack.c.l.b16 %v488
        %v521 = vunpack.c.l.b16 %v489
        %v522 = vunpack.c.l.b16 %v490
        %v523 = vunpack.c.l.b16 %v491
        %v524 = vunpack.c.l.b16 %v492
        %v525 = vunpack.c.l.b16 %v493
        %v526 = vunpack.c.l.b16 %v494
        %v527 = vunpack.c.l.b16 %v495
        %v528 = vunpack.c.l.b16 %v496
        %v529 = vpack.c.b16 %v514, %v513
        %v530 = vpack.c.b16 %v516, %v515
        %v531 = vpack.c.b16 %v518, %v517
        %v532 = vpack.c.b16 %v520, %v519
        %v533 = vpack.c.b16 %v522, %v521
        %v534 = vpack.c.b16 %v524, %v523
        %v535 = vpack.c.b16 %v526, %v525
        %v536 = vpack.c.b16 %v528, %v527
        %545 = vmatpush.bf16.msra.mxu0 %v536
        %546 = vmatpush.bf16.msra.mxu0 %v535
        %547 = vmatpush.bf16.msra.mxu0 %v534
        %548 = vmatpush.bf16.msra.mxu0 %v533
        %549 = vmatpush.bf16.msra.mxu0 %v532
        %550 = vmatpush.bf16.msra.mxu0 %v531
        %551 = vmatpush.bf16.msra.mxu0 %v530
        %552 = vmatpush.bf16.msra.mxu0 %v529
        %553 = vmatmul.bf16.gmra.mxu0 %v465
        %v554 = vpop.f32.mrf.mxu0
        %v555 = vadd.f32 0.0, %v554
        %v556 = vpop.f32.mrf.mxu0
        %v557 = vadd.f32 0.0, %v556
        %558 = vmatmul.bf16.gmra.mxu0 %v466
        %v559 = vpop.f32.mrf.mxu0
        %v560 = vadd.f32 0.0, %v559
        %v561 = vpop.f32.mrf.mxu0
        %v562 = vadd.f32 0.0, %v561
        %563 = vmatmul.bf16.gmra.mxu0 %v467
        %v564 = vpop.f32.mrf.mxu0
        %v565 = vadd.f32 0.0, %v564
        %v566 = vpop.f32.mrf.mxu0
        %v567 = vadd.f32 0.0, %v566
        %568 = vmatmul.bf16.gmra.mxu0 %v468
        %v569 = vpop.f32.mrf.mxu0
        %v570 = vadd.f32 0.0, %v569
        %v571 = vpop.f32.mrf.mxu0
        %v572 = vadd.f32 0.0, %v571
        %573 = vmatmul.bf16.gmra.mxu0 %v469
        %v574 = vpop.f32.mrf.mxu0
        %v575 = vadd.f32 0.0, %v574
        %v576 = vpop.f32.mrf.mxu0
        %v577 = vadd.f32 0.0, %v576
        %578 = vmatmul.bf16.gmra.mxu0 %v470
        %v579 = vpop.f32.mrf.mxu0
        %v580 = vadd.f32 0.0, %v579
        %v581 = vpop.f32.mrf.mxu0
        %v582 = vadd.f32 0.0, %v581
        %583 = vmatmul.bf16.gmra.mxu0 %v471
        %v584 = vpop.f32.mrf.mxu0
        %v585 = vadd.f32 0.0, %v584
        %v586 = vpop.f32.mrf.mxu0
        %v587 = vadd.f32 0.0, %v586
        %588 = vmatmul.bf16.gmra.mxu0 %v472
        %v589 = vpop.f32.mrf.mxu0
        %v590 = vadd.f32 0.0, %v589
        %v591 = vpop.f32.mrf.mxu0
        %v592 = vadd.f32 0.0, %v591
        %593 = vmatmul.bf16.gmra.mxu0 %v473
        %v594 = vpop.f32.mrf.mxu0
        %v595 = vadd.f32 0.0, %v594
        %v596 = vpop.f32.mrf.mxu0
        %v597 = vadd.f32 0.0, %v596
        %598 = vmatmul.bf16.gmra.mxu0 %v474
        %v599 = vpop.f32.mrf.mxu0
        %v600 = vadd.f32 0.0, %v599
        %v601 = vpop.f32.mrf.mxu0
        %v602 = vadd.f32 0.0, %v601
        %603 = vmatmul.bf16.gmra.mxu0 %v475
        %v604 = vpop.f32.mrf.mxu0
        %v605 = vadd.f32 0.0, %v604
        %v606 = vpop.f32.mrf.mxu0
        %v607 = vadd.f32 0.0, %v606
        %608 = vmatmul.bf16.gmra.mxu0 %v476
        %v609 = vpop.f32.mrf.mxu0
        %v610 = vadd.f32 0.0, %v609
        %v611 = vpop.f32.mrf.mxu0
        %v612 = vadd.f32 0.0, %v611
        %613 = vmatmul.bf16.gmra.mxu0 %v477
        %v614 = vpop.f32.mrf.mxu0
        %v615 = vadd.f32 0.0, %v614
        %v616 = vpop.f32.mrf.mxu0
        %v617 = vadd.f32 0.0, %v616
        %618 = vmatmul.bf16.gmra.mxu0 %v478
        %v619 = vpop.f32.mrf.mxu0
        %v620 = vadd.f32 0.0, %v619
        %v621 = vpop.f32.mrf.mxu0
        %v622 = vadd.f32 0.0, %v621
        %623 = vmatmul.bf16.gmra.mxu0 %v479
        %v624 = vpop.f32.mrf.mxu0
        %v625 = vadd.f32 0.0, %v624
        %v626 = vpop.f32.mrf.mxu0
        %v627 = vadd.f32 0.0, %v626
        %628 = vmatmul.bf16.gmra.mxu0 %v480
        %v629 = vpop.f32.mrf.mxu0
        %v630 = vadd.f32 0.0, %v629
        %v631 = vpop.f32.mrf.mxu0
        %v632 = vadd.f32 0.0, %v631
        %633 = vdwg.mxu0
        %v634 = vld [vmem:[%s4] sm:$0x1]
        %v636 = vperm.slane %v634, 0
        %v638 = vmul.f32 %v555, %v636
        %v639 = vmul.f32 %v557, %v636
        %v640 = vmul.f32 %v560, %v636
        %v641 = vmul.f32 %v562, %v636
        %v642 = vmul.f32 %v565, %v636
        %v643 = vmul.f32 %v567, %v636
        %v644 = vmul.f32 %v570, %v636
        %v645 = vmul.f32 %v572, %v636
        %v646 = vmul.f32 %v575, %v636
        %v647 = vmul.f32 %v577, %v636
        %v648 = vmul.f32 %v580, %v636
        %v649 = vmul.f32 %v582, %v636
        %v650 = vmul.f32 %v585, %v636
        %v651 = vmul.f32 %v587, %v636
        %v652 = vmul.f32 %v590, %v636
        %v653 = vmul.f32 %v592, %v636
        %v654 = vmul.f32 %v595, %v636
        %v655 = vmul.f32 %v597, %v636
        %v656 = vmul.f32 %v600, %v636
        %v657 = vmul.f32 %v602, %v636
        %v658 = vmul.f32 %v605, %v636
        %v659 = vmul.f32 %v607, %v636
        %v660 = vmul.f32 %v610, %v636
        %v661 = vmul.f32 %v612, %v636
        %v662 = vmul.f32 %v615, %v636
        %v663 = vmul.f32 %v617, %v636
        %v664 = vmul.f32 %v620, %v636
        %v665 = vmul.f32 %v622, %v636
        %v666 = vmul.f32 %v625, %v636
        %v667 = vmul.f32 %v627, %v636
        %v668 = vmul.f32 %v630, %v636
        %v669 = vmul.f32 %v632, %v636
        %v670 = vld [vmem:[%s5] sm:$0x1]
        %v672 = vperm.slane %v670, 0
        %v674 = vadd.f32 %v638, %v672
        %v675 = vadd.f32 %v639, %v672
        %v676 = vadd.f32 %v640, %v672
        %v677 = vadd.f32 %v641, %v672
        %v678 = vadd.f32 %v642, %v672
        %v679 = vadd.f32 %v643, %v672
        %v680 = vadd.f32 %v644, %v672
        %v681 = vadd.f32 %v645, %v672
        %v682 = vadd.f32 %v646, %v672
        %v683 = vadd.f32 %v647, %v672
        %v684 = vadd.f32 %v648, %v672
        %v685 = vadd.f32 %v649, %v672
        %v686 = vadd.f32 %v650, %v672
        %v687 = vadd.f32 %v651, %v672
        %v688 = vadd.f32 %v652, %v672
        %v689 = vadd.f32 %v653, %v672
        %v690 = vadd.f32 %v654, %v672
        %v691 = vadd.f32 %v655, %v672
        %v692 = vadd.f32 %v656, %v672
        %v693 = vadd.f32 %v657, %v672
        %v694 = vadd.f32 %v658, %v672
        %v695 = vadd.f32 %v659, %v672
        %v696 = vadd.f32 %v660, %v672
        %v697 = vadd.f32 %v661, %v672
        %v698 = vadd.f32 %v662, %v672
        %v699 = vadd.f32 %v663, %v672
        %v700 = vadd.f32 %v664, %v672
        %v701 = vadd.f32 %v665, %v672
        %v702 = vadd.f32 %v666, %v672
        %v703 = vadd.f32 %v667, %v672
        %v704 = vadd.f32 %v668, %v672
        %v705 = vadd.f32 %v669, %v672
        %v706 = vmax.f32 %v674, 0.0
        %v707 = vmax.f32 %v675, 0.0
        %v708 = vmax.f32 %v676, 0.0
        %v709 = vmax.f32 %v677, 0.0
        %v710 = vmax.f32 %v678, 0.0
        %v711 = vmax.f32 %v679, 0.0
        %v712 = vmax.f32 %v680, 0.0
        %v713 = vmax.f32 %v681, 0.0
        %v714 = vmax.f32 %v682, 0.0
        %v715 = vmax.f32 %v683, 0.0
        %v716 = vmax.f32 %v684, 0.0
        %v717 = vmax.f32 %v685, 0.0
        %v718 = vmax.f32 %v686, 0.0
        %v719 = vmax.f32 %v687, 0.0
        %v720 = vmax.f32 %v688, 0.0
        %v721 = vmax.f32 %v689, 0.0
        %v722 = vmax.f32 %v690, 0.0
        %v723 = vmax.f32 %v691, 0.0
        %v724 = vmax.f32 %v692, 0.0
        %v725 = vmax.f32 %v693, 0.0
        %v726 = vmax.f32 %v694, 0.0
        %v727 = vmax.f32 %v695, 0.0
        %v728 = vmax.f32 %v696, 0.0
        %v729 = vmax.f32 %v697, 0.0
        %v730 = vmax.f32 %v698, 0.0
        %v731 = vmax.f32 %v699, 0.0
        %v732 = vmax.f32 %v700, 0.0
        %v733 = vmax.f32 %v701, 0.0
        %v734 = vmax.f32 %v702, 0.0
        %v735 = vmax.f32 %v703, 0.0
        %v736 = vmax.f32 %v704, 0.0
        %v737 = vmax.f32 %v705, 0.0
        %v738 = vpack.c.bf16 %v706, %v706
        %v739 = vpack.c.bf16 %v707, %v707
        %v740 = vpack.c.bf16 %v708, %v708
        %v741 = vpack.c.bf16 %v709, %v709
        %v742 = vpack.c.bf16 %v710, %v710
        %v743 = vpack.c.bf16 %v711, %v711
        %v744 = vpack.c.bf16 %v712, %v712
        %v745 = vpack.c.bf16 %v713, %v713
        %v746 = vpack.c.bf16 %v714, %v714
        %v747 = vpack.c.bf16 %v715, %v715
        %v748 = vpack.c.bf16 %v716, %v716
        %v749 = vpack.c.bf16 %v717, %v717
        %v750 = vpack.c.bf16 %v718, %v718
        %v751 = vpack.c.bf16 %v719, %v719
        %v752 = vpack.c.bf16 %v720, %v720
        %v753 = vpack.c.bf16 %v721, %v721
        %v754 = vpack.c.bf16 %v722, %v722
        %v755 = vpack.c.bf16 %v723, %v723
        %v756 = vpack.c.bf16 %v724, %v724
        %v757 = vpack.c.bf16 %v725, %v725
        %v758 = vpack.c.bf16 %v726, %v726
        %v759 = vpack.c.bf16 %v727, %v727
        %v760 = vpack.c.bf16 %v728, %v728
        %v761 = vpack.c.bf16 %v729, %v729
        %v762 = vpack.c.bf16 %v730, %v730
        %v763 = vpack.c.bf16 %v731, %v731
        %v764 = vpack.c.bf16 %v732, %v732
        %v765 = vpack.c.bf16 %v733, %v733
        %v766 = vpack.c.bf16 %v734, %v734
        %v767 = vpack.c.bf16 %v735, %v735
        %v768 = vpack.c.bf16 %v736, %v736
        %v769 = vpack.c.bf16 %v737, %v737
        %770 = vst [vmem:[#allocation2] sm:$0xf] 0
        %771 = vst [vmem:[#allocation2 + $0x4] sm:$0xf] 0
        %772 = vst [vmem:[#allocation2 + $0x8] sm:$0x1] 0
        %773 = vst [vmem:[#allocation2 + $0xc] sm:$0xf] 0
        %774 = vst [vmem:[#allocation2 + $0x10] sm:$0xf] 0
        %775 = vst [vmem:[#allocation2 + $0x14] sm:$0x1] 0
        %776 = vst [vmem:[#allocation2 + $0x18] sm:$0xf] 0
        %777 = vst [vmem:[#allocation2 + $0x1c] sm:$0xf] 0
        %778 = vst [vmem:[#allocation2 + $0x20] sm:$0x1] 0
        %779 = vst [vmem:[#allocation2 + $0x24] sm:$0xf] 0
        %780 = vst [vmem:[#allocation2 + $0x28] sm:$0xf] 0
        %781 = vst [vmem:[#allocation2 + $0x2c] sm:$0x1] 0
        %782 = vst [vmem:[#allocation2 + $0x30] sm:$0xf] 0
        %783 = vst [vmem:[#allocation2 + $0x34] sm:$0xf] 0
        %784 = vst [vmem:[#allocation2 + $0x38] sm:$0x1] 0
        %785 = vst [vmem:[#allocation2 + $0x3c] sm:$0xf] 0
        %786 = vst [vmem:[#allocation2 + $0x40] sm:$0xf] 0
        %787 = vst [vmem:[#allocation2 + $0x44] sm:$0x1] 0
        %788 = vst [vmem:[#allocation2 + $0x48] sm:$0xf] 0
        %789 = vst [vmem:[#allocation2 + $0x4c] sm:$0xf] 0
        %790 = vst [vmem:[#allocation2 + $0x50] sm:$0x1] 0
        %791 = vst [vmem:[#allocation2 + $0x54] sm:$0xf] 0
        %792 = vst [vmem:[#allocation2 + $0x58] sm:$0xf] 0
        %793 = vst [vmem:[#allocation2 + $0x5c] sm:$0x1] 0
        %794 = vst [vmem:[#allocation2 + $0x60] sm:$0xf] 0
        %795 = vst [vmem:[#allocation2 + $0x64] sm:$0xf] 0
        %796 = vst [vmem:[#allocation2 + $0x68] sm:$0x1] 0
        %797 = vst [vmem:[#allocation2 + $0x6c] sm:$0xf] 0
        %798 = vst [vmem:[#allocation2 + $0x70] sm:$0xf] 0
        %799 = vst [vmem:[#allocation2 + $0x74] sm:$0x1] 0
        %800 = vst [vmem:[#allocation2 + $0x78] sm:$0xf] 0
        %801 = vst [vmem:[#allocation2 + $0x7c] sm:$0xf] 0
        %802 = vst [vmem:[#allocation2 + $0x80] sm:$0x1] 0
        %803 = vst [vmem:[#allocation2 + $0x84] sm:$0xf] 0
        %804 = vst [vmem:[#allocation2 + $0x88] sm:$0xf] 0
        %805 = vst [vmem:[#allocation2 + $0x8c] sm:$0x1] 0
        %806 = vst [vmem:[#allocation2 + $0x90] sm:$0xf] 0
        %807 = vst [vmem:[#allocation2 + $0x94] sm:$0xf] 0
        %808 = vst [vmem:[#allocation2 + $0x98] sm:$0x1] 0
        %809 = vst [vmem:[#allocation2 + $0x9c] sm:$0xf] 0
        %810 = vst [vmem:[#allocation2 + $0xa0] sm:$0xf] 0
        %811 = vst [vmem:[#allocation2 + $0xa4] sm:$0x1] 0
        %812 = vst [vmem:[#allocation2 + $0xa8] sm:$0xf] 0
        %813 = vst [vmem:[#allocation2 + $0xac] sm:$0xf] 0
        %814 = vst [vmem:[#allocation2 + $0xb0] sm:$0x1] 0
        %815 = vst [vmem:[#allocation2 + $0xb4] sm:$0xf] 0
        %816 = vst [vmem:[#allocation2 + $0xb8] sm:$0xf] 0
        %817 = vst [vmem:[#allocation2 + $0xbc] sm:$0x1] 0
        %818 = vst [vmem:[#allocation2 + $0xc0] sm:$0xf] 0
        %819 = vst [vmem:[#allocation2 + $0xc4] sm:$0xf] 0
        %820 = vst [vmem:[#allocation2 + $0xc8] sm:$0x1] 0
        %821 = vst [vmem:[#allocation2 + $0xcc] sm:$0xf] 0
        %822 = vst [vmem:[#allocation2 + $0xd0] sm:$0xf] 0
        %823 = vst [vmem:[#allocation2 + $0xd4] sm:$0x1] 0
        %vm824 = vsmask.f32 256
        %vm825 = vsmask.f32 4368
        %vm826 = vmor %vm824, %vm825
        %v828 = vshrl.u32 %v738, 16
        %v830 = vrot.slane %v828, 7
        %v831 = vshll.u32 %v738, 16
        %v833 = vor.u32 %v830, %v831
        %v834 = vrot.slane %v830, 4
        %v836 = vshrl.u32 %v739, 16
        %v838 = vrot.slane %v836, 7
        %v839 = vshll.u32 %v739, 16
        %v841 = vor.u32 %v838, %v839
        %v842 = vsel %vm826, %v834, %v841
        %v843 = vrot.slane %v838, 4
        %v845 = vshrl.u32 %v740, 16
        %v847 = vrot.slane %v845, 7
        %v848 = vshll.u32 %v740, 16
        %v850 = vor.u32 %v847, %v848
        %v851 = vrot.slane %v847, 4
        %v853 = vshrl.u32 %v741, 16
        %v855 = vrot.slane %v853, 7
        %v856 = vshll.u32 %v741, 16
        %v858 = vor.u32 %v855, %v856
        %v859 = vsel %vm826, %v851, %v858
        %v860 = vrot.slane %v855, 4
        %v862 = vshrl.u32 %v742, 16
        %v864 = vrot.slane %v862, 7
        %v865 = vshll.u32 %v742, 16
        %v867 = vor.u32 %v864, %v865
        %v868 = vrot.slane %v864, 4
        %v870 = vshrl.u32 %v743, 16
        %v872 = vrot.slane %v870, 7
        %v873 = vshll.u32 %v743, 16
        %v875 = vor.u32 %v872, %v873
        %v876 = vsel %vm826, %v868, %v875
        %v877 = vrot.slane %v872, 4
        %v879 = vshrl.u32 %v744, 16
        %v881 = vrot.slane %v879, 7
        %v882 = vshll.u32 %v744, 16
        %v884 = vor.u32 %v881, %v882
        %v885 = vrot.slane %v881, 4
        %v887 = vshrl.u32 %v745, 16
        %v889 = vrot.slane %v887, 7
        %v890 = vshll.u32 %v745, 16
        %v892 = vor.u32 %v889, %v890
        %v893 = vsel %vm826, %v885, %v892
        %v894 = vrot.slane %v889, 4
        %v896 = vshrl.u32 %v746, 16
        %v898 = vrot.slane %v896, 7
        %v899 = vshll.u32 %v746, 16
        %v901 = vor.u32 %v898, %v899
        %v902 = vrot.slane %v898, 4
        %v904 = vshrl.u32 %v747, 16
        %v906 = vrot.slane %v904, 7
        %v907 = vshll.u32 %v747, 16
        %v909 = vor.u32 %v906, %v907
        %v910 = vsel %vm826, %v902, %v909
        %v911 = vrot.slane %v906, 4
        %v913 = vshrl.u32 %v748, 16
        %v915 = vrot.slane %v913, 7
        %v916 = vshll.u32 %v748, 16
        %v918 = vor.u32 %v915, %v916
        %v919 = vrot.slane %v915, 4
        %v921 = vshrl.u32 %v749, 16
        %v923 = vrot.slane %v921, 7
        %v924 = vshll.u32 %v749, 16
        %v926 = vor.u32 %v923, %v924
        %v927 = vsel %vm826, %v919, %v926
        %v928 = vrot.slane %v923, 4
        %v930 = vshrl.u32 %v750, 16
        %v932 = vrot.slane %v930, 7
        %v933 = vshll.u32 %v750, 16
        %v935 = vor.u32 %v932, %v933
        %v936 = vrot.slane %v932, 4
        %v938 = vshrl.u32 %v751, 16
        %v940 = vrot.slane %v938, 7
        %v941 = vshll.u32 %v751, 16
        %v943 = vor.u32 %v940, %v941
        %v944 = vsel %vm826, %v936, %v943
        %v945 = vrot.slane %v940, 4
        %v947 = vshrl.u32 %v752, 16
        %v949 = vrot.slane %v947, 7
        %v950 = vshll.u32 %v752, 16
        %v952 = vor.u32 %v949, %v950
        %v953 = vrot.slane %v949, 4
        %v955 = vshrl.u32 %v753, 16
        %v957 = vrot.slane %v955, 7
        %v958 = vshll.u32 %v753, 16
        %v960 = vor.u32 %v957, %v958
        %v961 = vsel %vm826, %v953, %v960
        %v962 = vrot.slane %v957, 4
        %v964 = vshrl.u32 %v754, 16
        %v966 = vrot.slane %v964, 7
        %v967 = vshll.u32 %v754, 16
        %v969 = vor.u32 %v966, %v967
        %v970 = vrot.slane %v966, 4
        %v972 = vshrl.u32 %v755, 16
        %v974 = vrot.slane %v972, 7
        %v975 = vshll.u32 %v755, 16
        %v977 = vor.u32 %v974, %v975
        %v978 = vsel %vm826, %v970, %v977
        %v979 = vrot.slane %v974, 4
        %v981 = vshrl.u32 %v756, 16
        %v983 = vrot.slane %v981, 7
        %v984 = vshll.u32 %v756, 16
        %v986 = vor.u32 %v983, %v984
        %v987 = vrot.slane %v983, 4
        %v989 = vshrl.u32 %v757, 16
        %v991 = vrot.slane %v989, 7
        %v992 = vshll.u32 %v757, 16
        %v994 = vor.u32 %v991, %v992
        %v995 = vsel %vm826, %v987, %v994
        %v996 = vrot.slane %v991, 4
        %v998 = vshrl.u32 %v758, 16
        %v1000 = vrot.slane %v998, 7
        %v1001 = vshll.u32 %v758, 16
        %v1003 = vor.u32 %v1000, %v1001
        %v1004 = vrot.slane %v1000, 4
        %v1006 = vshrl.u32 %v759, 16
        %v1008 = vrot.slane %v1006, 7
        %v1009 = vshll.u32 %v759, 16
        %v1011 = vor.u32 %v1008, %v1009
        %v1012 = vsel %vm826, %v1004, %v1011
        %v1013 = vrot.slane %v1008, 4
        %v1015 = vshrl.u32 %v760, 16
        %v1017 = vrot.slane %v1015, 7
        %v1018 = vshll.u32 %v760, 16
        %v1020 = vor.u32 %v1017, %v1018
        %v1021 = vrot.slane %v1017, 4
        %v1023 = vshrl.u32 %v761, 16
        %v1025 = vrot.slane %v1023, 7
        %v1026 = vshll.u32 %v761, 16
        %v1028 = vor.u32 %v1025, %v1026
        %v1029 = vsel %vm826, %v1021, %v1028
        %v1030 = vrot.slane %v1025, 4
        %v1032 = vshrl.u32 %v762, 16
        %v1034 = vrot.slane %v1032, 7
        %v1035 = vshll.u32 %v762, 16
        %v1037 = vor.u32 %v1034, %v1035
        %v1038 = vrot.slane %v1034, 4
        %v1040 = vshrl.u32 %v763, 16
        %v1042 = vrot.slane %v1040, 7
        %v1043 = vshll.u32 %v763, 16
        %v1045 = vor.u32 %v1042, %v1043
        %v1046 = vsel %vm826, %v1038, %v1045
        %v1047 = vrot.slane %v1042, 4
        %v1049 = vshrl.u32 %v764, 16
        %v1051 = vrot.slane %v1049, 7
        %v1052 = vshll.u32 %v764, 16
        %v1054 = vor.u32 %v1051, %v1052
        %v1055 = vrot.slane %v1051, 4
        %v1057 = vshrl.u32 %v765, 16
        %v1059 = vrot.slane %v1057, 7
        %v1060 = vshll.u32 %v765, 16
        %v1062 = vor.u32 %v1059, %v1060
        %v1063 = vsel %vm826, %v1055, %v1062
        %v1064 = vrot.slane %v1059, 4
        %v1066 = vshrl.u32 %v766, 16
        %v1068 = vrot.slane %v1066, 7
        %v1069 = vshll.u32 %v766, 16
        %v1071 = vor.u32 %v1068, %v1069
        %v1072 = vrot.slane %v1068, 4
        %v1074 = vshrl.u32 %v767, 16
        %v1076 = vrot.slane %v1074, 7
        %v1077 = vshll.u32 %v767, 16
        %v1079 = vor.u32 %v1076, %v1077
        %v1080 = vsel %vm826, %v1072, %v1079
        %v1081 = vrot.slane %v1076, 4
        %v1083 = vshrl.u32 %v768, 16
        %v1085 = vrot.slane %v1083, 7
        %v1086 = vshll.u32 %v768, 16
        %v1088 = vor.u32 %v1085, %v1086
        %v1089 = vrot.slane %v1085, 4
        %v1091 = vshrl.u32 %v769, 16
        %v1093 = vrot.slane %v1091, 7
        %v1094 = vshll.u32 %v769, 16
        %v1096 = vor.u32 %v1093, %v1094
        %v1097 = vsel %vm826, %v1089, %v1096
        %v1098 = vrot.slane %v1093, 4
        %s1147 = scalar_lea.vmem [#allocation2], 12
        %vm1148 = vcmask 1043456
        %vm1149 = vsmask.f32 7938
        %vm1150 = vmand %vm1148, %vm1149
        %v1151 = vld [vmem:[%s1147] sm:$0xf]
        %v1152 = vsel %vm1150, %v833, %v1151
        %1153 = vst [vmem:[%s1147] sm:$0xf] %v1152
        %1154 = vst [vmem:[%s1147 + $0x4] sm:$0xf] %v842
        %vm1155 = vcmask 1040384
        %vm1156 = vmand %vm1155, %vm824
        %v1157 = vld [vmem:[%s1147 + $0x8] sm:$0x1]
        %v1158 = vsel %vm1156, %v843, %v1157
        %1159 = vst [vmem:[%s1147 + $0x8] sm:$0x1] %v1158
        %v1160 = vld [vmem:[%s1147 + $0xc] sm:$0xf]
        %v1161 = vsel %vm1150, %v850, %v1160
        %1162 = vst [vmem:[%s1147 + $0xc] sm:$0xf] %v1161
        %1163 = vst [vmem:[%s1147 + $0x10] sm:$0xf] %v859
        %v1164 = vld [vmem:[%s1147 + $0x14] sm:$0x1]
        %v1165 = vsel %vm1156, %v860, %v1164
        %1166 = vst [vmem:[%s1147 + $0x14] sm:$0x1] %v1165
        %v1167 = vld [vmem:[%s1147 + $0x18] sm:$0xf]
        %v1168 = vsel %vm1150, %v867, %v1167
        %1169 = vst [vmem:[%s1147 + $0x18] sm:$0xf] %v1168
        %1170 = vst [vmem:[%s1147 + $0x1c] sm:$0xf] %v876
        %v1171 = vld [vmem:[%s1147 + $0x20] sm:$0x1]
        %v1172 = vsel %vm1156, %v877, %v1171
        %1173 = vst [vmem:[%s1147 + $0x20] sm:$0x1] %v1172
        %v1174 = vld [vmem:[%s1147 + $0x24] sm:$0xf]
        %v1175 = vsel %vm1150, %v884, %v1174
        %1176 = vst [vmem:[%s1147 + $0x24] sm:$0xf] %v1175
        %1177 = vst [vmem:[%s1147 + $0x28] sm:$0xf] %v893
        %v1178 = vld [vmem:[%s1147 + $0x2c] sm:$0x1]
        %v1179 = vsel %vm1156, %v894, %v1178
        %1180 = vst [vmem:[%s1147 + $0x2c] sm:$0x1] %v1179
        %v1181 = vld [vmem:[%s1147 + $0x30] sm:$0xf]
        %v1182 = vsel %vm1150, %v901, %v1181
        %1183 = vst [vmem:[%s1147 + $0x30] sm:$0xf] %v1182
        %1184 = vst [vmem:[%s1147 + $0x34] sm:$0xf] %v910
        %v1185 = vld [vmem:[%s1147 + $0x38] sm:$0x1]
        %v1186 = vsel %vm1156, %v911, %v1185
        %1187 = vst [vmem:[%s1147 + $0x38] sm:$0x1] %v1186
        %v1188 = vld [vmem:[%s1147 + $0x3c] sm:$0xf]
        %v1189 = vsel %vm1150, %v918, %v1188
        %1190 = vst [vmem:[%s1147 + $0x3c] sm:$0xf] %v1189
        %1191 = vst [vmem:[%s1147 + $0x40] sm:$0xf] %v927
        %v1192 = vld [vmem:[%s1147 + $0x44] sm:$0x1]
        %v1193 = vsel %vm1156, %v928, %v1192
        %1194 = vst [vmem:[%s1147 + $0x44] sm:$0x1] %v1193
        %v1195 = vld [vmem:[%s1147 + $0x48] sm:$0xf]
        %v1196 = vsel %vm1150, %v935, %v1195
        %1197 = vst [vmem:[%s1147 + $0x48] sm:$0xf] %v1196
        %1198 = vst [vmem:[%s1147 + $0x4c] sm:$0xf] %v944
        %v1199 = vld [vmem:[%s1147 + $0x50] sm:$0x1]
        %v1200 = vsel %vm1156, %v945, %v1199
        %1201 = vst [vmem:[%s1147 + $0x50] sm:$0x1] %v1200
        %v1202 = vld [vmem:[%s1147 + $0x54] sm:$0xf]
        %v1203 = vsel %vm1150, %v952, %v1202
        %1204 = vst [vmem:[%s1147 + $0x54] sm:$0xf] %v1203
        %1205 = vst [vmem:[%s1147 + $0x58] sm:$0xf] %v961
        %v1206 = vld [vmem:[%s1147 + $0x5c] sm:$0x1]
        %v1207 = vsel %vm1156, %v962, %v1206
        %1208 = vst [vmem:[%s1147 + $0x5c] sm:$0x1] %v1207
        %v1209 = vld [vmem:[%s1147 + $0x60] sm:$0xf]
        %v1210 = vsel %vm1150, %v969, %v1209
        %1211 = vst [vmem:[%s1147 + $0x60] sm:$0xf] %v1210
        %1212 = vst [vmem:[%s1147 + $0x64] sm:$0xf] %v978
        %v1213 = vld [vmem:[%s1147 + $0x68] sm:$0x1]
        %v1214 = vsel %vm1156, %v979, %v1213
        %1215 = vst [vmem:[%s1147 + $0x68] sm:$0x1] %v1214
        %v1216 = vld [vmem:[%s1147 + $0x6c] sm:$0xf]
        %v1217 = vsel %vm1150, %v986, %v1216
        %1218 = vst [vmem:[%s1147 + $0x6c] sm:$0xf] %v1217
        %1219 = vst [vmem:[%s1147 + $0x70] sm:$0xf] %v995
        %v1220 = vld [vmem:[%s1147 + $0x74] sm:$0x1]
        %v1221 = vsel %vm1156, %v996, %v1220
        %1222 = vst [vmem:[%s1147 + $0x74] sm:$0x1] %v1221
        %v1223 = vld [vmem:[%s1147 + $0x78] sm:$0xf]
        %v1224 = vsel %vm1150, %v1003, %v1223
        %1225 = vst [vmem:[%s1147 + $0x78] sm:$0xf] %v1224
        %1226 = vst [vmem:[%s1147 + $0x7c] sm:$0xf] %v1012
        %v1227 = vld [vmem:[%s1147 + $0x80] sm:$0x1]
        %v1228 = vsel %vm1156, %v1013, %v1227
        %1229 = vst [vmem:[%s1147 + $0x80] sm:$0x1] %v1228
        %v1230 = vld [vmem:[%s1147 + $0x84] sm:$0xf]
        %v1231 = vsel %vm1150, %v1020, %v1230
        %1232 = vst [vmem:[%s1147 + $0x84] sm:$0xf] %v1231
        %1233 = vst [vmem:[%s1147 + $0x88] sm:$0xf] %v1029
        %v1234 = vld [vmem:[%s1147 + $0x8c] sm:$0x1]
        %v1235 = vsel %vm1156, %v1030, %v1234
        %1236 = vst [vmem:[%s1147 + $0x8c] sm:$0x1] %v1235
        %v1237 = vld [vmem:[%s1147 + $0x90] sm:$0xf]
        %v1238 = vsel %vm1150, %v1037, %v1237
        %1239 = vst [vmem:[%s1147 + $0x90] sm:$0xf] %v1238
        %1240 = vst [vmem:[%s1147 + $0x94] sm:$0xf] %v1046
        %v1241 = vld [vmem:[%s1147 + $0x98] sm:$0x1]
        %v1242 = vsel %vm1156, %v1047, %v1241
        %1243 = vst [vmem:[%s1147 + $0x98] sm:$0x1] %v1242
        %v1244 = vld [vmem:[%s1147 + $0x9c] sm:$0xf]
        %v1245 = vsel %vm1150, %v1054, %v1244
        %1246 = vst [vmem:[%s1147 + $0x9c] sm:$0xf] %v1245
        %1247 = vst [vmem:[%s1147 + $0xa0] sm:$0xf] %v1063
        %v1248 = vld [vmem:[%s1147 + $0xa4] sm:$0x1]
        %v1249 = vsel %vm1156, %v1064, %v1248
        %1250 = vst [vmem:[%s1147 + $0xa4] sm:$0x1] %v1249
        %v1251 = vld [vmem:[%s1147 + $0xa8] sm:$0xf]
        %v1252 = vsel %vm1150, %v1071, %v1251
        %1253 = vst [vmem:[%s1147 + $0xa8] sm:$0xf] %v1252
        %1254 = vst [vmem:[%s1147 + $0xac] sm:$0xf] %v1080
        %v1255 = vld [vmem:[%s1147 + $0xb0] sm:$0x1]
        %v1256 = vsel %vm1156, %v1081, %v1255
        %1257 = vst [vmem:[%s1147 + $0xb0] sm:$0x1] %v1256
        %v1258 = vld [vmem:[%s1147 + $0xb4] sm:$0xf]
        %v1259 = vsel %vm1150, %v1088, %v1258
        %1260 = vst [vmem:[%s1147 + $0xb4] sm:$0xf] %v1259
        %1261 = vst [vmem:[%s1147 + $0xb8] sm:$0xf] %v1097
        %v1262 = vld [vmem:[%s1147 + $0xbc] sm:$0x1]
        %v1263 = vsel %vm1156, %v1098, %v1262
        %1264 = vst [vmem:[%s1147 + $0xbc] sm:$0x1] %v1263
        %v1265 = vld [vmem:[#allocation2] sm:$0xf]
        %v1266 = vld [vmem:[#allocation2 + $0x4] sm:$0xf]
        %v1267 = vld [vmem:[#allocation2 + $0xc] sm:$0xf]
        %v1268 = vld [vmem:[#allocation2 + $0x10] sm:$0xf]
        %v1269 = vld [vmem:[#allocation2 + $0x18] sm:$0xf]
        %v1270 = vld [vmem:[#allocation2 + $0x1c] sm:$0xf]
        %v1271 = vld [vmem:[#allocation2 + $0x24] sm:$0xf]
        %v1272 = vld [vmem:[#allocation2 + $0x28] sm:$0xf]
        %v1273 = vld [vmem:[#allocation2 + $0x30] sm:$0xf]
        %v1274 = vld [vmem:[#allocation2 + $0x34] sm:$0xf]
        %v1275 = vld [vmem:[#allocation2 + $0x3c] sm:$0xf]
        %v1276 = vld [vmem:[#allocation2 + $0x40] sm:$0xf]
        %v1277 = vld [vmem:[#allocation2 + $0x48] sm:$0xf]
        %v1278 = vld [vmem:[#allocation2 + $0x4c] sm:$0xf]
        %v1279 = vld [vmem:[#allocation2 + $0x54] sm:$0xf]
        %v1280 = vld [vmem:[#allocation2 + $0x58] sm:$0xf]
        %v1281 = vld [vmem:[#allocation2 + $0x60] sm:$0xf]
        %v1282 = vld [vmem:[#allocation2 + $0x64] sm:$0xf]
        %v1283 = vld [vmem:[#allocation2 + $0x6c] sm:$0xf]
        %v1284 = vld [vmem:[#allocation2 + $0x70] sm:$0xf]
        %v1285 = vld [vmem:[#allocation2 + $0x78] sm:$0xf]
        %v1286 = vld [vmem:[#allocation2 + $0x7c] sm:$0xf]
        %v1287 = vld [vmem:[#allocation2 + $0x84] sm:$0xf]
        %v1288 = vld [vmem:[#allocation2 + $0x88] sm:$0xf]
        %v1289 = vld [vmem:[#allocation2 + $0x90] sm:$0xf]
        %v1290 = vld [vmem:[#allocation2 + $0x94] sm:$0xf]
        %v1291 = vld [vmem:[#allocation2 + $0x9c] sm:$0xf]
        %v1292 = vld [vmem:[#allocation2 + $0xa0] sm:$0xf]
        %v1293 = vld [vmem:[#allocation2 + $0xa8] sm:$0xf]
        %v1294 = vld [vmem:[#allocation2 + $0xac] sm:$0xf]
        %v1295 = vld [vmem:[#allocation2 + $0xb4] sm:$0xf]
        %v1296 = vld [vmem:[#allocation2 + $0xb8] sm:$0xf]
        %v1297 = vld [vmem:[#allocation3] sm:$0xf]
        %v1298 = vld [vmem:[#allocation3 + $0x4] sm:$0xf]
        %v1299 = vld [vmem:[#allocation3 + $0x8] sm:$0xf]
        %v1300 = vld [vmem:[#allocation3 + $0xc] sm:$0xf]
        %v1301 = vld [vmem:[#allocation3 + $0x10] sm:$0xf]
        %v1302 = vld [vmem:[#allocation3 + $0x14] sm:$0xf]
        %v1303 = vld [vmem:[#allocation3 + $0x18] sm:$0xf]
        %v1304 = vld [vmem:[#allocation3 + $0x1c] sm:$0xf]
        %v1305 = vld [vmem:[#allocation3 + $0x20] sm:$0xf]
        %v1306 = vld [vmem:[#allocation3 + $0x24] sm:$0xf]
        %v1307 = vld [vmem:[#allocation3 + $0x28] sm:$0xf]
        %v1308 = vld [vmem:[#allocation3 + $0x2c] sm:$0xf]
        %v1309 = vld [vmem:[#allocation3 + $0x30] sm:$0xf]
        %v1310 = vld [vmem:[#allocation3 + $0x34] sm:$0xf]
        %v1311 = vld [vmem:[#allocation3 + $0x38] sm:$0xf]
        %v1312 = vld [vmem:[#allocation3 + $0x3c] sm:$0xf]
        %v1313 = vld [vmem:[#allocation2 + $0x8] sm:$0x1]
        %v1314 = vld [vmem:[#allocation2 + $0x14] sm:$0x1]
        %v1315 = vld [vmem:[#allocation2 + $0x20] sm:$0x1]
        %v1316 = vld [vmem:[#allocation2 + $0x2c] sm:$0x1]
        %v1317 = vld [vmem:[#allocation2 + $0x38] sm:$0x1]
        %v1318 = vld [vmem:[#allocation2 + $0x44] sm:$0x1]
        %v1319 = vld [vmem:[#allocation2 + $0x50] sm:$0x1]
        %v1320 = vld [vmem:[#allocation2 + $0x5c] sm:$0x1]
        %v1321 = vld [vmem:[#allocation2 + $0x68] sm:$0x1]
        %v1322 = vld [vmem:[#allocation2 + $0x74] sm:$0x1]
        %v1323 = vld [vmem:[#allocation2 + $0x80] sm:$0x1]
        %v1324 = vld [vmem:[#allocation2 + $0x8c] sm:$0x1]
        %v1325 = vld [vmem:[#allocation2 + $0x98] sm:$0x1]
        %v1326 = vld [vmem:[#allocation2 + $0xa4] sm:$0x1]
        %v1327 = vld [vmem:[#allocation2 + $0xb0] sm:$0x1]
        %v1328 = vld [vmem:[#allocation2 + $0xbc] sm:$0x1]
        %vm1329 = vsmask.f32 3328
        %vm1330 = vsmask.f32 7440
        %vm1331 = vmor %vm1329, %vm1330
        %v1333 = vshrl.u32 %v1265, 16
        %v1335 = vrot.slane %v1333, 4
        %v1336 = vshll.u32 %v1265, 16
        %v1338 = vrot.slane %v1336, 5
        %v1339 = vor.u32 %v1335, %v1338
        %v1340 = vrot.slane %v1339, 4
        %v1342 = vshll.u32 %v1266, 16
        %v1344 = vrot.slane %v1342, 5
        %v1345 = vsel %vm1331, %v1340, %v1344
        %v1346 = vshrl.u32 %v1266, 16
        %v1348 = vrot.slane %v1346, 4
        %v1349 = vor.u32 %v1348, %v1344
        %v1350 = vrot.slane %v1349, 4
        %v1352 = vshll.u32 %v1313, 16
        %v1354 = vrot.slane %v1352, 5
        %v1355 = vsel %vm1331, %v1350, %v1354
        %v1357 = vshrl.u32 %v1267, 16
        %v1359 = vrot.slane %v1357, 4
        %v1360 = vshll.u32 %v1267, 16
        %v1362 = vrot.slane %v1360, 5
        %v1363 = vor.u32 %v1359, %v1362
        %v1364 = vrot.slane %v1363, 4
        %v1366 = vshll.u32 %v1268, 16
        %v1368 = vrot.slane %v1366, 5
        %v1369 = vsel %vm1331, %v1364, %v1368
        %v1370 = vshrl.u32 %v1268, 16
        %v1372 = vrot.slane %v1370, 4
        %v1373 = vor.u32 %v1372, %v1368
        %v1374 = vrot.slane %v1373, 4
        %v1376 = vshll.u32 %v1314, 16
        %v1378 = vrot.slane %v1376, 5
        %v1379 = vsel %vm1331, %v1374, %v1378
        %v1381 = vshrl.u32 %v1269, 16
        %v1383 = vrot.slane %v1381, 4
        %v1384 = vshll.u32 %v1269, 16
        %v1386 = vrot.slane %v1384, 5
        %v1387 = vor.u32 %v1383, %v1386
        %v1388 = vrot.slane %v1387, 4
        %v1390 = vshll.u32 %v1270, 16
        %v1392 = vrot.slane %v1390, 5
        %v1393 = vsel %vm1331, %v1388, %v1392
        %v1394 = vshrl.u32 %v1270, 16
        %v1396 = vrot.slane %v1394, 4
        %v1397 = vor.u32 %v1396, %v1392
        %v1398 = vrot.slane %v1397, 4
        %v1400 = vshll.u32 %v1315, 16
        %v1402 = vrot.slane %v1400, 5
        %v1403 = vsel %vm1331, %v1398, %v1402
        %v1405 = vshrl.u32 %v1271, 16
        %v1407 = vrot.slane %v1405, 4
        %v1408 = vshll.u32 %v1271, 16
        %v1410 = vrot.slane %v1408, 5
        %v1411 = vor.u32 %v1407, %v1410
        %v1412 = vrot.slane %v1411, 4
        %v1414 = vshll.u32 %v1272, 16
        %v1416 = vrot.slane %v1414, 5
        %v1417 = vsel %vm1331, %v1412, %v1416
        %v1418 = vshrl.u32 %v1272, 16
        %v1420 = vrot.slane %v1418, 4
        %v1421 = vor.u32 %v1420, %v1416
        %v1422 = vrot.slane %v1421, 4
        %v1424 = vshll.u32 %v1316, 16
        %v1426 = vrot.slane %v1424, 5
        %v1427 = vsel %vm1331, %v1422, %v1426
        %v1429 = vshrl.u32 %v1273, 16
        %v1431 = vrot.slane %v1429, 4
        %v1432 = vshll.u32 %v1273, 16
        %v1434 = vrot.slane %v1432, 5
        %v1435 = vor.u32 %v1431, %v1434
        %v1436 = vrot.slane %v1435, 4
        %v1438 = vshll.u32 %v1274, 16
        %v1440 = vrot.slane %v1438, 5
        %v1441 = vsel %vm1331, %v1436, %v1440
        %v1442 = vshrl.u32 %v1274, 16
        %v1444 = vrot.slane %v1442, 4
        %v1445 = vor.u32 %v1444, %v1440
        %v1446 = vrot.slane %v1445, 4
        %v1448 = vshll.u32 %v1317, 16
        %v1450 = vrot.slane %v1448, 5
        %v1451 = vsel %vm1331, %v1446, %v1450
        %v1453 = vshrl.u32 %v1275, 16
        %v1455 = vrot.slane %v1453, 4
        %v1456 = vshll.u32 %v1275, 16
        %v1458 = vrot.slane %v1456, 5
        %v1459 = vor.u32 %v1455, %v1458
        %v1460 = vrot.slane %v1459, 4
        %v1462 = vshll.u32 %v1276, 16
        %v1464 = vrot.slane %v1462, 5
        %v1465 = vsel %vm1331, %v1460, %v1464
        %v1466 = vshrl.u32 %v1276, 16
        %v1468 = vrot.slane %v1466, 4
        %v1469 = vor.u32 %v1468, %v1464
        %v1470 = vrot.slane %v1469, 4
        %v1472 = vshll.u32 %v1318, 16
        %v1474 = vrot.slane %v1472, 5
        %v1475 = vsel %vm1331, %v1470, %v1474
        %v1477 = vshrl.u32 %v1277, 16
        %v1479 = vrot.slane %v1477, 4
        %v1480 = vshll.u32 %v1277, 16
        %v1482 = vrot.slane %v1480, 5
        %v1483 = vor.u32 %v1479, %v1482
        %v1484 = vrot.slane %v1483, 4
        %v1486 = vshll.u32 %v1278, 16
        %v1488 = vrot.slane %v1486, 5
        %v1489 = vsel %vm1331, %v1484, %v1488
        %v1490 = vshrl.u32 %v1278, 16
        %v1492 = vrot.slane %v1490, 4
        %v1493 = vor.u32 %v1492, %v1488
        %v1494 = vrot.slane %v1493, 4
        %v1496 = vshll.u32 %v1319, 16
        %v1498 = vrot.slane %v1496, 5
        %v1499 = vsel %vm1331, %v1494, %v1498
        %v1501 = vshrl.u32 %v1279, 16
        %v1503 = vrot.slane %v1501, 4
        %v1504 = vshll.u32 %v1279, 16
        %v1506 = vrot.slane %v1504, 5
        %v1507 = vor.u32 %v1503, %v1506
        %v1508 = vrot.slane %v1507, 4
        %v1510 = vshll.u32 %v1280, 16
        %v1512 = vrot.slane %v1510, 5
        %v1513 = vsel %vm1331, %v1508, %v1512
        %v1514 = vshrl.u32 %v1280, 16
        %v1516 = vrot.slane %v1514, 4
        %v1517 = vor.u32 %v1516, %v1512
        %v1518 = vrot.slane %v1517, 4
        %v1520 = vshll.u32 %v1320, 16
        %v1522 = vrot.slane %v1520, 5
        %v1523 = vsel %vm1331, %v1518, %v1522
        %v1525 = vshrl.u32 %v1281, 16
        %v1527 = vrot.slane %v1525, 4
        %v1528 = vshll.u32 %v1281, 16
        %v1530 = vrot.slane %v1528, 5
        %v1531 = vor.u32 %v1527, %v1530
        %v1532 = vrot.slane %v1531, 4
        %v1534 = vshll.u32 %v1282, 16
        %v1536 = vrot.slane %v1534, 5
        %v1537 = vsel %vm1331, %v1532, %v1536
        %v1538 = vshrl.u32 %v1282, 16
        %v1540 = vrot.slane %v1538, 4
        %v1541 = vor.u32 %v1540, %v1536
        %v1542 = vrot.slane %v1541, 4
        %v1544 = vshll.u32 %v1321, 16
        %v1546 = vrot.slane %v1544, 5
        %v1547 = vsel %vm1331, %v1542, %v1546
        %v1549 = vshrl.u32 %v1283, 16
        %v1551 = vrot.slane %v1549, 4
        %v1552 = vshll.u32 %v1283, 16
        %v1554 = vrot.slane %v1552, 5
        %v1555 = vor.u32 %v1551, %v1554
        %v1556 = vrot.slane %v1555, 4
        %v1558 = vshll.u32 %v1284, 16
        %v1560 = vrot.slane %v1558, 5
        %v1561 = vsel %vm1331, %v1556, %v1560
        %v1562 = vshrl.u32 %v1284, 16
        %v1564 = vrot.slane %v1562, 4
        %v1565 = vor.u32 %v1564, %v1560
        %v1566 = vrot.slane %v1565, 4
        %v1568 = vshll.u32 %v1322, 16
        %v1570 = vrot.slane %v1568, 5
        %v1571 = vsel %vm1331, %v1566, %v1570
        %v1573 = vshrl.u32 %v1285, 16
        %v1575 = vrot.slane %v1573, 4
        %v1576 = vshll.u32 %v1285, 16
        %v1578 = vrot.slane %v1576, 5
        %v1579 = vor.u32 %v1575, %v1578
        %v1580 = vrot.slane %v1579, 4
        %v1582 = vshll.u32 %v1286, 16
        %v1584 = vrot.slane %v1582, 5
        %v1585 = vsel %vm1331, %v1580, %v1584
        %v1586 = vshrl.u32 %v1286, 16
        %v1588 = vrot.slane %v1586, 4
        %v1589 = vor.u32 %v1588, %v1584
        %v1590 = vrot.slane %v1589, 4
        %v1592 = vshll.u32 %v1323, 16
        %v1594 = vrot.slane %v1592, 5
        %v1595 = vsel %vm1331, %v1590, %v1594
        %v1597 = vshrl.u32 %v1287, 16
        %v1599 = vrot.slane %v1597, 4
        %v1600 = vshll.u32 %v1287, 16
        %v1602 = vrot.slane %v1600, 5
        %v1603 = vor.u32 %v1599, %v1602
        %v1604 = vrot.slane %v1603, 4
        %v1606 = vshll.u32 %v1288, 16
        %v1608 = vrot.slane %v1606, 5
        %v1609 = vsel %vm1331, %v1604, %v1608
        %v1610 = vshrl.u32 %v1288, 16
        %v1612 = vrot.slane %v1610, 4
        %v1613 = vor.u32 %v1612, %v1608
        %v1614 = vrot.slane %v1613, 4
        %v1616 = vshll.u32 %v1324, 16
        %v1618 = vrot.slane %v1616, 5
        %v1619 = vsel %vm1331, %v1614, %v1618
        %v1621 = vshrl.u32 %v1289, 16
        %v1623 = vrot.slane %v1621, 4
        %v1624 = vshll.u32 %v1289, 16
        %v1626 = vrot.slane %v1624, 5
        %v1627 = vor.u32 %v1623, %v1626
        %v1628 = vrot.slane %v1627, 4
        %v1630 = vshll.u32 %v1290, 16
        %v1632 = vrot.slane %v1630, 5
        %v1633 = vsel %vm1331, %v1628, %v1632
        %v1634 = vshrl.u32 %v1290, 16
        %v1636 = vrot.slane %v1634, 4
        %v1637 = vor.u32 %v1636, %v1632
        %v1638 = vrot.slane %v1637, 4
        %v1640 = vshll.u32 %v1325, 16
        %v1642 = vrot.slane %v1640, 5
        %v1643 = vsel %vm1331, %v1638, %v1642
        %v1645 = vshrl.u32 %v1291, 16
        %v1647 = vrot.slane %v1645, 4
        %v1648 = vshll.u32 %v1291, 16
        %v1650 = vrot.slane %v1648, 5
        %v1651 = vor.u32 %v1647, %v1650
        %v1652 = vrot.slane %v1651, 4
        %v1654 = vshll.u32 %v1292, 16
        %v1656 = vrot.slane %v1654, 5
        %v1657 = vsel %vm1331, %v1652, %v1656
        %v1658 = vshrl.u32 %v1292, 16
        %v1660 = vrot.slane %v1658, 4
        %v1661 = vor.u32 %v1660, %v1656
        %v1662 = vrot.slane %v1661, 4
        %v1664 = vshll.u32 %v1326, 16
        %v1666 = vrot.slane %v1664, 5
        %v1667 = vsel %vm1331, %v1662, %v1666
        %v1669 = vshrl.u32 %v1293, 16
        %v1671 = vrot.slane %v1669, 4
        %v1672 = vshll.u32 %v1293, 16
        %v1674 = vrot.slane %v1672, 5
        %v1675 = vor.u32 %v1671, %v1674
        %v1676 = vrot.slane %v1675, 4
        %v1678 = vshll.u32 %v1294, 16
        %v1680 = vrot.slane %v1678, 5
        %v1681 = vsel %vm1331, %v1676, %v1680
        %v1682 = vshrl.u32 %v1294, 16
        %v1684 = vrot.slane %v1682, 4
        %v1685 = vor.u32 %v1684, %v1680
        %v1686 = vrot.slane %v1685, 4
        %v1688 = vshll.u32 %v1327, 16
        %v1690 = vrot.slane %v1688, 5
        %v1691 = vsel %vm1331, %v1686, %v1690
        %v1693 = vshrl.u32 %v1295, 16
        %v1695 = vrot.slane %v1693, 4
        %v1696 = vshll.u32 %v1295, 16
        %v1698 = vrot.slane %v1696, 5
        %v1699 = vor.u32 %v1695, %v1698
        %v1700 = vrot.slane %v1699, 4
        %v1702 = vshll.u32 %v1296, 16
        %v1704 = vrot.slane %v1702, 5
        %v1705 = vsel %vm1331, %v1700, %v1704
        %v1706 = vshrl.u32 %v1296, 16
        %v1708 = vrot.slane %v1706, 4
        %v1709 = vor.u32 %v1708, %v1704
        %v1710 = vrot.slane %v1709, 4
        %v1712 = vshll.u32 %v1328, 16
        %v1714 = vrot.slane %v1712, 5
        %v1715 = vsel %vm1331, %v1710, %v1714
        %s1716 = scalar_lea.vmem [#allocation3], 64
        %v1717 = vld [vmem:[%s1716] sm:$0xf]
        %v1718 = vld [vmem:[%s1716 + $0x4] sm:$0xf]
        %v1719 = vld [vmem:[%s1716 + $0x8] sm:$0xf]
        %v1720 = vld [vmem:[%s1716 + $0xc] sm:$0xf]
        %v1721 = vld [vmem:[%s1716 + $0x10] sm:$0xf]
        %v1722 = vld [vmem:[%s1716 + $0x14] sm:$0xf]
        %v1723 = vld [vmem:[%s1716 + $0x18] sm:$0xf]
        %v1724 = vld [vmem:[%s1716 + $0x1c] sm:$0xf]
        %v1725 = vld [vmem:[%s1716 + $0x20] sm:$0xf]
        %v1726 = vld [vmem:[%s1716 + $0x24] sm:$0xf]
        %v1727 = vld [vmem:[%s1716 + $0x28] sm:$0xf]
        %v1728 = vld [vmem:[%s1716 + $0x2c] sm:$0xf]
        %v1729 = vld [vmem:[%s1716 + $0x30] sm:$0xf]
        %v1730 = vld [vmem:[%s1716 + $0x34] sm:$0xf]
        %v1731 = vld [vmem:[%s1716 + $0x38] sm:$0xf]
        %v1732 = vld [vmem:[%s1716 + $0x3c] sm:$0xf]
        %v1733 = vunpack.c.l.b16 %v1345
        %v1734 = vunpack.c.l.b16 %v1355
        %v1735 = vunpack.c.l.b16 %v1369
        %v1736 = vunpack.c.l.b16 %v1379
        %v1737 = vunpack.c.l.b16 %v1393
        %v1738 = vunpack.c.l.b16 %v1403
        %v1739 = vunpack.c.l.b16 %v1417
        %v1740 = vunpack.c.l.b16 %v1427
        %v1741 = vunpack.c.l.b16 %v1441
        %v1742 = vunpack.c.l.b16 %v1451
        %v1743 = vunpack.c.l.b16 %v1465
        %v1744 = vunpack.c.l.b16 %v1475
        %v1745 = vunpack.c.l.b16 %v1489
        %v1746 = vunpack.c.l.b16 %v1499
        %v1747 = vunpack.c.l.b16 %v1513
        %v1748 = vunpack.c.l.b16 %v1523
        %v1749 = vunpack.c.l.b16 %v1537
        %v1750 = vunpack.c.l.b16 %v1547
        %v1751 = vunpack.c.l.b16 %v1561
        %v1752 = vunpack.c.l.b16 %v1571
        %v1753 = vunpack.c.l.b16 %v1585
        %v1754 = vunpack.c.l.b16 %v1595
        %v1755 = vunpack.c.l.b16 %v1609
        %v1756 = vunpack.c.l.b16 %v1619
        %v1757 = vunpack.c.l.b16 %v1633
        %v1758 = vunpack.c.l.b16 %v1643
        %v1759 = vunpack.c.l.b16 %v1657
        %v1760 = vunpack.c.l.b16 %v1667
        %v1761 = vunpack.c.l.b16 %v1681
        %v1762 = vunpack.c.l.b16 %v1691
        %v1763 = vunpack.c.l.b16 %v1705
        %v1764 = vunpack.c.l.b16 %v1715
        %v1765 = vpack.c.b16 %v1734, %v1733
        %v1766 = vpack.c.b16 %v1736, %v1735
        %v1767 = vpack.c.b16 %v1738, %v1737
        %v1768 = vpack.c.b16 %v1740, %v1739
        %v1769 = vpack.c.b16 %v1742, %v1741
        %v1770 = vpack.c.b16 %v1744, %v1743
        %v1771 = vpack.c.b16 %v1746, %v1745
        %v1772 = vpack.c.b16 %v1748, %v1747
        %v1773 = vpack.c.b16 %v1750, %v1749
        %v1774 = vpack.c.b16 %v1752, %v1751
        %v1775 = vpack.c.b16 %v1754, %v1753
        %v1776 = vpack.c.b16 %v1756, %v1755
        %v1777 = vpack.c.b16 %v1758, %v1757
        %v1778 = vpack.c.b16 %v1760, %v1759
        %v1779 = vpack.c.b16 %v1762, %v1761
        %v1780 = vpack.c.b16 %v1764, %v1763
        %v1813 = vunpack.c.l.b16 %v1717
        %v1814 = vunpack.c.l.b16 %v1718
        %v1815 = vunpack.c.l.b16 %v1719
        %v1816 = vunpack.c.l.b16 %v1720
        %v1817 = vunpack.c.l.b16 %v1721
        %v1818 = vunpack.c.l.b16 %v1722
        %v1819 = vunpack.c.l.b16 %v1723
        %v1820 = vunpack.c.l.b16 %v1724
        %v1821 = vunpack.c.l.b16 %v1725
        %v1822 = vunpack.c.l.b16 %v1726
        %v1823 = vunpack.c.l.b16 %v1727
        %v1824 = vunpack.c.l.b16 %v1728
        %v1825 = vunpack.c.l.b16 %v1729
        %v1826 = vunpack.c.l.b16 %v1730
        %v1827 = vunpack.c.l.b16 %v1731
        %v1828 = vunpack.c.l.b16 %v1732
        %v1829 = vpack.c.b16 %v1814, %v1813
        %v1830 = vpack.c.b16 %v1816, %v1815
        %v1831 = vpack.c.b16 %v1818, %v1817
        %v1832 = vpack.c.b16 %v1820, %v1819
        %v1833 = vpack.c.b16 %v1822, %v1821
        %v1834 = vpack.c.b16 %v1824, %v1823
        %v1835 = vpack.c.b16 %v1826, %v1825
        %v1836 = vpack.c.b16 %v1828, %v1827
        %1845 = vmatpush.bf16.msra.mxu0 %v1836
        %1846 = vmatpush.bf16.msra.mxu0 %v1835
        %1847 = vmatpush.bf16.msra.mxu0 %v1834
        %1848 = vmatpush.bf16.msra.mxu0 %v1833
        %1849 = vmatpush.bf16.msra.mxu0 %v1832
        %1850 = vmatpush.bf16.msra.mxu0 %v1831
        %1851 = vmatpush.bf16.msra.mxu0 %v1830
        %1852 = vmatpush.bf16.msra.mxu0 %v1829
        %1853 = vmatmul.bf16.gmra.mxu0 %v1765
        %v1854 = vpop.f32.mrf.mxu0
        %v1855 = vadd.f32 0.0, %v1854
        %v1856 = vpop.f32.mrf.mxu0
        %v1857 = vadd.f32 0.0, %v1856
        %1858 = vmatmul.bf16.gmra.mxu0 %v1766
        %v1859 = vpop.f32.mrf.mxu0
        %v1860 = vadd.f32 0.0, %v1859
        %v1861 = vpop.f32.mrf.mxu0
        %v1862 = vadd.f32 0.0, %v1861
        %1863 = vmatmul.bf16.gmra.mxu0 %v1767
        %v1864 = vpop.f32.mrf.mxu0
        %v1865 = vadd.f32 0.0, %v1864
        %v1866 = vpop.f32.mrf.mxu0
        %v1867 = vadd.f32 0.0, %v1866
        %1868 = vmatmul.bf16.gmra.mxu0 %v1768
        %v1869 = vpop.f32.mrf.mxu0
        %v1870 = vadd.f32 0.0, %v1869
        %v1871 = vpop.f32.mrf.mxu0
        %v1872 = vadd.f32 0.0, %v1871
        %1873 = vmatmul.bf16.gmra.mxu0 %v1769
        %v1874 = vpop.f32.mrf.mxu0
        %v1875 = vadd.f32 0.0, %v1874
        %v1876 = vpop.f32.mrf.mxu0
        %v1877 = vadd.f32 0.0, %v1876
        %1878 = vmatmul.bf16.gmra.mxu0 %v1770
        %v1879 = vpop.f32.mrf.mxu0
        %v1880 = vadd.f32 0.0, %v1879
        %v1881 = vpop.f32.mrf.mxu0
        %v1882 = vadd.f32 0.0, %v1881
        %1883 = vmatmul.bf16.gmra.mxu0 %v1771
        %v1884 = vpop.f32.mrf.mxu0
        %v1885 = vadd.f32 0.0, %v1884
        %v1886 = vpop.f32.mrf.mxu0
        %v1887 = vadd.f32 0.0, %v1886
        %1888 = vmatmul.bf16.gmra.mxu0 %v1772
        %v1889 = vpop.f32.mrf.mxu0
        %v1890 = vadd.f32 0.0, %v1889
        %v1891 = vpop.f32.mrf.mxu0
        %v1892 = vadd.f32 0.0, %v1891
        %1893 = vmatmul.bf16.gmra.mxu0 %v1773
        %v1894 = vpop.f32.mrf.mxu0
        %v1895 = vadd.f32 0.0, %v1894
        %v1896 = vpop.f32.mrf.mxu0
        %v1897 = vadd.f32 0.0, %v1896
        %1898 = vmatmul.bf16.gmra.mxu0 %v1774
        %v1899 = vpop.f32.mrf.mxu0
        %v1900 = vadd.f32 0.0, %v1899
        %v1901 = vpop.f32.mrf.mxu0
        %v1902 = vadd.f32 0.0, %v1901
        %1903 = vmatmul.bf16.gmra.mxu0 %v1775
        %v1904 = vpop.f32.mrf.mxu0
        %v1905 = vadd.f32 0.0, %v1904
        %v1906 = vpop.f32.mrf.mxu0
        %v1907 = vadd.f32 0.0, %v1906
        %1908 = vmatmul.bf16.gmra.mxu0 %v1776
        %v1909 = vpop.f32.mrf.mxu0
        %v1910 = vadd.f32 0.0, %v1909
        %v1911 = vpop.f32.mrf.mxu0
        %v1912 = vadd.f32 0.0, %v1911
        %1913 = vmatmul.bf16.gmra.mxu0 %v1777
        %v1914 = vpop.f32.mrf.mxu0
        %v1915 = vadd.f32 0.0, %v1914
        %v1916 = vpop.f32.mrf.mxu0
        %v1917 = vadd.f32 0.0, %v1916
        %1918 = vmatmul.bf16.gmra.mxu0 %v1778
        %v1919 = vpop.f32.mrf.mxu0
        %v1920 = vadd.f32 0.0, %v1919
        %v1921 = vpop.f32.mrf.mxu0
        %v1922 = vadd.f32 0.0, %v1921
        %1923 = vmatmul.bf16.gmra.mxu0 %v1779
        %v1924 = vpop.f32.mrf.mxu0
        %v1925 = vadd.f32 0.0, %v1924
        %v1926 = vpop.f32.mrf.mxu0
        %v1927 = vadd.f32 0.0, %v1926
        %1928 = vmatmul.bf16.gmra.mxu0 %v1780
        %v1929 = vpop.f32.mrf.mxu0
        %v1930 = vadd.f32 0.0, %v1929
        %v1931 = vpop.f32.mrf.mxu0
        %v1932 = vadd.f32 0.0, %v1931
        %1933 = vdwg.mxu0
        %v1966 = vunpack.c.l.b16 %v1265
        %v1967 = vunpack.c.l.b16 %v1266
        %v1968 = vunpack.c.l.b16 %v1267
        %v1969 = vunpack.c.l.b16 %v1268
        %v1970 = vunpack.c.l.b16 %v1269
        %v1971 = vunpack.c.l.b16 %v1270
        %v1972 = vunpack.c.l.b16 %v1271
        %v1973 = vunpack.c.l.b16 %v1272
        %v1974 = vunpack.c.l.b16 %v1273
        %v1975 = vunpack.c.l.b16 %v1274
        %v1976 = vunpack.c.l.b16 %v1275
        %v1977 = vunpack.c.l.b16 %v1276
        %v1978 = vunpack.c.l.b16 %v1277
        %v1979 = vunpack.c.l.b16 %v1278
        %v1980 = vunpack.c.l.b16 %v1279
        %v1981 = vunpack.c.l.b16 %v1280
        %v1982 = vunpack.c.l.b16 %v1281
        %v1983 = vunpack.c.l.b16 %v1282
        %v1984 = vunpack.c.l.b16 %v1283
        %v1985 = vunpack.c.l.b16 %v1284
        %v1986 = vunpack.c.l.b16 %v1285
        %v1987 = vunpack.c.l.b16 %v1286
        %v1988 = vunpack.c.l.b16 %v1287
        %v1989 = vunpack.c.l.b16 %v1288
        %v1990 = vunpack.c.l.b16 %v1289
        %v1991 = vunpack.c.l.b16 %v1290
        %v1992 = vunpack.c.l.b16 %v1291
        %v1993 = vunpack.c.l.b16 %v1292
        %v1994 = vunpack.c.l.b16 %v1293
        %v1995 = vunpack.c.l.b16 %v1294
        %v1996 = vunpack.c.l.b16 %v1295
        %v1997 = vunpack.c.l.b16 %v1296
        %v1998 = vpack.c.b16 %v1967, %v1966
        %v1999 = vpack.c.b16 %v1969, %v1968
        %v2000 = vpack.c.b16 %v1971, %v1970
        %v2001 = vpack.c.b16 %v1973, %v1972
        %v2002 = vpack.c.b16 %v1975, %v1974
        %v2003 = vpack.c.b16 %v1977, %v1976
        %v2004 = vpack.c.b16 %v1979, %v1978
        %v2005 = vpack.c.b16 %v1981, %v1980
        %v2006 = vpack.c.b16 %v1983, %v1982
        %v2007 = vpack.c.b16 %v1985, %v1984
        %v2008 = vpack.c.b16 %v1987, %v1986
        %v2009 = vpack.c.b16 %v1989, %v1988
        %v2010 = vpack.c.b16 %v1991, %v1990
        %v2011 = vpack.c.b16 %v1993, %v1992
        %v2012 = vpack.c.b16 %v1995, %v1994
        %v2013 = vpack.c.b16 %v1997, %v1996
        %v2046 = vunpack.c.l.b16 %v1297
        %v2047 = vunpack.c.l.b16 %v1298
        %v2048 = vunpack.c.l.b16 %v1299
        %v2049 = vunpack.c.l.b16 %v1300
        %v2050 = vunpack.c.l.b16 %v1301
        %v2051 = vunpack.c.l.b16 %v1302
        %v2052 = vunpack.c.l.b16 %v1303
        %v2053 = vunpack.c.l.b16 %v1304
        %v2054 = vunpack.c.l.b16 %v1305
        %v2055 = vunpack.c.l.b16 %v1306
        %v2056 = vunpack.c.l.b16 %v1307
        %v2057 = vunpack.c.l.b16 %v1308
        %v2058 = vunpack.c.l.b16 %v1309
        %v2059 = vunpack.c.l.b16 %v1310
        %v2060 = vunpack.c.l.b16 %v1311
        %v2061 = vunpack.c.l.b16 %v1312
        %v2062 = vpack.c.b16 %v2047, %v2046
        %v2063 = vpack.c.b16 %v2049, %v2048
        %v2064 = vpack.c.b16 %v2051, %v2050
        %v2065 = vpack.c.b16 %v2053, %v2052
        %v2066 = vpack.c.b16 %v2055, %v2054
        %v2067 = vpack.c.b16 %v2057, %v2056
        %v2068 = vpack.c.b16 %v2059, %v2058
        %v2069 = vpack.c.b16 %v2061, %v2060
        %2078 = vmatpush.bf16.msra.mxu0 %v2069
        %2079 = vmatpush.bf16.msra.mxu0 %v2068
        %2080 = vmatpush.bf16.msra.mxu0 %v2067
        %2081 = vmatpush.bf16.msra.mxu0 %v2066
        %2082 = vmatpush.bf16.msra.mxu0 %v2065
        %2083 = vmatpush.bf16.msra.mxu0 %v2064
        %2084 = vmatpush.bf16.msra.mxu0 %v2063
        %2085 = vmatpush.bf16.msra.mxu0 %v2062
        %2086 = vmatmul.bf16.gmra.mxu0 %v1998
        %v2087 = vpop.f32.mrf.mxu0
        %v2088 = vadd.f32 %v1855, %v2087
        %v2089 = vpop.f32.mrf.mxu0
        %v2090 = vadd.f32 %v1857, %v2089
        %2091 = vmatmul.bf16.gmra.mxu0 %v1999
        %v2092 = vpop.f32.mrf.mxu0
        %v2093 = vadd.f32 %v1860, %v2092
        %v2094 = vpop.f32.mrf.mxu0
        %v2095 = vadd.f32 %v1862, %v2094
        %2096 = vmatmul.bf16.gmra.mxu0 %v2000
        %v2097 = vpop.f32.mrf.mxu0
        %v2098 = vadd.f32 %v1865, %v2097
        %v2099 = vpop.f32.mrf.mxu0
        %v2100 = vadd.f32 %v1867, %v2099
        %2101 = vmatmul.bf16.gmra.mxu0 %v2001
        %v2102 = vpop.f32.mrf.mxu0
        %v2103 = vadd.f32 %v1870, %v2102
        %v2104 = vpop.f32.mrf.mxu0
        %v2105 = vadd.f32 %v1872, %v2104
        %2106 = vmatmul.bf16.gmra.mxu0 %v2002
        %v2107 = vpop.f32.mrf.mxu0
        %v2108 = vadd.f32 %v1875, %v2107
        %v2109 = vpop.f32.mrf.mxu0
        %v2110 = vadd.f32 %v1877, %v2109
        %2111 = vmatmul.bf16.gmra.mxu0 %v2003
        %v2112 = vpop.f32.mrf.mxu0
        %v2113 = vadd.f32 %v1880, %v2112
        %v2114 = vpop.f32.mrf.mxu0
        %v2115 = vadd.f32 %v1882, %v2114
        %2116 = vmatmul.bf16.gmra.mxu0 %v2004
        %v2117 = vpop.f32.mrf.mxu0
        %v2118 = vadd.f32 %v1885, %v2117
        %v2119 = vpop.f32.mrf.mxu0
        %v2120 = vadd.f32 %v1887, %v2119
        %2121 = vmatmul.bf16.gmra.mxu0 %v2005
        %v2122 = vpop.f32.mrf.mxu0
        %v2123 = vadd.f32 %v1890, %v2122
        %v2124 = vpop.f32.mrf.mxu0
        %v2125 = vadd.f32 %v1892, %v2124
        %2126 = vmatmul.bf16.gmra.mxu0 %v2006
        %v2127 = vpop.f32.mrf.mxu0
        %v2128 = vadd.f32 %v1895, %v2127
        %v2129 = vpop.f32.mrf.mxu0
        %v2130 = vadd.f32 %v1897, %v2129
        %2131 = vmatmul.bf16.gmra.mxu0 %v2007
        %v2132 = vpop.f32.mrf.mxu0
        %v2133 = vadd.f32 %v1900, %v2132
        %v2134 = vpop.f32.mrf.mxu0
        %v2135 = vadd.f32 %v1902, %v2134
        %2136 = vmatmul.bf16.gmra.mxu0 %v2008
        %v2137 = vpop.f32.mrf.mxu0
        %v2138 = vadd.f32 %v1905, %v2137
        %v2139 = vpop.f32.mrf.mxu0
        %v2140 = vadd.f32 %v1907, %v2139
        %2141 = vmatmul.bf16.gmra.mxu0 %v2009
        %v2142 = vpop.f32.mrf.mxu0
        %v2143 = vadd.f32 %v1910, %v2142
        %v2144 = vpop.f32.mrf.mxu0
        %v2145 = vadd.f32 %v1912, %v2144
        %2146 = vmatmul.bf16.gmra.mxu0 %v2010
        %v2147 = vpop.f32.mrf.mxu0
        %v2148 = vadd.f32 %v1915, %v2147
        %v2149 = vpop.f32.mrf.mxu0
        %v2150 = vadd.f32 %v1917, %v2149
        %2151 = vmatmul.bf16.gmra.mxu0 %v2011
        %v2152 = vpop.f32.mrf.mxu0
        %v2153 = vadd.f32 %v1920, %v2152
        %v2154 = vpop.f32.mrf.mxu0
        %v2155 = vadd.f32 %v1922, %v2154
        %2156 = vmatmul.bf16.gmra.mxu0 %v2012
        %v2157 = vpop.f32.mrf.mxu0
        %v2158 = vadd.f32 %v1925, %v2157
        %v2159 = vpop.f32.mrf.mxu0
        %v2160 = vadd.f32 %v1927, %v2159
        %2161 = vmatmul.bf16.gmra.mxu0 %v2013
        %v2162 = vpop.f32.mrf.mxu0
        %v2163 = vadd.f32 %v1930, %v2162
        %v2164 = vpop.f32.mrf.mxu0
        %v2165 = vadd.f32 %v1932, %v2164
        %2166 = vdwg.mxu0
        %v2167 = vld [vmem:[#allocation2] sm:$0xe]
        %v2168 = vld [vmem:[#allocation2 + $0xc] sm:$0xe]
        %v2169 = vld [vmem:[#allocation2 + $0x18] sm:$0xe]
        %v2170 = vld [vmem:[#allocation2 + $0x24] sm:$0xe]
        %v2171 = vld [vmem:[#allocation2 + $0x30] sm:$0xe]
        %v2172 = vld [vmem:[#allocation2 + $0x3c] sm:$0xe]
        %v2173 = vld [vmem:[#allocation2 + $0x48] sm:$0xe]
        %v2174 = vld [vmem:[#allocation2 + $0x54] sm:$0xe]
        %v2175 = vld [vmem:[#allocation2 + $0x60] sm:$0xe]
        %v2176 = vld [vmem:[#allocation2 + $0x6c] sm:$0xe]
        %v2177 = vld [vmem:[#allocation2 + $0x78] sm:$0xe]
        %v2178 = vld [vmem:[#allocation2 + $0x84] sm:$0xe]
        %v2179 = vld [vmem:[#allocation2 + $0x90] sm:$0xe]
        %v2180 = vld [vmem:[#allocation2 + $0x9c] sm:$0xe]
        %v2181 = vld [vmem:[#allocation2 + $0xa8] sm:$0xe]
        %v2182 = vld [vmem:[#allocation2 + $0xb4] sm:$0xe]
        %vm2215 = vcmask 1042432
        %vm2216 = vcmask 1046532
        %vm2217 = vmor %vm2215, %vm2216
        %v2218 = vrot.slane %v2167, 5
        %v2219 = vrot.slane %v2218, 4
        %v2220 = vrot.slane %v1266, 5
        %v2221 = vsel %vm2217, %v2219, %v2220
        %v2222 = vrot.slane %v2220, 4
        %v2223 = vrot.slane %v1313, 5
        %v2224 = vsel %vm2217, %v2222, %v2223
        %v2225 = vrot.slane %v2168, 5
        %v2226 = vrot.slane %v2225, 4
        %v2227 = vrot.slane %v1268, 5
        %v2228 = vsel %vm2217, %v2226, %v2227
        %v2229 = vrot.slane %v2227, 4
        %v2230 = vrot.slane %v1314, 5
        %v2231 = vsel %vm2217, %v2229, %v2230
        %v2232 = vrot.slane %v2169, 5
        %v2233 = vrot.slane %v2232, 4
        %v2234 = vrot.slane %v1270, 5
        %v2235 = vsel %vm2217, %v2233, %v2234
        %v2236 = vrot.slane %v2234, 4
        %v2237 = vrot.slane %v1315, 5
        %v2238 = vsel %vm2217, %v2236, %v2237
        %v2239 = vrot.slane %v2170, 5
        %v2240 = vrot.slane %v2239, 4
        %v2241 = vrot.slane %v1272, 5
        %v2242 = vsel %vm2217, %v2240, %v2241
        %v2243 = vrot.slane %v2241, 4
        %v2244 = vrot.slane %v1316, 5
        %v2245 = vsel %vm2217, %v2243, %v2244
        %v2246 = vrot.slane %v2171, 5
        %v2247 = vrot.slane %v2246, 4
        %v2248 = vrot.slane %v1274, 5
        %v2249 = vsel %vm2217, %v2247, %v2248
        %v2250 = vrot.slane %v2248, 4
        %v2251 = vrot.slane %v1317, 5
        %v2252 = vsel %vm2217, %v2250, %v2251
        %v2253 = vrot.slane %v2172, 5
        %v2254 = vrot.slane %v2253, 4
        %v2255 = vrot.slane %v1276, 5
        %v2256 = vsel %vm2217, %v2254, %v2255
        %v2257 = vrot.slane %v2255, 4
        %v2258 = vrot.slane %v1318, 5
        %v2259 = vsel %vm2217, %v2257, %v2258
        %v2260 = vrot.slane %v2173, 5
        %v2261 = vrot.slane %v2260, 4
        %v2262 = vrot.slane %v1278, 5
        %v2263 = vsel %vm2217, %v2261, %v2262
        %v2264 = vrot.slane %v2262, 4
        %v2265 = vrot.slane %v1319, 5
        %v2266 = vsel %vm2217, %v2264, %v2265
        %v2267 = vrot.slane %v2174, 5
        %v2268 = vrot.slane %v2267, 4
        %v2269 = vrot.slane %v1280, 5
        %v2270 = vsel %vm2217, %v2268, %v2269
        %v2271 = vrot.slane %v2269, 4
        %v2272 = vrot.slane %v1320, 5
        %v2273 = vsel %vm2217, %v2271, %v2272
        %v2274 = vrot.slane %v2175, 5
        %v2275 = vrot.slane %v2274, 4
        %v2276 = vrot.slane %v1282, 5
        %v2277 = vsel %vm2217, %v2275, %v2276
        %v2278 = vrot.slane %v2276, 4
        %v2279 = vrot.slane %v1321, 5
        %v2280 = vsel %vm2217, %v2278, %v2279
        %v2281 = vrot.slane %v2176, 5
        %v2282 = vrot.slane %v2281, 4
        %v2283 = vrot.slane %v1284, 5
        %v2284 = vsel %vm2217, %v2282, %v2283
        %v2285 = vrot.slane %v2283, 4
        %v2286 = vrot.slane %v1322, 5
        %v2287 = vsel %vm2217, %v2285, %v2286
        %v2288 = vrot.slane %v2177, 5
        %v2289 = vrot.slane %v2288, 4
        %v2290 = vrot.slane %v1286, 5
        %v2291 = vsel %vm2217, %v2289, %v2290
        %v2292 = vrot.slane %v2290, 4
        %v2293 = vrot.slane %v1323, 5
        %v2294 = vsel %vm2217, %v2292, %v2293
        %v2295 = vrot.slane %v2178, 5
        %v2296 = vrot.slane %v2295, 4
        %v2297 = vrot.slane %v1288, 5
        %v2298 = vsel %vm2217, %v2296, %v2297
        %v2299 = vrot.slane %v2297, 4
        %v2300 = vrot.slane %v1324, 5
        %v2301 = vsel %vm2217, %v2299, %v2300
        %v2302 = vrot.slane %v2179, 5
        %v2303 = vrot.slane %v2302, 4
        %v2304 = vrot.slane %v1290, 5
        %v2305 = vsel %vm2217, %v2303, %v2304
        %v2306 = vrot.slane %v2304, 4
        %v2307 = vrot.slane %v1325, 5
        %v2308 = vsel %vm2217, %v2306, %v2307
        %v2309 = vrot.slane %v2180, 5
        %v2310 = vrot.slane %v2309, 4
        %v2311 = vrot.slane %v1292, 5
        %v2312 = vsel %vm2217, %v2310, %v2311
        %v2313 = vrot.slane %v2311, 4
        %v2314 = vrot.slane %v1326, 5
        %v2315 = vsel %vm2217, %v2313, %v2314
        %v2316 = vrot.slane %v2181, 5
        %v2317 = vrot.slane %v2316, 4
        %v2318 = vrot.slane %v1294, 5
        %v2319 = vsel %vm2217, %v2317, %v2318
        %v2320 = vrot.slane %v2318, 4
        %v2321 = vrot.slane %v1327, 5
        %v2322 = vsel %vm2217, %v2320, %v2321
        %v2323 = vrot.slane %v2182, 5
        %v2324 = vrot.slane %v2323, 4
        %v2325 = vrot.slane %v1296, 5
        %v2326 = vsel %vm2217, %v2324, %v2325
        %v2327 = vrot.slane %v2325, 4
        %v2328 = vrot.slane %v1328, 5
        %v2329 = vsel %vm2217, %v2327, %v2328
        %s2330 = scalar_lea.vmem [#allocation3], 128
        %v2331 = vld [vmem:[%s2330] sm:$0xf]
        %v2332 = vld [vmem:[%s2330 + $0x4] sm:$0xf]
        %v2333 = vld [vmem:[%s2330 + $0x8] sm:$0xf]
        %v2334 = vld [vmem:[%s2330 + $0xc] sm:$0xf]
        %v2335 = vld [vmem:[%s2330 + $0x10] sm:$0xf]
        %v2336 = vld [vmem:[%s2330 + $0x14] sm:$0xf]
        %v2337 = vld [vmem:[%s2330 + $0x18] sm:$0xf]
        %v2338 = vld [vmem:[%s2330 + $0x1c] sm:$0xf]
        %v2339 = vld [vmem:[%s2330 + $0x20] sm:$0xf]
        %v2340 = vld [vmem:[%s2330 + $0x24] sm:$0xf]
        %v2341 = vld [vmem:[%s2330 + $0x28] sm:$0xf]
        %v2342 = vld [vmem:[%s2330 + $0x2c] sm:$0xf]
        %v2343 = vld [vmem:[%s2330 + $0x30] sm:$0xf]
        %v2344 = vld [vmem:[%s2330 + $0x34] sm:$0xf]
        %v2345 = vld [vmem:[%s2330 + $0x38] sm:$0xf]
        %v2346 = vld [vmem:[%s2330 + $0x3c] sm:$0xf]
        %v2347 = vunpack.c.l.b16 %v2221
        %v2348 = vunpack.c.l.b16 %v2224
        %v2349 = vunpack.c.l.b16 %v2228
        %v2350 = vunpack.c.l.b16 %v2231
        %v2351 = vunpack.c.l.b16 %v2235
        %v2352 = vunpack.c.l.b16 %v2238
        %v2353 = vunpack.c.l.b16 %v2242
        %v2354 = vunpack.c.l.b16 %v2245
        %v2355 = vunpack.c.l.b16 %v2249
        %v2356 = vunpack.c.l.b16 %v2252
        %v2357 = vunpack.c.l.b16 %v2256
        %v2358 = vunpack.c.l.b16 %v2259
        %v2359 = vunpack.c.l.b16 %v2263
        %v2360 = vunpack.c.l.b16 %v2266
        %v2361 = vunpack.c.l.b16 %v2270
        %v2362 = vunpack.c.l.b16 %v2273
        %v2363 = vunpack.c.l.b16 %v2277
        %v2364 = vunpack.c.l.b16 %v2280
        %v2365 = vunpack.c.l.b16 %v2284
        %v2366 = vunpack.c.l.b16 %v2287
        %v2367 = vunpack.c.l.b16 %v2291
        %v2368 = vunpack.c.l.b16 %v2294
        %v2369 = vunpack.c.l.b16 %v2298
        %v2370 = vunpack.c.l.b16 %v2301
        %v2371 = vunpack.c.l.b16 %v2305
        %v2372 = vunpack.c.l.b16 %v2308
        %v2373 = vunpack.c.l.b16 %v2312
        %v2374 = vunpack.c.l.b16 %v2315
        %v2375 = vunpack.c.l.b16 %v2319
        %v2376 = vunpack.c.l.b16 %v2322
        %v2377 = vunpack.c.l.b16 %v2326
        %v2378 = vunpack.c.l.b16 %v2329
        %v2379 = vpack.c.b16 %v2348, %v2347
        %v2380 = vpack.c.b16 %v2350, %v2349
        %v2381 = vpack.c.b16 %v2352, %v2351
        %v2382 = vpack.c.b16 %v2354, %v2353
        %v2383 = vpack.c.b16 %v2356, %v2355
        %v2384 = vpack.c.b16 %v2358, %v2357
        %v2385 = vpack.c.b16 %v2360, %v2359
        %v2386 = vpack.c.b16 %v2362, %v2361
        %v2387 = vpack.c.b16 %v2364, %v2363
        %v2388 = vpack.c.b16 %v2366, %v2365
        %v2389 = vpack.c.b16 %v2368, %v2367
        %v2390 = vpack.c.b16 %v2370, %v2369
        %v2391 = vpack.c.b16 %v2372, %v2371
        %v2392 = vpack.c.b16 %v2374, %v2373
        %v2393 = vpack.c.b16 %v2376, %v2375
        %v2394 = vpack.c.b16 %v2378, %v2377
        %v2427 = vunpack.c.l.b16 %v2331
        %v2428 = vunpack.c.l.b16 %v2332
        %v2429 = vunpack.c.l.b16 %v2333
        %v2430 = vunpack.c.l.b16 %v2334
        %v2431 = vunpack.c.l.b16 %v2335
        %v2432 = vunpack.c.l.b16 %v2336
        %v2433 = vunpack.c.l.b16 %v2337
        %v2434 = vunpack.c.l.b16 %v2338
        %v2435 = vunpack.c.l.b16 %v2339
        %v2436 = vunpack.c.l.b16 %v2340
        %v2437 = vunpack.c.l.b16 %v2341
        %v2438 = vunpack.c.l.b16 %v2342
        %v2439 = vunpack.c.l.b16 %v2343
        %v2440 = vunpack.c.l.b16 %v2344
        %v2441 = vunpack.c.l.b16 %v2345
        %v2442 = vunpack.c.l.b16 %v2346
        %v2443 = vpack.c.b16 %v2428, %v2427
        %v2444 = vpack.c.b16 %v2430, %v2429
        %v2445 = vpack.c.b16 %v2432, %v2431
        %v2446 = vpack.c.b16 %v2434, %v2433
        %v2447 = vpack.c.b16 %v2436, %v2435
        %v2448 = vpack.c.b16 %v2438, %v2437
        %v2449 = vpack.c.b16 %v2440, %v2439
        %v2450 = vpack.c.b16 %v2442, %v2441
        %2459 = vmatpush.bf16.msra.mxu0 %v2450
        %2460 = vmatpush.bf16.msra.mxu0 %v2449
        %2461 = vmatpush.bf16.msra.mxu0 %v2448
        %2462 = vmatpush.bf16.msra.mxu0 %v2447
        %2463 = vmatpush.bf16.msra.mxu0 %v2446
        %2464 = vmatpush.bf16.msra.mxu0 %v2445
        %2465 = vmatpush.bf16.msra.mxu0 %v2444
        %2466 = vmatpush.bf16.msra.mxu0 %v2443
        %2467 = vmatmul.bf16.gmra.mxu0 %v2379
        %v2468 = vpop.f32.mrf.mxu0
        %v2469 = vadd.f32 0.0, %v2468
        %v2470 = vpop.f32.mrf.mxu0
        %v2471 = vadd.f32 0.0, %v2470
        %2472 = vmatmul.bf16.gmra.mxu0 %v2380
        %v2473 = vpop.f32.mrf.mxu0
        %v2474 = vadd.f32 0.0, %v2473
        %v2475 = vpop.f32.mrf.mxu0
        %v2476 = vadd.f32 0.0, %v2475
        %2477 = vmatmul.bf16.gmra.mxu0 %v2381
        %v2478 = vpop.f32.mrf.mxu0
        %v2479 = vadd.f32 0.0, %v2478
        %v2480 = vpop.f32.mrf.mxu0
        %v2481 = vadd.f32 0.0, %v2480
        %2482 = vmatmul.bf16.gmra.mxu0 %v2382
        %v2483 = vpop.f32.mrf.mxu0
        %v2484 = vadd.f32 0.0, %v2483
        %v2485 = vpop.f32.mrf.mxu0
        %v2486 = vadd.f32 0.0, %v2485
        %2487 = vmatmul.bf16.gmra.mxu0 %v2383
        %v2488 = vpop.f32.mrf.mxu0
        %v2489 = vadd.f32 0.0, %v2488
        %v2490 = vpop.f32.mrf.mxu0
        %v2491 = vadd.f32 0.0, %v2490
        %2492 = vmatmul.bf16.gmra.mxu0 %v2384
        %v2493 = vpop.f32.mrf.mxu0
        %v2494 = vadd.f32 0.0, %v2493
        %v2495 = vpop.f32.mrf.mxu0
        %v2496 = vadd.f32 0.0, %v2495
        %2497 = vmatmul.bf16.gmra.mxu0 %v2385
        %v2498 = vpop.f32.mrf.mxu0
        %v2499 = vadd.f32 0.0, %v2498
        %v2500 = vpop.f32.mrf.mxu0
        %v2501 = vadd.f32 0.0, %v2500
        %2502 = vmatmul.bf16.gmra.mxu0 %v2386
        %v2503 = vpop.f32.mrf.mxu0
        %v2504 = vadd.f32 0.0, %v2503
        %v2505 = vpop.f32.mrf.mxu0
        %v2506 = vadd.f32 0.0, %v2505
        %2507 = vmatmul.bf16.gmra.mxu0 %v2387
        %v2508 = vpop.f32.mrf.mxu0
        %v2509 = vadd.f32 0.0, %v2508
        %v2510 = vpop.f32.mrf.mxu0
        %v2511 = vadd.f32 0.0, %v2510
        %2512 = vmatmul.bf16.gmra.mxu0 %v2388
        %v2513 = vpop.f32.mrf.mxu0
        %v2514 = vadd.f32 0.0, %v2513
        %v2515 = vpop.f32.mrf.mxu0
        %v2516 = vadd.f32 0.0, %v2515
        %2517 = vmatmul.bf16.gmra.mxu0 %v2389
        %v2518 = vpop.f32.mrf.mxu0
        %v2519 = vadd.f32 0.0, %v2518
        %v2520 = vpop.f32.mrf.mxu0
        %v2521 = vadd.f32 0.0, %v2520
        %2522 = vmatmul.bf16.gmra.mxu0 %v2390
        %v2523 = vpop.f32.mrf.mxu0
        %v2524 = vadd.f32 0.0, %v2523
        %v2525 = vpop.f32.mrf.mxu0
        %v2526 = vadd.f32 0.0, %v2525
        %2527 = vmatmul.bf16.gmra.mxu0 %v2391
        %v2528 = vpop.f32.mrf.mxu0
        %v2529 = vadd.f32 0.0, %v2528
        %v2530 = vpop.f32.mrf.mxu0
        %v2531 = vadd.f32 0.0, %v2530
        %2532 = vmatmul.bf16.gmra.mxu0 %v2392
        %v2533 = vpop.f32.mrf.mxu0
        %v2534 = vadd.f32 0.0, %v2533
        %v2535 = vpop.f32.mrf.mxu0
        %v2536 = vadd.f32 0.0, %v2535
        %2537 = vmatmul.bf16.gmra.mxu0 %v2393
        %v2538 = vpop.f32.mrf.mxu0
        %v2539 = vadd.f32 0.0, %v2538
        %v2540 = vpop.f32.mrf.mxu0
        %v2541 = vadd.f32 0.0, %v2540
        %2542 = vmatmul.bf16.gmra.mxu0 %v2394
        %v2543 = vpop.f32.mrf.mxu0
        %v2544 = vadd.f32 0.0, %v2543
        %v2545 = vpop.f32.mrf.mxu0
        %v2546 = vadd.f32 0.0, %v2545
        %2547 = vdwg.mxu0
        %v2548 = vadd.f32 %v2088, %v2469
        %v2549 = vadd.f32 %v2090, %v2471
        %v2550 = vadd.f32 %v2093, %v2474
        %v2551 = vadd.f32 %v2095, %v2476
        %v2552 = vadd.f32 %v2098, %v2479
        %v2553 = vadd.f32 %v2100, %v2481
        %v2554 = vadd.f32 %v2103, %v2484
        %v2555 = vadd.f32 %v2105, %v2486
        %v2556 = vadd.f32 %v2108, %v2489
        %v2557 = vadd.f32 %v2110, %v2491
        %v2558 = vadd.f32 %v2113, %v2494
        %v2559 = vadd.f32 %v2115, %v2496
        %v2560 = vadd.f32 %v2118, %v2499
        %v2561 = vadd.f32 %v2120, %v2501
        %v2562 = vadd.f32 %v2123, %v2504
        %v2563 = vadd.f32 %v2125, %v2506
        %v2564 = vadd.f32 %v2128, %v2509
        %v2565 = vadd.f32 %v2130, %v2511
        %v2566 = vadd.f32 %v2133, %v2514
        %v2567 = vadd.f32 %v2135, %v2516
        %v2568 = vadd.f32 %v2138, %v2519
        %v2569 = vadd.f32 %v2140, %v2521
        %v2570 = vadd.f32 %v2143, %v2524
        %v2571 = vadd.f32 %v2145, %v2526
        %v2572 = vadd.f32 %v2148, %v2529
        %v2573 = vadd.f32 %v2150, %v2531
        %v2574 = vadd.f32 %v2153, %v2534
        %v2575 = vadd.f32 %v2155, %v2536
        %v2576 = vadd.f32 %v2158, %v2539
        %v2577 = vadd.f32 %v2160, %v2541
        %v2578 = vadd.f32 %v2163, %v2544
        %v2579 = vadd.f32 %v2165, %v2546
        %v2580 = vld [vmem:[%s1147] sm:$0xf]
        %v2581 = vld [vmem:[%s1147 + $0x4] sm:$0xf]
        %v2582 = vld [vmem:[%s1147 + $0xc] sm:$0xf]
        %v2583 = vld [vmem:[%s1147 + $0x10] sm:$0xf]
        %v2584 = vld [vmem:[%s1147 + $0x18] sm:$0xf]
        %v2585 = vld [vmem:[%s1147 + $0x1c] sm:$0xf]
        %v2586 = vld [vmem:[%s1147 + $0x24] sm:$0xf]
        %v2587 = vld [vmem:[%s1147 + $0x28] sm:$0xf]
        %v2588 = vld [vmem:[%s1147 + $0x30] sm:$0xf]
        %v2589 = vld [vmem:[%s1147 + $0x34] sm:$0xf]
        %v2590 = vld [vmem:[%s1147 + $0x3c] sm:$0xf]
        %v2591 = vld [vmem:[%s1147 + $0x40] sm:$0xf]
        %v2592 = vld [vmem:[%s1147 + $0x48] sm:$0xf]
        %v2593 = vld [vmem:[%s1147 + $0x4c] sm:$0xf]
        %v2594 = vld [vmem:[%s1147 + $0x54] sm:$0xf]
        %v2595 = vld [vmem:[%s1147 + $0x58] sm:$0xf]
        %v2596 = vld [vmem:[%s1147 + $0x60] sm:$0xf]
        %v2597 = vld [vmem:[%s1147 + $0x64] sm:$0xf]
        %v2598 = vld [vmem:[%s1147 + $0x6c] sm:$0xf]
        %v2599 = vld [vmem:[%s1147 + $0x70] sm:$0xf]
        %v2600 = vld [vmem:[%s1147 + $0x78] sm:$0xf]
        %v2601 = vld [vmem:[%s1147 + $0x7c] sm:$0xf]
        %v2602 = vld [vmem:[%s1147 + $0x84] sm:$0xf]
        %v2603 = vld [vmem:[%s1147 + $0x88] sm:$0xf]
        %v2604 = vld [vmem:[%s1147 + $0x90] sm:$0xf]
        %v2605 = vld [vmem:[%s1147 + $0x94] sm:$0xf]
        %v2606 = vld [vmem:[%s1147 + $0x9c] sm:$0xf]
        %v2607 = vld [vmem:[%s1147 + $0xa0] sm:$0xf]
        %v2608 = vld [vmem:[%s1147 + $0xa8] sm:$0xf]
        %v2609 = vld [vmem:[%s1147 + $0xac] sm:$0xf]
        %v2610 = vld [vmem:[%s1147 + $0xb4] sm:$0xf]
        %v2611 = vld [vmem:[%s1147 + $0xb8] sm:$0xf]
        %s2612 = scalar_lea.vmem [#allocation3], 192
        %v2613 = vld [vmem:[%s2612] sm:$0xf]
        %v2614 = vld [vmem:[%s2612 + $0x4] sm:$0xf]
        %v2615 = vld [vmem:[%s2612 + $0x8] sm:$0xf]
        %v2616 = vld [vmem:[%s2612 + $0xc] sm:$0xf]
        %v2617 = vld [vmem:[%s2612 + $0x10] sm:$0xf]
        %v2618 = vld [vmem:[%s2612 + $0x14] sm:$0xf]
        %v2619 = vld [vmem:[%s2612 + $0x18] sm:$0xf]
        %v2620 = vld [vmem:[%s2612 + $0x1c] sm:$0xf]
        %v2621 = vld [vmem:[%s2612 + $0x20] sm:$0xf]
        %v2622 = vld [vmem:[%s2612 + $0x24] sm:$0xf]
        %v2623 = vld [vmem:[%s2612 + $0x28] sm:$0xf]
        %v2624 = vld [vmem:[%s2612 + $0x2c] sm:$0xf]
        %v2625 = vld [vmem:[%s2612 + $0x30] sm:$0xf]
        %v2626 = vld [vmem:[%s2612 + $0x34] sm:$0xf]
        %v2627 = vld [vmem:[%s2612 + $0x38] sm:$0xf]
        %v2628 = vld [vmem:[%s2612 + $0x3c] sm:$0xf]
        %v2661 = vunpack.c.l.b16 %v2580
        %v2662 = vunpack.c.l.b16 %v2581
        %v2663 = vunpack.c.l.b16 %v2582
        %v2664 = vunpack.c.l.b16 %v2583
        %v2665 = vunpack.c.l.b16 %v2584
        %v2666 = vunpack.c.l.b16 %v2585
        %v2667 = vunpack.c.l.b16 %v2586
        %v2668 = vunpack.c.l.b16 %v2587
        %v2669 = vunpack.c.l.b16 %v2588
        %v2670 = vunpack.c.l.b16 %v2589
        %v2671 = vunpack.c.l.b16 %v2590
        %v2672 = vunpack.c.l.b16 %v2591
        %v2673 = vunpack.c.l.b16 %v2592
        %v2674 = vunpack.c.l.b16 %v2593
        %v2675 = vunpack.c.l.b16 %v2594
        %v2676 = vunpack.c.l.b16 %v2595
        %v2677 = vunpack.c.l.b16 %v2596
        %v2678 = vunpack.c.l.b16 %v2597
        %v2679 = vunpack.c.l.b16 %v2598
        %v2680 = vunpack.c.l.b16 %v2599
        %v2681 = vunpack.c.l.b16 %v2600
        %v2682 = vunpack.c.l.b16 %v2601
        %v2683 = vunpack.c.l.b16 %v2602
        %v2684 = vunpack.c.l.b16 %v2603
        %v2685 = vunpack.c.l.b16 %v2604
        %v2686 = vunpack.c.l.b16 %v2605
        %v2687 = vunpack.c.l.b16 %v2606
        %v2688 = vunpack.c.l.b16 %v2607
        %v2689 = vunpack.c.l.b16 %v2608
        %v2690 = vunpack.c.l.b16 %v2609
        %v2691 = vunpack.c.l.b16 %v2610
        %v2692 = vunpack.c.l.b16 %v2611
        %v2693 = vpack.c.b16 %v2662, %v2661
        %v2694 = vpack.c.b16 %v2664, %v2663
        %v2695 = vpack.c.b16 %v2666, %v2665
        %v2696 = vpack.c.b16 %v2668, %v2667
        %v2697 = vpack.c.b16 %v2670, %v2669
        %v2698 = vpack.c.b16 %v2672, %v2671
        %v2699 = vpack.c.b16 %v2674, %v2673
        %v2700 = vpack.c.b16 %v2676, %v2675
        %v2701 = vpack.c.b16 %v2678, %v2677
        %v2702 = vpack.c.b16 %v2680, %v2679
        %v2703 = vpack.c.b16 %v2682, %v2681
        %v2704 = vpack.c.b16 %v2684, %v2683
        %v2705 = vpack.c.b16 %v2686, %v2685
        %v2706 = vpack.c.b16 %v2688, %v2687
        %v2707 = vpack.c.b16 %v2690, %v2689
        %v2708 = vpack.c.b16 %v2692, %v2691
        %v2741 = vunpack.c.l.b16 %v2613
        %v2742 = vunpack.c.l.b16 %v2614
        %v2743 = vunpack.c.l.b16 %v2615
        %v2744 = vunpack.c.l.b16 %v2616
        %v2745 = vunpack.c.l.b16 %v2617
        %v2746 = vunpack.c.l.b16 %v2618
        %v2747 = vunpack.c.l.b16 %v2619
        %v2748 = vunpack.c.l.b16 %v2620
        %v2749 = vunpack.c.l.b16 %v2621
        %v2750 = vunpack.c.l.b16 %v2622
        %v2751 = vunpack.c.l.b16 %v2623
        %v2752 = vunpack.c.l.b16 %v2624
        %v2753 = vunpack.c.l.b16 %v2625
        %v2754 = vunpack.c.l.b16 %v2626
        %v2755 = vunpack.c.l.b16 %v2627
        %v2756 = vunpack.c.l.b16 %v2628
        %v2757 = vpack.c.b16 %v2742, %v2741
        %v2758 = vpack.c.b16 %v2744, %v2743
        %v2759 = vpack.c.b16 %v2746, %v2745
        %v2760 = vpack.c.b16 %v2748, %v2747
        %v2761 = vpack.c.b16 %v2750, %v2749
        %v2762 = vpack.c.b16 %v2752, %v2751
        %v2763 = vpack.c.b16 %v2754, %v2753
        %v2764 = vpack.c.b16 %v2756, %v2755
        %2773 = vmatpush.bf16.msra.mxu0 %v2764
        %2774 = vmatpush.bf16.msra.mxu0 %v2763
        %2775 = vmatpush.bf16.msra.mxu0 %v2762
        %2776 = vmatpush.bf16.msra.mxu0 %v2761
        %2777 = vmatpush.bf16.msra.mxu0 %v2760
        %2778 = vmatpush.bf16.msra.mxu0 %v2759
        %2779 = vmatpush.bf16.msra.mxu0 %v2758
        %2780 = vmatpush.bf16.msra.mxu0 %v2757
        %2781 = vmatmul.bf16.gmra.mxu0 %v2693
        %v2782 = vpop.f32.mrf.mxu0
        %v2783 = vadd.f32 0.0, %v2782
        %v2784 = vpop.f32.mrf.mxu0
        %v2785 = vadd.f32 0.0, %v2784
        %2786 = vmatmul.bf16.gmra.mxu0 %v2694
        %v2787 = vpop.f32.mrf.mxu0
        %v2788 = vadd.f32 0.0, %v2787
        %v2789 = vpop.f32.mrf.mxu0
        %v2790 = vadd.f32 0.0, %v2789
        %2791 = vmatmul.bf16.gmra.mxu0 %v2695
        %v2792 = vpop.f32.mrf.mxu0
        %v2793 = vadd.f32 0.0, %v2792
        %v2794 = vpop.f32.mrf.mxu0
        %v2795 = vadd.f32 0.0, %v2794
        %2796 = vmatmul.bf16.gmra.mxu0 %v2696
        %v2797 = vpop.f32.mrf.mxu0
        %v2798 = vadd.f32 0.0, %v2797
        %v2799 = vpop.f32.mrf.mxu0
        %v2800 = vadd.f32 0.0, %v2799
        %2801 = vmatmul.bf16.gmra.mxu0 %v2697
        %v2802 = vpop.f32.mrf.mxu0
        %v2803 = vadd.f32 0.0, %v2802
        %v2804 = vpop.f32.mrf.mxu0
        %v2805 = vadd.f32 0.0, %v2804
        %2806 = vmatmul.bf16.gmra.mxu0 %v2698
        %v2807 = vpop.f32.mrf.mxu0
        %v2808 = vadd.f32 0.0, %v2807
        %v2809 = vpop.f32.mrf.mxu0
        %v2810 = vadd.f32 0.0, %v2809
        %2811 = vmatmul.bf16.gmra.mxu0 %v2699
        %v2812 = vpop.f32.mrf.mxu0
        %v2813 = vadd.f32 0.0, %v2812
        %v2814 = vpop.f32.mrf.mxu0
        %v2815 = vadd.f32 0.0, %v2814
        %2816 = vmatmul.bf16.gmra.mxu0 %v2700
        %v2817 = vpop.f32.mrf.mxu0
        %v2818 = vadd.f32 0.0, %v2817
        %v2819 = vpop.f32.mrf.mxu0
        %v2820 = vadd.f32 0.0, %v2819
        %2821 = vmatmul.bf16.gmra.mxu0 %v2701
        %v2822 = vpop.f32.mrf.mxu0
        %v2823 = vadd.f32 0.0, %v2822
        %v2824 = vpop.f32.mrf.mxu0
        %v2825 = vadd.f32 0.0, %v2824
        %2826 = vmatmul.bf16.gmra.mxu0 %v2702
        %v2827 = vpop.f32.mrf.mxu0
        %v2828 = vadd.f32 0.0, %v2827
        %v2829 = vpop.f32.mrf.mxu0
        %v2830 = vadd.f32 0.0, %v2829
        %2831 = vmatmul.bf16.gmra.mxu0 %v2703
        %v2832 = vpop.f32.mrf.mxu0
        %v2833 = vadd.f32 0.0, %v2832
        %v2834 = vpop.f32.mrf.mxu0
        %v2835 = vadd.f32 0.0, %v2834
        %2836 = vmatmul.bf16.gmra.mxu0 %v2704
        %v2837 = vpop.f32.mrf.mxu0
        %v2838 = vadd.f32 0.0, %v2837
        %v2839 = vpop.f32.mrf.mxu0
        %v2840 = vadd.f32 0.0, %v2839
        %2841 = vmatmul.bf16.gmra.mxu0 %v2705
        %v2842 = vpop.f32.mrf.mxu0
        %v2843 = vadd.f32 0.0, %v2842
        %v2844 = vpop.f32.mrf.mxu0
        %v2845 = vadd.f32 0.0, %v2844
        %2846 = vmatmul.bf16.gmra.mxu0 %v2706
        %v2847 = vpop.f32.mrf.mxu0
        %v2848 = vadd.f32 0.0, %v2847
        %v2849 = vpop.f32.mrf.mxu0
        %v2850 = vadd.f32 0.0, %v2849
        %2851 = vmatmul.bf16.gmra.mxu0 %v2707
        %v2852 = vpop.f32.mrf.mxu0
        %v2853 = vadd.f32 0.0, %v2852
        %v2854 = vpop.f32.mrf.mxu0
        %v2855 = vadd.f32 0.0, %v2854
        %2856 = vmatmul.bf16.gmra.mxu0 %v2708
        %v2857 = vpop.f32.mrf.mxu0
        %v2858 = vadd.f32 0.0, %v2857
        %v2859 = vpop.f32.mrf.mxu0
        %v2860 = vadd.f32 0.0, %v2859
        %2861 = vdwg.mxu0
        %v2862 = vadd.f32 %v2548, %v2783
        %v2863 = vadd.f32 %v2549, %v2785
        %v2864 = vadd.f32 %v2550, %v2788
        %v2865 = vadd.f32 %v2551, %v2790
        %v2866 = vadd.f32 %v2552, %v2793
        %v2867 = vadd.f32 %v2553, %v2795
        %v2868 = vadd.f32 %v2554, %v2798
        %v2869 = vadd.f32 %v2555, %v2800
        %v2870 = vadd.f32 %v2556, %v2803
        %v2871 = vadd.f32 %v2557, %v2805
        %v2872 = vadd.f32 %v2558, %v2808
        %v2873 = vadd.f32 %v2559, %v2810
        %v2874 = vadd.f32 %v2560, %v2813
        %v2875 = vadd.f32 %v2561, %v2815
        %v2876 = vadd.f32 %v2562, %v2818
        %v2877 = vadd.f32 %v2563, %v2820
        %v2878 = vadd.f32 %v2564, %v2823
        %v2879 = vadd.f32 %v2565, %v2825
        %v2880 = vadd.f32 %v2566, %v2828
        %v2881 = vadd.f32 %v2567, %v2830
        %v2882 = vadd.f32 %v2568, %v2833
        %v2883 = vadd.f32 %v2569, %v2835
        %v2884 = vadd.f32 %v2570, %v2838
        %v2885 = vadd.f32 %v2571, %v2840
        %v2886 = vadd.f32 %v2572, %v2843
        %v2887 = vadd.f32 %v2573, %v2845
        %v2888 = vadd.f32 %v2574, %v2848
        %v2889 = vadd.f32 %v2575, %v2850
        %v2890 = vadd.f32 %v2576, %v2853
        %v2891 = vadd.f32 %v2577, %v2855
        %v2892 = vadd.f32 %v2578, %v2858
        %v2893 = vadd.f32 %v2579, %v2860
        %v2894 = vld [vmem:[%s1147] sm:$0xf]
        %v2895 = vld [vmem:[%s1147 + $0x4] sm:$0xf]
        %v2896 = vld [vmem:[%s1147 + $0x8] sm:$0x1]
        %v2897 = vld [vmem:[%s1147 + $0xc] sm:$0xf]
        %v2898 = vld [vmem:[%s1147 + $0x10] sm:$0xf]
        %v2899 = vld [vmem:[%s1147 + $0x14] sm:$0x1]
        %v2900 = vld [vmem:[%s1147 + $0x18] sm:$0xf]
        %v2901 = vld [vmem:[%s1147 + $0x1c] sm:$0xf]
        %v2902 = vld [vmem:[%s1147 + $0x20] sm:$0x1]
        %v2903 = vld [vmem:[%s1147 + $0x24] sm:$0xf]
        %v2904 = vld [vmem:[%s1147 + $0x28] sm:$0xf]
        %v2905 = vld [vmem:[%s1147 + $0x2c] sm:$0x1]
        %v2906 = vld [vmem:[%s1147 + $0x30] sm:$0xf]
        %v2907 = vld [vmem:[%s1147 + $0x34] sm:$0xf]
        %v2908 = vld [vmem:[%s1147 + $0x38] sm:$0x1]
        %v2909 = vld [vmem:[%s1147 + $0x3c] sm:$0xf]
        %v2910 = vld [vmem:[%s1147 + $0x40] sm:$0xf]
        %v2911 = vld [vmem:[%s1147 + $0x44] sm:$0x1]
        %v2912 = vld [vmem:[%s1147 + $0x48] sm:$0xf]
        %v2913 = vld [vmem:[%s1147 + $0x4c] sm:$0xf]
        %v2914 = vld [vmem:[%s1147 + $0x50] sm:$0x1]
        %v2915 = vld [vmem:[%s1147 + $0x54] sm:$0xf]
        %v2916 = vld [vmem:[%s1147 + $0x58] sm:$0xf]
        %v2917 = vld [vmem:[%s1147 + $0x5c] sm:$0x1]
        %v2918 = vld [vmem:[%s1147 + $0x60] sm:$0xf]
        %v2919 = vld [vmem:[%s1147 + $0x64] sm:$0xf]
        %v2920 = vld [vmem:[%s1147 + $0x68] sm:$0x1]
        %v2921 = vld [vmem:[%s1147 + $0x6c] sm:$0xf]
        %v2922 = vld [vmem:[%s1147 + $0x70] sm:$0xf]
        %v2923 = vld [vmem:[%s1147 + $0x74] sm:$0x1]
        %v2924 = vld [vmem:[%s1147 + $0x78] sm:$0xf]
        %v2925 = vld [vmem:[%s1147 + $0x7c] sm:$0xf]
        %v2926 = vld [vmem:[%s1147 + $0x80] sm:$0x1]
        %v2927 = vld [vmem:[%s1147 + $0x84] sm:$0xf]
        %v2928 = vld [vmem:[%s1147 + $0x88] sm:$0xf]
        %v2929 = vld [vmem:[%s1147 + $0x8c] sm:$0x1]
        %v2930 = vld [vmem:[%s1147 + $0x90] sm:$0xf]
        %v2931 = vld [vmem:[%s1147 + $0x94] sm:$0xf]
        %v2932 = vld [vmem:[%s1147 + $0x98] sm:$0x1]
        %v2933 = vld [vmem:[%s1147 + $0x9c] sm:$0xf]
        %v2934 = vld [vmem:[%s1147 + $0xa0] sm:$0xf]
        %v2935 = vld [vmem:[%s1147 + $0xa4] sm:$0x1]
        %v2936 = vld [vmem:[%s1147 + $0xa8] sm:$0xf]
        %v2937 = vld [vmem:[%s1147 + $0xac] sm:$0xf]
        %v2938 = vld [vmem:[%s1147 + $0xb0] sm:$0x1]
        %v2939 = vld [vmem:[%s1147 + $0xb4] sm:$0xf]
        %v2940 = vld [vmem:[%s1147 + $0xb8] sm:$0xf]
        %v2941 = vld [vmem:[%s1147 + $0xbc] sm:$0x1]
        %v2943 = vshrl.u32 %v2894, 16
        %v2945 = vrot.slane %v2943, 4
        %v2946 = vshll.u32 %v2894, 16
        %v2948 = vrot.slane %v2946, 5
        %v2949 = vor.u32 %v2945, %v2948
        %v2950 = vrot.slane %v2949, 4
        %v2952 = vshll.u32 %v2895, 16
        %v2954 = vrot.slane %v2952, 5
        %v2955 = vsel %vm1331, %v2950, %v2954
        %v2956 = vshrl.u32 %v2895, 16
        %v2958 = vrot.slane %v2956, 4
        %v2959 = vor.u32 %v2958, %v2954
        %v2960 = vrot.slane %v2959, 4
        %v2962 = vshll.u32 %v2896, 16
        %v2964 = vrot.slane %v2962, 5
        %v2965 = vsel %vm1331, %v2960, %v2964
        %v2967 = vshrl.u32 %v2897, 16
        %v2969 = vrot.slane %v2967, 4
        %v2970 = vshll.u32 %v2897, 16
        %v2972 = vrot.slane %v2970, 5
        %v2973 = vor.u32 %v2969, %v2972
        %v2974 = vrot.slane %v2973, 4
        %v2976 = vshll.u32 %v2898, 16
        %v2978 = vrot.slane %v2976, 5
        %v2979 = vsel %vm1331, %v2974, %v2978
        %v2980 = vshrl.u32 %v2898, 16
        %v2982 = vrot.slane %v2980, 4
        %v2983 = vor.u32 %v2982, %v2978
        %v2984 = vrot.slane %v2983, 4
        %v2986 = vshll.u32 %v2899, 16
        %v2988 = vrot.slane %v2986, 5
        %v2989 = vsel %vm1331, %v2984, %v2988
        %v2991 = vshrl.u32 %v2900, 16
        %v2993 = vrot.slane %v2991, 4
        %v2994 = vshll.u32 %v2900, 16
        %v2996 = vrot.slane %v2994, 5
        %v2997 = vor.u32 %v2993, %v2996
        %v2998 = vrot.slane %v2997, 4
        %v3000 = vshll.u32 %v2901, 16
        %v3002 = vrot.slane %v3000, 5
        %v3003 = vsel %vm1331, %v2998, %v3002
        %v3004 = vshrl.u32 %v2901, 16
        %v3006 = vrot.slane %v3004, 4
        %v3007 = vor.u32 %v3006, %v3002
        %v3008 = vrot.slane %v3007, 4
        %v3010 = vshll.u32 %v2902, 16
        %v3012 = vrot.slane %v3010, 5
        %v3013 = vsel %vm1331, %v3008, %v3012
        %v3015 = vshrl.u32 %v2903, 16
        %v3017 = vrot.slane %v3015, 4
        %v3018 = vshll.u32 %v2903, 16
        %v3020 = vrot.slane %v3018, 5
        %v3021 = vor.u32 %v3017, %v3020
        %v3022 = vrot.slane %v3021, 4
        %v3024 = vshll.u32 %v2904, 16
        %v3026 = vrot.slane %v3024, 5
        %v3027 = vsel %vm1331, %v3022, %v3026
        %v3028 = vshrl.u32 %v2904, 16
        %v3030 = vrot.slane %v3028, 4
        %v3031 = vor.u32 %v3030, %v3026
        %v3032 = vrot.slane %v3031, 4
        %v3034 = vshll.u32 %v2905, 16
        %v3036 = vrot.slane %v3034, 5
        %v3037 = vsel %vm1331, %v3032, %v3036
        %v3039 = vshrl.u32 %v2906, 16
        %v3041 = vrot.slane %v3039, 4
        %v3042 = vshll.u32 %v2906, 16
        %v3044 = vrot.slane %v3042, 5
        %v3045 = vor.u32 %v3041, %v3044
        %v3046 = vrot.slane %v3045, 4
        %v3048 = vshll.u32 %v2907, 16
        %v3050 = vrot.slane %v3048, 5
        %v3051 = vsel %vm1331, %v3046, %v3050
        %v3052 = vshrl.u32 %v2907, 16
        %v3054 = vrot.slane %v3052, 4
        %v3055 = vor.u32 %v3054, %v3050
        %v3056 = vrot.slane %v3055, 4
        %v3058 = vshll.u32 %v2908, 16
        %v3060 = vrot.slane %v3058, 5
        %v3061 = vsel %vm1331, %v3056, %v3060
        %v3063 = vshrl.u32 %v2909, 16
        %v3065 = vrot.slane %v3063, 4
        %v3066 = vshll.u32 %v2909, 16
        %v3068 = vrot.slane %v3066, 5
        %v3069 = vor.u32 %v3065, %v3068
        %v3070 = vrot.slane %v3069, 4
        %v3072 = vshll.u32 %v2910, 16
        %v3074 = vrot.slane %v3072, 5
        %v3075 = vsel %vm1331, %v3070, %v3074
        %v3076 = vshrl.u32 %v2910, 16
        %v3078 = vrot.slane %v3076, 4
        %v3079 = vor.u32 %v3078, %v3074
        %v3080 = vrot.slane %v3079, 4
        %v3082 = vshll.u32 %v2911, 16
        %v3084 = vrot.slane %v3082, 5
        %v3085 = vsel %vm1331, %v3080, %v3084
        %v3087 = vshrl.u32 %v2912, 16
        %v3089 = vrot.slane %v3087, 4
        %v3090 = vshll.u32 %v2912, 16
        %v3092 = vrot.slane %v3090, 5
        %v3093 = vor.u32 %v3089, %v3092
        %v3094 = vrot.slane %v3093, 4
        %v3096 = vshll.u32 %v2913, 16
        %v3098 = vrot.slane %v3096, 5
        %v3099 = vsel %vm1331, %v3094, %v3098
        %v3100 = vshrl.u32 %v2913, 16
        %v3102 = vrot.slane %v3100, 4
        %v3103 = vor.u32 %v3102, %v3098
        %v3104 = vrot.slane %v3103, 4
        %v3106 = vshll.u32 %v2914, 16
        %v3108 = vrot.slane %v3106, 5
        %v3109 = vsel %vm1331, %v3104, %v3108
        %v3111 = vshrl.u32 %v2915, 16
        %v3113 = vrot.slane %v3111, 4
        %v3114 = vshll.u32 %v2915, 16
        %v3116 = vrot.slane %v3114, 5
        %v3117 = vor.u32 %v3113, %v3116
        %v3118 = vrot.slane %v3117, 4
        %v3120 = vshll.u32 %v2916, 16
        %v3122 = vrot.slane %v3120, 5
        %v3123 = vsel %vm1331, %v3118, %v3122
        %v3124 = vshrl.u32 %v2916, 16
        %v3126 = vrot.slane %v3124, 4
        %v3127 = vor.u32 %v3126, %v3122
        %v3128 = vrot.slane %v3127, 4
        %v3130 = vshll.u32 %v2917, 16
        %v3132 = vrot.slane %v3130, 5
        %v3133 = vsel %vm1331, %v3128, %v3132
        %v3135 = vshrl.u32 %v2918, 16
        %v3137 = vrot.slane %v3135, 4
        %v3138 = vshll.u32 %v2918, 16
        %v3140 = vrot.slane %v3138, 5
        %v3141 = vor.u32 %v3137, %v3140
        %v3142 = vrot.slane %v3141, 4
        %v3144 = vshll.u32 %v2919, 16
        %v3146 = vrot.slane %v3144, 5
        %v3147 = vsel %vm1331, %v3142, %v3146
        %v3148 = vshrl.u32 %v2919, 16
        %v3150 = vrot.slane %v3148, 4
        %v3151 = vor.u32 %v3150, %v3146
        %v3152 = vrot.slane %v3151, 4
        %v3154 = vshll.u32 %v2920, 16
        %v3156 = vrot.slane %v3154, 5
        %v3157 = vsel %vm1331, %v3152, %v3156
        %v3159 = vshrl.u32 %v2921, 16
        %v3161 = vrot.slane %v3159, 4
        %v3162 = vshll.u32 %v2921, 16
        %v3164 = vrot.slane %v3162, 5
        %v3165 = vor.u32 %v3161, %v3164
        %v3166 = vrot.slane %v3165, 4
        %v3168 = vshll.u32 %v2922, 16
        %v3170 = vrot.slane %v3168, 5
        %v3171 = vsel %vm1331, %v3166, %v3170
        %v3172 = vshrl.u32 %v2922, 16
        %v3174 = vrot.slane %v3172, 4
        %v3175 = vor.u32 %v3174, %v3170
        %v3176 = vrot.slane %v3175, 4
        %v3178 = vshll.u32 %v2923, 16
        %v3180 = vrot.slane %v3178, 5
        %v3181 = vsel %vm1331, %v3176, %v3180
        %v3183 = vshrl.u32 %v2924, 16
        %v3185 = vrot.slane %v3183, 4
        %v3186 = vshll.u32 %v2924, 16
        %v3188 = vrot.slane %v3186, 5
        %v3189 = vor.u32 %v3185, %v3188
        %v3190 = vrot.slane %v3189, 4
        %v3192 = vshll.u32 %v2925, 16
        %v3194 = vrot.slane %v3192, 5
        %v3195 = vsel %vm1331, %v3190, %v3194
        %v3196 = vshrl.u32 %v2925, 16
        %v3198 = vrot.slane %v3196, 4
        %v3199 = vor.u32 %v3198, %v3194
        %v3200 = vrot.slane %v3199, 4
        %v3202 = vshll.u32 %v2926, 16
        %v3204 = vrot.slane %v3202, 5
        %v3205 = vsel %vm1331, %v3200, %v3204
        %v3207 = vshrl.u32 %v2927, 16
        %v3209 = vrot.slane %v3207, 4
        %v3210 = vshll.u32 %v2927, 16
        %v3212 = vrot.slane %v3210, 5
        %v3213 = vor.u32 %v3209, %v3212
        %v3214 = vrot.slane %v3213, 4
        %v3216 = vshll.u32 %v2928, 16
        %v3218 = vrot.slane %v3216, 5
        %v3219 = vsel %vm1331, %v3214, %v3218
        %v3220 = vshrl.u32 %v2928, 16
        %v3222 = vrot.slane %v3220, 4
        %v3223 = vor.u32 %v3222, %v3218
        %v3224 = vrot.slane %v3223, 4
        %v3226 = vshll.u32 %v2929, 16
        %v3228 = vrot.slane %v3226, 5
        %v3229 = vsel %vm1331, %v3224, %v3228
        %v3231 = vshrl.u32 %v2930, 16
        %v3233 = vrot.slane %v3231, 4
        %v3234 = vshll.u32 %v2930, 16
        %v3236 = vrot.slane %v3234, 5
        %v3237 = vor.u32 %v3233, %v3236
        %v3238 = vrot.slane %v3237, 4
        %v3240 = vshll.u32 %v2931, 16
        %v3242 = vrot.slane %v3240, 5
        %v3243 = vsel %vm1331, %v3238, %v3242
        %v3244 = vshrl.u32 %v2931, 16
        %v3246 = vrot.slane %v3244, 4
        %v3247 = vor.u32 %v3246, %v3242
        %v3248 = vrot.slane %v3247, 4
        %v3250 = vshll.u32 %v2932, 16
        %v3252 = vrot.slane %v3250, 5
        %v3253 = vsel %vm1331, %v3248, %v3252
        %v3255 = vshrl.u32 %v2933, 16
        %v3257 = vrot.slane %v3255, 4
        %v3258 = vshll.u32 %v2933, 16
        %v3260 = vrot.slane %v3258, 5
        %v3261 = vor.u32 %v3257, %v3260
        %v3262 = vrot.slane %v3261, 4
        %v3264 = vshll.u32 %v2934, 16
        %v3266 = vrot.slane %v3264, 5
        %v3267 = vsel %vm1331, %v3262, %v3266
        %v3268 = vshrl.u32 %v2934, 16
        %v3270 = vrot.slane %v3268, 4
        %v3271 = vor.u32 %v3270, %v3266
        %v3272 = vrot.slane %v3271, 4
        %v3274 = vshll.u32 %v2935, 16
        %v3276 = vrot.slane %v3274, 5
        %v3277 = vsel %vm1331, %v3272, %v3276
        %v3279 = vshrl.u32 %v2936, 16
        %v3281 = vrot.slane %v3279, 4
        %v3282 = vshll.u32 %v2936, 16
        %v3284 = vrot.slane %v3282, 5
        %v3285 = vor.u32 %v3281, %v3284
        %v3286 = vrot.slane %v3285, 4
        %v3288 = vshll.u32 %v2937, 16
        %v3290 = vrot.slane %v3288, 5
        %v3291 = vsel %vm1331, %v3286, %v3290
        %v3292 = vshrl.u32 %v2937, 16
        %v3294 = vrot.slane %v3292, 4
        %v3295 = vor.u32 %v3294, %v3290
        %v3296 = vrot.slane %v3295, 4
        %v3298 = vshll.u32 %v2938, 16
        %v3300 = vrot.slane %v3298, 5
        %v3301 = vsel %vm1331, %v3296, %v3300
        %v3303 = vshrl.u32 %v2939, 16
        %v3305 = vrot.slane %v3303, 4
        %v3306 = vshll.u32 %v2939, 16
        %v3308 = vrot.slane %v3306, 5
        %v3309 = vor.u32 %v3305, %v3308
        %v3310 = vrot.slane %v3309, 4
        %v3312 = vshll.u32 %v2940, 16
        %v3314 = vrot.slane %v3312, 5
        %v3315 = vsel %vm1331, %v3310, %v3314
        %v3316 = vshrl.u32 %v2940, 16
        %v3318 = vrot.slane %v3316, 4
        %v3319 = vor.u32 %v3318, %v3314
        %v3320 = vrot.slane %v3319, 4
        %v3322 = vshll.u32 %v2941, 16
        %v3324 = vrot.slane %v3322, 5
        %v3325 = vsel %vm1331, %v3320, %v3324
        %s3326 = scalar_lea.vmem [#allocation3], 256
        %v3327 = vld [vmem:[%s3326] sm:$0xf]
        %v3328 = vld [vmem:[%s3326 + $0x4] sm:$0xf]
        %v3329 = vld [vmem:[%s3326 + $0x8] sm:$0xf]
        %v3330 = vld [vmem:[%s3326 + $0xc] sm:$0xf]
        %v3331 = vld [vmem:[%s3326 + $0x10] sm:$0xf]
        %v3332 = vld [vmem:[%s3326 + $0x14] sm:$0xf]
        %v3333 = vld [vmem:[%s3326 + $0x18] sm:$0xf]
        %v3334 = vld [vmem:[%s3326 + $0x1c] sm:$0xf]
        %v3335 = vld [vmem:[%s3326 + $0x20] sm:$0xf]
        %v3336 = vld [vmem:[%s3326 + $0x24] sm:$0xf]
        %v3337 = vld [vmem:[%s3326 + $0x28] sm:$0xf]
        %v3338 = vld [vmem:[%s3326 + $0x2c] sm:$0xf]
        %v3339 = vld [vmem:[%s3326 + $0x30] sm:$0xf]
        %v3340 = vld [vmem:[%s3326 + $0x34] sm:$0xf]
        %v3341 = vld [vmem:[%s3326 + $0x38] sm:$0xf]
        %v3342 = vld [vmem:[%s3326 + $0x3c] sm:$0xf]
        %v3343 = vunpack.c.l.b16 %v2955
        %v3344 = vunpack.c.l.b16 %v2965
        %v3345 = vunpack.c.l.b16 %v2979
        %v3346 = vunpack.c.l.b16 %v2989
        %v3347 = vunpack.c.l.b16 %v3003
        %v3348 = vunpack.c.l.b16 %v3013
        %v3349 = vunpack.c.l.b16 %v3027
        %v3350 = vunpack.c.l.b16 %v3037
        %v3351 = vunpack.c.l.b16 %v3051
        %v3352 = vunpack.c.l.b16 %v3061
        %v3353 = vunpack.c.l.b16 %v3075
        %v3354 = vunpack.c.l.b16 %v3085
        %v3355 = vunpack.c.l.b16 %v3099
        %v3356 = vunpack.c.l.b16 %v3109
        %v3357 = vunpack.c.l.b16 %v3123
        %v3358 = vunpack.c.l.b16 %v3133
        %v3359 = vunpack.c.l.b16 %v3147
        %v3360 = vunpack.c.l.b16 %v3157
        %v3361 = vunpack.c.l.b16 %v3171
        %v3362 = vunpack.c.l.b16 %v3181
        %v3363 = vunpack.c.l.b16 %v3195
        %v3364 = vunpack.c.l.b16 %v3205
        %v3365 = vunpack.c.l.b16 %v3219
        %v3366 = vunpack.c.l.b16 %v3229
        %v3367 = vunpack.c.l.b16 %v3243
        %v3368 = vunpack.c.l.b16 %v3253
        %v3369 = vunpack.c.l.b16 %v3267
        %v3370 = vunpack.c.l.b16 %v3277
        %v3371 = vunpack.c.l.b16 %v3291
        %v3372 = vunpack.c.l.b16 %v3301
        %v3373 = vunpack.c.l.b16 %v3315
        %v3374 = vunpack.c.l.b16 %v3325
        %v3375 = vpack.c.b16 %v3344, %v3343
        %v3376 = vpack.c.b16 %v3346, %v3345
        %v3377 = vpack.c.b16 %v3348, %v3347
        %v3378 = vpack.c.b16 %v3350, %v3349
        %v3379 = vpack.c.b16 %v3352, %v3351
        %v3380 = vpack.c.b16 %v3354, %v3353
        %v3381 = vpack.c.b16 %v3356, %v3355
        %v3382 = vpack.c.b16 %v3358, %v3357
        %v3383 = vpack.c.b16 %v3360, %v3359
        %v3384 = vpack.c.b16 %v3362, %v3361
        %v3385 = vpack.c.b16 %v3364, %v3363
        %v3386 = vpack.c.b16 %v3366, %v3365
        %v3387 = vpack.c.b16 %v3368, %v3367
        %v3388 = vpack.c.b16 %v3370, %v3369
        %v3389 = vpack.c.b16 %v3372, %v3371
        %v3390 = vpack.c.b16 %v3374, %v3373
        %v3423 = vunpack.c.l.b16 %v3327
        %v3424 = vunpack.c.l.b16 %v3328
        %v3425 = vunpack.c.l.b16 %v3329
        %v3426 = vunpack.c.l.b16 %v3330
        %v3427 = vunpack.c.l.b16 %v3331
        %v3428 = vunpack.c.l.b16 %v3332
        %v3429 = vunpack.c.l.b16 %v3333
        %v3430 = vunpack.c.l.b16 %v3334
        %v3431 = vunpack.c.l.b16 %v3335
        %v3432 = vunpack.c.l.b16 %v3336
        %v3433 = vunpack.c.l.b16 %v3337
        %v3434 = vunpack.c.l.b16 %v3338
        %v3435 = vunpack.c.l.b16 %v3339
        %v3436 = vunpack.c.l.b16 %v3340
        %v3437 = vunpack.c.l.b16 %v3341
        %v3438 = vunpack.c.l.b16 %v3342
        %v3439 = vpack.c.b16 %v3424, %v3423
        %v3440 = vpack.c.b16 %v3426, %v3425
        %v3441 = vpack.c.b16 %v3428, %v3427
        %v3442 = vpack.c.b16 %v3430, %v3429
        %v3443 = vpack.c.b16 %v3432, %v3431
        %v3444 = vpack.c.b16 %v3434, %v3433
        %v3445 = vpack.c.b16 %v3436, %v3435
        %v3446 = vpack.c.b16 %v3438, %v3437
        %3455 = vmatpush.bf16.msra.mxu0 %v3446
        %3456 = vmatpush.bf16.msra.mxu0 %v3445
        %3457 = vmatpush.bf16.msra.mxu0 %v3444
        %3458 = vmatpush.bf16.msra.mxu0 %v3443
        %3459 = vmatpush.bf16.msra.mxu0 %v3442
        %3460 = vmatpush.bf16.msra.mxu0 %v3441
        %3461 = vmatpush.bf16.msra.mxu0 %v3440
        %3462 = vmatpush.bf16.msra.mxu0 %v3439
        %3463 = vmatmul.bf16.gmra.mxu0 %v3375
        %v3464 = vpop.f32.mrf.mxu0
        %v3465 = vadd.f32 0.0, %v3464
        %v3466 = vpop.f32.mrf.mxu0
        %v3467 = vadd.f32 0.0, %v3466
        %3468 = vmatmul.bf16.gmra.mxu0 %v3376
        %v3469 = vpop.f32.mrf.mxu0
        %v3470 = vadd.f32 0.0, %v3469
        %v3471 = vpop.f32.mrf.mxu0
        %v3472 = vadd.f32 0.0, %v3471
        %3473 = vmatmul.bf16.gmra.mxu0 %v3377
        %v3474 = vpop.f32.mrf.mxu0
        %v3475 = vadd.f32 0.0, %v3474
        %v3476 = vpop.f32.mrf.mxu0
        %v3477 = vadd.f32 0.0, %v3476
        %3478 = vmatmul.bf16.gmra.mxu0 %v3378
        %v3479 = vpop.f32.mrf.mxu0
        %v3480 = vadd.f32 0.0, %v3479
        %v3481 = vpop.f32.mrf.mxu0
        %v3482 = vadd.f32 0.0, %v3481
        %3483 = vmatmul.bf16.gmra.mxu0 %v3379
        %v3484 = vpop.f32.mrf.mxu0
        %v3485 = vadd.f32 0.0, %v3484
        %v3486 = vpop.f32.mrf.mxu0
        %v3487 = vadd.f32 0.0, %v3486
        %3488 = vmatmul.bf16.gmra.mxu0 %v3380
        %v3489 = vpop.f32.mrf.mxu0
        %v3490 = vadd.f32 0.0, %v3489
        %v3491 = vpop.f32.mrf.mxu0
        %v3492 = vadd.f32 0.0, %v3491
        %3493 = vmatmul.bf16.gmra.mxu0 %v3381
        %v3494 = vpop.f32.mrf.mxu0
        %v3495 = vadd.f32 0.0, %v3494
        %v3496 = vpop.f32.mrf.mxu0
        %v3497 = vadd.f32 0.0, %v3496
        %3498 = vmatmul.bf16.gmra.mxu0 %v3382
        %v3499 = vpop.f32.mrf.mxu0
        %v3500 = vadd.f32 0.0, %v3499
        %v3501 = vpop.f32.mrf.mxu0
        %v3502 = vadd.f32 0.0, %v3501
        %3503 = vmatmul.bf16.gmra.mxu0 %v3383
        %v3504 = vpop.f32.mrf.mxu0
        %v3505 = vadd.f32 0.0, %v3504
        %v3506 = vpop.f32.mrf.mxu0
        %v3507 = vadd.f32 0.0, %v3506
        %3508 = vmatmul.bf16.gmra.mxu0 %v3384
        %v3509 = vpop.f32.mrf.mxu0
        %v3510 = vadd.f32 0.0, %v3509
        %v3511 = vpop.f32.mrf.mxu0
        %v3512 = vadd.f32 0.0, %v3511
        %3513 = vmatmul.bf16.gmra.mxu0 %v3385
        %v3514 = vpop.f32.mrf.mxu0
        %v3515 = vadd.f32 0.0, %v3514
        %v3516 = vpop.f32.mrf.mxu0
        %v3517 = vadd.f32 0.0, %v3516
        %3518 = vmatmul.bf16.gmra.mxu0 %v3386
        %v3519 = vpop.f32.mrf.mxu0
        %v3520 = vadd.f32 0.0, %v3519
        %v3521 = vpop.f32.mrf.mxu0
        %v3522 = vadd.f32 0.0, %v3521
        %3523 = vmatmul.bf16.gmra.mxu0 %v3387
        %v3524 = vpop.f32.mrf.mxu0
        %v3525 = vadd.f32 0.0, %v3524
        %v3526 = vpop.f32.mrf.mxu0
        %v3527 = vadd.f32 0.0, %v3526
        %3528 = vmatmul.bf16.gmra.mxu0 %v3388
        %v3529 = vpop.f32.mrf.mxu0
        %v3530 = vadd.f32 0.0, %v3529
        %v3531 = vpop.f32.mrf.mxu0
        %v3532 = vadd.f32 0.0, %v3531
        %3533 = vmatmul.bf16.gmra.mxu0 %v3389
        %v3534 = vpop.f32.mrf.mxu0
        %v3535 = vadd.f32 0.0, %v3534
        %v3536 = vpop.f32.mrf.mxu0
        %v3537 = vadd.f32 0.0, %v3536
        %3538 = vmatmul.bf16.gmra.mxu0 %v3390
        %v3539 = vpop.f32.mrf.mxu0
        %v3540 = vadd.f32 0.0, %v3539
        %v3541 = vpop.f32.mrf.mxu0
        %v3542 = vadd.f32 0.0, %v3541
        %3543 = vdwg.mxu0
        %v3544 = vadd.f32 %v2862, %v3465
        %v3545 = vadd.f32 %v2863, %v3467
        %v3546 = vadd.f32 %v2864, %v3470
        %v3547 = vadd.f32 %v2865, %v3472
        %v3548 = vadd.f32 %v2866, %v3475
        %v3549 = vadd.f32 %v2867, %v3477
        %v3550 = vadd.f32 %v2868, %v3480
        %v3551 = vadd.f32 %v2869, %v3482
        %v3552 = vadd.f32 %v2870, %v3485
        %v3553 = vadd.f32 %v2871, %v3487
        %v3554 = vadd.f32 %v2872, %v3490
        %v3555 = vadd.f32 %v2873, %v3492
        %v3556 = vadd.f32 %v2874, %v3495
        %v3557 = vadd.f32 %v2875, %v3497
        %v3558 = vadd.f32 %v2876, %v3500
        %v3559 = vadd.f32 %v2877, %v3502
        %v3560 = vadd.f32 %v2878, %v3505
        %v3561 = vadd.f32 %v2879, %v3507
        %v3562 = vadd.f32 %v2880, %v3510
        %v3563 = vadd.f32 %v2881, %v3512
        %v3564 = vadd.f32 %v2882, %v3515
        %v3565 = vadd.f32 %v2883, %v3517
        %v3566 = vadd.f32 %v2884, %v3520
        %v3567 = vadd.f32 %v2885, %v3522
        %v3568 = vadd.f32 %v2886, %v3525
        %v3569 = vadd.f32 %v2887, %v3527
        %v3570 = vadd.f32 %v2888, %v3530
        %v3571 = vadd.f32 %v2889, %v3532
        %v3572 = vadd.f32 %v2890, %v3535
        %v3573 = vadd.f32 %v2891, %v3537
        %v3574 = vadd.f32 %v2892, %v3540
        %v3575 = vadd.f32 %v2893, %v3542
        %v3576 = vld [vmem:[%s1147] sm:$0xe]
        %v3577 = vld [vmem:[%s1147 + $0xc] sm:$0xe]
        %v3578 = vld [vmem:[%s1147 + $0x18] sm:$0xe]
        %v3579 = vld [vmem:[%s1147 + $0x24] sm:$0xe]
        %v3580 = vld [vmem:[%s1147 + $0x30] sm:$0xe]
        %v3581 = vld [vmem:[%s1147 + $0x3c] sm:$0xe]
        %v3582 = vld [vmem:[%s1147 + $0x48] sm:$0xe]
        %v3583 = vld [vmem:[%s1147 + $0x54] sm:$0xe]
        %v3584 = vld [vmem:[%s1147 + $0x60] sm:$0xe]
        %v3585 = vld [vmem:[%s1147 + $0x6c] sm:$0xe]
        %v3586 = vld [vmem:[%s1147 + $0x78] sm:$0xe]
        %v3587 = vld [vmem:[%s1147 + $0x84] sm:$0xe]
        %v3588 = vld [vmem:[%s1147 + $0x90] sm:$0xe]
        %v3589 = vld [vmem:[%s1147 + $0x9c] sm:$0xe]
        %v3590 = vld [vmem:[%s1147 + $0xa8] sm:$0xe]
        %v3591 = vld [vmem:[%s1147 + $0xb4] sm:$0xe]
        %v3640 = vrot.slane %v3576, 5
        %v3641 = vrot.slane %v3640, 4
        %v3642 = vrot.slane %v2895, 5
        %v3643 = vsel %vm2217, %v3641, %v3642
        %v3644 = vrot.slane %v3642, 4
        %v3645 = vrot.slane %v2896, 5
        %v3646 = vsel %vm2217, %v3644, %v3645
        %v3647 = vrot.slane %v3577, 5
        %v3648 = vrot.slane %v3647, 4
        %v3649 = vrot.slane %v2898, 5
        %v3650 = vsel %vm2217, %v3648, %v3649
        %v3651 = vrot.slane %v3649, 4
        %v3652 = vrot.slane %v2899, 5
        %v3653 = vsel %vm2217, %v3651, %v3652
        %v3654 = vrot.slane %v3578, 5
        %v3655 = vrot.slane %v3654, 4
        %v3656 = vrot.slane %v2901, 5
        %v3657 = vsel %vm2217, %v3655, %v3656
        %v3658 = vrot.slane %v3656, 4
        %v3659 = vrot.slane %v2902, 5
        %v3660 = vsel %vm2217, %v3658, %v3659
        %v3661 = vrot.slane %v3579, 5
        %v3662 = vrot.slane %v3661, 4
        %v3663 = vrot.slane %v2904, 5
        %v3664 = vsel %vm2217, %v3662, %v3663
        %v3665 = vrot.slane %v3663, 4
        %v3666 = vrot.slane %v2905, 5
        %v3667 = vsel %vm2217, %v3665, %v3666
        %v3668 = vrot.slane %v3580, 5
        %v3669 = vrot.slane %v3668, 4
        %v3670 = vrot.slane %v2907, 5
        %v3671 = vsel %vm2217, %v3669, %v3670
        %v3672 = vrot.slane %v3670, 4
        %v3673 = vrot.slane %v2908, 5
        %v3674 = vsel %vm2217, %v3672, %v3673
        %v3675 = vrot.slane %v3581, 5
        %v3676 = vrot.slane %v3675, 4
        %v3677 = vrot.slane %v2910, 5
        %v3678 = vsel %vm2217, %v3676, %v3677
        %v3679 = vrot.slane %v3677, 4
        %v3680 = vrot.slane %v2911, 5
        %v3681 = vsel %vm2217, %v3679, %v3680
        %v3682 = vrot.slane %v3582, 5
        %v3683 = vrot.slane %v3682, 4
        %v3684 = vrot.slane %v2913, 5
        %v3685 = vsel %vm2217, %v3683, %v3684
        %v3686 = vrot.slane %v3684, 4
        %v3687 = vrot.slane %v2914, 5
        %v3688 = vsel %vm2217, %v3686, %v3687
        %v3689 = vrot.slane %v3583, 5
        %v3690 = vrot.slane %v3689, 4
        %v3691 = vrot.slane %v2916, 5
        %v3692 = vsel %vm2217, %v3690, %v3691
        %v3693 = vrot.slane %v3691, 4
        %v3694 = vrot.slane %v2917, 5
        %v3695 = vsel %vm2217, %v3693, %v3694
        %v3696 = vrot.slane %v3584, 5
        %v3697 = vrot.slane %v3696, 4
        %v3698 = vrot.slane %v2919, 5
        %v3699 = vsel %vm2217, %v3697, %v3698
        %v3700 = vrot.slane %v3698, 4
        %v3701 = vrot.slane %v2920, 5
        %v3702 = vsel %vm2217, %v3700, %v3701
        %v3703 = vrot.slane %v3585, 5
        %v3704 = vrot.slane %v3703, 4
        %v3705 = vrot.slane %v2922, 5
        %v3706 = vsel %vm2217, %v3704, %v3705
        %v3707 = vrot.slane %v3705, 4
        %v3708 = vrot.slane %v2923, 5
        %v3709 = vsel %vm2217, %v3707, %v3708
        %v3710 = vrot.slane %v3586, 5
        %v3711 = vrot.slane %v3710, 4
        %v3712 = vrot.slane %v2925, 5
        %v3713 = vsel %vm2217, %v3711, %v3712
        %v3714 = vrot.slane %v3712, 4
        %v3715 = vrot.slane %v2926, 5
        %v3716 = vsel %vm2217, %v3714, %v3715
        %v3717 = vrot.slane %v3587, 5
        %v3718 = vrot.slane %v3717, 4
        %v3719 = vrot.slane %v2928, 5
        %v3720 = vsel %vm2217, %v3718, %v3719
        %v3721 = vrot.slane %v3719, 4
        %v3722 = vrot.slane %v2929, 5
        %v3723 = vsel %vm2217, %v3721, %v3722
        %v3724 = vrot.slane %v3588, 5
        %v3725 = vrot.slane %v3724, 4
        %v3726 = vrot.slane %v2931, 5
        %v3727 = vsel %vm2217, %v3725, %v3726
        %v3728 = vrot.slane %v3726, 4
        %v3729 = vrot.slane %v2932, 5
        %v3730 = vsel %vm2217, %v3728, %v3729
        %v3731 = vrot.slane %v3589, 5
        %v3732 = vrot.slane %v3731, 4
        %v3733 = vrot.slane %v2934, 5
        %v3734 = vsel %vm2217, %v3732, %v3733
        %v3735 = vrot.slane %v3733, 4
        %v3736 = vrot.slane %v2935, 5
        %v3737 = vsel %vm2217, %v3735, %v3736
        %v3738 = vrot.slane %v3590, 5
        %v3739 = vrot.slane %v3738, 4
        %v3740 = vrot.slane %v2937, 5
        %v3741 = vsel %vm2217, %v3739, %v3740
        %v3742 = vrot.slane %v3740, 4
        %v3743 = vrot.slane %v2938, 5
        %v3744 = vsel %vm2217, %v3742, %v3743
        %v3745 = vrot.slane %v3591, 5
        %v3746 = vrot.slane %v3745, 4
        %v3747 = vrot.slane %v2940, 5
        %v3748 = vsel %vm2217, %v3746, %v3747
        %v3749 = vrot.slane %v3747, 4
        %v3750 = vrot.slane %v2941, 5
        %v3751 = vsel %vm2217, %v3749, %v3750
        %s3752 = scalar_lea.vmem [#allocation3], 320
        %v3753 = vld [vmem:[%s3752] sm:$0xf]
        %v3754 = vld [vmem:[%s3752 + $0x4] sm:$0xf]
        %v3755 = vld [vmem:[%s3752 + $0x8] sm:$0xf]
        %v3756 = vld [vmem:[%s3752 + $0xc] sm:$0xf]
        %v3757 = vld [vmem:[%s3752 + $0x10] sm:$0xf]
        %v3758 = vld [vmem:[%s3752 + $0x14] sm:$0xf]
        %v3759 = vld [vmem:[%s3752 + $0x18] sm:$0xf]
        %v3760 = vld [vmem:[%s3752 + $0x1c] sm:$0xf]
        %v3761 = vld [vmem:[%s3752 + $0x20] sm:$0xf]
        %v3762 = vld [vmem:[%s3752 + $0x24] sm:$0xf]
        %v3763 = vld [vmem:[%s3752 + $0x28] sm:$0xf]
        %v3764 = vld [vmem:[%s3752 + $0x2c] sm:$0xf]
        %v3765 = vld [vmem:[%s3752 + $0x30] sm:$0xf]
        %v3766 = vld [vmem:[%s3752 + $0x34] sm:$0xf]
        %v3767 = vld [vmem:[%s3752 + $0x38] sm:$0xf]
        %v3768 = vld [vmem:[%s3752 + $0x3c] sm:$0xf]
        %v3769 = vunpack.c.l.b16 %v3643
        %v3770 = vunpack.c.l.b16 %v3646
        %v3771 = vunpack.c.l.b16 %v3650
        %v3772 = vunpack.c.l.b16 %v3653
        %v3773 = vunpack.c.l.b16 %v3657
        %v3774 = vunpack.c.l.b16 %v3660
        %v3775 = vunpack.c.l.b16 %v3664
        %v3776 = vunpack.c.l.b16 %v3667
        %v3777 = vunpack.c.l.b16 %v3671
        %v3778 = vunpack.c.l.b16 %v3674
        %v3779 = vunpack.c.l.b16 %v3678
        %v3780 = vunpack.c.l.b16 %v3681
        %v3781 = vunpack.c.l.b16 %v3685
        %v3782 = vunpack.c.l.b16 %v3688
        %v3783 = vunpack.c.l.b16 %v3692
        %v3784 = vunpack.c.l.b16 %v3695
        %v3785 = vunpack.c.l.b16 %v3699
        %v3786 = vunpack.c.l.b16 %v3702
        %v3787 = vunpack.c.l.b16 %v3706
        %v3788 = vunpack.c.l.b16 %v3709
        %v3789 = vunpack.c.l.b16 %v3713
        %v3790 = vunpack.c.l.b16 %v3716
        %v3791 = vunpack.c.l.b16 %v3720
        %v3792 = vunpack.c.l.b16 %v3723
        %v3793 = vunpack.c.l.b16 %v3727
        %v3794 = vunpack.c.l.b16 %v3730
        %v3795 = vunpack.c.l.b16 %v3734
        %v3796 = vunpack.c.l.b16 %v3737
        %v3797 = vunpack.c.l.b16 %v3741
        %v3798 = vunpack.c.l.b16 %v3744
        %v3799 = vunpack.c.l.b16 %v3748
        %v3800 = vunpack.c.l.b16 %v3751
        %v3801 = vpack.c.b16 %v3770, %v3769
        %v3802 = vpack.c.b16 %v3772, %v3771
        %v3803 = vpack.c.b16 %v3774, %v3773
        %v3804 = vpack.c.b16 %v3776, %v3775
        %v3805 = vpack.c.b16 %v3778, %v3777
        %v3806 = vpack.c.b16 %v3780, %v3779
        %v3807 = vpack.c.b16 %v3782, %v3781
        %v3808 = vpack.c.b16 %v3784, %v3783
        %v3809 = vpack.c.b16 %v3786, %v3785
        %v3810 = vpack.c.b16 %v3788, %v3787
        %v3811 = vpack.c.b16 %v3790, %v3789
        %v3812 = vpack.c.b16 %v3792, %v3791
        %v3813 = vpack.c.b16 %v3794, %v3793
        %v3814 = vpack.c.b16 %v3796, %v3795
        %v3815 = vpack.c.b16 %v3798, %v3797
        %v3816 = vpack.c.b16 %v3800, %v3799
        %v3849 = vunpack.c.l.b16 %v3753
        %v3850 = vunpack.c.l.b16 %v3754
        %v3851 = vunpack.c.l.b16 %v3755
        %v3852 = vunpack.c.l.b16 %v3756
        %v3853 = vunpack.c.l.b16 %v3757
        %v3854 = vunpack.c.l.b16 %v3758
        %v3855 = vunpack.c.l.b16 %v3759
        %v3856 = vunpack.c.l.b16 %v3760
        %v3857 = vunpack.c.l.b16 %v3761
        %v3858 = vunpack.c.l.b16 %v3762
        %v3859 = vunpack.c.l.b16 %v3763
        %v3860 = vunpack.c.l.b16 %v3764
        %v3861 = vunpack.c.l.b16 %v3765
        %v3862 = vunpack.c.l.b16 %v3766
        %v3863 = vunpack.c.l.b16 %v3767
        %v3864 = vunpack.c.l.b16 %v3768
        %v3865 = vpack.c.b16 %v3850, %v3849
        %v3866 = vpack.c.b16 %v3852, %v3851
        %v3867 = vpack.c.b16 %v3854, %v3853
        %v3868 = vpack.c.b16 %v3856, %v3855
        %v3869 = vpack.c.b16 %v3858, %v3857
        %v3870 = vpack.c.b16 %v3860, %v3859
        %v3871 = vpack.c.b16 %v3862, %v3861
        %v3872 = vpack.c.b16 %v3864, %v3863
        %3881 = vmatpush.bf16.msra.mxu0 %v3872
        %3882 = vmatpush.bf16.msra.mxu0 %v3871
        %3883 = vmatpush.bf16.msra.mxu0 %v3870
        %3884 = vmatpush.bf16.msra.mxu0 %v3869
        %3885 = vmatpush.bf16.msra.mxu0 %v3868
        %3886 = vmatpush.bf16.msra.mxu0 %v3867
        %3887 = vmatpush.bf16.msra.mxu0 %v3866
        %3888 = vmatpush.bf16.msra.mxu0 %v3865
        %3889 = vmatmul.bf16.gmra.mxu0 %v3801
        %v3890 = vpop.f32.mrf.mxu0
        %v3891 = vadd.f32 0.0, %v3890
        %v3892 = vpop.f32.mrf.mxu0
        %v3893 = vadd.f32 0.0, %v3892
        %3894 = vmatmul.bf16.gmra.mxu0 %v3802
        %v3895 = vpop.f32.mrf.mxu0
        %v3896 = vadd.f32 0.0, %v3895
        %v3897 = vpop.f32.mrf.mxu0
        %v3898 = vadd.f32 0.0, %v3897
        %3899 = vmatmul.bf16.gmra.mxu0 %v3803
        %v3900 = vpop.f32.mrf.mxu0
        %v3901 = vadd.f32 0.0, %v3900
        %v3902 = vpop.f32.mrf.mxu0
        %v3903 = vadd.f32 0.0, %v3902
        %3904 = vmatmul.bf16.gmra.mxu0 %v3804
        %v3905 = vpop.f32.mrf.mxu0
        %v3906 = vadd.f32 0.0, %v3905
        %v3907 = vpop.f32.mrf.mxu0
        %v3908 = vadd.f32 0.0, %v3907
        %3909 = vmatmul.bf16.gmra.mxu0 %v3805
        %v3910 = vpop.f32.mrf.mxu0
        %v3911 = vadd.f32 0.0, %v3910
        %v3912 = vpop.f32.mrf.mxu0
        %v3913 = vadd.f32 0.0, %v3912
        %3914 = vmatmul.bf16.gmra.mxu0 %v3806
        %v3915 = vpop.f32.mrf.mxu0
        %v3916 = vadd.f32 0.0, %v3915
        %v3917 = vpop.f32.mrf.mxu0
        %v3918 = vadd.f32 0.0, %v3917
        %3919 = vmatmul.bf16.gmra.mxu0 %v3807
        %v3920 = vpop.f32.mrf.mxu0
        %v3921 = vadd.f32 0.0, %v3920
        %v3922 = vpop.f32.mrf.mxu0
        %v3923 = vadd.f32 0.0, %v3922
        %3924 = vmatmul.bf16.gmra.mxu0 %v3808
        %v3925 = vpop.f32.mrf.mxu0
        %v3926 = vadd.f32 0.0, %v3925
        %v3927 = vpop.f32.mrf.mxu0
        %v3928 = vadd.f32 0.0, %v3927
        %3929 = vmatmul.bf16.gmra.mxu0 %v3809
        %v3930 = vpop.f32.mrf.mxu0
        %v3931 = vadd.f32 0.0, %v3930
        %v3932 = vpop.f32.mrf.mxu0
        %v3933 = vadd.f32 0.0, %v3932
        %3934 = vmatmul.bf16.gmra.mxu0 %v3810
        %v3935 = vpop.f32.mrf.mxu0
        %v3936 = vadd.f32 0.0, %v3935
        %v3937 = vpop.f32.mrf.mxu0
        %v3938 = vadd.f32 0.0, %v3937
        %3939 = vmatmul.bf16.gmra.mxu0 %v3811
        %v3940 = vpop.f32.mrf.mxu0
        %v3941 = vadd.f32 0.0, %v3940
        %v3942 = vpop.f32.mrf.mxu0
        %v3943 = vadd.f32 0.0, %v3942
        %3944 = vmatmul.bf16.gmra.mxu0 %v3812
        %v3945 = vpop.f32.mrf.mxu0
        %v3946 = vadd.f32 0.0, %v3945
        %v3947 = vpop.f32.mrf.mxu0
        %v3948 = vadd.f32 0.0, %v3947
        %3949 = vmatmul.bf16.gmra.mxu0 %v3813
        %v3950 = vpop.f32.mrf.mxu0
        %v3951 = vadd.f32 0.0, %v3950
        %v3952 = vpop.f32.mrf.mxu0
        %v3953 = vadd.f32 0.0, %v3952
        %3954 = vmatmul.bf16.gmra.mxu0 %v3814
        %v3955 = vpop.f32.mrf.mxu0
        %v3956 = vadd.f32 0.0, %v3955
        %v3957 = vpop.f32.mrf.mxu0
        %v3958 = vadd.f32 0.0, %v3957
        %3959 = vmatmul.bf16.gmra.mxu0 %v3815
        %v3960 = vpop.f32.mrf.mxu0
        %v3961 = vadd.f32 0.0, %v3960
        %v3962 = vpop.f32.mrf.mxu0
        %v3963 = vadd.f32 0.0, %v3962
        %3964 = vmatmul.bf16.gmra.mxu0 %v3816
        %v3965 = vpop.f32.mrf.mxu0
        %v3966 = vadd.f32 0.0, %v3965
        %v3967 = vpop.f32.mrf.mxu0
        %v3968 = vadd.f32 0.0, %v3967
        %3969 = vdwg.mxu0
        %v3970 = vadd.f32 %v3544, %v3891
        %v3971 = vadd.f32 %v3545, %v3893
        %v3972 = vadd.f32 %v3546, %v3896
        %v3973 = vadd.f32 %v3547, %v3898
        %v3974 = vadd.f32 %v3548, %v3901
        %v3975 = vadd.f32 %v3549, %v3903
        %v3976 = vadd.f32 %v3550, %v3906
        %v3977 = vadd.f32 %v3551, %v3908
        %v3978 = vadd.f32 %v3552, %v3911
        %v3979 = vadd.f32 %v3553, %v3913
        %v3980 = vadd.f32 %v3554, %v3916
        %v3981 = vadd.f32 %v3555, %v3918
        %v3982 = vadd.f32 %v3556, %v3921
        %v3983 = vadd.f32 %v3557, %v3923
        %v3984 = vadd.f32 %v3558, %v3926
        %v3985 = vadd.f32 %v3559, %v3928
        %v3986 = vadd.f32 %v3560, %v3931
        %v3987 = vadd.f32 %v3561, %v3933
        %v3988 = vadd.f32 %v3562, %v3936
        %v3989 = vadd.f32 %v3563, %v3938
        %v3990 = vadd.f32 %v3564, %v3941
        %v3991 = vadd.f32 %v3565, %v3943
        %v3992 = vadd.f32 %v3566, %v3946
        %v3993 = vadd.f32 %v3567, %v3948
        %v3994 = vadd.f32 %v3568, %v3951
        %v3995 = vadd.f32 %v3569, %v3953
        %v3996 = vadd.f32 %v3570, %v3956
        %v3997 = vadd.f32 %v3571, %v3958
        %v3998 = vadd.f32 %v3572, %v3961
        %v3999 = vadd.f32 %v3573, %v3963
        %v4000 = vadd.f32 %v3574, %v3966
        %v4001 = vadd.f32 %v3575, %v3968
        %s4002 = scalar_lea.vmem [#allocation2], 24
        %v4003 = vld [vmem:[%s4002] sm:$0xf]
        %v4004 = vld [vmem:[%s4002 + $0x4] sm:$0xf]
        %v4005 = vld [vmem:[%s4002 + $0xc] sm:$0xf]
        %v4006 = vld [vmem:[%s4002 + $0x10] sm:$0xf]
        %v4007 = vld [vmem:[%s4002 + $0x18] sm:$0xf]
        %v4008 = vld [vmem:[%s4002 + $0x1c] sm:$0xf]
        %v4009 = vld [vmem:[%s4002 + $0x24] sm:$0xf]
        %v4010 = vld [vmem:[%s4002 + $0x28] sm:$0xf]
        %v4011 = vld [vmem:[%s4002 + $0x30] sm:$0xf]
        %v4012 = vld [vmem:[%s4002 + $0x34] sm:$0xf]
        %v4013 = vld [vmem:[%s4002 + $0x3c] sm:$0xf]
        %v4014 = vld [vmem:[%s4002 + $0x40] sm:$0xf]
        %v4015 = vld [vmem:[%s4002 + $0x48] sm:$0xf]
        %v4016 = vld [vmem:[%s4002 + $0x4c] sm:$0xf]
        %v4017 = vld [vmem:[%s4002 + $0x54] sm:$0xf]
        %v4018 = vld [vmem:[%s4002 + $0x58] sm:$0xf]
        %v4019 = vld [vmem:[%s4002 + $0x60] sm:$0xf]
        %v4020 = vld [vmem:[%s4002 + $0x64] sm:$0xf]
        %v4021 = vld [vmem:[%s4002 + $0x6c] sm:$0xf]
        %v4022 = vld [vmem:[%s4002 + $0x70] sm:$0xf]
        %v4023 = vld [vmem:[%s4002 + $0x78] sm:$0xf]
        %v4024 = vld [vmem:[%s4002 + $0x7c] sm:$0xf]
        %v4025 = vld [vmem:[%s4002 + $0x84] sm:$0xf]
        %v4026 = vld [vmem:[%s4002 + $0x88] sm:$0xf]
        %v4027 = vld [vmem:[%s4002 + $0x90] sm:$0xf]
        %v4028 = vld [vmem:[%s4002 + $0x94] sm:$0xf]
        %v4029 = vld [vmem:[%s4002 + $0x9c] sm:$0xf]
        %v4030 = vld [vmem:[%s4002 + $0xa0] sm:$0xf]
        %v4031 = vld [vmem:[%s4002 + $0xa8] sm:$0xf]
        %v4032 = vld [vmem:[%s4002 + $0xac] sm:$0xf]
        %v4033 = vld [vmem:[%s4002 + $0xb4] sm:$0xf]
        %v4034 = vld [vmem:[%s4002 + $0xb8] sm:$0xf]
        %s4035 = scalar_lea.vmem [#allocation3], 384
        %v4036 = vld [vmem:[%s4035] sm:$0xf]
        %v4037 = vld [vmem:[%s4035 + $0x4] sm:$0xf]
        %v4038 = vld [vmem:[%s4035 + $0x8] sm:$0xf]
        %v4039 = vld [vmem:[%s4035 + $0xc] sm:$0xf]
        %v4040 = vld [vmem:[%s4035 + $0x10] sm:$0xf]
        %v4041 = vld [vmem:[%s4035 + $0x14] sm:$0xf]
        %v4042 = vld [vmem:[%s4035 + $0x18] sm:$0xf]
        %v4043 = vld [vmem:[%s4035 + $0x1c] sm:$0xf]
        %v4044 = vld [vmem:[%s4035 + $0x20] sm:$0xf]
        %v4045 = vld [vmem:[%s4035 + $0x24] sm:$0xf]
        %v4046 = vld [vmem:[%s4035 + $0x28] sm:$0xf]
        %v4047 = vld [vmem:[%s4035 + $0x2c] sm:$0xf]
        %v4048 = vld [vmem:[%s4035 + $0x30] sm:$0xf]
        %v4049 = vld [vmem:[%s4035 + $0x34] sm:$0xf]
        %v4050 = vld [vmem:[%s4035 + $0x38] sm:$0xf]
        %v4051 = vld [vmem:[%s4035 + $0x3c] sm:$0xf]
        %v4084 = vunpack.c.l.b16 %v4003
        %v4085 = vunpack.c.l.b16 %v4004
        %v4086 = vunpack.c.l.b16 %v4005
        %v4087 = vunpack.c.l.b16 %v4006
        %v4088 = vunpack.c.l.b16 %v4007
        %v4089 = vunpack.c.l.b16 %v4008
        %v4090 = vunpack.c.l.b16 %v4009
        %v4091 = vunpack.c.l.b16 %v4010
        %v4092 = vunpack.c.l.b16 %v4011
        %v4093 = vunpack.c.l.b16 %v4012
        %v4094 = vunpack.c.l.b16 %v4013
        %v4095 = vunpack.c.l.b16 %v4014
        %v4096 = vunpack.c.l.b16 %v4015
        %v4097 = vunpack.c.l.b16 %v4016
        %v4098 = vunpack.c.l.b16 %v4017
        %v4099 = vunpack.c.l.b16 %v4018
        %v4100 = vunpack.c.l.b16 %v4019
        %v4101 = vunpack.c.l.b16 %v4020
        %v4102 = vunpack.c.l.b16 %v4021
        %v4103 = vunpack.c.l.b16 %v4022
        %v4104 = vunpack.c.l.b16 %v4023
        %v4105 = vunpack.c.l.b16 %v4024
        %v4106 = vunpack.c.l.b16 %v4025
        %v4107 = vunpack.c.l.b16 %v4026
        %v4108 = vunpack.c.l.b16 %v4027
        %v4109 = vunpack.c.l.b16 %v4028
        %v4110 = vunpack.c.l.b16 %v4029
        %v4111 = vunpack.c.l.b16 %v4030
        %v4112 = vunpack.c.l.b16 %v4031
        %v4113 = vunpack.c.l.b16 %v4032
        %v4114 = vunpack.c.l.b16 %v4033
        %v4115 = vunpack.c.l.b16 %v4034
        %v4116 = vpack.c.b16 %v4085, %v4084
        %v4117 = vpack.c.b16 %v4087, %v4086
        %v4118 = vpack.c.b16 %v4089, %v4088
        %v4119 = vpack.c.b16 %v4091, %v4090
        %v4120 = vpack.c.b16 %v4093, %v4092
        %v4121 = vpack.c.b16 %v4095, %v4094
        %v4122 = vpack.c.b16 %v4097, %v4096
        %v4123 = vpack.c.b16 %v4099, %v4098
        %v4124 = vpack.c.b16 %v4101, %v4100
        %v4125 = vpack.c.b16 %v4103, %v4102
        %v4126 = vpack.c.b16 %v4105, %v4104
        %v4127 = vpack.c.b16 %v4107, %v4106
        %v4128 = vpack.c.b16 %v4109, %v4108
        %v4129 = vpack.c.b16 %v4111, %v4110
        %v4130 = vpack.c.b16 %v4113, %v4112
        %v4131 = vpack.c.b16 %v4115, %v4114
        %v4164 = vunpack.c.l.b16 %v4036
        %v4165 = vunpack.c.l.b16 %v4037
        %v4166 = vunpack.c.l.b16 %v4038
        %v4167 = vunpack.c.l.b16 %v4039
        %v4168 = vunpack.c.l.b16 %v4040
        %v4169 = vunpack.c.l.b16 %v4041
        %v4170 = vunpack.c.l.b16 %v4042
        %v4171 = vunpack.c.l.b16 %v4043
        %v4172 = vunpack.c.l.b16 %v4044
        %v4173 = vunpack.c.l.b16 %v4045
        %v4174 = vunpack.c.l.b16 %v4046
        %v4175 = vunpack.c.l.b16 %v4047
        %v4176 = vunpack.c.l.b16 %v4048
        %v4177 = vunpack.c.l.b16 %v4049
        %v4178 = vunpack.c.l.b16 %v4050
        %v4179 = vunpack.c.l.b16 %v4051
        %v4180 = vpack.c.b16 %v4165, %v4164
        %v4181 = vpack.c.b16 %v4167, %v4166
        %v4182 = vpack.c.b16 %v4169, %v4168
        %v4183 = vpack.c.b16 %v4171, %v4170
        %v4184 = vpack.c.b16 %v4173, %v4172
        %v4185 = vpack.c.b16 %v4175, %v4174
        %v4186 = vpack.c.b16 %v4177, %v4176
        %v4187 = vpack.c.b16 %v4179, %v4178
        %4196 = vmatpush.bf16.msra.mxu0 %v4187
        %4197 = vmatpush.bf16.msra.mxu0 %v4186
        %4198 = vmatpush.bf16.msra.mxu0 %v4185
        %4199 = vmatpush.bf16.msra.mxu0 %v4184
        %4200 = vmatpush.bf16.msra.mxu0 %v4183
        %4201 = vmatpush.bf16.msra.mxu0 %v4182
        %4202 = vmatpush.bf16.msra.mxu0 %v4181
        %4203 = vmatpush.bf16.msra.mxu0 %v4180
        %4204 = vmatmul.bf16.gmra.mxu0 %v4116
        %v4205 = vpop.f32.mrf.mxu0
        %v4206 = vadd.f32 0.0, %v4205
        %v4207 = vpop.f32.mrf.mxu0
        %v4208 = vadd.f32 0.0, %v4207
        %4209 = vmatmul.bf16.gmra.mxu0 %v4117
        %v4210 = vpop.f32.mrf.mxu0
        %v4211 = vadd.f32 0.0, %v4210
        %v4212 = vpop.f32.mrf.mxu0
        %v4213 = vadd.f32 0.0, %v4212
        %4214 = vmatmul.bf16.gmra.mxu0 %v4118
        %v4215 = vpop.f32.mrf.mxu0
        %v4216 = vadd.f32 0.0, %v4215
        %v4217 = vpop.f32.mrf.mxu0
        %v4218 = vadd.f32 0.0, %v4217
        %4219 = vmatmul.bf16.gmra.mxu0 %v4119
        %v4220 = vpop.f32.mrf.mxu0
        %v4221 = vadd.f32 0.0, %v4220
        %v4222 = vpop.f32.mrf.mxu0
        %v4223 = vadd.f32 0.0, %v4222
        %4224 = vmatmul.bf16.gmra.mxu0 %v4120
        %v4225 = vpop.f32.mrf.mxu0
        %v4226 = vadd.f32 0.0, %v4225
        %v4227 = vpop.f32.mrf.mxu0
        %v4228 = vadd.f32 0.0, %v4227
        %4229 = vmatmul.bf16.gmra.mxu0 %v4121
        %v4230 = vpop.f32.mrf.mxu0
        %v4231 = vadd.f32 0.0, %v4230
        %v4232 = vpop.f32.mrf.mxu0
        %v4233 = vadd.f32 0.0, %v4232
        %4234 = vmatmul.bf16.gmra.mxu0 %v4122
        %v4235 = vpop.f32.mrf.mxu0
        %v4236 = vadd.f32 0.0, %v4235
        %v4237 = vpop.f32.mrf.mxu0
        %v4238 = vadd.f32 0.0, %v4237
        %4239 = vmatmul.bf16.gmra.mxu0 %v4123
        %v4240 = vpop.f32.mrf.mxu0
        %v4241 = vadd.f32 0.0, %v4240
        %v4242 = vpop.f32.mrf.mxu0
        %v4243 = vadd.f32 0.0, %v4242
        %4244 = vmatmul.bf16.gmra.mxu0 %v4124
        %v4245 = vpop.f32.mrf.mxu0
        %v4246 = vadd.f32 0.0, %v4245
        %v4247 = vpop.f32.mrf.mxu0
        %v4248 = vadd.f32 0.0, %v4247
        %4249 = vmatmul.bf16.gmra.mxu0 %v4125
        %v4250 = vpop.f32.mrf.mxu0
        %v4251 = vadd.f32 0.0, %v4250
        %v4252 = vpop.f32.mrf.mxu0
        %v4253 = vadd.f32 0.0, %v4252
        %4254 = vmatmul.bf16.gmra.mxu0 %v4126
        %v4255 = vpop.f32.mrf.mxu0
        %v4256 = vadd.f32 0.0, %v4255
        %v4257 = vpop.f32.mrf.mxu0
        %v4258 = vadd.f32 0.0, %v4257
        %4259 = vmatmul.bf16.gmra.mxu0 %v4127
        %v4260 = vpop.f32.mrf.mxu0
        %v4261 = vadd.f32 0.0, %v4260
        %v4262 = vpop.f32.mrf.mxu0
        %v4263 = vadd.f32 0.0, %v4262
        %4264 = vmatmul.bf16.gmra.mxu0 %v4128
        %v4265 = vpop.f32.mrf.mxu0
        %v4266 = vadd.f32 0.0, %v4265
        %v4267 = vpop.f32.mrf.mxu0
        %v4268 = vadd.f32 0.0, %v4267
        %4269 = vmatmul.bf16.gmra.mxu0 %v4129
        %v4270 = vpop.f32.mrf.mxu0
        %v4271 = vadd.f32 0.0, %v4270
        %v4272 = vpop.f32.mrf.mxu0
        %v4273 = vadd.f32 0.0, %v4272
        %4274 = vmatmul.bf16.gmra.mxu0 %v4130
        %v4275 = vpop.f32.mrf.mxu0
        %v4276 = vadd.f32 0.0, %v4275
        %v4277 = vpop.f32.mrf.mxu0
        %v4278 = vadd.f32 0.0, %v4277
        %4279 = vmatmul.bf16.gmra.mxu0 %v4131
        %v4280 = vpop.f32.mrf.mxu0
        %v4281 = vadd.f32 0.0, %v4280
        %v4282 = vpop.f32.mrf.mxu0
        %v4283 = vadd.f32 0.0, %v4282
        %4284 = vdwg.mxu0
        %v4285 = vadd.f32 %v3970, %v4206
        %v4286 = vadd.f32 %v3971, %v4208
        %v4287 = vadd.f32 %v3972, %v4211
        %v4288 = vadd.f32 %v3973, %v4213
        %v4289 = vadd.f32 %v3974, %v4216
        %v4290 = vadd.f32 %v3975, %v4218
        %v4291 = vadd.f32 %v3976, %v4221
        %v4292 = vadd.f32 %v3977, %v4223
        %v4293 = vadd.f32 %v3978, %v4226
        %v4294 = vadd.f32 %v3979, %v4228
        %v4295 = vadd.f32 %v3980, %v4231
        %v4296 = vadd.f32 %v3981, %v4233
        %v4297 = vadd.f32 %v3982, %v4236
        %v4298 = vadd.f32 %v3983, %v4238
        %v4299 = vadd.f32 %v3984, %v4241
        %v4300 = vadd.f32 %v3985, %v4243
        %v4301 = vadd.f32 %v3986, %v4246
        %v4302 = vadd.f32 %v3987, %v4248
        %v4303 = vadd.f32 %v3988, %v4251
        %v4304 = vadd.f32 %v3989, %v4253
        %v4305 = vadd.f32 %v3990, %v4256
        %v4306 = vadd.f32 %v3991, %v4258
        %v4307 = vadd.f32 %v3992, %v4261
        %v4308 = vadd.f32 %v3993, %v4263
        %v4309 = vadd.f32 %v3994, %v4266
        %v4310 = vadd.f32 %v3995, %v4268
        %v4311 = vadd.f32 %v3996, %v4271
        %v4312 = vadd.f32 %v3997, %v4273
        %v4313 = vadd.f32 %v3998, %v4276
        %v4314 = vadd.f32 %v3999, %v4278
        %v4315 = vadd.f32 %v4000, %v4281
        %v4316 = vadd.f32 %v4001, %v4283
        %v4317 = vld [vmem:[%s4002] sm:$0xf]
        %v4318 = vld [vmem:[%s4002 + $0x4] sm:$0xf]
        %v4319 = vld [vmem:[%s4002 + $0x8] sm:$0x1]
        %v4320 = vld [vmem:[%s4002 + $0xc] sm:$0xf]
        %v4321 = vld [vmem:[%s4002 + $0x10] sm:$0xf]
        %v4322 = vld [vmem:[%s4002 + $0x14] sm:$0x1]
        %v4323 = vld [vmem:[%s4002 + $0x18] sm:$0xf]
        %v4324 = vld [vmem:[%s4002 + $0x1c] sm:$0xf]
        %v4325 = vld [vmem:[%s4002 + $0x20] sm:$0x1]
        %v4326 = vld [vmem:[%s4002 + $0x24] sm:$0xf]
        %v4327 = vld [vmem:[%s4002 + $0x28] sm:$0xf]
        %v4328 = vld [vmem:[%s4002 + $0x2c] sm:$0x1]
        %v4329 = vld [vmem:[%s4002 + $0x30] sm:$0xf]
        %v4330 = vld [vmem:[%s4002 + $0x34] sm:$0xf]
        %v4331 = vld [vmem:[%s4002 + $0x38] sm:$0x1]
        %v4332 = vld [vmem:[%s4002 + $0x3c] sm:$0xf]
        %v4333 = vld [vmem:[%s4002 + $0x40] sm:$0xf]
        %v4334 = vld [vmem:[%s4002 + $0x44] sm:$0x1]
        %v4335 = vld [vmem:[%s4002 + $0x48] sm:$0xf]
        %v4336 = vld [vmem:[%s4002 + $0x4c] sm:$0xf]
        %v4337 = vld [vmem:[%s4002 + $0x50] sm:$0x1]
        %v4338 = vld [vmem:[%s4002 + $0x54] sm:$0xf]
        %v4339 = vld [vmem:[%s4002 + $0x58] sm:$0xf]
        %v4340 = vld [vmem:[%s4002 + $0x5c] sm:$0x1]
        %v4341 = vld [vmem:[%s4002 + $0x60] sm:$0xf]
        %v4342 = vld [vmem:[%s4002 + $0x64] sm:$0xf]
        %v4343 = vld [vmem:[%s4002 + $0x68] sm:$0x1]
        %v4344 = vld [vmem:[%s4002 + $0x6c] sm:$0xf]
        %v4345 = vld [vmem:[%s4002 + $0x70] sm:$0xf]
        %v4346 = vld [vmem:[%s4002 + $0x74] sm:$0x1]
        %v4347 = vld [vmem:[%s4002 + $0x78] sm:$0xf]
        %v4348 = vld [vmem:[%s4002 + $0x7c] sm:$0xf]
        %v4349 = vld [vmem:[%s4002 + $0x80] sm:$0x1]
        %v4350 = vld [vmem:[%s4002 + $0x84] sm:$0xf]
        %v4351 = vld [vmem:[%s4002 + $0x88] sm:$0xf]
        %v4352 = vld [vmem:[%s4002 + $0x8c] sm:$0x1]
        %v4353 = vld [vmem:[%s4002 + $0x90] sm:$0xf]
        %v4354 = vld [vmem:[%s4002 + $0x94] sm:$0xf]
        %v4355 = vld [vmem:[%s4002 + $0x98] sm:$0x1]
        %v4356 = vld [vmem:[%s4002 + $0x9c] sm:$0xf]
        %v4357 = vld [vmem:[%s4002 + $0xa0] sm:$0xf]
        %v4358 = vld [vmem:[%s4002 + $0xa4] sm:$0x1]
        %v4359 = vld [vmem:[%s4002 + $0xa8] sm:$0xf]
        %v4360 = vld [vmem:[%s4002 + $0xac] sm:$0xf]
        %v4361 = vld [vmem:[%s4002 + $0xb0] sm:$0x1]
        %v4362 = vld [vmem:[%s4002 + $0xb4] sm:$0xf]
        %v4363 = vld [vmem:[%s4002 + $0xb8] sm:$0xf]
        %v4364 = vld [vmem:[%s4002 + $0xbc] sm:$0x1]
        %v4366 = vshrl.u32 %v4317, 16
        %v4368 = vrot.slane %v4366, 4
        %v4369 = vshll.u32 %v4317, 16
        %v4371 = vrot.slane %v4369, 5
        %v4372 = vor.u32 %v4368, %v4371
        %v4373 = vrot.slane %v4372, 4
        %v4375 = vshll.u32 %v4318, 16
        %v4377 = vrot.slane %v4375, 5
        %v4378 = vsel %vm1331, %v4373, %v4377
        %v4379 = vshrl.u32 %v4318, 16
        %v4381 = vrot.slane %v4379, 4
        %v4382 = vor.u32 %v4381, %v4377
        %v4383 = vrot.slane %v4382, 4
        %v4385 = vshll.u32 %v4319, 16
        %v4387 = vrot.slane %v4385, 5
        %v4388 = vsel %vm1331, %v4383, %v4387
        %v4390 = vshrl.u32 %v4320, 16
        %v4392 = vrot.slane %v4390, 4
        %v4393 = vshll.u32 %v4320, 16
        %v4395 = vrot.slane %v4393, 5
        %v4396 = vor.u32 %v4392, %v4395
        %v4397 = vrot.slane %v4396, 4
        %v4399 = vshll.u32 %v4321, 16
        %v4401 = vrot.slane %v4399, 5
        %v4402 = vsel %vm1331, %v4397, %v4401
        %v4403 = vshrl.u32 %v4321, 16
        %v4405 = vrot.slane %v4403, 4
        %v4406 = vor.u32 %v4405, %v4401
        %v4407 = vrot.slane %v4406, 4
        %v4409 = vshll.u32 %v4322, 16
        %v4411 = vrot.slane %v4409, 5
        %v4412 = vsel %vm1331, %v4407, %v4411
        %v4414 = vshrl.u32 %v4323, 16
        %v4416 = vrot.slane %v4414, 4
        %v4417 = vshll.u32 %v4323, 16
        %v4419 = vrot.slane %v4417, 5
        %v4420 = vor.u32 %v4416, %v4419
        %v4421 = vrot.slane %v4420, 4
        %v4423 = vshll.u32 %v4324, 16
        %v4425 = vrot.slane %v4423, 5
        %v4426 = vsel %vm1331, %v4421, %v4425
        %v4427 = vshrl.u32 %v4324, 16
        %v4429 = vrot.slane %v4427, 4
        %v4430 = vor.u32 %v4429, %v4425
        %v4431 = vrot.slane %v4430, 4
        %v4433 = vshll.u32 %v4325, 16
        %v4435 = vrot.slane %v4433, 5
        %v4436 = vsel %vm1331, %v4431, %v4435
        %v4438 = vshrl.u32 %v4326, 16
        %v4440 = vrot.slane %v4438, 4
        %v4441 = vshll.u32 %v4326, 16
        %v4443 = vrot.slane %v4441, 5
        %v4444 = vor.u32 %v4440, %v4443
        %v4445 = vrot.slane %v4444, 4
        %v4447 = vshll.u32 %v4327, 16
        %v4449 = vrot.slane %v4447, 5
        %v4450 = vsel %vm1331, %v4445, %v4449
        %v4451 = vshrl.u32 %v4327, 16
        %v4453 = vrot.slane %v4451, 4
        %v4454 = vor.u32 %v4453, %v4449
        %v4455 = vrot.slane %v4454, 4
        %v4457 = vshll.u32 %v4328, 16
        %v4459 = vrot.slane %v4457, 5
        %v4460 = vsel %vm1331, %v4455, %v4459
        %v4462 = vshrl.u32 %v4329, 16
        %v4464 = vrot.slane %v4462, 4
        %v4465 = vshll.u32 %v4329, 16
        %v4467 = vrot.slane %v4465, 5
        %v4468 = vor.u32 %v4464, %v4467
        %v4469 = vrot.slane %v4468, 4
        %v4471 = vshll.u32 %v4330, 16
        %v4473 = vrot.slane %v4471, 5
        %v4474 = vsel %vm1331, %v4469, %v4473
        %v4475 = vshrl.u32 %v4330, 16
        %v4477 = vrot.slane %v4475, 4
        %v4478 = vor.u32 %v4477, %v4473
        %v4479 = vrot.slane %v4478, 4
        %v4481 = vshll.u32 %v4331, 16
        %v4483 = vrot.slane %v4481, 5
        %v4484 = vsel %vm1331, %v4479, %v4483
        %v4486 = vshrl.u32 %v4332, 16
        %v4488 = vrot.slane %v4486, 4
        %v4489 = vshll.u32 %v4332, 16
        %v4491 = vrot.slane %v4489, 5
        %v4492 = vor.u32 %v4488, %v4491
        %v4493 = vrot.slane %v4492, 4
        %v4495 = vshll.u32 %v4333, 16
        %v4497 = vrot.slane %v4495, 5
        %v4498 = vsel %vm1331, %v4493, %v4497
        %v4499 = vshrl.u32 %v4333, 16
        %v4501 = vrot.slane %v4499, 4
        %v4502 = vor.u32 %v4501, %v4497
        %v4503 = vrot.slane %v4502, 4
        %v4505 = vshll.u32 %v4334, 16
        %v4507 = vrot.slane %v4505, 5
        %v4508 = vsel %vm1331, %v4503, %v4507
        %v4510 = vshrl.u32 %v4335, 16
        %v4512 = vrot.slane %v4510, 4
        %v4513 = vshll.u32 %v4335, 16
        %v4515 = vrot.slane %v4513, 5
        %v4516 = vor.u32 %v4512, %v4515
        %v4517 = vrot.slane %v4516, 4
        %v4519 = vshll.u32 %v4336, 16
        %v4521 = vrot.slane %v4519, 5
        %v4522 = vsel %vm1331, %v4517, %v4521
        %v4523 = vshrl.u32 %v4336, 16
        %v4525 = vrot.slane %v4523, 4
        %v4526 = vor.u32 %v4525, %v4521
        %v4527 = vrot.slane %v4526, 4
        %v4529 = vshll.u32 %v4337, 16
        %v4531 = vrot.slane %v4529, 5
        %v4532 = vsel %vm1331, %v4527, %v4531
        %v4534 = vshrl.u32 %v4338, 16
        %v4536 = vrot.slane %v4534, 4
        %v4537 = vshll.u32 %v4338, 16
        %v4539 = vrot.slane %v4537, 5
        %v4540 = vor.u32 %v4536, %v4539
        %v4541 = vrot.slane %v4540, 4
        %v4543 = vshll.u32 %v4339, 16
        %v4545 = vrot.slane %v4543, 5
        %v4546 = vsel %vm1331, %v4541, %v4545
        %v4547 = vshrl.u32 %v4339, 16
        %v4549 = vrot.slane %v4547, 4
        %v4550 = vor.u32 %v4549, %v4545
        %v4551 = vrot.slane %v4550, 4
        %v4553 = vshll.u32 %v4340, 16
        %v4555 = vrot.slane %v4553, 5
        %v4556 = vsel %vm1331, %v4551, %v4555
        %v4558 = vshrl.u32 %v4341, 16
        %v4560 = vrot.slane %v4558, 4
        %v4561 = vshll.u32 %v4341, 16
        %v4563 = vrot.slane %v4561, 5
        %v4564 = vor.u32 %v4560, %v4563
        %v4565 = vrot.slane %v4564, 4
        %v4567 = vshll.u32 %v4342, 16
        %v4569 = vrot.slane %v4567, 5
        %v4570 = vsel %vm1331, %v4565, %v4569
        %v4571 = vshrl.u32 %v4342, 16
        %v4573 = vrot.slane %v4571, 4
        %v4574 = vor.u32 %v4573, %v4569
        %v4575 = vrot.slane %v4574, 4
        %v4577 = vshll.u32 %v4343, 16
        %v4579 = vrot.slane %v4577, 5
        %v4580 = vsel %vm1331, %v4575, %v4579
        %v4582 = vshrl.u32 %v4344, 16
        %v4584 = vrot.slane %v4582, 4
        %v4585 = vshll.u32 %v4344, 16
        %v4587 = vrot.slane %v4585, 5
        %v4588 = vor.u32 %v4584, %v4587
        %v4589 = vrot.slane %v4588, 4
        %v4591 = vshll.u32 %v4345, 16
        %v4593 = vrot.slane %v4591, 5
        %v4594 = vsel %vm1331, %v4589, %v4593
        %v4595 = vshrl.u32 %v4345, 16
        %v4597 = vrot.slane %v4595, 4
        %v4598 = vor.u32 %v4597, %v4593
        %v4599 = vrot.slane %v4598, 4
        %v4601 = vshll.u32 %v4346, 16
        %v4603 = vrot.slane %v4601, 5
        %v4604 = vsel %vm1331, %v4599, %v4603
        %v4606 = vshrl.u32 %v4347, 16
        %v4608 = vrot.slane %v4606, 4
        %v4609 = vshll.u32 %v4347, 16
        %v4611 = vrot.slane %v4609, 5
        %v4612 = vor.u32 %v4608, %v4611
        %v4613 = vrot.slane %v4612, 4
        %v4615 = vshll.u32 %v4348, 16
        %v4617 = vrot.slane %v4615, 5
        %v4618 = vsel %vm1331, %v4613, %v4617
        %v4619 = vshrl.u32 %v4348, 16
        %v4621 = vrot.slane %v4619, 4
        %v4622 = vor.u32 %v4621, %v4617
        %v4623 = vrot.slane %v4622, 4
        %v4625 = vshll.u32 %v4349, 16
        %v4627 = vrot.slane %v4625, 5
        %v4628 = vsel %vm1331, %v4623, %v4627
        %v4630 = vshrl.u32 %v4350, 16
        %v4632 = vrot.slane %v4630, 4
        %v4633 = vshll.u32 %v4350, 16
        %v4635 = vrot.slane %v4633, 5
        %v4636 = vor.u32 %v4632, %v4635
        %v4637 = vrot.slane %v4636, 4
        %v4639 = vshll.u32 %v4351, 16
        %v4641 = vrot.slane %v4639, 5
        %v4642 = vsel %vm1331, %v4637, %v4641
        %v4643 = vshrl.u32 %v4351, 16
        %v4645 = vrot.slane %v4643, 4
        %v4646 = vor.u32 %v4645, %v4641
        %v4647 = vrot.slane %v4646, 4
        %v4649 = vshll.u32 %v4352, 16
        %v4651 = vrot.slane %v4649, 5
        %v4652 = vsel %vm1331, %v4647, %v4651
        %v4654 = vshrl.u32 %v4353, 16
        %v4656 = vrot.slane %v4654, 4
        %v4657 = vshll.u32 %v4353, 16
        %v4659 = vrot.slane %v4657, 5
        %v4660 = vor.u32 %v4656, %v4659
        %v4661 = vrot.slane %v4660, 4
        %v4663 = vshll.u32 %v4354, 16
        %v4665 = vrot.slane %v4663, 5
        %v4666 = vsel %vm1331, %v4661, %v4665
        %v4667 = vshrl.u32 %v4354, 16
        %v4669 = vrot.slane %v4667, 4
        %v4670 = vor.u32 %v4669, %v4665
        %v4671 = vrot.slane %v4670, 4
        %v4673 = vshll.u32 %v4355, 16
        %v4675 = vrot.slane %v4673, 5
        %v4676 = vsel %vm1331, %v4671, %v4675
        %v4678 = vshrl.u32 %v4356, 16
        %v4680 = vrot.slane %v4678, 4
        %v4681 = vshll.u32 %v4356, 16
        %v4683 = vrot.slane %v4681, 5
        %v4684 = vor.u32 %v4680, %v4683
        %v4685 = vrot.slane %v4684, 4
        %v4687 = vshll.u32 %v4357, 16
        %v4689 = vrot.slane %v4687, 5
        %v4690 = vsel %vm1331, %v4685, %v4689
        %v4691 = vshrl.u32 %v4357, 16
        %v4693 = vrot.slane %v4691, 4
        %v4694 = vor.u32 %v4693, %v4689
        %v4695 = vrot.slane %v4694, 4
        %v4697 = vshll.u32 %v4358, 16
        %v4699 = vrot.slane %v4697, 5
        %v4700 = vsel %vm1331, %v4695, %v4699
        %v4702 = vshrl.u32 %v4359, 16
        %v4704 = vrot.slane %v4702, 4
        %v4705 = vshll.u32 %v4359, 16
        %v4707 = vrot.slane %v4705, 5
        %v4708 = vor.u32 %v4704, %v4707
        %v4709 = vrot.slane %v4708, 4
        %v4711 = vshll.u32 %v4360, 16
        %v4713 = vrot.slane %v4711, 5
        %v4714 = vsel %vm1331, %v4709, %v4713
        %v4715 = vshrl.u32 %v4360, 16
        %v4717 = vrot.slane %v4715, 4
        %v4718 = vor.u32 %v4717, %v4713
        %v4719 = vrot.slane %v4718, 4
        %v4721 = vshll.u32 %v4361, 16
        %v4723 = vrot.slane %v4721, 5
        %v4724 = vsel %vm1331, %v4719, %v4723
        %v4726 = vshrl.u32 %v4362, 16
        %v4728 = vrot.slane %v4726, 4
        %v4729 = vshll.u32 %v4362, 16
        %v4731 = vrot.slane %v4729, 5
        %v4732 = vor.u32 %v4728, %v4731
        %v4733 = vrot.slane %v4732, 4
        %v4735 = vshll.u32 %v4363, 16
        %v4737 = vrot.slane %v4735, 5
        %v4738 = vsel %vm1331, %v4733, %v4737
        %v4739 = vshrl.u32 %v4363, 16
        %v4741 = vrot.slane %v4739, 4
        %v4742 = vor.u32 %v4741, %v4737
        %v4743 = vrot.slane %v4742, 4
        %v4745 = vshll.u32 %v4364, 16
        %v4747 = vrot.slane %v4745, 5
        %v4748 = vsel %vm1331, %v4743, %v4747
        %s4749 = scalar_lea.vmem [#allocation3], 448
        %v4750 = vld [vmem:[%s4749] sm:$0xf]
        %v4751 = vld [vmem:[%s4749 + $0x4] sm:$0xf]
        %v4752 = vld [vmem:[%s4749 + $0x8] sm:$0xf]
        %v4753 = vld [vmem:[%s4749 + $0xc] sm:$0xf]
        %v4754 = vld [vmem:[%s4749 + $0x10] sm:$0xf]
        %v4755 = vld [vmem:[%s4749 + $0x14] sm:$0xf]
        %v4756 = vld [vmem:[%s4749 + $0x18] sm:$0xf]
        %v4757 = vld [vmem:[%s4749 + $0x1c] sm:$0xf]
        %v4758 = vld [vmem:[%s4749 + $0x20] sm:$0xf]
        %v4759 = vld [vmem:[%s4749 + $0x24] sm:$0xf]
        %v4760 = vld [vmem:[%s4749 + $0x28] sm:$0xf]
        %v4761 = vld [vmem:[%s4749 + $0x2c] sm:$0xf]
        %v4762 = vld [vmem:[%s4749 + $0x30] sm:$0xf]
        %v4763 = vld [vmem:[%s4749 + $0x34] sm:$0xf]
        %v4764 = vld [vmem:[%s4749 + $0x38] sm:$0xf]
        %v4765 = vld [vmem:[%s4749 + $0x3c] sm:$0xf]
        %v4766 = vunpack.c.l.b16 %v4378
        %v4767 = vunpack.c.l.b16 %v4388
        %v4768 = vunpack.c.l.b16 %v4402
        %v4769 = vunpack.c.l.b16 %v4412
        %v4770 = vunpack.c.l.b16 %v4426
        %v4771 = vunpack.c.l.b16 %v4436
        %v4772 = vunpack.c.l.b16 %v4450
        %v4773 = vunpack.c.l.b16 %v4460
        %v4774 = vunpack.c.l.b16 %v4474
        %v4775 = vunpack.c.l.b16 %v4484
        %v4776 = vunpack.c.l.b16 %v4498
        %v4777 = vunpack.c.l.b16 %v4508
        %v4778 = vunpack.c.l.b16 %v4522
        %v4779 = vunpack.c.l.b16 %v4532
        %v4780 = vunpack.c.l.b16 %v4546
        %v4781 = vunpack.c.l.b16 %v4556
        %v4782 = vunpack.c.l.b16 %v4570
        %v4783 = vunpack.c.l.b16 %v4580
        %v4784 = vunpack.c.l.b16 %v4594
        %v4785 = vunpack.c.l.b16 %v4604
        %v4786 = vunpack.c.l.b16 %v4618
        %v4787 = vunpack.c.l.b16 %v4628
        %v4788 = vunpack.c.l.b16 %v4642
        %v4789 = vunpack.c.l.b16 %v4652
        %v4790 = vunpack.c.l.b16 %v4666
        %v4791 = vunpack.c.l.b16 %v4676
        %v4792 = vunpack.c.l.b16 %v4690
        %v4793 = vunpack.c.l.b16 %v4700
        %v4794 = vunpack.c.l.b16 %v4714
        %v4795 = vunpack.c.l.b16 %v4724
        %v4796 = vunpack.c.l.b16 %v4738
        %v4797 = vunpack.c.l.b16 %v4748
        %v4798 = vpack.c.b16 %v4767, %v4766
        %v4799 = vpack.c.b16 %v4769, %v4768
        %v4800 = vpack.c.b16 %v4771, %v4770
        %v4801 = vpack.c.b16 %v4773, %v4772
        %v4802 = vpack.c.b16 %v4775, %v4774
        %v4803 = vpack.c.b16 %v4777, %v4776
        %v4804 = vpack.c.b16 %v4779, %v4778
        %v4805 = vpack.c.b16 %v4781, %v4780
        %v4806 = vpack.c.b16 %v4783, %v4782
        %v4807 = vpack.c.b16 %v4785, %v4784
        %v4808 = vpack.c.b16 %v4787, %v4786
        %v4809 = vpack.c.b16 %v4789, %v4788
        %v4810 = vpack.c.b16 %v4791, %v4790
        %v4811 = vpack.c.b16 %v4793, %v4792
        %v4812 = vpack.c.b16 %v4795, %v4794
        %v4813 = vpack.c.b16 %v4797, %v4796
        %v4846 = vunpack.c.l.b16 %v4750
        %v4847 = vunpack.c.l.b16 %v4751
        %v4848 = vunpack.c.l.b16 %v4752
        %v4849 = vunpack.c.l.b16 %v4753
        %v4850 = vunpack.c.l.b16 %v4754
        %v4851 = vunpack.c.l.b16 %v4755
        %v4852 = vunpack.c.l.b16 %v4756
        %v4853 = vunpack.c.l.b16 %v4757
        %v4854 = vunpack.c.l.b16 %v4758
        %v4855 = vunpack.c.l.b16 %v4759
        %v4856 = vunpack.c.l.b16 %v4760
        %v4857 = vunpack.c.l.b16 %v4761
        %v4858 = vunpack.c.l.b16 %v4762
        %v4859 = vunpack.c.l.b16 %v4763
        %v4860 = vunpack.c.l.b16 %v4764
        %v4861 = vunpack.c.l.b16 %v4765
        %v4862 = vpack.c.b16 %v4847, %v4846
        %v4863 = vpack.c.b16 %v4849, %v4848
        %v4864 = vpack.c.b16 %v4851, %v4850
        %v4865 = vpack.c.b16 %v4853, %v4852
        %v4866 = vpack.c.b16 %v4855, %v4854
        %v4867 = vpack.c.b16 %v4857, %v4856
        %v4868 = vpack.c.b16 %v4859, %v4858
        %v4869 = vpack.c.b16 %v4861, %v4860
        %4878 = vmatpush.bf16.msra.mxu0 %v4869
        %4879 = vmatpush.bf16.msra.mxu0 %v4868
        %4880 = vmatpush.bf16.msra.mxu0 %v4867
        %4881 = vmatpush.bf16.msra.mxu0 %v4866
        %4882 = vmatpush.bf16.msra.mxu0 %v4865
        %4883 = vmatpush.bf16.msra.mxu0 %v4864
        %4884 = vmatpush.bf16.msra.mxu0 %v4863
        %4885 = vmatpush.bf16.msra.mxu0 %v4862
        %4886 = vmatmul.bf16.gmra.mxu0 %v4798
        %v4887 = vpop.f32.mrf.mxu0
        %v4888 = vadd.f32 0.0, %v4887
        %v4889 = vpop.f32.mrf.mxu0
        %v4890 = vadd.f32 0.0, %v4889
        %4891 = vmatmul.bf16.gmra.mxu0 %v4799
        %v4892 = vpop.f32.mrf.mxu0
        %v4893 = vadd.f32 0.0, %v4892
        %v4894 = vpop.f32.mrf.mxu0
        %v4895 = vadd.f32 0.0, %v4894
        %4896 = vmatmul.bf16.gmra.mxu0 %v4800
        %v4897 = vpop.f32.mrf.mxu0
        %v4898 = vadd.f32 0.0, %v4897
        %v4899 = vpop.f32.mrf.mxu0
        %v4900 = vadd.f32 0.0, %v4899
        %4901 = vmatmul.bf16.gmra.mxu0 %v4801
        %v4902 = vpop.f32.mrf.mxu0
        %v4903 = vadd.f32 0.0, %v4902
        %v4904 = vpop.f32.mrf.mxu0
        %v4905 = vadd.f32 0.0, %v4904
        %4906 = vmatmul.bf16.gmra.mxu0 %v4802
        %v4907 = vpop.f32.mrf.mxu0
        %v4908 = vadd.f32 0.0, %v4907
        %v4909 = vpop.f32.mrf.mxu0
        %v4910 = vadd.f32 0.0, %v4909
        %4911 = vmatmul.bf16.gmra.mxu0 %v4803
        %v4912 = vpop.f32.mrf.mxu0
        %v4913 = vadd.f32 0.0, %v4912
        %v4914 = vpop.f32.mrf.mxu0
        %v4915 = vadd.f32 0.0, %v4914
        %4916 = vmatmul.bf16.gmra.mxu0 %v4804
        %v4917 = vpop.f32.mrf.mxu0
        %v4918 = vadd.f32 0.0, %v4917
        %v4919 = vpop.f32.mrf.mxu0
        %v4920 = vadd.f32 0.0, %v4919
        %4921 = vmatmul.bf16.gmra.mxu0 %v4805
        %v4922 = vpop.f32.mrf.mxu0
        %v4923 = vadd.f32 0.0, %v4922
        %v4924 = vpop.f32.mrf.mxu0
        %v4925 = vadd.f32 0.0, %v4924
        %4926 = vmatmul.bf16.gmra.mxu0 %v4806
        %v4927 = vpop.f32.mrf.mxu0
        %v4928 = vadd.f32 0.0, %v4927
        %v4929 = vpop.f32.mrf.mxu0
        %v4930 = vadd.f32 0.0, %v4929
        %4931 = vmatmul.bf16.gmra.mxu0 %v4807
        %v4932 = vpop.f32.mrf.mxu0
        %v4933 = vadd.f32 0.0, %v4932
        %v4934 = vpop.f32.mrf.mxu0
        %v4935 = vadd.f32 0.0, %v4934
        %4936 = vmatmul.bf16.gmra.mxu0 %v4808
        %v4937 = vpop.f32.mrf.mxu0
        %v4938 = vadd.f32 0.0, %v4937
        %v4939 = vpop.f32.mrf.mxu0
        %v4940 = vadd.f32 0.0, %v4939
        %4941 = vmatmul.bf16.gmra.mxu0 %v4809
        %v4942 = vpop.f32.mrf.mxu0
        %v4943 = vadd.f32 0.0, %v4942
        %v4944 = vpop.f32.mrf.mxu0
        %v4945 = vadd.f32 0.0, %v4944
        %4946 = vmatmul.bf16.gmra.mxu0 %v4810
        %v4947 = vpop.f32.mrf.mxu0
        %v4948 = vadd.f32 0.0, %v4947
        %v4949 = vpop.f32.mrf.mxu0
        %v4950 = vadd.f32 0.0, %v4949
        %4951 = vmatmul.bf16.gmra.mxu0 %v4811
        %v4952 = vpop.f32.mrf.mxu0
        %v4953 = vadd.f32 0.0, %v4952
        %v4954 = vpop.f32.mrf.mxu0
        %v4955 = vadd.f32 0.0, %v4954
        %4956 = vmatmul.bf16.gmra.mxu0 %v4812
        %v4957 = vpop.f32.mrf.mxu0
        %v4958 = vadd.f32 0.0, %v4957
        %v4959 = vpop.f32.mrf.mxu0
        %v4960 = vadd.f32 0.0, %v4959
        %4961 = vmatmul.bf16.gmra.mxu0 %v4813
        %v4962 = vpop.f32.mrf.mxu0
        %v4963 = vadd.f32 0.0, %v4962
        %v4964 = vpop.f32.mrf.mxu0
        %v4965 = vadd.f32 0.0, %v4964
        %4966 = vdwg.mxu0
        %v4967 = vadd.f32 %v4285, %v4888
        %v4968 = vadd.f32 %v4286, %v4890
        %v4969 = vadd.f32 %v4287, %v4893
        %v4970 = vadd.f32 %v4288, %v4895
        %v4971 = vadd.f32 %v4289, %v4898
        %v4972 = vadd.f32 %v4290, %v4900
        %v4973 = vadd.f32 %v4291, %v4903
        %v4974 = vadd.f32 %v4292, %v4905
        %v4975 = vadd.f32 %v4293, %v4908
        %v4976 = vadd.f32 %v4294, %v4910
        %v4977 = vadd.f32 %v4295, %v4913
        %v4978 = vadd.f32 %v4296, %v4915
        %v4979 = vadd.f32 %v4297, %v4918
        %v4980 = vadd.f32 %v4298, %v4920
        %v4981 = vadd.f32 %v4299, %v4923
        %v4982 = vadd.f32 %v4300, %v4925
        %v4983 = vadd.f32 %v4301, %v4928
        %v4984 = vadd.f32 %v4302, %v4930
        %v4985 = vadd.f32 %v4303, %v4933
        %v4986 = vadd.f32 %v4304, %v4935
        %v4987 = vadd.f32 %v4305, %v4938
        %v4988 = vadd.f32 %v4306, %v4940
        %v4989 = vadd.f32 %v4307, %v4943
        %v4990 = vadd.f32 %v4308, %v4945
        %v4991 = vadd.f32 %v4309, %v4948
        %v4992 = vadd.f32 %v4310, %v4950
        %v4993 = vadd.f32 %v4311, %v4953
        %v4994 = vadd.f32 %v4312, %v4955
        %v4995 = vadd.f32 %v4313, %v4958
        %v4996 = vadd.f32 %v4314, %v4960
        %v4997 = vadd.f32 %v4315, %v4963
        %v4998 = vadd.f32 %v4316, %v4965
        %v4999 = vld [vmem:[%s4002] sm:$0xe]
        %v5000 = vld [vmem:[%s4002 + $0xc] sm:$0xe]
        %v5001 = vld [vmem:[%s4002 + $0x18] sm:$0xe]
        %v5002 = vld [vmem:[%s4002 + $0x24] sm:$0xe]
        %v5003 = vld [vmem:[%s4002 + $0x30] sm:$0xe]
        %v5004 = vld [vmem:[%s4002 + $0x3c] sm:$0xe]
        %v5005 = vld [vmem:[%s4002 + $0x48] sm:$0xe]
        %v5006 = vld [vmem:[%s4002 + $0x54] sm:$0xe]
        %v5007 = vld [vmem:[%s4002 + $0x60] sm:$0xe]
        %v5008 = vld [vmem:[%s4002 + $0x6c] sm:$0xe]
        %v5009 = vld [vmem:[%s4002 + $0x78] sm:$0xe]
        %v5010 = vld [vmem:[%s4002 + $0x84] sm:$0xe]
        %v5011 = vld [vmem:[%s4002 + $0x90] sm:$0xe]
        %v5012 = vld [vmem:[%s4002 + $0x9c] sm:$0xe]
        %v5013 = vld [vmem:[%s4002 + $0xa8] sm:$0xe]
        %v5014 = vld [vmem:[%s4002 + $0xb4] sm:$0xe]
        %v5063 = vrot.slane %v4999, 5
        %v5064 = vrot.slane %v5063, 4
        %v5065 = vrot.slane %v4318, 5
        %v5066 = vsel %vm2217, %v5064, %v5065
        %v5067 = vrot.slane %v5065, 4
        %v5068 = vrot.slane %v4319, 5
        %v5069 = vsel %vm2217, %v5067, %v5068
        %v5070 = vrot.slane %v5000, 5
        %v5071 = vrot.slane %v5070, 4
        %v5072 = vrot.slane %v4321, 5
        %v5073 = vsel %vm2217, %v5071, %v5072
        %v5074 = vrot.slane %v5072, 4
        %v5075 = vrot.slane %v4322, 5
        %v5076 = vsel %vm2217, %v5074, %v5075
        %v5077 = vrot.slane %v5001, 5
        %v5078 = vrot.slane %v5077, 4
        %v5079 = vrot.slane %v4324, 5
        %v5080 = vsel %vm2217, %v5078, %v5079
        %v5081 = vrot.slane %v5079, 4
        %v5082 = vrot.slane %v4325, 5
        %v5083 = vsel %vm2217, %v5081, %v5082
        %v5084 = vrot.slane %v5002, 5
        %v5085 = vrot.slane %v5084, 4
        %v5086 = vrot.slane %v4327, 5
        %v5087 = vsel %vm2217, %v5085, %v5086
        %v5088 = vrot.slane %v5086, 4
        %v5089 = vrot.slane %v4328, 5
        %v5090 = vsel %vm2217, %v5088, %v5089
        %v5091 = vrot.slane %v5003, 5
        %v5092 = vrot.slane %v5091, 4
        %v5093 = vrot.slane %v4330, 5
        %v5094 = vsel %vm2217, %v5092, %v5093
        %v5095 = vrot.slane %v5093, 4
        %v5096 = vrot.slane %v4331, 5
        %v5097 = vsel %vm2217, %v5095, %v5096
        %v5098 = vrot.slane %v5004, 5
        %v5099 = vrot.slane %v5098, 4
        %v5100 = vrot.slane %v4333, 5
        %v5101 = vsel %vm2217, %v5099, %v5100
        %v5102 = vrot.slane %v5100, 4
        %v5103 = vrot.slane %v4334, 5
        %v5104 = vsel %vm2217, %v5102, %v5103
        %v5105 = vrot.slane %v5005, 5
        %v5106 = vrot.slane %v5105, 4
        %v5107 = vrot.slane %v4336, 5
        %v5108 = vsel %vm2217, %v5106, %v5107
        %v5109 = vrot.slane %v5107, 4
        %v5110 = vrot.slane %v4337, 5
        %v5111 = vsel %vm2217, %v5109, %v5110
        %v5112 = vrot.slane %v5006, 5
        %v5113 = vrot.slane %v5112, 4
        %v5114 = vrot.slane %v4339, 5
        %v5115 = vsel %vm2217, %v5113, %v5114
        %v5116 = vrot.slane %v5114, 4
        %v5117 = vrot.slane %v4340, 5
        %v5118 = vsel %vm2217, %v5116, %v5117
        %v5119 = vrot.slane %v5007, 5
        %v5120 = vrot.slane %v5119, 4
        %v5121 = vrot.slane %v4342, 5
        %v5122 = vsel %vm2217, %v5120, %v5121
        %v5123 = vrot.slane %v5121, 4
        %v5124 = vrot.slane %v4343, 5
        %v5125 = vsel %vm2217, %v5123, %v5124
        %v5126 = vrot.slane %v5008, 5
        %v5127 = vrot.slane %v5126, 4
        %v5128 = vrot.slane %v4345, 5
        %v5129 = vsel %vm2217, %v5127, %v5128
        %v5130 = vrot.slane %v5128, 4
        %v5131 = vrot.slane %v4346, 5
        %v5132 = vsel %vm2217, %v5130, %v5131
        %v5133 = vrot.slane %v5009, 5
        %v5134 = vrot.slane %v5133, 4
        %v5135 = vrot.slane %v4348, 5
        %v5136 = vsel %vm2217, %v5134, %v5135
        %v5137 = vrot.slane %v5135, 4
        %v5138 = vrot.slane %v4349, 5
        %v5139 = vsel %vm2217, %v5137, %v5138
        %v5140 = vrot.slane %v5010, 5
        %v5141 = vrot.slane %v5140, 4
        %v5142 = vrot.slane %v4351, 5
        %v5143 = vsel %vm2217, %v5141, %v5142
        %v5144 = vrot.slane %v5142, 4
        %v5145 = vrot.slane %v4352, 5
        %v5146 = vsel %vm2217, %v5144, %v5145
        %v5147 = vrot.slane %v5011, 5
        %v5148 = vrot.slane %v5147, 4
        %v5149 = vrot.slane %v4354, 5
        %v5150 = vsel %vm2217, %v5148, %v5149
        %v5151 = vrot.slane %v5149, 4
        %v5152 = vrot.slane %v4355, 5
        %v5153 = vsel %vm2217, %v5151, %v5152
        %v5154 = vrot.slane %v5012, 5
        %v5155 = vrot.slane %v5154, 4
        %v5156 = vrot.slane %v4357, 5
        %v5157 = vsel %vm2217, %v5155, %v5156
        %v5158 = vrot.slane %v5156, 4
        %v5159 = vrot.slane %v4358, 5
        %v5160 = vsel %vm2217, %v5158, %v5159
        %v5161 = vrot.slane %v5013, 5
        %v5162 = vrot.slane %v5161, 4
        %v5163 = vrot.slane %v4360, 5
        %v5164 = vsel %vm2217, %v5162, %v5163
        %v5165 = vrot.slane %v5163, 4
        %v5166 = vrot.slane %v4361, 5
        %v5167 = vsel %vm2217, %v5165, %v5166
        %v5168 = vrot.slane %v5014, 5
        %v5169 = vrot.slane %v5168, 4
        %v5170 = vrot.slane %v4363, 5
        %v5171 = vsel %vm2217, %v5169, %v5170
        %v5172 = vrot.slane %v5170, 4
        %v5173 = vrot.slane %v4364, 5
        %v5174 = vsel %vm2217, %v5172, %v5173
        %s5175 = scalar_lea.vmem [#allocation3], 512
        %v5176 = vld [vmem:[%s5175] sm:$0xf]
        %v5177 = vld [vmem:[%s5175 + $0x4] sm:$0xf]
        %v5178 = vld [vmem:[%s5175 + $0x8] sm:$0xf]
        %v5179 = vld [vmem:[%s5175 + $0xc] sm:$0xf]
        %v5180 = vld [vmem:[%s5175 + $0x10] sm:$0xf]
        %v5181 = vld [vmem:[%s5175 + $0x14] sm:$0xf]
        %v5182 = vld [vmem:[%s5175 + $0x18] sm:$0xf]
        %v5183 = vld [vmem:[%s5175 + $0x1c] sm:$0xf]
        %v5184 = vld [vmem:[%s5175 + $0x20] sm:$0xf]
        %v5185 = vld [vmem:[%s5175 + $0x24] sm:$0xf]
        %v5186 = vld [vmem:[%s5175 + $0x28] sm:$0xf]
        %v5187 = vld [vmem:[%s5175 + $0x2c] sm:$0xf]
        %v5188 = vld [vmem:[%s5175 + $0x30] sm:$0xf]
        %v5189 = vld [vmem:[%s5175 + $0x34] sm:$0xf]
        %v5190 = vld [vmem:[%s5175 + $0x38] sm:$0xf]
        %v5191 = vld [vmem:[%s5175 + $0x3c] sm:$0xf]
        %v5192 = vunpack.c.l.b16 %v5066
        %v5193 = vunpack.c.l.b16 %v5069
        %v5194 = vunpack.c.l.b16 %v5073
        %v5195 = vunpack.c.l.b16 %v5076
        %v5196 = vunpack.c.l.b16 %v5080
        %v5197 = vunpack.c.l.b16 %v5083
        %v5198 = vunpack.c.l.b16 %v5087
        %v5199 = vunpack.c.l.b16 %v5090
        %v5200 = vunpack.c.l.b16 %v5094
        %v5201 = vunpack.c.l.b16 %v5097
        %v5202 = vunpack.c.l.b16 %v5101
        %v5203 = vunpack.c.l.b16 %v5104
        %v5204 = vunpack.c.l.b16 %v5108
        %v5205 = vunpack.c.l.b16 %v5111
        %v5206 = vunpack.c.l.b16 %v5115
        %v5207 = vunpack.c.l.b16 %v5118
        %v5208 = vunpack.c.l.b16 %v5122
        %v5209 = vunpack.c.l.b16 %v5125
        %v5210 = vunpack.c.l.b16 %v5129
        %v5211 = vunpack.c.l.b16 %v5132
        %v5212 = vunpack.c.l.b16 %v5136
        %v5213 = vunpack.c.l.b16 %v5139
        %v5214 = vunpack.c.l.b16 %v5143
        %v5215 = vunpack.c.l.b16 %v5146
        %v5216 = vunpack.c.l.b16 %v5150
        %v5217 = vunpack.c.l.b16 %v5153
        %v5218 = vunpack.c.l.b16 %v5157
        %v5219 = vunpack.c.l.b16 %v5160
        %v5220 = vunpack.c.l.b16 %v5164
        %v5221 = vunpack.c.l.b16 %v5167
        %v5222 = vunpack.c.l.b16 %v5171
        %v5223 = vunpack.c.l.b16 %v5174
        %v5224 = vpack.c.b16 %v5193, %v5192
        %v5225 = vpack.c.b16 %v5195, %v5194
        %v5226 = vpack.c.b16 %v5197, %v5196
        %v5227 = vpack.c.b16 %v5199, %v5198
        %v5228 = vpack.c.b16 %v5201, %v5200
        %v5229 = vpack.c.b16 %v5203, %v5202
        %v5230 = vpack.c.b16 %v5205, %v5204
        %v5231 = vpack.c.b16 %v5207, %v5206
        %v5232 = vpack.c.b16 %v5209, %v5208
        %v5233 = vpack.c.b16 %v5211, %v5210
        %v5234 = vpack.c.b16 %v5213, %v5212
        %v5235 = vpack.c.b16 %v5215, %v5214
        %v5236 = vpack.c.b16 %v5217, %v5216
        %v5237 = vpack.c.b16 %v5219, %v5218
        %v5238 = vpack.c.b16 %v5221, %v5220
        %v5239 = vpack.c.b16 %v5223, %v5222
        %v5272 = vunpack.c.l.b16 %v5176
        %v5273 = vunpack.c.l.b16 %v5177
        %v5274 = vunpack.c.l.b16 %v5178
        %v5275 = vunpack.c.l.b16 %v5179
        %v5276 = vunpack.c.l.b16 %v5180
        %v5277 = vunpack.c.l.b16 %v5181
        %v5278 = vunpack.c.l.b16 %v5182
        %v5279 = vunpack.c.l.b16 %v5183
        %v5280 = vunpack.c.l.b16 %v5184
        %v5281 = vunpack.c.l.b16 %v5185
        %v5282 = vunpack.c.l.b16 %v5186
        %v5283 = vunpack.c.l.b16 %v5187
        %v5284 = vunpack.c.l.b16 %v5188
        %v5285 = vunpack.c.l.b16 %v5189
        %v5286 = vunpack.c.l.b16 %v5190
        %v5287 = vunpack.c.l.b16 %v5191
        %v5288 = vpack.c.b16 %v5273, %v5272
        %v5289 = vpack.c.b16 %v5275, %v5274
        %v5290 = vpack.c.b16 %v5277, %v5276
        %v5291 = vpack.c.b16 %v5279, %v5278
        %v5292 = vpack.c.b16 %v5281, %v5280
        %v5293 = vpack.c.b16 %v5283, %v5282
        %v5294 = vpack.c.b16 %v5285, %v5284
        %v5295 = vpack.c.b16 %v5287, %v5286
        %5304 = vmatpush.bf16.msra.mxu0 %v5295
        %5305 = vmatpush.bf16.msra.mxu0 %v5294
        %5306 = vmatpush.bf16.msra.mxu0 %v5293
        %5307 = vmatpush.bf16.msra.mxu0 %v5292
        %5308 = vmatpush.bf16.msra.mxu0 %v5291
        %5309 = vmatpush.bf16.msra.mxu0 %v5290
        %5310 = vmatpush.bf16.msra.mxu0 %v5289
        %5311 = vmatpush.bf16.msra.mxu0 %v5288
        %5312 = vmatmul.bf16.gmra.mxu0 %v5224
        %v5313 = vpop.f32.mrf.mxu0
        %v5314 = vadd.f32 0.0, %v5313
        %v5315 = vpop.f32.mrf.mxu0
        %v5316 = vadd.f32 0.0, %v5315
        %5317 = vmatmul.bf16.gmra.mxu0 %v5225
        %v5318 = vpop.f32.mrf.mxu0
        %v5319 = vadd.f32 0.0, %v5318
        %v5320 = vpop.f32.mrf.mxu0
        %v5321 = vadd.f32 0.0, %v5320
        %5322 = vmatmul.bf16.gmra.mxu0 %v5226
        %v5323 = vpop.f32.mrf.mxu0
        %v5324 = vadd.f32 0.0, %v5323
        %v5325 = vpop.f32.mrf.mxu0
        %v5326 = vadd.f32 0.0, %v5325
        %5327 = vmatmul.bf16.gmra.mxu0 %v5227
        %v5328 = vpop.f32.mrf.mxu0
        %v5329 = vadd.f32 0.0, %v5328
        %v5330 = vpop.f32.mrf.mxu0
        %v5331 = vadd.f32 0.0, %v5330
        %5332 = vmatmul.bf16.gmra.mxu0 %v5228
        %v5333 = vpop.f32.mrf.mxu0
        %v5334 = vadd.f32 0.0, %v5333
        %v5335 = vpop.f32.mrf.mxu0
        %v5336 = vadd.f32 0.0, %v5335
        %5337 = vmatmul.bf16.gmra.mxu0 %v5229
        %v5338 = vpop.f32.mrf.mxu0
        %v5339 = vadd.f32 0.0, %v5338
        %v5340 = vpop.f32.mrf.mxu0
        %v5341 = vadd.f32 0.0, %v5340
        %5342 = vmatmul.bf16.gmra.mxu0 %v5230
        %v5343 = vpop.f32.mrf.mxu0
        %v5344 = vadd.f32 0.0, %v5343
        %v5345 = vpop.f32.mrf.mxu0
        %v5346 = vadd.f32 0.0, %v5345
        %5347 = vmatmul.bf16.gmra.mxu0 %v5231
        %v5348 = vpop.f32.mrf.mxu0
        %v5349 = vadd.f32 0.0, %v5348
        %v5350 = vpop.f32.mrf.mxu0
        %v5351 = vadd.f32 0.0, %v5350
        %5352 = vmatmul.bf16.gmra.mxu0 %v5232
        %v5353 = vpop.f32.mrf.mxu0
        %v5354 = vadd.f32 0.0, %v5353
        %v5355 = vpop.f32.mrf.mxu0
        %v5356 = vadd.f32 0.0, %v5355
        %5357 = vmatmul.bf16.gmra.mxu0 %v5233
        %v5358 = vpop.f32.mrf.mxu0
        %v5359 = vadd.f32 0.0, %v5358
        %v5360 = vpop.f32.mrf.mxu0
        %v5361 = vadd.f32 0.0, %v5360
        %5362 = vmatmul.bf16.gmra.mxu0 %v5234
        %v5363 = vpop.f32.mrf.mxu0
        %v5364 = vadd.f32 0.0, %v5363
        %v5365 = vpop.f32.mrf.mxu0
        %v5366 = vadd.f32 0.0, %v5365
        %5367 = vmatmul.bf16.gmra.mxu0 %v5235
        %v5368 = vpop.f32.mrf.mxu0
        %v5369 = vadd.f32 0.0, %v5368
        %v5370 = vpop.f32.mrf.mxu0
        %v5371 = vadd.f32 0.0, %v5370
        %5372 = vmatmul.bf16.gmra.mxu0 %v5236
        %v5373 = vpop.f32.mrf.mxu0
        %v5374 = vadd.f32 0.0, %v5373
        %v5375 = vpop.f32.mrf.mxu0
        %v5376 = vadd.f32 0.0, %v5375
        %5377 = vmatmul.bf16.gmra.mxu0 %v5237
        %v5378 = vpop.f32.mrf.mxu0
        %v5379 = vadd.f32 0.0, %v5378
        %v5380 = vpop.f32.mrf.mxu0
        %v5381 = vadd.f32 0.0, %v5380
        %5382 = vmatmul.bf16.gmra.mxu0 %v5238
        %v5383 = vpop.f32.mrf.mxu0
        %v5384 = vadd.f32 0.0, %v5383
        %v5385 = vpop.f32.mrf.mxu0
        %v5386 = vadd.f32 0.0, %v5385
        %5387 = vmatmul.bf16.gmra.mxu0 %v5239
        %v5388 = vpop.f32.mrf.mxu0
        %v5389 = vadd.f32 0.0, %v5388
        %v5390 = vpop.f32.mrf.mxu0
        %v5391 = vadd.f32 0.0, %v5390
        %5392 = vdwg.mxu0
        %v5393 = vadd.f32 %v4967, %v5314
        %v5394 = vadd.f32 %v4968, %v5316
        %v5395 = vadd.f32 %v4969, %v5319
        %v5396 = vadd.f32 %v4970, %v5321
        %v5397 = vadd.f32 %v4971, %v5324
        %v5398 = vadd.f32 %v4972, %v5326
        %v5399 = vadd.f32 %v4973, %v5329
        %v5400 = vadd.f32 %v4974, %v5331
        %v5401 = vadd.f32 %v4975, %v5334
        %v5402 = vadd.f32 %v4976, %v5336
        %v5403 = vadd.f32 %v4977, %v5339
        %v5404 = vadd.f32 %v4978, %v5341
        %v5405 = vadd.f32 %v4979, %v5344
        %v5406 = vadd.f32 %v4980, %v5346
        %v5407 = vadd.f32 %v4981, %v5349
        %v5408 = vadd.f32 %v4982, %v5351
        %v5409 = vadd.f32 %v4983, %v5354
        %v5410 = vadd.f32 %v4984, %v5356
        %v5411 = vadd.f32 %v4985, %v5359
        %v5412 = vadd.f32 %v4986, %v5361
        %v5413 = vadd.f32 %v4987, %v5364
        %v5414 = vadd.f32 %v4988, %v5366
        %v5415 = vadd.f32 %v4989, %v5369
        %v5416 = vadd.f32 %v4990, %v5371
        %v5417 = vadd.f32 %v4991, %v5374
        %v5418 = vadd.f32 %v4992, %v5376
        %v5419 = vadd.f32 %v4993, %v5379
        %v5420 = vadd.f32 %v4994, %v5381
        %v5421 = vadd.f32 %v4995, %v5384
        %v5422 = vadd.f32 %v4996, %v5386
        %v5423 = vadd.f32 %v4997, %v5389
        %v5424 = vadd.f32 %v4998, %v5391
        %v5425 = vlaneseq
        %v5426 = vand.u32 %v5425, 127
        %vm5427 = vcmp.ge.s32.totalorder %v5426, 8
        %vm5428 = vcmp.lt.s32.totalorder %v5426, 12
        %vm5429 = vmand %vm5427, %vm5428
        %v5430 = vpack.c.bf16 %v5393, %v5393
        %v5431 = vpack.c.bf16 %v5394, %v5394
        %v5432 = vpack.c.bf16 %v5395, %v5395
        %v5433 = vpack.c.bf16 %v5396, %v5396
        %v5434 = vpack.c.bf16 %v5397, %v5397
        %v5435 = vpack.c.bf16 %v5398, %v5398
        %v5436 = vpack.c.bf16 %v5399, %v5399
        %v5437 = vpack.c.bf16 %v5400, %v5400
        %v5438 = vpack.c.bf16 %v5401, %v5401
        %v5439 = vpack.c.bf16 %v5402, %v5402
        %v5440 = vpack.c.bf16 %v5403, %v5403
        %v5441 = vpack.c.bf16 %v5404, %v5404
        %v5442 = vpack.c.bf16 %v5405, %v5405
        %v5443 = vpack.c.bf16 %v5406, %v5406
        %v5444 = vpack.c.bf16 %v5407, %v5407
        %v5445 = vpack.c.bf16 %v5408, %v5408
        %v5446 = vpack.c.bf16 %v5409, %v5409
        %v5447 = vpack.c.bf16 %v5410, %v5410
        %v5448 = vpack.c.bf16 %v5411, %v5411
        %v5449 = vpack.c.bf16 %v5412, %v5412
        %v5450 = vpack.c.bf16 %v5413, %v5413
        %v5451 = vpack.c.bf16 %v5414, %v5414
        %v5452 = vpack.c.bf16 %v5415, %v5415
        %v5453 = vpack.c.bf16 %v5416, %v5416
        %v5454 = vpack.c.bf16 %v5417, %v5417
        %v5455 = vpack.c.bf16 %v5418, %v5418
        %v5456 = vpack.c.bf16 %v5419, %v5419
        %v5457 = vpack.c.bf16 %v5420, %v5420
        %v5458 = vpack.c.bf16 %v5421, %v5421
        %v5459 = vpack.c.bf16 %v5422, %v5422
        %v5460 = vpack.c.bf16 %v5423, %v5423
        %v5461 = vpack.c.bf16 %v5424, %v5424
        %v5462 = vsel %vm5429, 1, 0
        %vm5463 = vcmp.eq.s32.totalorder %v5462, 1
        %vm5464 = vmpackc.low %vm5463, %vm5463
        %v5465 = vsel %vm5464, %v5430, %v297
        %v5466 = vsel %vm5464, %v5431, %v298
        %v5467 = vsel %vm5464, %v5432, %v299
        %v5468 = vsel %vm5464, %v5433, %v300
        %v5469 = vsel %vm5464, %v5434, %v301
        %v5470 = vsel %vm5464, %v5435, %v302
        %v5471 = vsel %vm5464, %v5436, %v303
        %v5472 = vsel %vm5464, %v5437, %v304
        %v5473 = vsel %vm5464, %v5438, %v305
        %v5474 = vsel %vm5464, %v5439, %v306
        %v5475 = vsel %vm5464, %v5440, %v307
        %v5476 = vsel %vm5464, %v5441, %v308
        %v5477 = vsel %vm5464, %v5442, %v309
        %v5478 = vsel %vm5464, %v5443, %v310
        %v5479 = vsel %vm5464, %v5444, %v311
        %v5480 = vsel %vm5464, %v5445, %v312
        %v5481 = vsel %vm5464, %v5446, %v313
        %v5482 = vsel %vm5464, %v5447, %v314
        %v5483 = vsel %vm5464, %v5448, %v315
        %v5484 = vsel %vm5464, %v5449, %v316
        %v5485 = vsel %vm5464, %v5450, %v317
        %v5486 = vsel %vm5464, %v5451, %v318
        %v5487 = vsel %vm5464, %v5452, %v319
        %v5488 = vsel %vm5464, %v5453, %v320
        %v5489 = vsel %vm5464, %v5454, %v321
        %v5490 = vsel %vm5464, %v5455, %v322
        %v5491 = vsel %vm5464, %v5456, %v323
        %v5492 = vsel %vm5464, %v5457, %v324
        %v5493 = vsel %vm5464, %v5458, %v325
        %v5494 = vsel %vm5464, %v5459, %v326
        %v5495 = vsel %vm5464, %v5460, %v327
        %v5496 = vsel %vm5464, %v5461, %v328
        %5497 = vst [vmem:[%s295] sm:$0xf] %v5465
        %5498 = vst [vmem:[%s295 + $0x4] sm:$0xf] %v5466
        %5499 = vst [vmem:[%s295 + $0x8] sm:$0xf] %v5467
        %5500 = vst [vmem:[%s295 + $0xc] sm:$0xf] %v5468
        %5501 = vst [vmem:[%s295 + $0x10] sm:$0xf] %v5469
        %5502 = vst [vmem:[%s295 + $0x14] sm:$0xf] %v5470
        %5503 = vst [vmem:[%s295 + $0x18] sm:$0xf] %v5471
        %5504 = vst [vmem:[%s295 + $0x1c] sm:$0xf] %v5472
        %5505 = vst [vmem:[%s295 + $0x20] sm:$0xf] %v5473
        %5506 = vst [vmem:[%s295 + $0x24] sm:$0xf] %v5474
        %5507 = vst [vmem:[%s295 + $0x28] sm:$0xf] %v5475
        %5508 = vst [vmem:[%s295 + $0x2c] sm:$0xf] %v5476
        %5509 = vst [vmem:[%s295 + $0x30] sm:$0xf] %v5477
        %5510 = vst [vmem:[%s295 + $0x34] sm:$0xf] %v5478
        %5511 = vst [vmem:[%s295 + $0x38] sm:$0xf] %v5479
        %5512 = vst [vmem:[%s295 + $0x3c] sm:$0xf] %v5480
        %5513 = vst [vmem:[%s295 + $0x40] sm:$0xf] %v5481
        %5514 = vst [vmem:[%s295 + $0x44] sm:$0xf] %v5482
        %5515 = vst [vmem:[%s295 + $0x48] sm:$0xf] %v5483
        %5516 = vst [vmem:[%s295 + $0x4c] sm:$0xf] %v5484
        %5517 = vst [vmem:[%s295 + $0x50] sm:$0xf] %v5485
        %5518 = vst [vmem:[%s295 + $0x54] sm:$0xf] %v5486
        %5519 = vst [vmem:[%s295 + $0x58] sm:$0xf] %v5487
        %5520 = vst [vmem:[%s295 + $0x5c] sm:$0xf] %v5488
        %5521 = vst [vmem:[%s295 + $0x60] sm:$0xf] %v5489
        %5522 = vst [vmem:[%s295 + $0x64] sm:$0xf] %v5490
        %5523 = vst [vmem:[%s295 + $0x68] sm:$0xf] %v5491
        %5524 = vst [vmem:[%s295 + $0x6c] sm:$0xf] %v5492
        %5525 = vst [vmem:[%s295 + $0x70] sm:$0xf] %v5493
        %5526 = vst [vmem:[%s295 + $0x74] sm:$0xf] %v5494
        %5527 = vst [vmem:[%s295 + $0x78] sm:$0xf] %v5495
        %5528 = vst [vmem:[%s295 + $0x7c] sm:$0xf] %v5496
        %p5529 = scmp.lt.s32.totalorder %s19, 1
        %s5530 = scalar_select %p5529, %s19, 1
        %s5531 = smul.addr %s5530, 32
        %s5532 = smul.addr %s5531, 4
        %s5533 = scalar_lea.vmem %s7, %s5532
        // Predicated region
        $region53: #{dense2d_block_forward.3} parent=47 // pred_check
          %p5534 = pneg %p189
        $region54: #{dense2d_block_forward.3} parent=47 // pred_check_branch
          %5536 = sbr.rel (%p5534) target = $region56
        $region55: #{dense2d_block_forward.3} parent=47 // pred_region
          _
        $region56: #{dense2d_block_forward.3} parent=47 // pred_fallthru
          _
      $region48: #{dense2d_block_forward.3} parent=5 // pred_fallthru
        _
      %p5537 = scmp.le.s32.totalorder 2, %s14
      // Predicated region
      $region57: #{dense2d_block_forward.3} parent=5 // pred_check
        %p5538 = pneg %p5537
      $region58: #{dense2d_block_forward.3} parent=5 // pred_check_branch
        %5540 = sbr.rel (%p5538) target = $region60
      $region59: #{dense2d_block_forward.3} parent=5 // pred_region
        %s5541 = ssub.s32 %s14, 2
        // Predicated region
        $region61: #{dense2d_block_forward.3} parent=59 // pred_check
          %p5542 = pneg %p195
        $region62: #{dense2d_block_forward.3} parent=59 // pred_check_branch
          %5544 = sbr.rel (%p5542) target = $region64
        $region63: #{dense2d_block_forward.3} parent=59 // pred_region
          %p5545 = scmp.lt.s32.totalorder %s20, 1
          %s5546 = scalar_select %p5545, %s20, 1
          %s5547 = smul.addr %s5546, 32
          %s5548 = smul.addr %s5547, 4
          %s5549 = scalar_lea.vmem %s7, %s5548
        $region64: #{dense2d_block_forward.3} parent=59 // pred_fallthru
          _
      $region60: #{dense2d_block_forward.3} parent=5 // pred_fallthru
        _
    $region6: #{dense2d_block_forward.3} parent=1 // loop_footer
      %s18 = sadd.s32 1, %s14
    $region7: #{dense2d_block_forward.3} parent=1 // loop_footer_branch
      %13 = sbr.rel target = $region3
    $region8: #{dense2d_block_forward.3} parent=1 // loop_exit
      _
    %5550 = vsyncpa [#allocation4], 1
    %s5551 = scalar_lea.sflag [#allocation4], 1
    %5552 = vsyncpa %s5551, 1

// kernel: dense2d_block_forward.2
$region0: #{dense2d_block_forward.2}
  #allocation0 [shape = 'u32[]', space=smem, size = 0x4, offset = 0x4, fixed_abs, tag = 'smem constant byte address 0x4 - core index']
  #allocation1 [shape = 'u32[72,128]{1,0:T(1,128)}', space=vmem, size = 0x9000, scoped, tag = 'internal scratch']
  #allocation2 [shape = 'bf16[18,18,128]{2,1,0:T(8,128)(2,1)}', space=vmem, size = 0x1b000, scoped, tag = 'scratch operand']
  %s0 = inlined_call_operand.vmem [shape: bf16[2,16,16,128], index: 0, kind: input, shape index: {}, may-alias: {0,7}]
  %s1 = inlined_call_operand.vmem [shape: f32[1,128], index: 1, kind: input, shape index: {}]
  %s2 = inlined_call_operand.vmem [shape: f32[1,128], index: 2, kind: input, shape index: {}]
  %s3 = inlined_call_operand.vmem [shape: bf16[128,128], index: 3, kind: input, shape index: {}]
  %s4 = inlined_call_operand.vmem [shape: f32[1,128], index: 4, kind: input, shape index: {}]
  %s5 = inlined_call_operand.vmem [shape: f32[1,128], index: 5, kind: input, shape index: {}]
  %s6 = inlined_call_operand.vmem [shape: bf16[9,128,128], index: 6, kind: input, shape index: {}]
  %s7 = inlined_call_operand.vmem [shape: bf16[2,16,16,128], index: 7, kind: output, shape index: {}, may-alias: {0,7}]
  %s8 = sld [smem:[#allocation0]]
  $region61: #{dense2d_block_forward.2} parent=0
    _
  %s10 = ssub.s32 1, %s8
  %s11 = scalar_select 0, %s10, %s8
  loop: start=0, step=1, limit=4
  $region2: #{dense2d_block_forward.2} parent=0 // loop_pre_header
    _
  $region3: #{dense2d_block_forward.2} parent=0 // loop_header
    %s13 = sphi 0, %s17
    %p14 = scmp.ge.s32.totalorder %s13, 4
    %s23 = sphi 0, %s25
    %s26 = sphi 0, %s23
    %s27 = sphi 0, %s26
    %s43 = sphi 0, %s27
    %s47 = sphi 0, %s47
    %s49 = sphi 0, %s47
    %s50 = sphi 0, %s49
    %s64 = sphi 0, %s50
    %s68 = sphi 0, %s68
    %s70 = sphi 0, %s68
    %s71 = sphi 0, %s70
    %s85 = sphi 0, %s71
    %s89 = sphi 0, %s89
    %s91 = sphi 0, %s89
    %s92 = sphi 0, %s91
    %s106 = sphi 0, %s92
    %s110 = sphi 0, %s110
    %s112 = sphi 0, %s110
    %s113 = sphi 0, %s112
    %s127 = sphi 0, %s113
    %s131 = sphi 0, %s131
    %s133 = sphi 0, %s131
    %s134 = sphi 0, %s133
    %s148 = sphi 0, %s134
    %s152 = sphi 0, %s152
    %s154 = sphi 0, %s152
    %s155 = sphi 0, %s154
    %s169 = sphi 0, %s155
    %s175 = sphi 0, %s177
    %s178 = sphi 0, %s175
    %s179 = sphi 0, %s178
    %s195 = sphi 0, %s179
  $region4: #{dense2d_block_forward.2} parent=0 // loop_header_branch
    %16 = sbr.rel (%p14) target = $region8
  $region5: #{dense2d_block_forward.2} parent=0 // loop_body
    %s18 = ssub.s32 %s13, 1
    %s19 = ssub.s32 %s13, 2
    %s20 = sadd.s32 %s13, 1
    %s21 = ssub.s32 %s13, %s20
    %p22 = scmp.eq.s32.totalorder %s21, 0
    %s24 = sadd.s32 %s23, 1
    %s25 = scalar_select %p22, %s23, %s24
    %p28 = pneg %p22
    %p29 = scmp.eq.s32.totalorder %s13, 1
    %p30 = por %p28, %p29
    %p31 = scmp.ne.s32.totalorder %s23, %s26
    %p32 = scmp.eq.s32.totalorder %s13, 0
    %p33 = por %p31, %p32
    %p34 = scmp.ne.s32.totalorder %s23, %s26
    %p35 = scmp.eq.s32.totalorder %s18, 1
    %p36 = por %p34, %p35
    %p37 = scmp.ne.s32.totalorder %s26, %s27
    %p38 = scmp.eq.s32.totalorder %s18, 0
    %p39 = por %p37, %p38
    %p40 = scmp.ne.s32.totalorder %s26, %s27
    %p41 = scmp.eq.s32.totalorder %s19, 1
    %p42 = por %p40, %p41
    %p44 = scmp.ne.s32.totalorder %s27, %s43
    %p45 = scmp.eq.s32.totalorder %s19, 0
    %p46 = por %p44, %p45
    %s48 = sadd.s32 %s47, 1
    %p51 = scmp.eq.s32.totalorder %s13, 1
    %p52 = scmp.ne.s32.totalorder %s47, %s49
    %p53 = scmp.eq.s32.totalorder %s13, 0
    %p54 = por %p52, %p53
    %p55 = scmp.ne.s32.totalorder %s47, %s49
    %p56 = scmp.eq.s32.totalorder %s18, 1
    %p57 = por %p55, %p56
    %p58 = scmp.ne.s32.totalorder %s49, %s50
    %p59 = scmp.eq.s32.totalorder %s18, 0
    %p60 = por %p58, %p59
    %p61 = scmp.ne.s32.totalorder %s49, %s50
    %p62 = scmp.eq.s32.totalorder %s19, 1
    %p63 = por %p61, %p62
    %p65 = scmp.ne.s32.totalorder %s50, %s64
    %p66 = scmp.eq.s32.totalorder %s19, 0
    %p67 = por %p65, %p66
    %s69 = sadd.s32 %s68, 1
    %p72 = scmp.eq.s32.totalorder %s13, 1
    %p73 = scmp.ne.s32.totalorder %s68, %s70
    %p74 = scmp.eq.s32.totalorder %s13, 0
    %p75 = por %p73, %p74
    %p76 = scmp.ne.s32.totalorder %s68, %s70
    %p77 = scmp.eq.s32.totalorder %s18, 1
    %p78 = por %p76, %p77
    %p79 = scmp.ne.s32.totalorder %s70, %s71
    %p80 = scmp.eq.s32.totalorder %s18, 0
    %p81 = por %p79, %p80
    %p82 = scmp.ne.s32.totalorder %s70, %s71
    %p83 = scmp.eq.s32.totalorder %s19, 1
    %p84 = por %p82, %p83
    %p86 = scmp.ne.s32.totalorder %s71, %s85
    %p87 = scmp.eq.s32.totalorder %s19, 0
    %p88 = por %p86, %p87
    %s90 = sadd.s32 %s89, 1
    %p93 = scmp.eq.s32.totalorder %s13, 1
    %p94 = scmp.ne.s32.totalorder %s89, %s91
    %p95 = scmp.eq.s32.totalorder %s13, 0
    %p96 = por %p94, %p95
    %p97 = scmp.ne.s32.totalorder %s89, %s91
    %p98 = scmp.eq.s32.totalorder %s18, 1
    %p99 = por %p97, %p98
    %p100 = scmp.ne.s32.totalorder %s91, %s92
    %p101 = scmp.eq.s32.totalorder %s18, 0
    %p102 = por %p100, %p101
    %p103 = scmp.ne.s32.totalorder %s91, %s92
    %p104 = scmp.eq.s32.totalorder %s19, 1
    %p105 = por %p103, %p104
    %p107 = scmp.ne.s32.totalorder %s92, %s106
    %p108 = scmp.eq.s32.totalorder %s19, 0
    %p109 = por %p107, %p108
    %s111 = sadd.s32 %s110, 1
    %p114 = scmp.eq.s32.totalorder %s13, 1
    %p115 = scmp.ne.s32.totalorder %s110, %s112
    %p116 = scmp.eq.s32.totalorder %s13, 0
    %p117 = por %p115, %p116
    %p118 = scmp.ne.s32.totalorder %s110, %s112
    %p119 = scmp.eq.s32.totalorder %s18, 1
    %p120 = por %p118, %p119
    %p121 = scmp.ne.s32.totalorder %s112, %s113
    %p122 = scmp.eq.s32.totalorder %s18, 0
    %p123 = por %p121, %p122
    %p124 = scmp.ne.s32.totalorder %s112, %s113
    %p125 = scmp.eq.s32.totalorder %s19, 1
    %p126 = por %p124, %p125
    %p128 = scmp.ne.s32.totalorder %s113, %s127
    %p129 = scmp.eq.s32.totalorder %s19, 0
    %p130 = por %p128, %p129
    %s132 = sadd.s32 %s131, 1
    %p135 = scmp.eq.s32.totalorder %s13, 1
    %p136 = scmp.ne.s32.totalorder %s131, %s133
    %p137 = scmp.eq.s32.totalorder %s13, 0
    %p138 = por %p136, %p137
    %p139 = scmp.ne.s32.totalorder %s131, %s133
    %p140 = scmp.eq.s32.totalorder %s18, 1
    %p141 = por %p139, %p140
    %p142 = scmp.ne.s32.totalorder %s133, %s134
    %p143 = scmp.eq.s32.totalorder %s18, 0
    %p144 = por %p142, %p143
    %p145 = scmp.ne.s32.totalorder %s133, %s134
    %p146 = scmp.eq.s32.totalorder %s19, 1
    %p147 = por %p145, %p146
    %p149 = scmp.ne.s32.totalorder %s134, %s148
    %p150 = scmp.eq.s32.totalorder %s19, 0
    %p151 = por %p149, %p150
    %s153 = sadd.s32 %s152, 1
    %p156 = scmp.eq.s32.totalorder %s13, 1
    %p157 = scmp.ne.s32.totalorder %s152, %s154
    %p158 = scmp.eq.s32.totalorder %s13, 0
    %p159 = por %p157, %p158
    %p160 = scmp.ne.s32.totalorder %s152, %s154
    %p161 = scmp.eq.s32.totalorder %s18, 1
    %p162 = por %p160, %p161
    %p163 = scmp.ne.s32.totalorder %s154, %s155
    %p164 = scmp.eq.s32.totalorder %s18, 0
    %p165 = por %p163, %p164
    %p166 = scmp.ne.s32.totalorder %s154, %s155
    %p167 = scmp.eq.s32.totalorder %s19, 1
    %p168 = por %p166, %p167
    %p170 = scmp.ne.s32.totalorder %s155, %s169
    %p171 = scmp.eq.s32.totalorder %s19, 0
    %p172 = por %p170, %p171
    %s173 = ssub.s32 %s13, %s20
    %p174 = scmp.eq.s32.totalorder %s173, 0
    %s176 = sadd.s32 %s175, 1
    %s177 = scalar_select %p174, %s175, %s176
    %p180 = pneg %p174
    %p181 = scmp.eq.s32.totalorder %s13, 1
    %p182 = por %p180, %p181
    %p183 = scmp.ne.s32.totalorder %s175, %s178
    %p184 = scmp.eq.s32.totalorder %s13, 0
    %p185 = por %p183, %p184
    %p186 = scmp.ne.s32.totalorder %s175, %s178
    %p187 = scmp.eq.s32.totalorder %s18, 1
    %p188 = por %p186, %p187
    %p189 = scmp.ne.s32.totalorder %s178, %s179
    %p190 = scmp.eq.s32.totalorder %s18, 0
    %p191 = por %p189, %p190
    %p192 = scmp.ne.s32.totalorder %s178, %s179
    %p193 = scmp.eq.s32.totalorder %s19, 1
    %p194 = por %p192, %p193
    %p196 = scmp.ne.s32.totalorder %s179, %s195
    %p197 = scmp.eq.s32.totalorder %s19, 0
    %p198 = por %p196, %p197
    %p199 = scmp.le.s32.totalorder 1, %s13
    %p200 = scmp.lt.s32.totalorder %s13, 3
    %p201 = pnand %p199, %p200
    %p202 = pneg %p201
    // Predicated region
    $region9: #{dense2d_block_forward.2} parent=5 // pred_check
      _
    $region10: #{dense2d_block_forward.2} parent=5 // pred_check_branch
      %204 = sbr.rel (%p201) target = $region12
    $region11: #{dense2d_block_forward.2} parent=5 // pred_region
      %s205 = ssub.s32 %s13, 1
      // Predicated region
      $region13: #{dense2d_block_forward.2} parent=11 // pred_check
        %p206 = pneg %p60
      $region14: #{dense2d_block_forward.2} parent=11 // pred_check_branch
        %208 = sbr.rel (%p206) target = $region16
      $region15: #{dense2d_block_forward.2} parent=11 // pred_region
        _
      $region16: #{dense2d_block_forward.2} parent=11 // pred_fallthru
        _
      // Predicated region
      $region17: #{dense2d_block_forward.2} parent=11 // pred_check
        %p209 = pneg %p81
      $region18: #{dense2d_block_forward.2} parent=11 // pred_check_branch
        %211 = sbr.rel (%p209) target = $region20
      $region19: #{dense2d_block_forward.2} parent=11 // pred_region
        _
      $region20: #{dense2d_block_forward.2} parent=11 // pred_fallthru
        _
      // Predicated region
      $region21: #{dense2d_block_forward.2} parent=11 // pred_check
        %p212 = pneg %p102
      $region22: #{dense2d_block_forward.2} parent=11 // pred_check_branch
        %214 = sbr.rel (%p212) target = $region24
      $region23: #{dense2d_block_forward.2} parent=11 // pred_region
        _
      $region24: #{dense2d_block_forward.2} parent=11 // pred_fallthru
        _
      // Predicated region
      $region25: #{dense2d_block_forward.2} parent=11 // pred_check
        %p215 = pneg %p123
      $region26: #{dense2d_block_forward.2} parent=11 // pred_check_branch
        %217 = sbr.rel (%p215) target = $region28
      $region27: #{dense2d_block_forward.2} parent=11 // pred_region
        _
      $region28: #{dense2d_block_forward.2} parent=11 // pred_fallthru
        _
      // Predicated region
      $region29: #{dense2d_block_forward.2} parent=11 // pred_check
        %p218 = pneg %p144
      $region30: #{dense2d_block_forward.2} parent=11 // pred_check_branch
        %220 = sbr.rel (%p218) target = $region32
      $region31: #{dense2d_block_forward.2} parent=11 // pred_region
        _
      $region32: #{dense2d_block_forward.2} parent=11 // pred_fallthru
        _
      // Predicated region
      $region33: #{dense2d_block_forward.2} parent=11 // pred_check
        %p221 = pneg %p165
      $region34: #{dense2d_block_forward.2} parent=11 // pred_check_branch
        %223 = sbr.rel (%p221) target = $region36
      $region35: #{dense2d_block_forward.2} parent=11 // pred_region
        _
      $region36: #{dense2d_block_forward.2} parent=11 // pred_fallthru
        _
    $region12: #{dense2d_block_forward.2} parent=5 // pred_fallthru
      _
    %p224 = scmp.lt.s32.totalorder %s13, 2
    // Predicated region
    $region37: #{dense2d_block_forward.2} parent=5 // pred_check
      %p225 = pneg %p224
    $region38: #{dense2d_block_forward.2} parent=5 // pred_check_branch
      %227 = sbr.rel (%p225) target = $region40
    $region39: #{dense2d_block_forward.2} parent=5 // pred_region
      // Predicated region
      $region41: #{dense2d_block_forward.2} parent=39 // pred_check
        %p228 = pneg %p33
      $region42: #{dense2d_block_forward.2} parent=39 // pred_check_branch
        %230 = sbr.rel (%p228) target = $region44
      $region43: #{dense2d_block_forward.2} parent=39 // pred_region
        %p231 = scmp.lt.s32.totalorder %s13, 1
        %s232 = scalar_select %p231, %s13, 1
        %s233 = smul.addr %s232, 32
        %s234 = smul.addr %s233, 4
        %s235 = scalar_lea.vmem %s0, %s234
      $region44: #{dense2d_block_forward.2} parent=39 // pred_fallthru
        _
    $region40: #{dense2d_block_forward.2} parent=5 // pred_fallthru
      _
    %p236 = scmp.le.s32.totalorder 1, %s13
    %p237 = scmp.lt.s32.totalorder %s13, 3
    %p238 = pnand %p236, %p237
    %p239 = pneg %p238
    // Predicated region
    $region45: #{dense2d_block_forward.2} parent=5 // pred_check
      _
    $region46: #{dense2d_block_forward.2} parent=5 // pred_check_branch
      %241 = sbr.rel (%p238) target = $region48
    $region47: #{dense2d_block_forward.2} parent=5 // pred_region
      %s242 = ssub.s32 %s13, 1
      %p243 = scmp.lt.s32.totalorder %s18, 1
      %s244 = scalar_select %p243, %s18, 1
      %s245 = smul.addr %s244, 32
      %s246 = smul.addr %s245, 4
      %s247 = scalar_lea.vmem %s0, %s246
      %p248 = pneg %p39
      %p249 = pneg %p36
      %p250 = pneg %p60
      %p251 = pneg %p57
      %p252 = pneg %p81
      %p253 = pneg %p78
      %p254 = pneg %p102
      %p255 = pneg %p99
      %p256 = pneg %p123
      %p257 = pneg %p120
      %p258 = pneg %p144
      %p259 = pneg %p141
      %p260 = pneg %p165
      %p261 = pneg %p162
      %p262 = pneg %p191
      %p263 = pneg %p188
      %p264 = scmp.lt.s32.totalorder %s18, 1
      %s265 = scalar_select %p264, %s18, 1
      %s266 = smul.addr %s265, 32
      %s267 = smul.addr %s266, 4
      %s268 = scalar_lea.vmem %s7, %s267
      %p269 = scmp.lt.s32.totalorder %s18, 1
      %s270 = scalar_select %p269, %s18, 1
      %s271 = smul.addr %s270, 32
      %s272 = smul.addr %s271, 4
      %s273 = scalar_lea.vmem %s0, %s272
      %p274 = scmp.lt.s32.totalorder %s18, 1
      %s275 = scalar_select %p274, %s18, 1
      %s276 = smul.addr %s275, 32
      %s277 = smul.addr %s276, 4
      %s278 = scalar_lea.vmem %s7, %s277
      %v280 = vld [vmem:[%s273] sm:$0xf]
      %v281 = vld [vmem:[%s273 + $0x4] sm:$0xf]
      %v282 = vld [vmem:[%s273 + $0x8] sm:$0xf]
      %v283 = vld [vmem:[%s273 + $0xc] sm:$0xf]
      %v284 = vld [vmem:[%s273 + $0x10] sm:$0xf]
      %v285 = vld [vmem:[%s273 + $0x14] sm:$0xf]
      %v286 = vld [vmem:[%s273 + $0x18] sm:$0xf]
      %v287 = vld [vmem:[%s273 + $0x1c] sm:$0xf]
      %v288 = vld [vmem:[%s273 + $0x20] sm:$0xf]
      %v289 = vld [vmem:[%s273 + $0x24] sm:$0xf]
      %v290 = vld [vmem:[%s273 + $0x28] sm:$0xf]
      %v291 = vld [vmem:[%s273 + $0x2c] sm:$0xf]
      %v292 = vld [vmem:[%s273 + $0x30] sm:$0xf]
      %v293 = vld [vmem:[%s273 + $0x34] sm:$0xf]
      %v294 = vld [vmem:[%s273 + $0x38] sm:$0xf]
      %v295 = vld [vmem:[%s273 + $0x3c] sm:$0xf]
      %v296 = vld [vmem:[%s273 + $0x40] sm:$0xf]
      %v297 = vld [vmem:[%s273 + $0x44] sm:$0xf]
      %v298 = vld [vmem:[%s273 + $0x48] sm:$0xf]
      %v299 = vld [vmem:[%s273 + $0x4c] sm:$0xf]
      %v300 = vld [vmem:[%s273 + $0x50] sm:$0xf]
      %v301 = vld [vmem:[%s273 + $0x54] sm:$0xf]
      %v302 = vld [vmem:[%s273 + $0x58] sm:$0xf]
      %v303 = vld [vmem:[%s273 + $0x5c] sm:$0xf]
      %v304 = vld [vmem:[%s273 + $0x60] sm:$0xf]
      %v305 = vld [vmem:[%s273 + $0x64] sm:$0xf]
      %v306 = vld [vmem:[%s273 + $0x68] sm:$0xf]
      %v307 = vld [vmem:[%s273 + $0x6c] sm:$0xf]
      %v308 = vld [vmem:[%s273 + $0x70] sm:$0xf]
      %v309 = vld [vmem:[%s273 + $0x74] sm:$0xf]
      %v310 = vld [vmem:[%s273 + $0x78] sm:$0xf]
      %v311 = vld [vmem:[%s273 + $0x7c] sm:$0xf]
      %v312 = vunpack.c.l.bf16 %v280
      %v313 = vunpack.c.l.bf16 %v281
      %v314 = vunpack.c.l.bf16 %v282
      %v315 = vunpack.c.l.bf16 %v283
      %v316 = vunpack.c.l.bf16 %v284
      %v317 = vunpack.c.l.bf16 %v285
      %v318 = vunpack.c.l.bf16 %v286
      %v319 = vunpack.c.l.bf16 %v287
      %v320 = vunpack.c.l.bf16 %v288
      %v321 = vunpack.c.l.bf16 %v289
      %v322 = vunpack.c.l.bf16 %v290
      %v323 = vunpack.c.l.bf16 %v291
      %v324 = vunpack.c.l.bf16 %v292
      %v325 = vunpack.c.l.bf16 %v293
      %v326 = vunpack.c.l.bf16 %v294
      %v327 = vunpack.c.l.bf16 %v295
      %v328 = vunpack.c.l.bf16 %v296
      %v329 = vunpack.c.l.bf16 %v297
      %v330 = vunpack.c.l.bf16 %v298
      %v331 = vunpack.c.l.bf16 %v299
      %v332 = vunpack.c.l.bf16 %v300
      %v333 = vunpack.c.l.bf16 %v301
      %v334 = vunpack.c.l.bf16 %v302
      %v335 = vunpack.c.l.bf16 %v303
      %v336 = vunpack.c.l.bf16 %v304
      %v337 = vunpack.c.l.bf16 %v305
      %v338 = vunpack.c.l.bf16 %v306
      %v339 = vunpack.c.l.bf16 %v307
      %v340 = vunpack.c.l.bf16 %v308
      %v341 = vunpack.c.l.bf16 %v309
      %v342 = vunpack.c.l.bf16 %v310
      %v343 = vunpack.c.l.bf16 %v311
      %v344 = vld [vmem:[%s1] sm:$0x1]
      %v346 = vperm.slane %v344, 0
      %v348 = vmul.f32 %v312, %v346
      %v349 = vmul.f32 %v313, %v346
      %v350 = vmul.f32 %v314, %v346
      %v351 = vmul.f32 %v315, %v346
      %v352 = vmul.f32 %v316, %v346
      %v353 = vmul.f32 %v317, %v346
      %v354 = vmul.f32 %v318, %v346
      %v355 = vmul.f32 %v319, %v346
      %v356 = vmul.f32 %v320, %v346
      %v357 = vmul.f32 %v321, %v346
      %v358 = vmul.f32 %v322, %v346
      %v359 = vmul.f32 %v323, %v346
      %v360 = vmul.f32 %v324, %v346
      %v361 = vmul.f32 %v325, %v346
      %v362 = vmul.f32 %v326, %v346
      %v363 = vmul.f32 %v327, %v346
      %v364 = vmul.f32 %v328, %v346
      %v365 = vmul.f32 %v329, %v346
      %v366 = vmul.f32 %v330, %v346
      %v367 = vmul.f32 %v331, %v346
      %v368 = vmul.f32 %v332, %v346
      %v369 = vmul.f32 %v333, %v346
      %v370 = vmul.f32 %v334, %v346
      %v371 = vmul.f32 %v335, %v346
      %v372 = vmul.f32 %v336, %v346
      %v373 = vmul.f32 %v337, %v346
      %v374 = vmul.f32 %v338, %v346
      %v375 = vmul.f32 %v339, %v346
      %v376 = vmul.f32 %v340, %v346
      %v377 = vmul.f32 %v341, %v346
      %v378 = vmul.f32 %v342, %v346
      %v379 = vmul.f32 %v343, %v346
      %v380 = vld [vmem:[%s2] sm:$0x1]
      %v382 = vperm.slane %v380, 0
      %v384 = vadd.f32 %v348, %v382
      %v385 = vadd.f32 %v349, %v382
      %v386 = vadd.f32 %v350, %v382
      %v387 = vadd.f32 %v351, %v382
      %v388 = vadd.f32 %v352, %v382
      %v389 = vadd.f32 %v353, %v382
      %v390 = vadd.f32 %v354, %v382
      %v391 = vadd.f32 %v355, %v382
      %v392 = vadd.f32 %v356, %v382
      %v393 = vadd.f32 %v357, %v382
      %v394 = vadd.f32 %v358, %v382
      %v395 = vadd.f32 %v359, %v382
      %v396 = vadd.f32 %v360, %v382
      %v397 = vadd.f32 %v361, %v382
      %v398 = vadd.f32 %v362, %v382
      %v399 = vadd.f32 %v363, %v382
      %v400 = vadd.f32 %v364, %v382
      %v401 = vadd.f32 %v365, %v382
      %v402 = vadd.f32 %v366, %v382
      %v403 = vadd.f32 %v367, %v382
      %v404 = vadd.f32 %v368, %v382
      %v405 = vadd.f32 %v369, %v382
      %v406 = vadd.f32 %v370, %v382
      %v407 = vadd.f32 %v371, %v382
      %v408 = vadd.f32 %v372, %v382
      %v409 = vadd.f32 %v373, %v382
      %v410 = vadd.f32 %v374, %v382
      %v411 = vadd.f32 %v375, %v382
      %v412 = vadd.f32 %v376, %v382
      %v413 = vadd.f32 %v377, %v382
      %v414 = vadd.f32 %v378, %v382
      %v415 = vadd.f32 %v379, %v382
      %v416 = vmax.f32 %v384, 0.0
      %v417 = vmax.f32 %v385, 0.0
      %v418 = vmax.f32 %v386, 0.0
      %v419 = vmax.f32 %v387, 0.0
      %v420 = vmax.f32 %v388, 0.0
      %v421 = vmax.f32 %v389, 0.0
      %v422 = vmax.f32 %v390, 0.0
      %v423 = vmax.f32 %v391, 0.0
      %v424 = vmax.f32 %v392, 0.0
      %v425 = vmax.f32 %v393, 0.0
      %v426 = vmax.f32 %v394, 0.0
      %v427 = vmax.f32 %v395, 0.0
      %v428 = vmax.f32 %v396, 0.0
      %v429 = vmax.f32 %v397, 0.0
      %v430 = vmax.f32 %v398, 0.0
      %v431 = vmax.f32 %v399, 0.0
      %v432 = vmax.f32 %v400, 0.0
      %v433 = vmax.f32 %v401, 0.0
      %v434 = vmax.f32 %v402, 0.0
      %v435 = vmax.f32 %v403, 0.0
      %v436 = vmax.f32 %v404, 0.0
      %v437 = vmax.f32 %v405, 0.0
      %v438 = vmax.f32 %v406, 0.0
      %v439 = vmax.f32 %v407, 0.0
      %v440 = vmax.f32 %v408, 0.0
      %v441 = vmax.f32 %v409, 0.0
      %v442 = vmax.f32 %v410, 0.0
      %v443 = vmax.f32 %v411, 0.0
      %v444 = vmax.f32 %v412, 0.0
      %v445 = vmax.f32 %v413, 0.0
      %v446 = vmax.f32 %v414, 0.0
      %v447 = vmax.f32 %v415, 0.0
      %v448 = vpack.c.bf16 %v417, %v416
      %v449 = vpack.c.bf16 %v419, %v418
      %v450 = vpack.c.bf16 %v421, %v420
      %v451 = vpack.c.bf16 %v423, %v422
      %v452 = vpack.c.bf16 %v425, %v424
      %v453 = vpack.c.bf16 %v427, %v426
      %v454 = vpack.c.bf16 %v429, %v428
      %v455 = vpack.c.bf16 %v431, %v430
      %v456 = vpack.c.bf16 %v433, %v432
      %v457 = vpack.c.bf16 %v435, %v434
      %v458 = vpack.c.bf16 %v437, %v436
      %v459 = vpack.c.bf16 %v439, %v438
      %v460 = vpack.c.bf16 %v441, %v440
      %v461 = vpack.c.bf16 %v443, %v442
      %v462 = vpack.c.bf16 %v445, %v444
      %v463 = vpack.c.bf16 %v447, %v446
      %v464 = vld [vmem:[%s3] sm:$0xf]
      %v465 = vld [vmem:[%s3 + $0x4] sm:$0xf]
      %v466 = vld [vmem:[%s3 + $0x8] sm:$0xf]
      %v467 = vld [vmem:[%s3 + $0xc] sm:$0xf]
      %v468 = vld [vmem:[%s3 + $0x10] sm:$0xf]
      %v469 = vld [vmem:[%s3 + $0x14] sm:$0xf]
      %v470 = vld [vmem:[%s3 + $0x18] sm:$0xf]
      %v471 = vld [vmem:[%s3 + $0x1c] sm:$0xf]
      %v472 = vld [vmem:[%s3 + $0x20] sm:$0xf]
      %v473 = vld [vmem:[%s3 + $0x24] sm:$0xf]
      %v474 = vld [vmem:[%s3 + $0x28] sm:$0xf]
      %v475 = vld [vmem:[%s3 + $0x2c] sm:$0xf]
      %v476 = vld [vmem:[%s3 + $0x30] sm:$0xf]
      %v477 = vld [vmem:[%s3 + $0x34] sm:$0xf]
      %v478 = vld [vmem:[%s3 + $0x38] sm:$0xf]
      %v479 = vld [vmem:[%s3 + $0x3c] sm:$0xf]
      %v496 = vunpack.c.l.b16 %v464
      %v497 = vunpack.c.l.b16 %v465
      %v498 = vunpack.c.l.b16 %v466
      %v499 = vunpack.c.l.b16 %v467
      %v500 = vunpack.c.l.b16 %v468
      %v501 = vunpack.c.l.b16 %v469
      %v502 = vunpack.c.l.b16 %v470
      %v503 = vunpack.c.l.b16 %v471
      %v504 = vunpack.c.l.b16 %v472
      %v505 = vunpack.c.l.b16 %v473
      %v506 = vunpack.c.l.b16 %v474
      %v507 = vunpack.c.l.b16 %v475
      %v508 = vunpack.c.l.b16 %v476
      %v509 = vunpack.c.l.b16 %v477
      %v510 = vunpack.c.l.b16 %v478
      %v511 = vunpack.c.l.b16 %v479
      %v512 = vpack.c.b16 %v497, %v496
      %v513 = vpack.c.b16 %v499, %v498
      %v514 = vpack.c.b16 %v501, %v500
      %v515 = vpack.c.b16 %v503, %v502
      %v516 = vpack.c.b16 %v505, %v504
      %v517 = vpack.c.b16 %v507, %v506
      %v518 = vpack.c.b16 %v509, %v508
      %v519 = vpack.c.b16 %v511, %v510
      %528 = vmatpush.bf16.msra.mxu0 %v519
      %529 = vmatpush.bf16.msra.mxu0 %v518
      %530 = vmatpush.bf16.msra.mxu0 %v517
      %531 = vmatpush.bf16.msra.mxu0 %v516
      %532 = vmatpush.bf16.msra.mxu0 %v515
      %533 = vmatpush.bf16.msra.mxu0 %v514
      %534 = vmatpush.bf16.msra.mxu0 %v513
      %535 = vmatpush.bf16.msra.mxu0 %v512
      %536 = vmatmul.bf16.gmra.mxu0 %v448
      %v537 = vpop.f32.mrf.mxu0
      %v538 = vadd.f32 0.0, %v537
      %v539 = vpop.f32.mrf.mxu0
      %v540 = vadd.f32 0.0, %v539
      %541 = vmatmul.bf16.gmra.mxu0 %v449
      %v542 = vpop.f32.mrf.mxu0
      %v543 = vadd.f32 0.0, %v542
      %v544 = vpop.f32.mrf.mxu0
      %v545 = vadd.f32 0.0, %v544
      %546 = vmatmul.bf16.gmra.mxu0 %v450
      %v547 = vpop.f32.mrf.mxu0
      %v548 = vadd.f32 0.0, %v547
      %v549 = vpop.f32.mrf.mxu0
      %v550 = vadd.f32 0.0, %v549
      %551 = vmatmul.bf16.gmra.mxu0 %v451
      %v552 = vpop.f32.mrf.mxu0
      %v553 = vadd.f32 0.0, %v552
      %v554 = vpop.f32.mrf.mxu0
      %v555 = vadd.f32 0.0, %v554
      %556 = vmatmul.bf16.gmra.mxu0 %v452
      %v557 = vpop.f32.mrf.mxu0
      %v558 = vadd.f32 0.0, %v557
      %v559 = vpop.f32.mrf.mxu0
      %v560 = vadd.f32 0.0, %v559
      %561 = vmatmul.bf16.gmra.mxu0 %v453
      %v562 = vpop.f32.mrf.mxu0
      %v563 = vadd.f32 0.0, %v562
      %v564 = vpop.f32.mrf.mxu0
      %v565 = vadd.f32 0.0, %v564
      %566 = vmatmul.bf16.gmra.mxu0 %v454
      %v567 = vpop.f32.mrf.mxu0
      %v568 = vadd.f32 0.0, %v567
      %v569 = vpop.f32.mrf.mxu0
      %v570 = vadd.f32 0.0, %v569
      %571 = vmatmul.bf16.gmra.mxu0 %v455
      %v572 = vpop.f32.mrf.mxu0
      %v573 = vadd.f32 0.0, %v572
      %v574 = vpop.f32.mrf.mxu0
      %v575 = vadd.f32 0.0, %v574
      %576 = vmatmul.bf16.gmra.mxu0 %v456
      %v577 = vpop.f32.mrf.mxu0
      %v578 = vadd.f32 0.0, %v577
      %v579 = vpop.f32.mrf.mxu0
      %v580 = vadd.f32 0.0, %v579
      %581 = vmatmul.bf16.gmra.mxu0 %v457
      %v582 = vpop.f32.mrf.mxu0
      %v583 = vadd.f32 0.0, %v582
      %v584 = vpop.f32.mrf.mxu0
      %v585 = vadd.f32 0.0, %v584
      %586 = vmatmul.bf16.gmra.mxu0 %v458
      %v587 = vpop.f32.mrf.mxu0
      %v588 = vadd.f32 0.0, %v587
      %v589 = vpop.f32.mrf.mxu0
      %v590 = vadd.f32 0.0, %v589
      %591 = vmatmul.bf16.gmra.mxu0 %v459
      %v592 = vpop.f32.mrf.mxu0
      %v593 = vadd.f32 0.0, %v592
      %v594 = vpop.f32.mrf.mxu0
      %v595 = vadd.f32 0.0, %v594
      %596 = vmatmul.bf16.gmra.mxu0 %v460
      %v597 = vpop.f32.mrf.mxu0
      %v598 = vadd.f32 0.0, %v597
      %v599 = vpop.f32.mrf.mxu0
      %v600 = vadd.f32 0.0, %v599
      %601 = vmatmul.bf16.gmra.mxu0 %v461
      %v602 = vpop.f32.mrf.mxu0
      %v603 = vadd.f32 0.0, %v602
      %v604 = vpop.f32.mrf.mxu0
      %v605 = vadd.f32 0.0, %v604
      %606 = vmatmul.bf16.gmra.mxu0 %v462
      %v607 = vpop.f32.mrf.mxu0
      %v608 = vadd.f32 0.0, %v607
      %v609 = vpop.f32.mrf.mxu0
      %v610 = vadd.f32 0.0, %v609
      %611 = vmatmul.bf16.gmra.mxu0 %v463
      %v612 = vpop.f32.mrf.mxu0
      %v613 = vadd.f32 0.0, %v612
      %v614 = vpop.f32.mrf.mxu0
      %v615 = vadd.f32 0.0, %v614
      %616 = vdwg.mxu0
      %v617 = vld [vmem:[%s4] sm:$0x1]
      %v619 = vperm.slane %v617, 0
      %v621 = vmul.f32 %v538, %v619
      %v622 = vmul.f32 %v540, %v619
      %v623 = vmul.f32 %v543, %v619
      %v624 = vmul.f32 %v545, %v619
      %v625 = vmul.f32 %v548, %v619
      %v626 = vmul.f32 %v550, %v619
      %v627 = vmul.f32 %v553, %v619
      %v628 = vmul.f32 %v555, %v619
      %v629 = vmul.f32 %v558, %v619
      %v630 = vmul.f32 %v560, %v619
      %v631 = vmul.f32 %v563, %v619
      %v632 = vmul.f32 %v565, %v619
      %v633 = vmul.f32 %v568, %v619
      %v634 = vmul.f32 %v570, %v619
      %v635 = vmul.f32 %v573, %v619
      %v636 = vmul.f32 %v575, %v619
      %v637 = vmul.f32 %v578, %v619
      %v638 = vmul.f32 %v580, %v619
      %v639 = vmul.f32 %v583, %v619
      %v640 = vmul.f32 %v585, %v619
      %v641 = vmul.f32 %v588, %v619
      %v642 = vmul.f32 %v590, %v619
      %v643 = vmul.f32 %v593, %v619
      %v644 = vmul.f32 %v595, %v619
      %v645 = vmul.f32 %v598, %v619
      %v646 = vmul.f32 %v600, %v619
      %v647 = vmul.f32 %v603, %v619
      %v648 = vmul.f32 %v605, %v619
      %v649 = vmul.f32 %v608, %v619
      %v650 = vmul.f32 %v610, %v619
      %v651 = vmul.f32 %v613, %v619
      %v652 = vmul.f32 %v615, %v619
      %v653 = vld [vmem:[%s5] sm:$0x1]
      %v655 = vperm.slane %v653, 0
      %v657 = vadd.f32 %v621, %v655
      %v658 = vadd.f32 %v622, %v655
      %v659 = vadd.f32 %v623, %v655
      %v660 = vadd.f32 %v624, %v655
      %v661 = vadd.f32 %v625, %v655
      %v662 = vadd.f32 %v626, %v655
      %v663 = vadd.f32 %v627, %v655
      %v664 = vadd.f32 %v628, %v655
      %v665 = vadd.f32 %v629, %v655
      %v666 = vadd.f32 %v630, %v655
      %v667 = vadd.f32 %v631, %v655
      %v668 = vadd.f32 %v632, %v655
      %v669 = vadd.f32 %v633, %v655
      %v670 = vadd.f32 %v634, %v655
      %v671 = vadd.f32 %v635, %v655
      %v672 = vadd.f32 %v636, %v655
      %v673 = vadd.f32 %v637, %v655
      %v674 = vadd.f32 %v638, %v655
      %v675 = vadd.f32 %v639, %v655
      %v676 = vadd.f32 %v640, %v655
      %v677 = vadd.f32 %v641, %v655
      %v678 = vadd.f32 %v642, %v655
      %v679 = vadd.f32 %v643, %v655
      %v680 = vadd.f32 %v644, %v655
      %v681 = vadd.f32 %v645, %v655
      %v682 = vadd.f32 %v646, %v655
      %v683 = vadd.f32 %v647, %v655
      %v684 = vadd.f32 %v648, %v655
      %v685 = vadd.f32 %v649, %v655
      %v686 = vadd.f32 %v650, %v655
      %v687 = vadd.f32 %v651, %v655
      %v688 = vadd.f32 %v652, %v655
      %v689 = vmax.f32 %v657, 0.0
      %v690 = vmax.f32 %v658, 0.0
      %v691 = vmax.f32 %v659, 0.0
      %v692 = vmax.f32 %v660, 0.0
      %v693 = vmax.f32 %v661, 0.0
      %v694 = vmax.f32 %v662, 0.0
      %v695 = vmax.f32 %v663, 0.0
      %v696 = vmax.f32 %v664, 0.0
      %v697 = vmax.f32 %v665, 0.0
      %v698 = vmax.f32 %v666, 0.0
      %v699 = vmax.f32 %v667, 0.0
      %v700 = vmax.f32 %v668, 0.0
      %v701 = vmax.f32 %v669, 0.0
      %v702 = vmax.f32 %v670, 0.0
      %v703 = vmax.f32 %v671, 0.0
      %v704 = vmax.f32 %v672, 0.0
      %v705 = vmax.f32 %v673, 0.0
      %v706 = vmax.f32 %v674, 0.0
      %v707 = vmax.f32 %v675, 0.0
      %v708 = vmax.f32 %v676, 0.0
      %v709 = vmax.f32 %v677, 0.0
      %v710 = vmax.f32 %v678, 0.0
      %v711 = vmax.f32 %v679, 0.0
      %v712 = vmax.f32 %v680, 0.0
      %v713 = vmax.f32 %v681, 0.0
      %v714 = vmax.f32 %v682, 0.0
      %v715 = vmax.f32 %v683, 0.0
      %v716 = vmax.f32 %v684, 0.0
      %v717 = vmax.f32 %v685, 0.0
      %v718 = vmax.f32 %v686, 0.0
      %v719 = vmax.f32 %v687, 0.0
      %v720 = vmax.f32 %v688, 0.0
      %v721 = vpack.c.bf16 %v689, %v689
      %v722 = vpack.c.bf16 %v690, %v690
      %v723 = vpack.c.bf16 %v691, %v691
      %v724 = vpack.c.bf16 %v692, %v692
      %v725 = vpack.c.bf16 %v693, %v693
      %v726 = vpack.c.bf16 %v694, %v694
      %v727 = vpack.c.bf16 %v695, %v695
      %v728 = vpack.c.bf16 %v696, %v696
      %v729 = vpack.c.bf16 %v697, %v697
      %v730 = vpack.c.bf16 %v698, %v698
      %v731 = vpack.c.bf16 %v699, %v699
      %v732 = vpack.c.bf16 %v700, %v700
      %v733 = vpack.c.bf16 %v701, %v701
      %v734 = vpack.c.bf16 %v702, %v702
      %v735 = vpack.c.bf16 %v703, %v703
      %v736 = vpack.c.bf16 %v704, %v704
      %v737 = vpack.c.bf16 %v705, %v705
      %v738 = vpack.c.bf16 %v706, %v706
      %v739 = vpack.c.bf16 %v707, %v707
      %v740 = vpack.c.bf16 %v708, %v708
      %v741 = vpack.c.bf16 %v709, %v709
      %v742 = vpack.c.bf16 %v710, %v710
      %v743 = vpack.c.bf16 %v711, %v711
      %v744 = vpack.c.bf16 %v712, %v712
      %v745 = vpack.c.bf16 %v713, %v713
      %v746 = vpack.c.bf16 %v714, %v714
      %v747 = vpack.c.bf16 %v715, %v715
      %v748 = vpack.c.bf16 %v716, %v716
      %v749 = vpack.c.bf16 %v717, %v717
      %v750 = vpack.c.bf16 %v718, %v718
      %v751 = vpack.c.bf16 %v719, %v719
      %v752 = vpack.c.bf16 %v720, %v720
      %753 = vst [vmem:[#allocation2] sm:$0xf] 0
      %754 = vst [vmem:[#allocation2 + $0x4] sm:$0xf] 0
      %755 = vst [vmem:[#allocation2 + $0x8] sm:$0x1] 0
      %756 = vst [vmem:[#allocation2 + $0xc] sm:$0xf] 0
      %757 = vst [vmem:[#allocation2 + $0x10] sm:$0xf] 0
      %758 = vst [vmem:[#allocation2 + $0x14] sm:$0x1] 0
      %759 = vst [vmem:[#allocation2 + $0x18] sm:$0xf] 0
      %760 = vst [vmem:[#allocation2 + $0x1c] sm:$0xf] 0
      %761 = vst [vmem:[#allocation2 + $0x20] sm:$0x1] 0
      %762 = vst [vmem:[#allocation2 + $0x24] sm:$0xf] 0
      %763 = vst [vmem:[#allocation2 + $0x28] sm:$0xf] 0
      %764 = vst [vmem:[#allocation2 + $0x2c] sm:$0x1] 0
      %765 = vst [vmem:[#allocation2 + $0x30] sm:$0xf] 0
      %766 = vst [vmem:[#allocation2 + $0x34] sm:$0xf] 0
      %767 = vst [vmem:[#allocation2 + $0x38] sm:$0x1] 0
      %768 = vst [vmem:[#allocation2 + $0x3c] sm:$0xf] 0
      %769 = vst [vmem:[#allocation2 + $0x40] sm:$0xf] 0
      %770 = vst [vmem:[#allocation2 + $0x44] sm:$0x1] 0
      %771 = vst [vmem:[#allocation2 + $0x48] sm:$0xf] 0
      %772 = vst [vmem:[#allocation2 + $0x4c] sm:$0xf] 0
      %773 = vst [vmem:[#allocation2 + $0x50] sm:$0x1] 0
      %774 = vst [vmem:[#allocation2 + $0x54] sm:$0xf] 0
      %775 = vst [vmem:[#allocation2 + $0x58] sm:$0xf] 0
      %776 = vst [vmem:[#allocation2 + $0x5c] sm:$0x1] 0
      %777 = vst [vmem:[#allocation2 + $0x60] sm:$0xf] 0
      %778 = vst [vmem:[#allocation2 + $0x64] sm:$0xf] 0
      %779 = vst [vmem:[#allocation2 + $0x68] sm:$0x1] 0
      %780 = vst [vmem:[#allocation2 + $0x6c] sm:$0xf] 0
      %781 = vst [vmem:[#allocation2 + $0x70] sm:$0xf] 0
      %782 = vst [vmem:[#allocation2 + $0x74] sm:$0x1] 0
      %783 = vst [vmem:[#allocation2 + $0x78] sm:$0xf] 0
      %784 = vst [vmem:[#allocation2 + $0x7c] sm:$0xf] 0
      %785 = vst [vmem:[#allocation2 + $0x80] sm:$0x1] 0
      %786 = vst [vmem:[#allocation2 + $0x84] sm:$0xf] 0
      %787 = vst [vmem:[#allocation2 + $0x88] sm:$0xf] 0
      %788 = vst [vmem:[#allocation2 + $0x8c] sm:$0x1] 0
      %789 = vst [vmem:[#allocation2 + $0x90] sm:$0xf] 0
      %790 = vst [vmem:[#allocation2 + $0x94] sm:$0xf] 0
      %791 = vst [vmem:[#allocation2 + $0x98] sm:$0x1] 0
      %792 = vst [vmem:[#allocation2 + $0x9c] sm:$0xf] 0
      %793 = vst [vmem:[#allocation2 + $0xa0] sm:$0xf] 0
      %794 = vst [vmem:[#allocation2 + $0xa4] sm:$0x1] 0
      %795 = vst [vmem:[#allocation2 + $0xa8] sm:$0xf] 0
      %796 = vst [vmem:[#allocation2 + $0xac] sm:$0xf] 0
      %797 = vst [vmem:[#allocation2 + $0xb0] sm:$0x1] 0
      %798 = vst [vmem:[#allocation2 + $0xb4] sm:$0xf] 0
      %799 = vst [vmem:[#allocation2 + $0xb8] sm:$0xf] 0
      %800 = vst [vmem:[#allocation2 + $0xbc] sm:$0x1] 0
      %801 = vst [vmem:[#allocation2 + $0xc0] sm:$0xf] 0
      %802 = vst [vmem:[#allocation2 + $0xc4] sm:$0xf] 0
      %803 = vst [vmem:[#allocation2 + $0xc8] sm:$0x1] 0
      %804 = vst [vmem:[#allocation2 + $0xcc] sm:$0xf] 0
      %805 = vst [vmem:[#allocation2 + $0xd0] sm:$0xf] 0
      %806 = vst [vmem:[#allocation2 + $0xd4] sm:$0x1] 0
      %vm807 = vsmask.f32 256
      %vm808 = vsmask.f32 4368
      %vm809 = vmor %vm807, %vm808
      %v811 = vshrl.u32 %v721, 16
      %v813 = vrot.slane %v811, 7
      %v814 = vshll.u32 %v721, 16
      %v816 = vor.u32 %v813, %v814
      %v817 = vrot.slane %v813, 4
      %v819 = vshrl.u32 %v722, 16
      %v821 = vrot.slane %v819, 7
      %v822 = vshll.u32 %v722, 16
      %v824 = vor.u32 %v821, %v822
      %v825 = vsel %vm809, %v817, %v824
      %v826 = vrot.slane %v821, 4
      %v828 = vshrl.u32 %v723, 16
      %v830 = vrot.slane %v828, 7
      %v831 = vshll.u32 %v723, 16
      %v833 = vor.u32 %v830, %v831
      %v834 = vrot.slane %v830, 4
      %v836 = vshrl.u32 %v724, 16
      %v838 = vrot.slane %v836, 7
      %v839 = vshll.u32 %v724, 16
      %v841 = vor.u32 %v838, %v839
      %v842 = vsel %vm809, %v834, %v841
      %v843 = vrot.slane %v838, 4
      %v845 = vshrl.u32 %v725, 16
      %v847 = vrot.slane %v845, 7
      %v848 = vshll.u32 %v725, 16
      %v850 = vor.u32 %v847, %v848
      %v851 = vrot.slane %v847, 4
      %v853 = vshrl.u32 %v726, 16
      %v855 = vrot.slane %v853, 7
      %v856 = vshll.u32 %v726, 16
      %v858 = vor.u32 %v855, %v856
      %v859 = vsel %vm809, %v851, %v858
      %v860 = vrot.slane %v855, 4
      %v862 = vshrl.u32 %v727, 16
      %v864 = vrot.slane %v862, 7
      %v865 = vshll.u32 %v727, 16
      %v867 = vor.u32 %v864, %v865
      %v868 = vrot.slane %v864, 4
      %v870 = vshrl.u32 %v728, 16
      %v872 = vrot.slane %v870, 7
      %v873 = vshll.u32 %v728, 16
      %v875 = vor.u32 %v872, %v873
      %v876 = vsel %vm809, %v868, %v875
      %v877 = vrot.slane %v872, 4
      %v879 = vshrl.u32 %v729, 16
      %v881 = vrot.slane %v879, 7
      %v882 = vshll.u32 %v729, 16
      %v884 = vor.u32 %v881, %v882
      %v885 = vrot.slane %v881, 4
      %v887 = vshrl.u32 %v730, 16
      %v889 = vrot.slane %v887, 7
      %v890 = vshll.u32 %v730, 16
      %v892 = vor.u32 %v889, %v890
      %v893 = vsel %vm809, %v885, %v892
      %v894 = vrot.slane %v889, 4
      %v896 = vshrl.u32 %v731, 16
      %v898 = vrot.slane %v896, 7
      %v899 = vshll.u32 %v731, 16
      %v901 = vor.u32 %v898, %v899
      %v902 = vrot.slane %v898, 4
      %v904 = vshrl.u32 %v732, 16
      %v906 = vrot.slane %v904, 7
      %v907 = vshll.u32 %v732, 16
      %v909 = vor.u32 %v906, %v907
      %v910 = vsel %vm809, %v902, %v909
      %v911 = vrot.slane %v906, 4
      %v913 = vshrl.u32 %v733, 16
      %v915 = vrot.slane %v913, 7
      %v916 = vshll.u32 %v733, 16
      %v918 = vor.u32 %v915, %v916
      %v919 = vrot.slane %v915, 4
      %v921 = vshrl.u32 %v734, 16
      %v923 = vrot.slane %v921, 7
      %v924 = vshll.u32 %v734, 16
      %v926 = vor.u32 %v923, %v924
      %v927 = vsel %vm809, %v919, %v926
      %v928 = vrot.slane %v923, 4
      %v930 = vshrl.u32 %v735, 16
      %v932 = vrot.slane %v930, 7
      %v933 = vshll.u32 %v735, 16
      %v935 = vor.u32 %v932, %v933
      %v936 = vrot.slane %v932, 4
      %v938 = vshrl.u32 %v736, 16
      %v940 = vrot.slane %v938, 7
      %v941 = vshll.u32 %v736, 16
      %v943 = vor.u32 %v940, %v941
      %v944 = vsel %vm809, %v936, %v943
      %v945 = vrot.slane %v940, 4
      %v947 = vshrl.u32 %v737, 16
      %v949 = vrot.slane %v947, 7
      %v950 = vshll.u32 %v737, 16
      %v952 = vor.u32 %v949, %v950
      %v953 = vrot.slane %v949, 4
      %v955 = vshrl.u32 %v738, 16
      %v957 = vrot.slane %v955, 7
      %v958 = vshll.u32 %v738, 16
      %v960 = vor.u32 %v957, %v958
      %v961 = vsel %vm809, %v953, %v960
      %v962 = vrot.slane %v957, 4
      %v964 = vshrl.u32 %v739, 16
      %v966 = vrot.slane %v964, 7
      %v967 = vshll.u32 %v739, 16
      %v969 = vor.u32 %v966, %v967
      %v970 = vrot.slane %v966, 4
      %v972 = vshrl.u32 %v740, 16
      %v974 = vrot.slane %v972, 7
      %v975 = vshll.u32 %v740, 16
      %v977 = vor.u32 %v974, %v975
      %v978 = vsel %vm809, %v970, %v977
      %v979 = vrot.slane %v974, 4
      %v981 = vshrl.u32 %v741, 16
      %v983 = vrot.slane %v981, 7
      %v984 = vshll.u32 %v741, 16
      %v986 = vor.u32 %v983, %v984
      %v987 = vrot.slane %v983, 4
      %v989 = vshrl.u32 %v742, 16
      %v991 = vrot.slane %v989, 7
      %v992 = vshll.u32 %v742, 16
      %v994 = vor.u32 %v991, %v992
      %v995 = vsel %vm809, %v987, %v994
      %v996 = vrot.slane %v991, 4
      %v998 = vshrl.u32 %v743, 16
      %v1000 = vrot.slane %v998, 7
      %v1001 = vshll.u32 %v743, 16
      %v1003 = vor.u32 %v1000, %v1001
      %v1004 = vrot.slane %v1000, 4
      %v1006 = vshrl.u32 %v744, 16
      %v1008 = vrot.slane %v1006, 7
      %v1009 = vshll.u32 %v744, 16
      %v1011 = vor.u32 %v1008, %v1009
      %v1012 = vsel %vm809, %v1004, %v1011
      %v1013 = vrot.slane %v1008, 4
      %v1015 = vshrl.u32 %v745, 16
      %v1017 = vrot.slane %v1015, 7
      %v1018 = vshll.u32 %v745, 16
      %v1020 = vor.u32 %v1017, %v1018
      %v1021 = vrot.slane %v1017, 4
      %v1023 = vshrl.u32 %v746, 16
      %v1025 = vrot.slane %v1023, 7
      %v1026 = vshll.u32 %v746, 16
      %v1028 = vor.u32 %v1025, %v1026
      %v1029 = vsel %vm809, %v1021, %v1028
      %v1030 = vrot.slane %v1025, 4
      %v1032 = vshrl.u32 %v747, 16
      %v1034 = vrot.slane %v1032, 7
      %v1035 = vshll.u32 %v747, 16
      %v1037 = vor.u32 %v1034, %v1035
      %v1038 = vrot.slane %v1034, 4
      %v1040 = vshrl.u32 %v748, 16
      %v1042 = vrot.slane %v1040, 7
      %v1043 = vshll.u32 %v748, 16
      %v1045 = vor.u32 %v1042, %v1043
      %v1046 = vsel %vm809, %v1038, %v1045
      %v1047 = vrot.slane %v1042, 4
      %v1049 = vshrl.u32 %v749, 16
      %v1051 = vrot.slane %v1049, 7
      %v1052 = vshll.u32 %v749, 16
      %v1054 = vor.u32 %v1051, %v1052
      %v1055 = vrot.slane %v1051, 4
      %v1057 = vshrl.u32 %v750, 16
      %v1059 = vrot.slane %v1057, 7
      %v1060 = vshll.u32 %v750, 16
      %v1062 = vor.u32 %v1059, %v1060
      %v1063 = vsel %vm809, %v1055, %v1062
      %v1064 = vrot.slane %v1059, 4
      %v1066 = vshrl.u32 %v751, 16
      %v1068 = vrot.slane %v1066, 7
      %v1069 = vshll.u32 %v751, 16
      %v1071 = vor.u32 %v1068, %v1069
      %v1072 = vrot.slane %v1068, 4
      %v1074 = vshrl.u32 %v752, 16
      %v1076 = vrot.slane %v1074, 7
      %v1077 = vshll.u32 %v752, 16
      %v1079 = vor.u32 %v1076, %v1077
      %v1080 = vsel %vm809, %v1072, %v1079
      %v1081 = vrot.slane %v1076, 4
      %s1130 = scalar_lea.vmem [#allocation2], 12
      %vm1131 = vcmask 1043456
      %vm1132 = vsmask.f32 7938
      %vm1133 = vmand %vm1131, %vm1132
      %v1134 = vld [vmem:[%s1130] sm:$0xf]
      %v1135 = vsel %vm1133, %v816, %v1134
      %1136 = vst [vmem:[%s1130] sm:$0xf] %v1135
      %1137 = vst [vmem:[%s1130 + $0x4] sm:$0xf] %v825
      %vm1138 = vcmask 1040384
      %vm1139 = vmand %vm1138, %vm807
      %v1140 = vld [vmem:[%s1130 + $0x8] sm:$0x1]
      %v1141 = vsel %vm1139, %v826, %v1140
      %1142 = vst [vmem:[%s1130 + $0x8] sm:$0x1] %v1141
      %v1143 = vld [vmem:[%s1130 + $0xc] sm:$0xf]
      %v1144 = vsel %vm1133, %v833, %v1143
      %1145 = vst [vmem:[%s1130 + $0xc] sm:$0xf] %v1144
      %1146 = vst [vmem:[%s1130 + $0x10] sm:$0xf] %v842
      %v1147 = vld [vmem:[%s1130 + $0x14] sm:$0x1]
      %v1148 = vsel %vm1139, %v843, %v1147
      %1149 = vst [vmem:[%s1130 + $0x14] sm:$0x1] %v1148
      %v1150 = vld [vmem:[%s1130 + $0x18] sm:$0xf]
      %v1151 = vsel %vm1133, %v850, %v1150
      %1152 = vst [vmem:[%s1130 + $0x18] sm:$0xf] %v1151
      %1153 = vst [vmem:[%s1130 + $0x1c] sm:$0xf] %v859
      %v1154 = vld [vmem:[%s1130 + $0x20] sm:$0x1]
      %v1155 = vsel %vm1139, %v860, %v1154
      %1156 = vst [vmem:[%s1130 + $0x20] sm:$0x1] %v1155
      %v1157 = vld [vmem:[%s1130 + $0x24] sm:$0xf]
      %v1158 = vsel %vm1133, %v867, %v1157
      %1159 = vst [vmem:[%s1130 + $0x24] sm:$0xf] %v1158
      %1160 = vst [vmem:[%s1130 + $0x28] sm:$0xf] %v876
      %v1161 = vld [vmem:[%s1130 + $0x2c] sm:$0x1]
      %v1162 = vsel %vm1139, %v877, %v1161
      %1163 = vst [vmem:[%s1130 + $0x2c] sm:$0x1] %v1162
      %v1164 = vld [vmem:[%s1130 + $0x30] sm:$0xf]
      %v1165 = vsel %vm1133, %v884, %v1164
      %1166 = vst [vmem:[%s1130 + $0x30] sm:$0xf] %v1165
      %1167 = vst [vmem:[%s1130 + $0x34] sm:$0xf] %v893
      %v1168 = vld [vmem:[%s1130 + $0x38] sm:$0x1]
      %v1169 = vsel %vm1139, %v894, %v1168
      %1170 = vst [vmem:[%s1130 + $0x38] sm:$0x1] %v1169
      %v1171 = vld [vmem:[%s1130 + $0x3c] sm:$0xf]
      %v1172 = vsel %vm1133, %v901, %v1171
      %1173 = vst [vmem:[%s1130 + $0x3c] sm:$0xf] %v1172
      %1174 = vst [vmem:[%s1130 + $0x40] sm:$0xf] %v910
      %v1175 = vld [vmem:[%s1130 + $0x44] sm:$0x1]
      %v1176 = vsel %vm1139, %v911, %v1175
      %1177 = vst [vmem:[%s1130 + $0x44] sm:$0x1] %v1176
      %v1178 = vld [vmem:[%s1130 + $0x48] sm:$0xf]
      %v1179 = vsel %vm1133, %v918, %v1178
      %1180 = vst [vmem:[%s1130 + $0x48] sm:$0xf] %v1179
      %1181 = vst [vmem:[%s1130 + $0x4c] sm:$0xf] %v927
      %v1182 = vld [vmem:[%s1130 + $0x50] sm:$0x1]
      %v1183 = vsel %vm1139, %v928, %v1182
      %1184 = vst [vmem:[%s1130 + $0x50] sm:$0x1] %v1183
      %v1185 = vld [vmem:[%s1130 + $0x54] sm:$0xf]
      %v1186 = vsel %vm1133, %v935, %v1185
      %1187 = vst [vmem:[%s1130 + $0x54] sm:$0xf] %v1186
      %1188 = vst [vmem:[%s1130 + $0x58] sm:$0xf] %v944
      %v1189 = vld [vmem:[%s1130 + $0x5c] sm:$0x1]
      %v1190 = vsel %vm1139, %v945, %v1189
      %1191 = vst [vmem:[%s1130 + $0x5c] sm:$0x1] %v1190
      %v1192 = vld [vmem:[%s1130 + $0x60] sm:$0xf]
      %v1193 = vsel %vm1133, %v952, %v1192
      %1194 = vst [vmem:[%s1130 + $0x60] sm:$0xf] %v1193
      %1195 = vst [vmem:[%s1130 + $0x64] sm:$0xf] %v961
      %v1196 = vld [vmem:[%s1130 + $0x68] sm:$0x1]
      %v1197 = vsel %vm1139, %v962, %v1196
      %1198 = vst [vmem:[%s1130 + $0x68] sm:$0x1] %v1197
      %v1199 = vld [vmem:[%s1130 + $0x6c] sm:$0xf]
      %v1200 = vsel %vm1133, %v969, %v1199
      %1201 = vst [vmem:[%s1130 + $0x6c] sm:$0xf] %v1200
      %1202 = vst [vmem:[%s1130 + $0x70] sm:$0xf] %v978
      %v1203 = vld [vmem:[%s1130 + $0x74] sm:$0x1]
      %v1204 = vsel %vm1139, %v979, %v1203
      %1205 = vst [vmem:[%s1130 + $0x74] sm:$0x1] %v1204
      %v1206 = vld [vmem:[%s1130 + $0x78] sm:$0xf]
      %v1207 = vsel %vm1133, %v986, %v1206
      %1208 = vst [vmem:[%s1130 + $0x78] sm:$0xf] %v1207
      %1209 = vst [vmem:[%s1130 + $0x7c] sm:$0xf] %v995
      %v1210 = vld [vmem:[%s1130 + $0x80] sm:$0x1]
      %v1211 = vsel %vm1139, %v996, %v1210
      %1212 = vst [vmem:[%s1130 + $0x80] sm:$0x1] %v1211
      %v1213 = vld [vmem:[%s1130 + $0x84] sm:$0xf]
      %v1214 = vsel %vm1133, %v1003, %v1213
      %1215 = vst [vmem:[%s1130 + $0x84] sm:$0xf] %v1214
      %1216 = vst [vmem:[%s1130 + $0x88] sm:$0xf] %v1012
      %v1217 = vld [vmem:[%s1130 + $0x8c] sm:$0x1]
      %v1218 = vsel %vm1139, %v1013, %v1217
      %1219 = vst [vmem:[%s1130 + $0x8c] sm:$0x1] %v1218
      %v1220 = vld [vmem:[%s1130 + $0x90] sm:$0xf]
      %v1221 = vsel %vm1133, %v1020, %v1220
      %1222 = vst [vmem:[%s1130 + $0x90] sm:$0xf] %v1221
      %1223 = vst [vmem:[%s1130 + $0x94] sm:$0xf] %v1029
      %v1224 = vld [vmem:[%s1130 + $0x98] sm:$0x1]
      %v1225 = vsel %vm1139, %v1030, %v1224
      %1226 = vst [vmem:[%s1130 + $0x98] sm:$0x1] %v1225
      %v1227 = vld [vmem:[%s1130 + $0x9c] sm:$0xf]
      %v1228 = vsel %vm1133, %v1037, %v1227
      %1229 = vst [vmem:[%s1130 + $0x9c] sm:$0xf] %v1228
      %1230 = vst [vmem:[%s1130 + $0xa0] sm:$0xf] %v1046
      %v1231 = vld [vmem:[%s1130 + $0xa4] sm:$0x1]
      %v1232 = vsel %vm1139, %v1047, %v1231
      %1233 = vst [vmem:[%s1130 + $0xa4] sm:$0x1] %v1232
      %v1234 = vld [vmem:[%s1130 + $0xa8] sm:$0xf]
      %v1235 = vsel %vm1133, %v1054, %v1234
      %1236 = vst [vmem:[%s1130 + $0xa8] sm:$0xf] %v1235
      %1237 = vst [vmem:[%s1130 + $0xac] sm:$0xf] %v1063
      %v1238 = vld [vmem:[%s1130 + $0xb0] sm:$0x1]
      %v1239 = vsel %vm1139, %v1064, %v1238
      %1240 = vst [vmem:[%s1130 + $0xb0] sm:$0x1] %v1239
      %v1241 = vld [vmem:[%s1130 + $0xb4] sm:$0xf]
      %v1242 = vsel %vm1133, %v1071, %v1241
      %1243 = vst [vmem:[%s1130 + $0xb4] sm:$0xf] %v1242
      %1244 = vst [vmem:[%s1130 + $0xb8] sm:$0xf] %v1080
      %v1245 = vld [vmem:[%s1130 + $0xbc] sm:$0x1]
      %v1246 = vsel %vm1139, %v1081, %v1245
      %1247 = vst [vmem:[%s1130 + $0xbc] sm:$0x1] %v1246
      %v1248 = vld [vmem:[#allocation2] sm:$0xf]
      %v1249 = vld [vmem:[#allocation2 + $0x4] sm:$0xf]
      %v1250 = vld [vmem:[#allocation2 + $0xc] sm:$0xf]
      %v1251 = vld [vmem:[#allocation2 + $0x10] sm:$0xf]
      %v1252 = vld [vmem:[#allocation2 + $0x18] sm:$0xf]
      %v1253 = vld [vmem:[#allocation2 + $0x1c] sm:$0xf]
      %v1254 = vld [vmem:[#allocation2 + $0x24] sm:$0xf]
      %v1255 = vld [vmem:[#allocation2 + $0x28] sm:$0xf]
      %v1256 = vld [vmem:[#allocation2 + $0x30] sm:$0xf]
      %v1257 = vld [vmem:[#allocation2 + $0x34] sm:$0xf]
      %v1258 = vld [vmem:[#allocation2 + $0x3c] sm:$0xf]
      %v1259 = vld [vmem:[#allocation2 + $0x40] sm:$0xf]
      %v1260 = vld [vmem:[#allocation2 + $0x48] sm:$0xf]
      %v1261 = vld [vmem:[#allocation2 + $0x4c] sm:$0xf]
      %v1262 = vld [vmem:[#allocation2 + $0x54] sm:$0xf]
      %v1263 = vld [vmem:[#allocation2 + $0x58] sm:$0xf]
      %v1264 = vld [vmem:[#allocation2 + $0x60] sm:$0xf]
      %v1265 = vld [vmem:[#allocation2 + $0x64] sm:$0xf]
      %v1266 = vld [vmem:[#allocation2 + $0x6c] sm:$0xf]
      %v1267 = vld [vmem:[#allocation2 + $0x70] sm:$0xf]
      %v1268 = vld [vmem:[#allocation2 + $0x78] sm:$0xf]
      %v1269 = vld [vmem:[#allocation2 + $0x7c] sm:$0xf]
      %v1270 = vld [vmem:[#allocation2 + $0x84] sm:$0xf]
      %v1271 = vld [vmem:[#allocation2 + $0x88] sm:$0xf]
      %v1272 = vld [vmem:[#allocation2 + $0x90] sm:$0xf]
      %v1273 = vld [vmem:[#allocation2 + $0x94] sm:$0xf]
      %v1274 = vld [vmem:[#allocation2 + $0x9c] sm:$0xf]
      %v1275 = vld [vmem:[#allocation2 + $0xa0] sm:$0xf]
      %v1276 = vld [vmem:[#allocation2 + $0xa8] sm:$0xf]
      %v1277 = vld [vmem:[#allocation2 + $0xac] sm:$0xf]
      %v1278 = vld [vmem:[#allocation2 + $0xb4] sm:$0xf]
      %v1279 = vld [vmem:[#allocation2 + $0xb8] sm:$0xf]
      %v1280 = vld [vmem:[%s6] sm:$0xf]
      %v1281 = vld [vmem:[%s6 + $0x4] sm:$0xf]
      %v1282 = vld [vmem:[%s6 + $0x8] sm:$0xf]
      %v1283 = vld [vmem:[%s6 + $0xc] sm:$0xf]
      %v1284 = vld [vmem:[%s6 + $0x10] sm:$0xf]
      %v1285 = vld [vmem:[%s6 + $0x14] sm:$0xf]
      %v1286 = vld [vmem:[%s6 + $0x18] sm:$0xf]
      %v1287 = vld [vmem:[%s6 + $0x1c] sm:$0xf]
      %v1288 = vld [vmem:[%s6 + $0x20] sm:$0xf]
      %v1289 = vld [vmem:[%s6 + $0x24] sm:$0xf]
      %v1290 = vld [vmem:[%s6 + $0x28] sm:$0xf]
      %v1291 = vld [vmem:[%s6 + $0x2c] sm:$0xf]
      %v1292 = vld [vmem:[%s6 + $0x30] sm:$0xf]
      %v1293 = vld [vmem:[%s6 + $0x34] sm:$0xf]
      %v1294 = vld [vmem:[%s6 + $0x38] sm:$0xf]
      %v1295 = vld [vmem:[%s6 + $0x3c] sm:$0xf]
      %v1296 = vld [vmem:[#allocation2 + $0x8] sm:$0x1]
      %v1297 = vld [vmem:[#allocation2 + $0x14] sm:$0x1]
      %v1298 = vld [vmem:[#allocation2 + $0x20] sm:$0x1]
      %v1299 = vld [vmem:[#allocation2 + $0x2c] sm:$0x1]
      %v1300 = vld [vmem:[#allocation2 + $0x38] sm:$0x1]
      %v1301 = vld [vmem:[#allocation2 + $0x44] sm:$0x1]
      %v1302 = vld [vmem:[#allocation2 + $0x50] sm:$0x1]
      %v1303 = vld [vmem:[#allocation2 + $0x5c] sm:$0x1]
      %v1304 = vld [vmem:[#allocation2 + $0x68] sm:$0x1]
      %v1305 = vld [vmem:[#allocation2 + $0x74] sm:$0x1]
      %v1306 = vld [vmem:[#allocation2 + $0x80] sm:$0x1]
      %v1307 = vld [vmem:[#allocation2 + $0x8c] sm:$0x1]
      %v1308 = vld [vmem:[#allocation2 + $0x98] sm:$0x1]
      %v1309 = vld [vmem:[#allocation2 + $0xa4] sm:$0x1]
      %v1310 = vld [vmem:[#allocation2 + $0xb0] sm:$0x1]
      %v1311 = vld [vmem:[#allocation2 + $0xbc] sm:$0x1]
      %vm1312 = vsmask.f32 3328
      %vm1313 = vsmask.f32 7440
      %vm1314 = vmor %vm1312, %vm1313
      %v1316 = vshrl.u32 %v1248, 16
      %v1318 = vrot.slane %v1316, 4
      %v1319 = vshll.u32 %v1248, 16
      %v1321 = vrot.slane %v1319, 5
      %v1322 = vor.u32 %v1318, %v1321
      %v1323 = vrot.slane %v1322, 4
      %v1325 = vshll.u32 %v1249, 16
      %v1327 = vrot.slane %v1325, 5
      %v1328 = vsel %vm1314, %v1323, %v1327
      %v1329 = vshrl.u32 %v1249, 16
      %v1331 = vrot.slane %v1329, 4
      %v1332 = vor.u32 %v1331, %v1327
      %v1333 = vrot.slane %v1332, 4
      %v1335 = vshll.u32 %v1296, 16
      %v1337 = vrot.slane %v1335, 5
      %v1338 = vsel %vm1314, %v1333, %v1337
      %v1340 = vshrl.u32 %v1250, 16
      %v1342 = vrot.slane %v1340, 4
      %v1343 = vshll.u32 %v1250, 16
      %v1345 = vrot.slane %v1343, 5
      %v1346 = vor.u32 %v1342, %v1345
      %v1347 = vrot.slane %v1346, 4
      %v1349 = vshll.u32 %v1251, 16
      %v1351 = vrot.slane %v1349, 5
      %v1352 = vsel %vm1314, %v1347, %v1351
      %v1353 = vshrl.u32 %v1251, 16
      %v1355 = vrot.slane %v1353, 4
      %v1356 = vor.u32 %v1355, %v1351
      %v1357 = vrot.slane %v1356, 4
      %v1359 = vshll.u32 %v1297, 16
      %v1361 = vrot.slane %v1359, 5
      %v1362 = vsel %vm1314, %v1357, %v1361
      %v1364 = vshrl.u32 %v1252, 16
      %v1366 = vrot.slane %v1364, 4
      %v1367 = vshll.u32 %v1252, 16
      %v1369 = vrot.slane %v1367, 5
      %v1370 = vor.u32 %v1366, %v1369
      %v1371 = vrot.slane %v1370, 4
      %v1373 = vshll.u32 %v1253, 16
      %v1375 = vrot.slane %v1373, 5
      %v1376 = vsel %vm1314, %v1371, %v1375
      %v1377 = vshrl.u32 %v1253, 16
      %v1379 = vrot.slane %v1377, 4
      %v1380 = vor.u32 %v1379, %v1375
      %v1381 = vrot.slane %v1380, 4
      %v1383 = vshll.u32 %v1298, 16
      %v1385 = vrot.slane %v1383, 5
      %v1386 = vsel %vm1314, %v1381, %v1385
      %v1388 = vshrl.u32 %v1254, 16
      %v1390 = vrot.slane %v1388, 4
      %v1391 = vshll.u32 %v1254, 16
      %v1393 = vrot.slane %v1391, 5
      %v1394 = vor.u32 %v1390, %v1393
      %v1395 = vrot.slane %v1394, 4
      %v1397 = vshll.u32 %v1255, 16
      %v1399 = vrot.slane %v1397, 5
      %v1400 = vsel %vm1314, %v1395, %v1399
      %v1401 = vshrl.u32 %v1255, 16
      %v1403 = vrot.slane %v1401, 4
      %v1404 = vor.u32 %v1403, %v1399
      %v1405 = vrot.slane %v1404, 4
      %v1407 = vshll.u32 %v1299, 16
      %v1409 = vrot.slane %v1407, 5
      %v1410 = vsel %vm1314, %v1405, %v1409
      %v1412 = vshrl.u32 %v1256, 16
      %v1414 = vrot.slane %v1412, 4
      %v1415 = vshll.u32 %v1256, 16
      %v1417 = vrot.slane %v1415, 5
      %v1418 = vor.u32 %v1414, %v1417
      %v1419 = vrot.slane %v1418, 4
      %v1421 = vshll.u32 %v1257, 16
      %v1423 = vrot.slane %v1421, 5
      %v1424 = vsel %vm1314, %v1419, %v1423
      %v1425 = vshrl.u32 %v1257, 16
      %v1427 = vrot.slane %v1425, 4
      %v1428 = vor.u32 %v1427, %v1423
      %v1429 = vrot.slane %v1428, 4
      %v1431 = vshll.u32 %v1300, 16
      %v1433 = vrot.slane %v1431, 5
      %v1434 = vsel %vm1314, %v1429, %v1433
      %v1436 = vshrl.u32 %v1258, 16
      %v1438 = vrot.slane %v1436, 4
      %v1439 = vshll.u32 %v1258, 16
      %v1441 = vrot.slane %v1439, 5
      %v1442 = vor.u32 %v1438, %v1441
      %v1443 = vrot.slane %v1442, 4
      %v1445 = vshll.u32 %v1259, 16
      %v1447 = vrot.slane %v1445, 5
      %v1448 = vsel %vm1314, %v1443, %v1447
      %v1449 = vshrl.u32 %v1259, 16
      %v1451 = vrot.slane %v1449, 4
      %v1452 = vor.u32 %v1451, %v1447
      %v1453 = vrot.slane %v1452, 4
      %v1455 = vshll.u32 %v1301, 16
      %v1457 = vrot.slane %v1455, 5
      %v1458 = vsel %vm1314, %v1453, %v1457
      %v1460 = vshrl.u32 %v1260, 16
      %v1462 = vrot.slane %v1460, 4
      %v1463 = vshll.u32 %v1260, 16
      %v1465 = vrot.slane %v1463, 5
      %v1466 = vor.u32 %v1462, %v1465
      %v1467 = vrot.slane %v1466, 4
      %v1469 = vshll.u32 %v1261, 16
      %v1471 = vrot.slane %v1469, 5
      %v1472 = vsel %vm1314, %v1467, %v1471
      %v1473 = vshrl.u32 %v1261, 16
      %v1475 = vrot.slane %v1473, 4
      %v1476 = vor.u32 %v1475, %v1471
      %v1477 = vrot.slane %v1476, 4
      %v1479 = vshll.u32 %v1302, 16
      %v1481 = vrot.slane %v1479, 5
      %v1482 = vsel %vm1314, %v1477, %v1481
      %v1484 = vshrl.u32 %v1262, 16
      %v1486 = vrot.slane %v1484, 4
      %v1487 = vshll.u32 %v1262, 16
      %v1489 = vrot.slane %v1487, 5
      %v1490 = vor.u32 %v1486, %v1489
      %v1491 = vrot.slane %v1490, 4
      %v1493 = vshll.u32 %v1263, 16
      %v1495 = vrot.slane %v1493, 5
      %v1496 = vsel %vm1314, %v1491, %v1495
      %v1497 = vshrl.u32 %v1263, 16
      %v1499 = vrot.slane %v1497, 4
      %v1500 = vor.u32 %v1499, %v1495
      %v1501 = vrot.slane %v1500, 4
      %v1503 = vshll.u32 %v1303, 16
      %v1505 = vrot.slane %v1503, 5
      %v1506 = vsel %vm1314, %v1501, %v1505
      %v1508 = vshrl.u32 %v1264, 16
      %v1510 = vrot.slane %v1508, 4
      %v1511 = vshll.u32 %v1264, 16
      %v1513 = vrot.slane %v1511, 5
      %v1514 = vor.u32 %v1510, %v1513
      %v1515 = vrot.slane %v1514, 4
      %v1517 = vshll.u32 %v1265, 16
      %v1519 = vrot.slane %v1517, 5
      %v1520 = vsel %vm1314, %v1515, %v1519
      %v1521 = vshrl.u32 %v1265, 16
      %v1523 = vrot.slane %v1521, 4
      %v1524 = vor.u32 %v1523, %v1519
      %v1525 = vrot.slane %v1524, 4
      %v1527 = vshll.u32 %v1304, 16
      %v1529 = vrot.slane %v1527, 5
      %v1530 = vsel %vm1314, %v1525, %v1529
      %v1532 = vshrl.u32 %v1266, 16
      %v1534 = vrot.slane %v1532, 4
      %v1535 = vshll.u32 %v1266, 16
      %v1537 = vrot.slane %v1535, 5
      %v1538 = vor.u32 %v1534, %v1537
      %v1539 = vrot.slane %v1538, 4
      %v1541 = vshll.u32 %v1267, 16
      %v1543 = vrot.slane %v1541, 5
      %v1544 = vsel %vm1314, %v1539, %v1543
      %v1545 = vshrl.u32 %v1267, 16
      %v1547 = vrot.slane %v1545, 4
      %v1548 = vor.u32 %v1547, %v1543
      %v1549 = vrot.slane %v1548, 4
      %v1551 = vshll.u32 %v1305, 16
      %v1553 = vrot.slane %v1551, 5
      %v1554 = vsel %vm1314, %v1549, %v1553
      %v1556 = vshrl.u32 %v1268, 16
      %v1558 = vrot.slane %v1556, 4
      %v1559 = vshll.u32 %v1268, 16
      %v1561 = vrot.slane %v1559, 5
      %v1562 = vor.u32 %v1558, %v1561
      %v1563 = vrot.slane %v1562, 4
      %v1565 = vshll.u32 %v1269, 16
      %v1567 = vrot.slane %v1565, 5
      %v1568 = vsel %vm1314, %v1563, %v1567
      %v1569 = vshrl.u32 %v1269, 16
      %v1571 = vrot.slane %v1569, 4
      %v1572 = vor.u32 %v1571, %v1567
      %v1573 = vrot.slane %v1572, 4
      %v1575 = vshll.u32 %v1306, 16
      %v1577 = vrot.slane %v1575, 5
      %v1578 = vsel %vm1314, %v1573, %v1577
      %v1580 = vshrl.u32 %v1270, 16
      %v1582 = vrot.slane %v1580, 4
      %v1583 = vshll.u32 %v1270, 16
      %v1585 = vrot.slane %v1583, 5
      %v1586 = vor.u32 %v1582, %v1585
      %v1587 = vrot.slane %v1586, 4
      %v1589 = vshll.u32 %v1271, 16
      %v1591 = vrot.slane %v1589, 5
      %v1592 = vsel %vm1314, %v1587, %v1591
      %v1593 = vshrl.u32 %v1271, 16
      %v1595 = vrot.slane %v1593, 4
      %v1596 = vor.u32 %v1595, %v1591
      %v1597 = vrot.slane %v1596, 4
      %v1599 = vshll.u32 %v1307, 16
      %v1601 = vrot.slane %v1599, 5
      %v1602 = vsel %vm1314, %v1597, %v1601
      %v1604 = vshrl.u32 %v1272, 16
      %v1606 = vrot.slane %v1604, 4
      %v1607 = vshll.u32 %v1272, 16
      %v1609 = vrot.slane %v1607, 5
      %v1610 = vor.u32 %v1606, %v1609
      %v1611 = vrot.slane %v1610, 4
      %v1613 = vshll.u32 %v1273, 16
      %v1615 = vrot.slane %v1613, 5
      %v1616 = vsel %vm1314, %v1611, %v1615
      %v1617 = vshrl.u32 %v1273, 16
      %v1619 = vrot.slane %v1617, 4
      %v1620 = vor.u32 %v1619, %v1615
      %v1621 = vrot.slane %v1620, 4
      %v1623 = vshll.u32 %v1308, 16
      %v1625 = vrot.slane %v1623, 5
      %v1626 = vsel %vm1314, %v1621, %v1625
      %v1628 = vshrl.u32 %v1274, 16
      %v1630 = vrot.slane %v1628, 4
      %v1631 = vshll.u32 %v1274, 16
      %v1633 = vrot.slane %v1631, 5
      %v1634 = vor.u32 %v1630, %v1633
      %v1635 = vrot.slane %v1634, 4
      %v1637 = vshll.u32 %v1275, 16
      %v1639 = vrot.slane %v1637, 5
      %v1640 = vsel %vm1314, %v1635, %v1639
      %v1641 = vshrl.u32 %v1275, 16
      %v1643 = vrot.slane %v1641, 4
      %v1644 = vor.u32 %v1643, %v1639
      %v1645 = vrot.slane %v1644, 4
      %v1647 = vshll.u32 %v1309, 16
      %v1649 = vrot.slane %v1647, 5
      %v1650 = vsel %vm1314, %v1645, %v1649
      %v1652 = vshrl.u32 %v1276, 16
      %v1654 = vrot.slane %v1652, 4
      %v1655 = vshll.u32 %v1276, 16
      %v1657 = vrot.slane %v1655, 5
      %v1658 = vor.u32 %v1654, %v1657
      %v1659 = vrot.slane %v1658, 4
      %v1661 = vshll.u32 %v1277, 16
      %v1663 = vrot.slane %v1661, 5
      %v1664 = vsel %vm1314, %v1659, %v1663
      %v1665 = vshrl.u32 %v1277, 16
      %v1667 = vrot.slane %v1665, 4
      %v1668 = vor.u32 %v1667, %v1663
      %v1669 = vrot.slane %v1668, 4
      %v1671 = vshll.u32 %v1310, 16
      %v1673 = vrot.slane %v1671, 5
      %v1674 = vsel %vm1314, %v1669, %v1673
      %v1676 = vshrl.u32 %v1278, 16
      %v1678 = vrot.slane %v1676, 4
      %v1679 = vshll.u32 %v1278, 16
      %v1681 = vrot.slane %v1679, 5
      %v1682 = vor.u32 %v1678, %v1681
      %v1683 = vrot.slane %v1682, 4
      %v1685 = vshll.u32 %v1279, 16
      %v1687 = vrot.slane %v1685, 5
      %v1688 = vsel %vm1314, %v1683, %v1687
      %v1689 = vshrl.u32 %v1279, 16
      %v1691 = vrot.slane %v1689, 4
      %v1692 = vor.u32 %v1691, %v1687
      %v1693 = vrot.slane %v1692, 4
      %v1695 = vshll.u32 %v1311, 16
      %v1697 = vrot.slane %v1695, 5
      %v1698 = vsel %vm1314, %v1693, %v1697
      %s1699 = scalar_lea.vmem %s6, 64
      %v1700 = vld [vmem:[%s1699] sm:$0xf]
      %v1701 = vld [vmem:[%s1699 + $0x4] sm:$0xf]
      %v1702 = vld [vmem:[%s1699 + $0x8] sm:$0xf]
      %v1703 = vld [vmem:[%s1699 + $0xc] sm:$0xf]
      %v1704 = vld [vmem:[%s1699 + $0x10] sm:$0xf]
      %v1705 = vld [vmem:[%s1699 + $0x14] sm:$0xf]
      %v1706 = vld [vmem:[%s1699 + $0x18] sm:$0xf]
      %v1707 = vld [vmem:[%s1699 + $0x1c] sm:$0xf]
      %v1708 = vld [vmem:[%s1699 + $0x20] sm:$0xf]
      %v1709 = vld [vmem:[%s1699 + $0x24] sm:$0xf]
      %v1710 = vld [vmem:[%s1699 + $0x28] sm:$0xf]
      %v1711 = vld [vmem:[%s1699 + $0x2c] sm:$0xf]
      %v1712 = vld [vmem:[%s1699 + $0x30] sm:$0xf]
      %v1713 = vld [vmem:[%s1699 + $0x34] sm:$0xf]
      %v1714 = vld [vmem:[%s1699 + $0x38] sm:$0xf]
      %v1715 = vld [vmem:[%s1699 + $0x3c] sm:$0xf]
      %v1716 = vunpack.c.l.b16 %v1328
      %v1717 = vunpack.c.l.b16 %v1338
      %v1718 = vunpack.c.l.b16 %v1352
      %v1719 = vunpack.c.l.b16 %v1362
      %v1720 = vunpack.c.l.b16 %v1376
      %v1721 = vunpack.c.l.b16 %v1386
      %v1722 = vunpack.c.l.b16 %v1400
      %v1723 = vunpack.c.l.b16 %v1410
      %v1724 = vunpack.c.l.b16 %v1424
      %v1725 = vunpack.c.l.b16 %v1434
      %v1726 = vunpack.c.l.b16 %v1448
      %v1727 = vunpack.c.l.b16 %v1458
      %v1728 = vunpack.c.l.b16 %v1472
      %v1729 = vunpack.c.l.b16 %v1482
      %v1730 = vunpack.c.l.b16 %v1496
      %v1731 = vunpack.c.l.b16 %v1506
      %v1732 = vunpack.c.l.b16 %v1520
      %v1733 = vunpack.c.l.b16 %v1530
      %v1734 = vunpack.c.l.b16 %v1544
      %v1735 = vunpack.c.l.b16 %v1554
      %v1736 = vunpack.c.l.b16 %v1568
      %v1737 = vunpack.c.l.b16 %v1578
      %v1738 = vunpack.c.l.b16 %v1592
      %v1739 = vunpack.c.l.b16 %v1602
      %v1740 = vunpack.c.l.b16 %v1616
      %v1741 = vunpack.c.l.b16 %v1626
      %v1742 = vunpack.c.l.b16 %v1640
      %v1743 = vunpack.c.l.b16 %v1650
      %v1744 = vunpack.c.l.b16 %v1664
      %v1745 = vunpack.c.l.b16 %v1674
      %v1746 = vunpack.c.l.b16 %v1688
      %v1747 = vunpack.c.l.b16 %v1698
      %v1748 = vpack.c.b16 %v1717, %v1716
      %v1749 = vpack.c.b16 %v1719, %v1718
      %v1750 = vpack.c.b16 %v1721, %v1720
      %v1751 = vpack.c.b16 %v1723, %v1722
      %v1752 = vpack.c.b16 %v1725, %v1724
      %v1753 = vpack.c.b16 %v1727, %v1726
      %v1754 = vpack.c.b16 %v1729, %v1728
      %v1755 = vpack.c.b16 %v1731, %v1730
      %v1756 = vpack.c.b16 %v1733, %v1732
      %v1757 = vpack.c.b16 %v1735, %v1734
      %v1758 = vpack.c.b16 %v1737, %v1736
      %v1759 = vpack.c.b16 %v1739, %v1738
      %v1760 = vpack.c.b16 %v1741, %v1740
      %v1761 = vpack.c.b16 %v1743, %v1742
      %v1762 = vpack.c.b16 %v1745, %v1744
      %v1763 = vpack.c.b16 %v1747, %v1746
      %v1796 = vunpack.c.l.b16 %v1700
      %v1797 = vunpack.c.l.b16 %v1701
      %v1798 = vunpack.c.l.b16 %v1702
      %v1799 = vunpack.c.l.b16 %v1703
      %v1800 = vunpack.c.l.b16 %v1704
      %v1801 = vunpack.c.l.b16 %v1705
      %v1802 = vunpack.c.l.b16 %v1706
      %v1803 = vunpack.c.l.b16 %v1707
      %v1804 = vunpack.c.l.b16 %v1708
      %v1805 = vunpack.c.l.b16 %v1709
      %v1806 = vunpack.c.l.b16 %v1710
      %v1807 = vunpack.c.l.b16 %v1711
      %v1808 = vunpack.c.l.b16 %v1712
      %v1809 = vunpack.c.l.b16 %v1713
      %v1810 = vunpack.c.l.b16 %v1714
      %v1811 = vunpack.c.l.b16 %v1715
      %v1812 = vpack.c.b16 %v1797, %v1796
      %v1813 = vpack.c.b16 %v1799, %v1798
      %v1814 = vpack.c.b16 %v1801, %v1800
      %v1815 = vpack.c.b16 %v1803, %v1802
      %v1816 = vpack.c.b16 %v1805, %v1804
      %v1817 = vpack.c.b16 %v1807, %v1806
      %v1818 = vpack.c.b16 %v1809, %v1808
      %v1819 = vpack.c.b16 %v1811, %v1810
      %1828 = vmatpush.bf16.msra.mxu0 %v1819
      %1829 = vmatpush.bf16.msra.mxu0 %v1818
      %1830 = vmatpush.bf16.msra.mxu0 %v1817
      %1831 = vmatpush.bf16.msra.mxu0 %v1816
      %1832 = vmatpush.bf16.msra.mxu0 %v1815
      %1833 = vmatpush.bf16.msra.mxu0 %v1814
      %1834 = vmatpush.bf16.msra.mxu0 %v1813
      %1835 = vmatpush.bf16.msra.mxu0 %v1812
      %1836 = vmatmul.bf16.gmra.mxu0 %v1748
      %v1837 = vpop.f32.mrf.mxu0
      %v1838 = vadd.f32 0.0, %v1837
      %v1839 = vpop.f32.mrf.mxu0
      %v1840 = vadd.f32 0.0, %v1839
      %1841 = vmatmul.bf16.gmra.mxu0 %v1749
      %v1842 = vpop.f32.mrf.mxu0
      %v1843 = vadd.f32 0.0, %v1842
      %v1844 = vpop.f32.mrf.mxu0
      %v1845 = vadd.f32 0.0, %v1844
      %1846 = vmatmul.bf16.gmra.mxu0 %v1750
      %v1847 = vpop.f32.mrf.mxu0
      %v1848 = vadd.f32 0.0, %v1847
      %v1849 = vpop.f32.mrf.mxu0
      %v1850 = vadd.f32 0.0, %v1849
      %1851 = vmatmul.bf16.gmra.mxu0 %v1751
      %v1852 = vpop.f32.mrf.mxu0
      %v1853 = vadd.f32 0.0, %v1852
      %v1854 = vpop.f32.mrf.mxu0
      %v1855 = vadd.f32 0.0, %v1854
      %1856 = vmatmul.bf16.gmra.mxu0 %v1752
      %v1857 = vpop.f32.mrf.mxu0
      %v1858 = vadd.f32 0.0, %v1857
      %v1859 = vpop.f32.mrf.mxu0
      %v1860 = vadd.f32 0.0, %v1859
      %1861 = vmatmul.bf16.gmra.mxu0 %v1753
      %v1862 = vpop.f32.mrf.mxu0
      %v1863 = vadd.f32 0.0, %v1862
      %v1864 = vpop.f32.mrf.mxu0
      %v1865 = vadd.f32 0.0, %v1864
      %1866 = vmatmul.bf16.gmra.mxu0 %v1754
      %v1867 = vpop.f32.mrf.mxu0
      %v1868 = vadd.f32 0.0, %v1867
      %v1869 = vpop.f32.mrf.mxu0
      %v1870 = vadd.f32 0.0, %v1869
      %1871 = vmatmul.bf16.gmra.mxu0 %v1755
      %v1872 = vpop.f32.mrf.mxu0
      %v1873 = vadd.f32 0.0, %v1872
      %v1874 = vpop.f32.mrf.mxu0
      %v1875 = vadd.f32 0.0, %v1874
      %1876 = vmatmul.bf16.gmra.mxu0 %v1756
      %v1877 = vpop.f32.mrf.mxu0
      %v1878 = vadd.f32 0.0, %v1877
      %v1879 = vpop.f32.mrf.mxu0
      %v1880 = vadd.f32 0.0, %v1879
      %1881 = vmatmul.bf16.gmra.mxu0 %v1757
      %v1882 = vpop.f32.mrf.mxu0
      %v1883 = vadd.f32 0.0, %v1882
      %v1884 = vpop.f32.mrf.mxu0
      %v1885 = vadd.f32 0.0, %v1884
      %1886 = vmatmul.bf16.gmra.mxu0 %v1758
      %v1887 = vpop.f32.mrf.mxu0
      %v1888 = vadd.f32 0.0, %v1887
      %v1889 = vpop.f32.mrf.mxu0
      %v1890 = vadd.f32 0.0, %v1889
      %1891 = vmatmul.bf16.gmra.mxu0 %v1759
      %v1892 = vpop.f32.mrf.mxu0
      %v1893 = vadd.f32 0.0, %v1892
      %v1894 = vpop.f32.mrf.mxu0
      %v1895 = vadd.f32 0.0, %v1894
      %1896 = vmatmul.bf16.gmra.mxu0 %v1760
      %v1897 = vpop.f32.mrf.mxu0
      %v1898 = vadd.f32 0.0, %v1897
      %v1899 = vpop.f32.mrf.mxu0
      %v1900 = vadd.f32 0.0, %v1899
      %1901 = vmatmul.bf16.gmra.mxu0 %v1761
      %v1902 = vpop.f32.mrf.mxu0
      %v1903 = vadd.f32 0.0, %v1902
      %v1904 = vpop.f32.mrf.mxu0
      %v1905 = vadd.f32 0.0, %v1904
      %1906 = vmatmul.bf16.gmra.mxu0 %v1762
      %v1907 = vpop.f32.mrf.mxu0
      %v1908 = vadd.f32 0.0, %v1907
      %v1909 = vpop.f32.mrf.mxu0
      %v1910 = vadd.f32 0.0, %v1909
      %1911 = vmatmul.bf16.gmra.mxu0 %v1763
      %v1912 = vpop.f32.mrf.mxu0
      %v1913 = vadd.f32 0.0, %v1912
      %v1914 = vpop.f32.mrf.mxu0
      %v1915 = vadd.f32 0.0, %v1914
      %1916 = vdwg.mxu0
      %v1949 = vunpack.c.l.b16 %v1248
      %v1950 = vunpack.c.l.b16 %v1249
      %v1951 = vunpack.c.l.b16 %v1250
      %v1952 = vunpack.c.l.b16 %v1251
      %v1953 = vunpack.c.l.b16 %v1252
      %v1954 = vunpack.c.l.b16 %v1253
      %v1955 = vunpack.c.l.b16 %v1254
      %v1956 = vunpack.c.l.b16 %v1255
      %v1957 = vunpack.c.l.b16 %v1256
      %v1958 = vunpack.c.l.b16 %v1257
      %v1959 = vunpack.c.l.b16 %v1258
      %v1960 = vunpack.c.l.b16 %v1259
      %v1961 = vunpack.c.l.b16 %v1260
      %v1962 = vunpack.c.l.b16 %v1261
      %v1963 = vunpack.c.l.b16 %v1262
      %v1964 = vunpack.c.l.b16 %v1263
      %v1965 = vunpack.c.l.b16 %v1264
      %v1966 = vunpack.c.l.b16 %v1265
      %v1967 = vunpack.c.l.b16 %v1266
      %v1968 = vunpack.c.l.b16 %v1267
      %v1969 = vunpack.c.l.b16 %v1268
      %v1970 = vunpack.c.l.b16 %v1269
      %v1971 = vunpack.c.l.b16 %v1270
      %v1972 = vunpack.c.l.b16 %v1271
      %v1973 = vunpack.c.l.b16 %v1272
      %v1974 = vunpack.c.l.b16 %v1273
      %v1975 = vunpack.c.l.b16 %v1274
      %v1976 = vunpack.c.l.b16 %v1275
      %v1977 = vunpack.c.l.b16 %v1276
      %v1978 = vunpack.c.l.b16 %v1277
      %v1979 = vunpack.c.l.b16 %v1278
      %v1980 = vunpack.c.l.b16 %v1279
      %v1981 = vpack.c.b16 %v1950, %v1949
      %v1982 = vpack.c.b16 %v1952, %v1951
      %v1983 = vpack.c.b16 %v1954, %v1953
      %v1984 = vpack.c.b16 %v1956, %v1955
      %v1985 = vpack.c.b16 %v1958, %v1957
      %v1986 = vpack.c.b16 %v1960, %v1959
      %v1987 = vpack.c.b16 %v1962, %v1961
      %v1988 = vpack.c.b16 %v1964, %v1963
      %v1989 = vpack.c.b16 %v1966, %v1965
      %v1990 = vpack.c.b16 %v1968, %v1967
      %v1991 = vpack.c.b16 %v1970, %v1969
      %v1992 = vpack.c.b16 %v1972, %v1971
      %v1993 = vpack.c.b16 %v1974, %v1973
      %v1994 = vpack.c.b16 %v1976, %v1975
      %v1995 = vpack.c.b16 %v1978, %v1977
      %v1996 = vpack.c.b16 %v1980, %v1979
      %v2029 = vunpack.c.l.b16 %v1280
      %v2030 = vunpack.c.l.b16 %v1281
      %v2031 = vunpack.c.l.b16 %v1282
      %v2032 = vunpack.c.l.b16 %v1283
      %v2033 = vunpack.c.l.b16 %v1284
      %v2034 = vunpack.c.l.b16 %v1285
      %v2035 = vunpack.c.l.b16 %v1286
      %v2036 = vunpack.c.l.b16 %v1287
      %v2037 = vunpack.c.l.b16 %v1288
      %v2038 = vunpack.c.l.b16 %v1289
      %v2039 = vunpack.c.l.b16 %v1290
      %v2040 = vunpack.c.l.b16 %v1291
      %v2041 = vunpack.c.l.b16 %v1292
      %v2042 = vunpack.c.l.b16 %v1293
      %v2043 = vunpack.c.l.b16 %v1294
      %v2044 = vunpack.c.l.b16 %v1295
      %v2045 = vpack.c.b16 %v2030, %v2029
      %v2046 = vpack.c.b16 %v2032, %v2031
      %v2047 = vpack.c.b16 %v2034, %v2033
      %v2048 = vpack.c.b16 %v2036, %v2035
      %v2049 = vpack.c.b16 %v2038, %v2037
      %v2050 = vpack.c.b16 %v2040, %v2039
      %v2051 = vpack.c.b16 %v2042, %v2041
      %v2052 = vpack.c.b16 %v2044, %v2043
      %2061 = vmatpush.bf16.msra.mxu0 %v2052
      %2062 = vmatpush.bf16.msra.mxu0 %v2051
      %2063 = vmatpush.bf16.msra.mxu0 %v2050
      %2064 = vmatpush.bf16.msra.mxu0 %v2049
      %2065 = vmatpush.bf16.msra.mxu0 %v2048
      %2066 = vmatpush.bf16.msra.mxu0 %v2047
      %2067 = vmatpush.bf16.msra.mxu0 %v2046
      %2068 = vmatpush.bf16.msra.mxu0 %v2045
      %2069 = vmatmul.bf16.gmra.mxu0 %v1981
      %v2070 = vpop.f32.mrf.mxu0
      %v2071 = vadd.f32 %v1838, %v2070
      %v2072 = vpop.f32.mrf.mxu0
      %v2073 = vadd.f32 %v1840, %v2072
      %2074 = vmatmul.bf16.gmra.mxu0 %v1982
      %v2075 = vpop.f32.mrf.mxu0
      %v2076 = vadd.f32 %v1843, %v2075
      %v2077 = vpop.f32.mrf.mxu0
      %v2078 = vadd.f32 %v1845, %v2077
      %2079 = vmatmul.bf16.gmra.mxu0 %v1983
      %v2080 = vpop.f32.mrf.mxu0
      %v2081 = vadd.f32 %v1848, %v2080
      %v2082 = vpop.f32.mrf.mxu0
      %v2083 = vadd.f32 %v1850, %v2082
      %2084 = vmatmul.bf16.gmra.mxu0 %v1984
      %v2085 = vpop.f32.mrf.mxu0
      %v2086 = vadd.f32 %v1853, %v2085
      %v2087 = vpop.f32.mrf.mxu0
      %v2088 = vadd.f32 %v1855, %v2087
      %2089 = vmatmul.bf16.gmra.mxu0 %v1985
      %v2090 = vpop.f32.mrf.mxu0
      %v2091 = vadd.f32 %v1858, %v2090
      %v2092 = vpop.f32.mrf.mxu0
      %v2093 = vadd.f32 %v1860, %v2092
      %2094 = vmatmul.bf16.gmra.mxu0 %v1986
      %v2095 = vpop.f32.mrf.mxu0
      %v2096 = vadd.f32 %v1863, %v2095
      %v2097 = vpop.f32.mrf.mxu0
      %v2098 = vadd.f32 %v1865, %v2097
      %2099 = vmatmul.bf16.gmra.mxu0 %v1987
      %v2100 = vpop.f32.mrf.mxu0
      %v2101 = vadd.f32 %v1868, %v2100
      %v2102 = vpop.f32.mrf.mxu0
      %v2103 = vadd.f32 %v1870, %v2102
      %2104 = vmatmul.bf16.gmra.mxu0 %v1988
      %v2105 = vpop.f32.mrf.mxu0
      %v2106 = vadd.f32 %v1873, %v2105
      %v2107 = vpop.f32.mrf.mxu0
      %v2108 = vadd.f32 %v1875, %v2107
      %2109 = vmatmul.bf16.gmra.mxu0 %v1989
      %v2110 = vpop.f32.mrf.mxu0
      %v2111 = vadd.f32 %v1878, %v2110
      %v2112 = vpop.f32.mrf.mxu0
      %v2113 = vadd.f32 %v1880, %v2112
      %2114 = vmatmul.bf16.gmra.mxu0 %v1990
      %v2115 = vpop.f32.mrf.mxu0
      %v2116 = vadd.f32 %v1883, %v2115
      %v2117 = vpop.f32.mrf.mxu0
      %v2118 = vadd.f32 %v1885, %v2117
      %2119 = vmatmul.bf16.gmra.mxu0 %v1991
      %v2120 = vpop.f32.mrf.mxu0
      %v2121 = vadd.f32 %v1888, %v2120
      %v2122 = vpop.f32.mrf.mxu0
      %v2123 = vadd.f32 %v1890, %v2122
      %2124 = vmatmul.bf16.gmra.mxu0 %v1992
      %v2125 = vpop.f32.mrf.mxu0
      %v2126 = vadd.f32 %v1893, %v2125
      %v2127 = vpop.f32.mrf.mxu0
      %v2128 = vadd.f32 %v1895, %v2127
      %2129 = vmatmul.bf16.gmra.mxu0 %v1993
      %v2130 = vpop.f32.mrf.mxu0
      %v2131 = vadd.f32 %v1898, %v2130
      %v2132 = vpop.f32.mrf.mxu0
      %v2133 = vadd.f32 %v1900, %v2132
      %2134 = vmatmul.bf16.gmra.mxu0 %v1994
      %v2135 = vpop.f32.mrf.mxu0
      %v2136 = vadd.f32 %v1903, %v2135
      %v2137 = vpop.f32.mrf.mxu0
      %v2138 = vadd.f32 %v1905, %v2137
      %2139 = vmatmul.bf16.gmra.mxu0 %v1995
      %v2140 = vpop.f32.mrf.mxu0
      %v2141 = vadd.f32 %v1908, %v2140
      %v2142 = vpop.f32.mrf.mxu0
      %v2143 = vadd.f32 %v1910, %v2142
      %2144 = vmatmul.bf16.gmra.mxu0 %v1996
      %v2145 = vpop.f32.mrf.mxu0
      %v2146 = vadd.f32 %v1913, %v2145
      %v2147 = vpop.f32.mrf.mxu0
      %v2148 = vadd.f32 %v1915, %v2147
      %2149 = vdwg.mxu0
      %v2150 = vld [vmem:[#allocation2] sm:$0xe]
      %v2151 = vld [vmem:[#allocation2 + $0xc] sm:$0xe]
      %v2152 = vld [vmem:[#allocation2 + $0x18] sm:$0xe]
      %v2153 = vld [vmem:[#allocation2 + $0x24] sm:$0xe]
      %v2154 = vld [vmem:[#allocation2 + $0x30] sm:$0xe]
      %v2155 = vld [vmem:[#allocation2 + $0x3c] sm:$0xe]
      %v2156 = vld [vmem:[#allocation2 + $0x48] sm:$0xe]
      %v2157 = vld [vmem:[#allocation2 + $0x54] sm:$0xe]
      %v2158 = vld [vmem:[#allocation2 + $0x60] sm:$0xe]
      %v2159 = vld [vmem:[#allocation2 + $0x6c] sm:$0xe]
      %v2160 = vld [vmem:[#allocation2 + $0x78] sm:$0xe]
      %v2161 = vld [vmem:[#allocation2 + $0x84] sm:$0xe]
      %v2162 = vld [vmem:[#allocation2 + $0x90] sm:$0xe]
      %v2163 = vld [vmem:[#allocation2 + $0x9c] sm:$0xe]
      %v2164 = vld [vmem:[#allocation2 + $0xa8] sm:$0xe]
      %v2165 = vld [vmem:[#allocation2 + $0xb4] sm:$0xe]
      %vm2198 = vcmask 1042432
      %vm2199 = vcmask 1046532
      %vm2200 = vmor %vm2198, %vm2199
      %v2201 = vrot.slane %v2150, 5
      %v2202 = vrot.slane %v2201, 4
      %v2203 = vrot.slane %v1249, 5
      %v2204 = vsel %vm2200, %v2202, %v2203
      %v2205 = vrot.slane %v2203, 4
      %v2206 = vrot.slane %v1296, 5
      %v2207 = vsel %vm2200, %v2205, %v2206
      %v2208 = vrot.slane %v2151, 5
      %v2209 = vrot.slane %v2208, 4
      %v2210 = vrot.slane %v1251, 5
      %v2211 = vsel %vm2200, %v2209, %v2210
      %v2212 = vrot.slane %v2210, 4
      %v2213 = vrot.slane %v1297, 5
      %v2214 = vsel %vm2200, %v2212, %v2213
      %v2215 = vrot.slane %v2152, 5
      %v2216 = vrot.slane %v2215, 4
      %v2217 = vrot.slane %v1253, 5
      %v2218 = vsel %vm2200, %v2216, %v2217
      %v2219 = vrot.slane %v2217, 4
      %v2220 = vrot.slane %v1298, 5
      %v2221 = vsel %vm2200, %v2219, %v2220
      %v2222 = vrot.slane %v2153, 5
      %v2223 = vrot.slane %v2222, 4
      %v2224 = vrot.slane %v1255, 5
      %v2225 = vsel %vm2200, %v2223, %v2224
      %v2226 = vrot.slane %v2224, 4
      %v2227 = vrot.slane %v1299, 5
      %v2228 = vsel %vm2200, %v2226, %v2227
      %v2229 = vrot.slane %v2154, 5
      %v2230 = vrot.slane %v2229, 4
      %v2231 = vrot.slane %v1257, 5
      %v2232 = vsel %vm2200, %v2230, %v2231
      %v2233 = vrot.slane %v2231, 4
      %v2234 = vrot.slane %v1300, 5
      %v2235 = vsel %vm2200, %v2233, %v2234
      %v2236 = vrot.slane %v2155, 5
      %v2237 = vrot.slane %v2236, 4
      %v2238 = vrot.slane %v1259, 5
      %v2239 = vsel %vm2200, %v2237, %v2238
      %v2240 = vrot.slane %v2238, 4
      %v2241 = vrot.slane %v1301, 5
      %v2242 = vsel %vm2200, %v2240, %v2241
      %v2243 = vrot.slane %v2156, 5
      %v2244 = vrot.slane %v2243, 4
      %v2245 = vrot.slane %v1261, 5
      %v2246 = vsel %vm2200, %v2244, %v2245
      %v2247 = vrot.slane %v2245, 4
      %v2248 = vrot.slane %v1302, 5
      %v2249 = vsel %vm2200, %v2247, %v2248
      %v2250 = vrot.slane %v2157, 5
      %v2251 = vrot.slane %v2250, 4
      %v2252 = vrot.slane %v1263, 5
      %v2253 = vsel %vm2200, %v2251, %v2252
      %v2254 = vrot.slane %v2252, 4
      %v2255 = vrot.slane %v1303, 5
      %v2256 = vsel %vm2200, %v2254, %v2255
      %v2257 = vrot.slane %v2158, 5
      %v2258 = vrot.slane %v2257, 4
      %v2259 = vrot.slane %v1265, 5
      %v2260 = vsel %vm2200, %v2258, %v2259
      %v2261 = vrot.slane %v2259, 4
      %v2262 = vrot.slane %v1304, 5
      %v2263 = vsel %vm2200, %v2261, %v2262
      %v2264 = vrot.slane %v2159, 5
      %v2265 = vrot.slane %v2264, 4
      %v2266 = vrot.slane %v1267, 5
      %v2267 = vsel %vm2200, %v2265, %v2266
      %v2268 = vrot.slane %v2266, 4
      %v2269 = vrot.slane %v1305, 5
      %v2270 = vsel %vm2200, %v2268, %v2269
      %v2271 = vrot.slane %v2160, 5
      %v2272 = vrot.slane %v2271, 4
      %v2273 = vrot.slane %v1269, 5
      %v2274 = vsel %vm2200, %v2272, %v2273
      %v2275 = vrot.slane %v2273, 4
      %v2276 = vrot.slane %v1306, 5
      %v2277 = vsel %vm2200, %v2275, %v2276
      %v2278 = vrot.slane %v2161, 5
      %v2279 = vrot.slane %v2278, 4
      %v2280 = vrot.slane %v1271, 5
      %v2281 = vsel %vm2200, %v2279, %v2280
      %v2282 = vrot.slane %v2280, 4
      %v2283 = vrot.slane %v1307, 5
      %v2284 = vsel %vm2200, %v2282, %v2283
      %v2285 = vrot.slane %v2162, 5
      %v2286 = vrot.slane %v2285, 4
      %v2287 = vrot.slane %v1273, 5
      %v2288 = vsel %vm2200, %v2286, %v2287
      %v2289 = vrot.slane %v2287, 4
      %v2290 = vrot.slane %v1308, 5
      %v2291 = vsel %vm2200, %v2289, %v2290
      %v2292 = vrot.slane %v2163, 5
      %v2293 = vrot.slane %v2292, 4
      %v2294 = vrot.slane %v1275, 5
      %v2295 = vsel %vm2200, %v2293, %v2294
      %v2296 = vrot.slane %v2294, 4
      %v2297 = vrot.slane %v1309, 5
      %v2298 = vsel %vm2200, %v2296, %v2297
      %v2299 = vrot.slane %v2164, 5
      %v2300 = vrot.slane %v2299, 4
      %v2301 = vrot.slane %v1277, 5
      %v2302 = vsel %vm2200, %v2300, %v2301
      %v2303 = vrot.slane %v2301, 4
      %v2304 = vrot.slane %v1310, 5
      %v2305 = vsel %vm2200, %v2303, %v2304
      %v2306 = vrot.slane %v2165, 5
      %v2307 = vrot.slane %v2306, 4
      %v2308 = vrot.slane %v1279, 5
      %v2309 = vsel %vm2200, %v2307, %v2308
      %v2310 = vrot.slane %v2308, 4
      %v2311 = vrot.slane %v1311, 5
      %v2312 = vsel %vm2200, %v2310, %v2311
      %s2313 = scalar_lea.vmem %s6, 128
      %v2314 = vld [vmem:[%s2313] sm:$0xf]
      %v2315 = vld [vmem:[%s2313 + $0x4] sm:$0xf]
      %v2316 = vld [vmem:[%s2313 + $0x8] sm:$0xf]
      %v2317 = vld [vmem:[%s2313 + $0xc] sm:$0xf]
      %v2318 = vld [vmem:[%s2313 + $0x10] sm:$0xf]
      %v2319 = vld [vmem:[%s2313 + $0x14] sm:$0xf]
      %v2320 = vld [vmem:[%s2313 + $0x18] sm:$0xf]
      %v2321 = vld [vmem:[%s2313 + $0x1c] sm:$0xf]
      %v2322 = vld [vmem:[%s2313 + $0x20] sm:$0xf]
      %v2323 = vld [vmem:[%s2313 + $0x24] sm:$0xf]
      %v2324 = vld [vmem:[%s2313 + $0x28] sm:$0xf]
      %v2325 = vld [vmem:[%s2313 + $0x2c] sm:$0xf]
      %v2326 = vld [vmem:[%s2313 + $0x30] sm:$0xf]
      %v2327 = vld [vmem:[%s2313 + $0x34] sm:$0xf]
      %v2328 = vld [vmem:[%s2313 + $0x38] sm:$0xf]
      %v2329 = vld [vmem:[%s2313 + $0x3c] sm:$0xf]
      %v2330 = vunpack.c.l.b16 %v2204
      %v2331 = vunpack.c.l.b16 %v2207
      %v2332 = vunpack.c.l.b16 %v2211
      %v2333 = vunpack.c.l.b16 %v2214
      %v2334 = vunpack.c.l.b16 %v2218
      %v2335 = vunpack.c.l.b16 %v2221
      %v2336 = vunpack.c.l.b16 %v2225
      %v2337 = vunpack.c.l.b16 %v2228
      %v2338 = vunpack.c.l.b16 %v2232
      %v2339 = vunpack.c.l.b16 %v2235
      %v2340 = vunpack.c.l.b16 %v2239
      %v2341 = vunpack.c.l.b16 %v2242
      %v2342 = vunpack.c.l.b16 %v2246
      %v2343 = vunpack.c.l.b16 %v2249
      %v2344 = vunpack.c.l.b16 %v2253
      %v2345 = vunpack.c.l.b16 %v2256
      %v2346 = vunpack.c.l.b16 %v2260
      %v2347 = vunpack.c.l.b16 %v2263
      %v2348 = vunpack.c.l.b16 %v2267
      %v2349 = vunpack.c.l.b16 %v2270
      %v2350 = vunpack.c.l.b16 %v2274
      %v2351 = vunpack.c.l.b16 %v2277
      %v2352 = vunpack.c.l.b16 %v2281
      %v2353 = vunpack.c.l.b16 %v2284
      %v2354 = vunpack.c.l.b16 %v2288
      %v2355 = vunpack.c.l.b16 %v2291
      %v2356 = vunpack.c.l.b16 %v2295
      %v2357 = vunpack.c.l.b16 %v2298
      %v2358 = vunpack.c.l.b16 %v2302
      %v2359 = vunpack.c.l.b16 %v2305
      %v2360 = vunpack.c.l.b16 %v2309
      %v2361 = vunpack.c.l.b16 %v2312
      %v2362 = vpack.c.b16 %v2331, %v2330
      %v2363 = vpack.c.b16 %v2333, %v2332
      %v2364 = vpack.c.b16 %v2335, %v2334
      %v2365 = vpack.c.b16 %v2337, %v2336
      %v2366 = vpack.c.b16 %v2339, %v2338
      %v2367 = vpack.c.b16 %v2341, %v2340
      %v2368 = vpack.c.b16 %v2343, %v2342
      %v2369 = vpack.c.b16 %v2345, %v2344
      %v2370 = vpack.c.b16 %v2347, %v2346
      %v2371 = vpack.c.b16 %v2349, %v2348
      %v2372 = vpack.c.b16 %v2351, %v2350
      %v2373 = vpack.c.b16 %v2353, %v2352
      %v2374 = vpack.c.b16 %v2355, %v2354
      %v2375 = vpack.c.b16 %v2357, %v2356
      %v2376 = vpack.c.b16 %v2359, %v2358
      %v2377 = vpack.c.b16 %v2361, %v2360
      %v2410 = vunpack.c.l.b16 %v2314
      %v2411 = vunpack.c.l.b16 %v2315
      %v2412 = vunpack.c.l.b16 %v2316
      %v2413 = vunpack.c.l.b16 %v2317
      %v2414 = vunpack.c.l.b16 %v2318
      %v2415 = vunpack.c.l.b16 %v2319
      %v2416 = vunpack.c.l.b16 %v2320
      %v2417 = vunpack.c.l.b16 %v2321
      %v2418 = vunpack.c.l.b16 %v2322
      %v2419 = vunpack.c.l.b16 %v2323
      %v2420 = vunpack.c.l.b16 %v2324
      %v2421 = vunpack.c.l.b16 %v2325
      %v2422 = vunpack.c.l.b16 %v2326
      %v2423 = vunpack.c.l.b16 %v2327
      %v2424 = vunpack.c.l.b16 %v2328
      %v2425 = vunpack.c.l.b16 %v2329
      %v2426 = vpack.c.b16 %v2411, %v2410
      %v2427 = vpack.c.b16 %v2413, %v2412
      %v2428 = vpack.c.b16 %v2415, %v2414
      %v2429 = vpack.c.b16 %v2417, %v2416
      %v2430 = vpack.c.b16 %v2419, %v2418
      %v2431 = vpack.c.b16 %v2421, %v2420
      %v2432 = vpack.c.b16 %v2423, %v2422
      %v2433 = vpack.c.b16 %v2425, %v2424
      %2442 = vmatpush.bf16.msra.mxu0 %v2433
      %2443 = vmatpush.bf16.msra.mxu0 %v2432
      %2444 = vmatpush.bf16.msra.mxu0 %v2431
      %2445 = vmatpush.bf16.msra.mxu0 %v2430
      %2446 = vmatpush.bf16.msra.mxu0 %v2429
      %2447 = vmatpush.bf16.msra.mxu0 %v2428
      %2448 = vmatpush.bf16.msra.mxu0 %v2427
      %2449 = vmatpush.bf16.msra.mxu0 %v2426
      %2450 = vmatmul.bf16.gmra.mxu0 %v2362
      %v2451 = vpop.f32.mrf.mxu0
      %v2452 = vadd.f32 0.0, %v2451
      %v2453 = vpop.f32.mrf.mxu0
      %v2454 = vadd.f32 0.0, %v2453
      %2455 = vmatmul.bf16.gmra.mxu0 %v2363
      %v2456 = vpop.f32.mrf.mxu0
      %v2457 = vadd.f32 0.0, %v2456
      %v2458 = vpop.f32.mrf.mxu0
      %v2459 = vadd.f32 0.0, %v2458
      %2460 = vmatmul.bf16.gmra.mxu0 %v2364
      %v2461 = vpop.f32.mrf.mxu0
      %v2462 = vadd.f32 0.0, %v2461
      %v2463 = vpop.f32.mrf.mxu0
      %v2464 = vadd.f32 0.0, %v2463
      %2465 = vmatmul.bf16.gmra.mxu0 %v2365
      %v2466 = vpop.f32.mrf.mxu0
      %v2467 = vadd.f32 0.0, %v2466
      %v2468 = vpop.f32.mrf.mxu0
      %v2469 = vadd.f32 0.0, %v2468
      %2470 = vmatmul.bf16.gmra.mxu0 %v2366
      %v2471 = vpop.f32.mrf.mxu0
      %v2472 = vadd.f32 0.0, %v2471
      %v2473 = vpop.f32.mrf.mxu0
      %v2474 = vadd.f32 0.0, %v2473
      %2475 = vmatmul.bf16.gmra.mxu0 %v2367
      %v2476 = vpop.f32.mrf.mxu0
      %v2477 = vadd.f32 0.0, %v2476
      %v2478 = vpop.f32.mrf.mxu0
      %v2479 = vadd.f32 0.0, %v2478
      %2480 = vmatmul.bf16.gmra.mxu0 %v2368
      %v2481 = vpop.f32.mrf.mxu0
      %v2482 = vadd.f32 0.0, %v2481
      %v2483 = vpop.f32.mrf.mxu0
      %v2484 = vadd.f32 0.0, %v2483
      %2485 = vmatmul.bf16.gmra.mxu0 %v2369
      %v2486 = vpop.f32.mrf.mxu0
      %v2487 = vadd.f32 0.0, %v2486
      %v2488 = vpop.f32.mrf.mxu0
      %v2489 = vadd.f32 0.0, %v2488
      %2490 = vmatmul.bf16.gmra.mxu0 %v2370
      %v2491 = vpop.f32.mrf.mxu0
      %v2492 = vadd.f32 0.0, %v2491
      %v2493 = vpop.f32.mrf.mxu0
      %v2494 = vadd.f32 0.0, %v2493
      %2495 = vmatmul.bf16.gmra.mxu0 %v2371
      %v2496 = vpop.f32.mrf.mxu0
      %v2497 = vadd.f32 0.0, %v2496
      %v2498 = vpop.f32.mrf.mxu0
      %v2499 = vadd.f32 0.0, %v2498
      %2500 = vmatmul.bf16.gmra.mxu0 %v2372
      %v2501 = vpop.f32.mrf.mxu0
      %v2502 = vadd.f32 0.0, %v2501
      %v2503 = vpop.f32.mrf.mxu0
      %v2504 = vadd.f32 0.0, %v2503
      %2505 = vmatmul.bf16.gmra.mxu0 %v2373
      %v2506 = vpop.f32.mrf.mxu0
      %v2507 = vadd.f32 0.0, %v2506
      %v2508 = vpop.f32.mrf.mxu0
      %v2509 = vadd.f32 0.0, %v2508
      %2510 = vmatmul.bf16.gmra.mxu0 %v2374
      %v2511 = vpop.f32.mrf.mxu0
      %v2512 = vadd.f32 0.0, %v2511
      %v2513 = vpop.f32.mrf.mxu0
      %v2514 = vadd.f32 0.0, %v2513
      %2515 = vmatmul.bf16.gmra.mxu0 %v2375
      %v2516 = vpop.f32.mrf.mxu0
      %v2517 = vadd.f32 0.0, %v2516
      %v2518 = vpop.f32.mrf.mxu0
      %v2519 = vadd.f32 0.0, %v2518
      %2520 = vmatmul.bf16.gmra.mxu0 %v2376
      %v2521 = vpop.f32.mrf.mxu0
      %v2522 = vadd.f32 0.0, %v2521
      %v2523 = vpop.f32.mrf.mxu0
      %v2524 = vadd.f32 0.0, %v2523
      %2525 = vmatmul.bf16.gmra.mxu0 %v2377
      %v2526 = vpop.f32.mrf.mxu0
      %v2527 = vadd.f32 0.0, %v2526
      %v2528 = vpop.f32.mrf.mxu0
      %v2529 = vadd.f32 0.0, %v2528
      %2530 = vdwg.mxu0
      %v2531 = vadd.f32 %v2071, %v2452
      %v2532 = vadd.f32 %v2073, %v2454
      %v2533 = vadd.f32 %v2076, %v2457
      %v2534 = vadd.f32 %v2078, %v2459
      %v2535 = vadd.f32 %v2081, %v2462
      %v2536 = vadd.f32 %v2083, %v2464
      %v2537 = vadd.f32 %v2086, %v2467
      %v2538 = vadd.f32 %v2088, %v2469
      %v2539 = vadd.f32 %v2091, %v2472
      %v2540 = vadd.f32 %v2093, %v2474
      %v2541 = vadd.f32 %v2096, %v2477
      %v2542 = vadd.f32 %v2098, %v2479
      %v2543 = vadd.f32 %v2101, %v2482
      %v2544 = vadd.f32 %v2103, %v2484
      %v2545 = vadd.f32 %v2106, %v2487
      %v2546 = vadd.f32 %v2108, %v2489
      %v2547 = vadd.f32 %v2111, %v2492
      %v2548 = vadd.f32 %v2113, %v2494
      %v2549 = vadd.f32 %v2116, %v2497
      %v2550 = vadd.f32 %v2118, %v2499
      %v2551 = vadd.f32 %v2121, %v2502
      %v2552 = vadd.f32 %v2123, %v2504
      %v2553 = vadd.f32 %v2126, %v2507
      %v2554 = vadd.f32 %v2128, %v2509
      %v2555 = vadd.f32 %v2131, %v2512
      %v2556 = vadd.f32 %v2133, %v2514
      %v2557 = vadd.f32 %v2136, %v2517
      %v2558 = vadd.f32 %v2138, %v2519
      %v2559 = vadd.f32 %v2141, %v2522
      %v2560 = vadd.f32 %v2143, %v2524
      %v2561 = vadd.f32 %v2146, %v2527
      %v2562 = vadd.f32 %v2148, %v2529
      %v2563 = vld [vmem:[%s1130] sm:$0xf]
      %v2564 = vld [vmem:[%s1130 + $0x4] sm:$0xf]
      %v2565 = vld [vmem:[%s1130 + $0xc] sm:$0xf]
      %v2566 = vld [vmem:[%s1130 + $0x10] sm:$0xf]
      %v2567 = vld [vmem:[%s1130 + $0x18] sm:$0xf]
      %v2568 = vld [vmem:[%s1130 + $0x1c] sm:$0xf]
      %v2569 = vld [vmem:[%s1130 + $0x24] sm:$0xf]
      %v2570 = vld [vmem:[%s1130 + $0x28] sm:$0xf]
      %v2571 = vld [vmem:[%s1130 + $0x30] sm:$0xf]
      %v2572 = vld [vmem:[%s1130 + $0x34] sm:$0xf]
      %v2573 = vld [vmem:[%s1130 + $0x3c] sm:$0xf]
      %v2574 = vld [vmem:[%s1130 + $0x40] sm:$0xf]
      %v2575 = vld [vmem:[%s1130 + $0x48] sm:$0xf]
      %v2576 = vld [vmem:[%s1130 + $0x4c] sm:$0xf]
      %v2577 = vld [vmem:[%s1130 + $0x54] sm:$0xf]
      %v2578 = vld [vmem:[%s1130 + $0x58] sm:$0xf]
      %v2579 = vld [vmem:[%s1130 + $0x60] sm:$0xf]
      %v2580 = vld [vmem:[%s1130 + $0x64] sm:$0xf]
      %v2581 = vld [vmem:[%s1130 + $0x6c] sm:$0xf]
      %v2582 = vld [vmem:[%s1130 + $0x70] sm:$0xf]
      %v2583 = vld [vmem:[%s1130 + $0x78] sm:$0xf]
      %v2584 = vld [vmem:[%s1130 + $0x7c] sm:$0xf]
      %v2585 = vld [vmem:[%s1130 + $0x84] sm:$0xf]
      %v2586 = vld [vmem:[%s1130 + $0x88] sm:$0xf]
      %v2587 = vld [vmem:[%s1130 + $0x90] sm:$0xf]
      %v2588 = vld [vmem:[%s1130 + $0x94] sm:$0xf]
      %v2589 = vld [vmem:[%s1130 + $0x9c] sm:$0xf]
      %v2590 = vld [vmem:[%s1130 + $0xa0] sm:$0xf]
      %v2591 = vld [vmem:[%s1130 + $0xa8] sm:$0xf]
      %v2592 = vld [vmem:[%s1130 + $0xac] sm:$0xf]
      %v2593 = vld [vmem:[%s1130 + $0xb4] sm:$0xf]
      %v2594 = vld [vmem:[%s1130 + $0xb8] sm:$0xf]
      %s2595 = scalar_lea.vmem %s6, 192
      %v2596 = vld [vmem:[%s2595] sm:$0xf]
      %v2597 = vld [vmem:[%s2595 + $0x4] sm:$0xf]
      %v2598 = vld [vmem:[%s2595 + $0x8] sm:$0xf]
      %v2599 = vld [vmem:[%s2595 + $0xc] sm:$0xf]
      %v2600 = vld [vmem:[%s2595 + $0x10] sm:$0xf]
      %v2601 = vld [vmem:[%s2595 + $0x14] sm:$0xf]
      %v2602 = vld [vmem:[%s2595 + $0x18] sm:$0xf]
      %v2603 = vld [vmem:[%s2595 + $0x1c] sm:$0xf]
      %v2604 = vld [vmem:[%s2595 + $0x20] sm:$0xf]
      %v2605 = vld [vmem:[%s2595 + $0x24] sm:$0xf]
      %v2606 = vld [vmem:[%s2595 + $0x28] sm:$0xf]
      %v2607 = vld [vmem:[%s2595 + $0x2c] sm:$0xf]
      %v2608 = vld [vmem:[%s2595 + $0x30] sm:$0xf]
      %v2609 = vld [vmem:[%s2595 + $0x34] sm:$0xf]
      %v2610 = vld [vmem:[%s2595 + $0x38] sm:$0xf]
      %v2611 = vld [vmem:[%s2595 + $0x3c] sm:$0xf]
      %v2644 = vunpack.c.l.b16 %v2563
      %v2645 = vunpack.c.l.b16 %v2564
      %v2646 = vunpack.c.l.b16 %v2565
      %v2647 = vunpack.c.l.b16 %v2566
      %v2648 = vunpack.c.l.b16 %v2567
      %v2649 = vunpack.c.l.b16 %v2568
      %v2650 = vunpack.c.l.b16 %v2569
      %v2651 = vunpack.c.l.b16 %v2570
      %v2652 = vunpack.c.l.b16 %v2571
      %v2653 = vunpack.c.l.b16 %v2572
      %v2654 = vunpack.c.l.b16 %v2573
      %v2655 = vunpack.c.l.b16 %v2574
      %v2656 = vunpack.c.l.b16 %v2575
      %v2657 = vunpack.c.l.b16 %v2576
      %v2658 = vunpack.c.l.b16 %v2577
      %v2659 = vunpack.c.l.b16 %v2578
      %v2660 = vunpack.c.l.b16 %v2579
      %v2661 = vunpack.c.l.b16 %v2580
      %v2662 = vunpack.c.l.b16 %v2581
      %v2663 = vunpack.c.l.b16 %v2582
      %v2664 = vunpack.c.l.b16 %v2583
      %v2665 = vunpack.c.l.b16 %v2584
      %v2666 = vunpack.c.l.b16 %v2585
      %v2667 = vunpack.c.l.b16 %v2586
      %v2668 = vunpack.c.l.b16 %v2587
      %v2669 = vunpack.c.l.b16 %v2588
      %v2670 = vunpack.c.l.b16 %v2589
      %v2671 = vunpack.c.l.b16 %v2590
      %v2672 = vunpack.c.l.b16 %v2591
      %v2673 = vunpack.c.l.b16 %v2592
      %v2674 = vunpack.c.l.b16 %v2593
      %v2675 = vunpack.c.l.b16 %v2594
      %v2676 = vpack.c.b16 %v2645, %v2644
      %v2677 = vpack.c.b16 %v2647, %v2646
      %v2678 = vpack.c.b16 %v2649, %v2648
      %v2679 = vpack.c.b16 %v2651, %v2650
      %v2680 = vpack.c.b16 %v2653, %v2652
      %v2681 = vpack.c.b16 %v2655, %v2654
      %v2682 = vpack.c.b16 %v2657, %v2656
      %v2683 = vpack.c.b16 %v2659, %v2658
      %v2684 = vpack.c.b16 %v2661, %v2660
      %v2685 = vpack.c.b16 %v2663, %v2662
      %v2686 = vpack.c.b16 %v2665, %v2664
      %v2687 = vpack.c.b16 %v2667, %v2666
      %v2688 = vpack.c.b16 %v2669, %v2668
      %v2689 = vpack.c.b16 %v2671, %v2670
      %v2690 = vpack.c.b16 %v2673, %v2672
      %v2691 = vpack.c.b16 %v2675, %v2674
      %v2724 = vunpack.c.l.b16 %v2596
      %v2725 = vunpack.c.l.b16 %v2597
      %v2726 = vunpack.c.l.b16 %v2598
      %v2727 = vunpack.c.l.b16 %v2599
      %v2728 = vunpack.c.l.b16 %v2600
      %v2729 = vunpack.c.l.b16 %v2601
      %v2730 = vunpack.c.l.b16 %v2602
      %v2731 = vunpack.c.l.b16 %v2603
      %v2732 = vunpack.c.l.b16 %v2604
      %v2733 = vunpack.c.l.b16 %v2605
      %v2734 = vunpack.c.l.b16 %v2606
      %v2735 = vunpack.c.l.b16 %v2607
      %v2736 = vunpack.c.l.b16 %v2608
      %v2737 = vunpack.c.l.b16 %v2609
      %v2738 = vunpack.c.l.b16 %v2610
      %v2739 = vunpack.c.l.b16 %v2611
      %v2740 = vpack.c.b16 %v2725, %v2724
      %v2741 = vpack.c.b16 %v2727, %v2726
      %v2742 = vpack.c.b16 %v2729, %v2728
      %v2743 = vpack.c.b16 %v2731, %v2730
      %v2744 = vpack.c.b16 %v2733, %v2732
      %v2745 = vpack.c.b16 %v2735, %v2734
      %v2746 = vpack.c.b16 %v2737, %v2736
      %v2747 = vpack.c.b16 %v2739, %v2738
      %2756 = vmatpush.bf16.msra.mxu0 %v2747
      %2757 = vmatpush.bf16.msra.mxu0 %v2746
      %2758 = vmatpush.bf16.msra.mxu0 %v2745
      %2759 = vmatpush.bf16.msra.mxu0 %v2744
      %2760 = vmatpush.bf16.msra.mxu0 %v2743
      %2761 = vmatpush.bf16.msra.mxu0 %v2742
      %2762 = vmatpush.bf16.msra.mxu0 %v2741
      %2763 = vmatpush.bf16.msra.mxu0 %v2740
      %2764 = vmatmul.bf16.gmra.mxu0 %v2676
      %v2765 = vpop.f32.mrf.mxu0
      %v2766 = vadd.f32 0.0, %v2765
      %v2767 = vpop.f32.mrf.mxu0
      %v2768 = vadd.f32 0.0, %v2767
      %2769 = vmatmul.bf16.gmra.mxu0 %v2677
      %v2770 = vpop.f32.mrf.mxu0
      %v2771 = vadd.f32 0.0, %v2770
      %v2772 = vpop.f32.mrf.mxu0
      %v2773 = vadd.f32 0.0, %v2772
      %2774 = vmatmul.bf16.gmra.mxu0 %v2678
      %v2775 = vpop.f32.mrf.mxu0
      %v2776 = vadd.f32 0.0, %v2775
      %v2777 = vpop.f32.mrf.mxu0
      %v2778 = vadd.f32 0.0, %v2777
      %2779 = vmatmul.bf16.gmra.mxu0 %v2679
      %v2780 = vpop.f32.mrf.mxu0
      %v2781 = vadd.f32 0.0, %v2780
      %v2782 = vpop.f32.mrf.mxu0
      %v2783 = vadd.f32 0.0, %v2782
      %2784 = vmatmul.bf16.gmra.mxu0 %v2680
      %v2785 = vpop.f32.mrf.mxu0
      %v2786 = vadd.f32 0.0, %v2785
      %v2787 = vpop.f32.mrf.mxu0
      %v2788 = vadd.f32 0.0, %v2787
      %2789 = vmatmul.bf16.gmra.mxu0 %v2681
      %v2790 = vpop.f32.mrf.mxu0
      %v2791 = vadd.f32 0.0, %v2790
      %v2792 = vpop.f32.mrf.mxu0
      %v2793 = vadd.f32 0.0, %v2792
      %2794 = vmatmul.bf16.gmra.mxu0 %v2682
      %v2795 = vpop.f32.mrf.mxu0
      %v2796 = vadd.f32 0.0, %v2795
      %v2797 = vpop.f32.mrf.mxu0
      %v2798 = vadd.f32 0.0, %v2797
      %2799 = vmatmul.bf16.gmra.mxu0 %v2683
      %v2800 = vpop.f32.mrf.mxu0
      %v2801 = vadd.f32 0.0, %v2800
      %v2802 = vpop.f32.mrf.mxu0
      %v2803 = vadd.f32 0.0, %v2802
      %2804 = vmatmul.bf16.gmra.mxu0 %v2684
      %v2805 = vpop.f32.mrf.mxu0
      %v2806 = vadd.f32 0.0, %v2805
      %v2807 = vpop.f32.mrf.mxu0
      %v2808 = vadd.f32 0.0, %v2807
      %2809 = vmatmul.bf16.gmra.mxu0 %v2685
      %v2810 = vpop.f32.mrf.mxu0
      %v2811 = vadd.f32 0.0, %v2810
      %v2812 = vpop.f32.mrf.mxu0
      %v2813 = vadd.f32 0.0, %v2812
      %2814 = vmatmul.bf16.gmra.mxu0 %v2686
      %v2815 = vpop.f32.mrf.mxu0
      %v2816 = vadd.f32 0.0, %v2815
      %v2817 = vpop.f32.mrf.mxu0
      %v2818 = vadd.f32 0.0, %v2817
      %2819 = vmatmul.bf16.gmra.mxu0 %v2687
      %v2820 = vpop.f32.mrf.mxu0
      %v2821 = vadd.f32 0.0, %v2820
      %v2822 = vpop.f32.mrf.mxu0
      %v2823 = vadd.f32 0.0, %v2822
      %2824 = vmatmul.bf16.gmra.mxu0 %v2688
      %v2825 = vpop.f32.mrf.mxu0
      %v2826 = vadd.f32 0.0, %v2825
      %v2827 = vpop.f32.mrf.mxu0
      %v2828 = vadd.f32 0.0, %v2827
      %2829 = vmatmul.bf16.gmra.mxu0 %v2689
      %v2830 = vpop.f32.mrf.mxu0
      %v2831 = vadd.f32 0.0, %v2830
      %v2832 = vpop.f32.mrf.mxu0
      %v2833 = vadd.f32 0.0, %v2832
      %2834 = vmatmul.bf16.gmra.mxu0 %v2690
      %v2835 = vpop.f32.mrf.mxu0
      %v2836 = vadd.f32 0.0, %v2835
      %v2837 = vpop.f32.mrf.mxu0
      %v2838 = vadd.f32 0.0, %v2837
      %2839 = vmatmul.bf16.gmra.mxu0 %v2691
      %v2840 = vpop.f32.mrf.mxu0
      %v2841 = vadd.f32 0.0, %v2840
      %v2842 = vpop.f32.mrf.mxu0
      %v2843 = vadd.f32 0.0, %v2842
      %2844 = vdwg.mxu0
      %v2845 = vadd.f32 %v2531, %v2766
      %v2846 = vadd.f32 %v2532, %v2768
      %v2847 = vadd.f32 %v2533, %v2771
      %v2848 = vadd.f32 %v2534, %v2773
      %v2849 = vadd.f32 %v2535, %v2776
      %v2850 = vadd.f32 %v2536, %v2778
      %v2851 = vadd.f32 %v2537, %v2781
      %v2852 = vadd.f32 %v2538, %v2783
      %v2853 = vadd.f32 %v2539, %v2786
      %v2854 = vadd.f32 %v2540, %v2788
      %v2855 = vadd.f32 %v2541, %v2791
      %v2856 = vadd.f32 %v2542, %v2793
      %v2857 = vadd.f32 %v2543, %v2796
      %v2858 = vadd.f32 %v2544, %v2798
      %v2859 = vadd.f32 %v2545, %v2801
      %v2860 = vadd.f32 %v2546, %v2803
      %v2861 = vadd.f32 %v2547, %v2806
      %v2862 = vadd.f32 %v2548, %v2808
      %v2863 = vadd.f32 %v2549, %v2811
      %v2864 = vadd.f32 %v2550, %v2813
      %v2865 = vadd.f32 %v2551, %v2816
      %v2866 = vadd.f32 %v2552, %v2818
      %v2867 = vadd.f32 %v2553, %v2821
      %v2868 = vadd.f32 %v2554, %v2823
      %v2869 = vadd.f32 %v2555, %v2826
      %v2870 = vadd.f32 %v2556, %v2828
      %v2871 = vadd.f32 %v2557, %v2831
      %v2872 = vadd.f32 %v2558, %v2833
      %v2873 = vadd.f32 %v2559, %v2836
      %v2874 = vadd.f32 %v2560, %v2838
      %v2875 = vadd.f32 %v2561, %v2841
      %v2876 = vadd.f32 %v2562, %v2843
      %v2877 = vld [vmem:[%s1130] sm:$0xf]
      %v2878 = vld [vmem:[%s1130 + $0x4] sm:$0xf]
      %v2879 = vld [vmem:[%s1130 + $0x8] sm:$0x1]
      %v2880 = vld [vmem:[%s1130 + $0xc] sm:$0xf]
      %v2881 = vld [vmem:[%s1130 + $0x10] sm:$0xf]
      %v2882 = vld [vmem:[%s1130 + $0x14] sm:$0x1]
      %v2883 = vld [vmem:[%s1130 + $0x18] sm:$0xf]
      %v2884 = vld [vmem:[%s1130 + $0x1c] sm:$0xf]
      %v2885 = vld [vmem:[%s1130 + $0x20] sm:$0x1]
      %v2886 = vld [vmem:[%s1130 + $0x24] sm:$0xf]
      %v2887 = vld [vmem:[%s1130 + $0x28] sm:$0xf]
      %v2888 = vld [vmem:[%s1130 + $0x2c] sm:$0x1]
      %v2889 = vld [vmem:[%s1130 + $0x30] sm:$0xf]
      %v2890 = vld [vmem:[%s1130 + $0x34] sm:$0xf]
      %v2891 = vld [vmem:[%s1130 + $0x38] sm:$0x1]
      %v2892 = vld [vmem:[%s1130 + $0x3c] sm:$0xf]
      %v2893 = vld [vmem:[%s1130 + $0x40] sm:$0xf]
      %v2894 = vld [vmem:[%s1130 + $0x44] sm:$0x1]
      %v2895 = vld [vmem:[%s1130 + $0x48] sm:$0xf]
      %v2896 = vld [vmem:[%s1130 + $0x4c] sm:$0xf]
      %v2897 = vld [vmem:[%s1130 + $0x50] sm:$0x1]
      %v2898 = vld [vmem:[%s1130 + $0x54] sm:$0xf]
      %v2899 = vld [vmem:[%s1130 + $0x58] sm:$0xf]
      %v2900 = vld [vmem:[%s1130 + $0x5c] sm:$0x1]
      %v2901 = vld [vmem:[%s1130 + $0x60] sm:$0xf]
      %v2902 = vld [vmem:[%s1130 + $0x64] sm:$0xf]
      %v2903 = vld [vmem:[%s1130 + $0x68] sm:$0x1]
      %v2904 = vld [vmem:[%s1130 + $0x6c] sm:$0xf]
      %v2905 = vld [vmem:[%s1130 + $0x70] sm:$0xf]
      %v2906 = vld [vmem:[%s1130 + $0x74] sm:$0x1]
      %v2907 = vld [vmem:[%s1130 + $0x78] sm:$0xf]
      %v2908 = vld [vmem:[%s1130 + $0x7c] sm:$0xf]
      %v2909 = vld [vmem:[%s1130 + $0x80] sm:$0x1]
      %v2910 = vld [vmem:[%s1130 + $0x84] sm:$0xf]
      %v2911 = vld [vmem:[%s1130 + $0x88] sm:$0xf]
      %v2912 = vld [vmem:[%s1130 + $0x8c] sm:$0x1]
      %v2913 = vld [vmem:[%s1130 + $0x90] sm:$0xf]
      %v2914 = vld [vmem:[%s1130 + $0x94] sm:$0xf]
      %v2915 = vld [vmem:[%s1130 + $0x98] sm:$0x1]
      %v2916 = vld [vmem:[%s1130 + $0x9c] sm:$0xf]
      %v2917 = vld [vmem:[%s1130 + $0xa0] sm:$0xf]
      %v2918 = vld [vmem:[%s1130 + $0xa4] sm:$0x1]
      %v2919 = vld [vmem:[%s1130 + $0xa8] sm:$0xf]
      %v2920 = vld [vmem:[%s1130 + $0xac] sm:$0xf]
      %v2921 = vld [vmem:[%s1130 + $0xb0] sm:$0x1]
      %v2922 = vld [vmem:[%s1130 + $0xb4] sm:$0xf]
      %v2923 = vld [vmem:[%s1130 + $0xb8] sm:$0xf]
      %v2924 = vld [vmem:[%s1130 + $0xbc] sm:$0x1]
      %v2926 = vshrl.u32 %v2877, 16
      %v2928 = vrot.slane %v2926, 4
      %v2929 = vshll.u32 %v2877, 16
      %v2931 = vrot.slane %v2929, 5
      %v2932 = vor.u32 %v2928, %v2931
      %v2933 = vrot.slane %v2932, 4
      %v2935 = vshll.u32 %v2878, 16
      %v2937 = vrot.slane %v2935, 5
      %v2938 = vsel %vm1314, %v2933, %v2937
      %v2939 = vshrl.u32 %v2878, 16
      %v2941 = vrot.slane %v2939, 4
      %v2942 = vor.u32 %v2941, %v2937
      %v2943 = vrot.slane %v2942, 4
      %v2945 = vshll.u32 %v2879, 16
      %v2947 = vrot.slane %v2945, 5
      %v2948 = vsel %vm1314, %v2943, %v2947
      %v2950 = vshrl.u32 %v2880, 16
      %v2952 = vrot.slane %v2950, 4
      %v2953 = vshll.u32 %v2880, 16
      %v2955 = vrot.slane %v2953, 5
      %v2956 = vor.u32 %v2952, %v2955
      %v2957 = vrot.slane %v2956, 4
      %v2959 = vshll.u32 %v2881, 16
      %v2961 = vrot.slane %v2959, 5
      %v2962 = vsel %vm1314, %v2957, %v2961
      %v2963 = vshrl.u32 %v2881, 16
      %v2965 = vrot.slane %v2963, 4
      %v2966 = vor.u32 %v2965, %v2961
      %v2967 = vrot.slane %v2966, 4
      %v2969 = vshll.u32 %v2882, 16
      %v2971 = vrot.slane %v2969, 5
      %v2972 = vsel %vm1314, %v2967, %v2971
      %v2974 = vshrl.u32 %v2883, 16
      %v2976 = vrot.slane %v2974, 4
      %v2977 = vshll.u32 %v2883, 16
      %v2979 = vrot.slane %v2977, 5
      %v2980 = vor.u32 %v2976, %v2979
      %v2981 = vrot.slane %v2980, 4
      %v2983 = vshll.u32 %v2884, 16
      %v2985 = vrot.slane %v2983, 5
      %v2986 = vsel %vm1314, %v2981, %v2985
      %v2987 = vshrl.u32 %v2884, 16
      %v2989 = vrot.slane %v2987, 4
      %v2990 = vor.u32 %v2989, %v2985
      %v2991 = vrot.slane %v2990, 4
      %v2993 = vshll.u32 %v2885, 16
      %v2995 = vrot.slane %v2993, 5
      %v2996 = vsel %vm1314, %v2991, %v2995
      %v2998 = vshrl.u32 %v2886, 16
      %v3000 = vrot.slane %v2998, 4
      %v3001 = vshll.u32 %v2886, 16
      %v3003 = vrot.slane %v3001, 5
      %v3004 = vor.u32 %v3000, %v3003
      %v3005 = vrot.slane %v3004, 4
      %v3007 = vshll.u32 %v2887, 16
      %v3009 = vrot.slane %v3007, 5
      %v3010 = vsel %vm1314, %v3005, %v3009
      %v3011 = vshrl.u32 %v2887, 16
      %v3013 = vrot.slane %v3011, 4
      %v3014 = vor.u32 %v3013, %v3009
      %v3015 = vrot.slane %v3014, 4
      %v3017 = vshll.u32 %v2888, 16
      %v3019 = vrot.slane %v3017, 5
      %v3020 = vsel %vm1314, %v3015, %v3019
      %v3022 = vshrl.u32 %v2889, 16
      %v3024 = vrot.slane %v3022, 4
      %v3025 = vshll.u32 %v2889, 16
      %v3027 = vrot.slane %v3025, 5
      %v3028 = vor.u32 %v3024, %v3027
      %v3029 = vrot.slane %v3028, 4
      %v3031 = vshll.u32 %v2890, 16
      %v3033 = vrot.slane %v3031, 5
      %v3034 = vsel %vm1314, %v3029, %v3033
      %v3035 = vshrl.u32 %v2890, 16
      %v3037 = vrot.slane %v3035, 4
      %v3038 = vor.u32 %v3037, %v3033
      %v3039 = vrot.slane %v3038, 4
      %v3041 = vshll.u32 %v2891, 16
      %v3043 = vrot.slane %v3041, 5
      %v3044 = vsel %vm1314, %v3039, %v3043
      %v3046 = vshrl.u32 %v2892, 16
      %v3048 = vrot.slane %v3046, 4
      %v3049 = vshll.u32 %v2892, 16
      %v3051 = vrot.slane %v3049, 5
      %v3052 = vor.u32 %v3048, %v3051
      %v3053 = vrot.slane %v3052, 4
      %v3055 = vshll.u32 %v2893, 16
      %v3057 = vrot.slane %v3055, 5
      %v3058 = vsel %vm1314, %v3053, %v3057
      %v3059 = vshrl.u32 %v2893, 16
      %v3061 = vrot.slane %v3059, 4
      %v3062 = vor.u32 %v3061, %v3057
      %v3063 = vrot.slane %v3062, 4
      %v3065 = vshll.u32 %v2894, 16
      %v3067 = vrot.slane %v3065, 5
      %v3068 = vsel %vm1314, %v3063, %v3067
      %v3070 = vshrl.u32 %v2895, 16
      %v3072 = vrot.slane %v3070, 4
      %v3073 = vshll.u32 %v2895, 16
      %v3075 = vrot.slane %v3073, 5
      %v3076 = vor.u32 %v3072, %v3075
      %v3077 = vrot.slane %v3076, 4
      %v3079 = vshll.u32 %v2896, 16
      %v3081 = vrot.slane %v3079, 5
      %v3082 = vsel %vm1314, %v3077, %v3081
      %v3083 = vshrl.u32 %v2896, 16
      %v3085 = vrot.slane %v3083, 4
      %v3086 = vor.u32 %v3085, %v3081
      %v3087 = vrot.slane %v3086, 4
      %v3089 = vshll.u32 %v2897, 16
      %v3091 = vrot.slane %v3089, 5
      %v3092 = vsel %vm1314, %v3087, %v3091
      %v3094 = vshrl.u32 %v2898, 16
      %v3096 = vrot.slane %v3094, 4
      %v3097 = vshll.u32 %v2898, 16
      %v3099 = vrot.slane %v3097, 5
      %v3100 = vor.u32 %v3096, %v3099
      %v3101 = vrot.slane %v3100, 4
      %v3103 = vshll.u32 %v2899, 16
      %v3105 = vrot.slane %v3103, 5
      %v3106 = vsel %vm1314, %v3101, %v3105
      %v3107 = vshrl.u32 %v2899, 16
      %v3109 = vrot.slane %v3107, 4
      %v3110 = vor.u32 %v3109, %v3105
      %v3111 = vrot.slane %v3110, 4
      %v3113 = vshll.u32 %v2900, 16
      %v3115 = vrot.slane %v3113, 5
      %v3116 = vsel %vm1314, %v3111, %v3115
      %v3118 = vshrl.u32 %v2901, 16
      %v3120 = vrot.slane %v3118, 4
      %v3121 = vshll.u32 %v2901, 16
      %v3123 = vrot.slane %v3121, 5
      %v3124 = vor.u32 %v3120, %v3123
      %v3125 = vrot.slane %v3124, 4
      %v3127 = vshll.u32 %v2902, 16
      %v3129 = vrot.slane %v3127, 5
      %v3130 = vsel %vm1314, %v3125, %v3129
      %v3131 = vshrl.u32 %v2902, 16
      %v3133 = vrot.slane %v3131, 4
      %v3134 = vor.u32 %v3133, %v3129
      %v3135 = vrot.slane %v3134, 4
      %v3137 = vshll.u32 %v2903, 16
      %v3139 = vrot.slane %v3137, 5
      %v3140 = vsel %vm1314, %v3135, %v3139
      %v3142 = vshrl.u32 %v2904, 16
      %v3144 = vrot.slane %v3142, 4
      %v3145 = vshll.u32 %v2904, 16
      %v3147 = vrot.slane %v3145, 5
      %v3148 = vor.u32 %v3144, %v3147
      %v3149 = vrot.slane %v3148, 4
      %v3151 = vshll.u32 %v2905, 16
      %v3153 = vrot.slane %v3151, 5
      %v3154 = vsel %vm1314, %v3149, %v3153
      %v3155 = vshrl.u32 %v2905, 16
      %v3157 = vrot.slane %v3155, 4
      %v3158 = vor.u32 %v3157, %v3153
      %v3159 = vrot.slane %v3158, 4
      %v3161 = vshll.u32 %v2906, 16
      %v3163 = vrot.slane %v3161, 5
      %v3164 = vsel %vm1314, %v3159, %v3163
      %v3166 = vshrl.u32 %v2907, 16
      %v3168 = vrot.slane %v3166, 4
      %v3169 = vshll.u32 %v2907, 16
      %v3171 = vrot.slane %v3169, 5
      %v3172 = vor.u32 %v3168, %v3171
      %v3173 = vrot.slane %v3172, 4
      %v3175 = vshll.u32 %v2908, 16
      %v3177 = vrot.slane %v3175, 5
      %v3178 = vsel %vm1314, %v3173, %v3177
      %v3179 = vshrl.u32 %v2908, 16
      %v3181 = vrot.slane %v3179, 4
      %v3182 = vor.u32 %v3181, %v3177
      %v3183 = vrot.slane %v3182, 4
      %v3185 = vshll.u32 %v2909, 16
      %v3187 = vrot.slane %v3185, 5
      %v3188 = vsel %vm1314, %v3183, %v3187
      %v3190 = vshrl.u32 %v2910, 16
      %v3192 = vrot.slane %v3190, 4
      %v3193 = vshll.u32 %v2910, 16
      %v3195 = vrot.slane %v3193, 5
      %v3196 = vor.u32 %v3192, %v3195
      %v3197 = vrot.slane %v3196, 4
      %v3199 = vshll.u32 %v2911, 16
      %v3201 = vrot.slane %v3199, 5
      %v3202 = vsel %vm1314, %v3197, %v3201
      %v3203 = vshrl.u32 %v2911, 16
      %v3205 = vrot.slane %v3203, 4
      %v3206 = vor.u32 %v3205, %v3201
      %v3207 = vrot.slane %v3206, 4
      %v3209 = vshll.u32 %v2912, 16
      %v3211 = vrot.slane %v3209, 5
      %v3212 = vsel %vm1314, %v3207, %v3211
      %v3214 = vshrl.u32 %v2913, 16
      %v3216 = vrot.slane %v3214, 4
      %v3217 = vshll.u32 %v2913, 16
      %v3219 = vrot.slane %v3217, 5
      %v3220 = vor.u32 %v3216, %v3219
      %v3221 = vrot.slane %v3220, 4
      %v3223 = vshll.u32 %v2914, 16
      %v3225 = vrot.slane %v3223, 5
      %v3226 = vsel %vm1314, %v3221, %v3225
      %v3227 = vshrl.u32 %v2914, 16
      %v3229 = vrot.slane %v3227, 4
      %v3230 = vor.u32 %v3229, %v3225
      %v3231 = vrot.slane %v3230, 4
      %v3233 = vshll.u32 %v2915, 16
      %v3235 = vrot.slane %v3233, 5
      %v3236 = vsel %vm1314, %v3231, %v3235
      %v3238 = vshrl.u32 %v2916, 16
      %v3240 = vrot.slane %v3238, 4
      %v3241 = vshll.u32 %v2916, 16
      %v3243 = vrot.slane %v3241, 5
      %v3244 = vor.u32 %v3240, %v3243
      %v3245 = vrot.slane %v3244, 4
      %v3247 = vshll.u32 %v2917, 16
      %v3249 = vrot.slane %v3247, 5
      %v3250 = vsel %vm1314, %v3245, %v3249
      %v3251 = vshrl.u32 %v2917, 16
      %v3253 = vrot.slane %v3251, 4
      %v3254 = vor.u32 %v3253, %v3249
      %v3255 = vrot.slane %v3254, 4
      %v3257 = vshll.u32 %v2918, 16
      %v3259 = vrot.slane %v3257, 5
      %v3260 = vsel %vm1314, %v3255, %v3259
      %v3262 = vshrl.u32 %v2919, 16
      %v3264 = vrot.slane %v3262, 4
      %v3265 = vshll.u32 %v2919, 16
      %v3267 = vrot.slane %v3265, 5
      %v3268 = vor.u32 %v3264, %v3267
      %v3269 = vrot.slane %v3268, 4
      %v3271 = vshll.u32 %v2920, 16
      %v3273 = vrot.slane %v3271, 5
      %v3274 = vsel %vm1314, %v3269, %v3273
      %v3275 = vshrl.u32 %v2920, 16
      %v3277 = vrot.slane %v3275, 4
      %v3278 = vor.u32 %v3277, %v3273
      %v3279 = vrot.slane %v3278, 4
      %v3281 = vshll.u32 %v2921, 16
      %v3283 = vrot.slane %v3281, 5
      %v3284 = vsel %vm1314, %v3279, %v3283
      %v3286 = vshrl.u32 %v2922, 16
      %v3288 = vrot.slane %v3286, 4
      %v3289 = vshll.u32 %v2922, 16
      %v3291 = vrot.slane %v3289, 5
      %v3292 = vor.u32 %v3288, %v3291
      %v3293 = vrot.slane %v3292, 4
      %v3295 = vshll.u32 %v2923, 16
      %v3297 = vrot.slane %v3295, 5
      %v3298 = vsel %vm1314, %v3293, %v3297
      %v3299 = vshrl.u32 %v2923, 16
      %v3301 = vrot.slane %v3299, 4
      %v3302 = vor.u32 %v3301, %v3297
      %v3303 = vrot.slane %v3302, 4
      %v3305 = vshll.u32 %v2924, 16
      %v3307 = vrot.slane %v3305, 5
      %v3308 = vsel %vm1314, %v3303, %v3307
      %s3309 = scalar_lea.vmem %s6, 256
      %v3310 = vld [vmem:[%s3309] sm:$0xf]
      %v3311 = vld [vmem:[%s3309 + $0x4] sm:$0xf]
      %v3312 = vld [vmem:[%s3309 + $0x8] sm:$0xf]
      %v3313 = vld [vmem:[%s3309 + $0xc] sm:$0xf]
      %v3314 = vld [vmem:[%s3309 + $0x10] sm:$0xf]
      %v3315 = vld [vmem:[%s3309 + $0x14] sm:$0xf]
      %v3316 = vld [vmem:[%s3309 + $0x18] sm:$0xf]
      %v3317 = vld [vmem:[%s3309 + $0x1c] sm:$0xf]
      %v3318 = vld [vmem:[%s3309 + $0x20] sm:$0xf]
      %v3319 = vld [vmem:[%s3309 + $0x24] sm:$0xf]
      %v3320 = vld [vmem:[%s3309 + $0x28] sm:$0xf]
      %v3321 = vld [vmem:[%s3309 + $0x2c] sm:$0xf]
      %v3322 = vld [vmem:[%s3309 + $0x30] sm:$0xf]
      %v3323 = vld [vmem:[%s3309 + $0x34] sm:$0xf]
      %v3324 = vld [vmem:[%s3309 + $0x38] sm:$0xf]
      %v3325 = vld [vmem:[%s3309 + $0x3c] sm:$0xf]
      %v3326 = vunpack.c.l.b16 %v2938
      %v3327 = vunpack.c.l.b16 %v2948
      %v3328 = vunpack.c.l.b16 %v2962
      %v3329 = vunpack.c.l.b16 %v2972
      %v3330 = vunpack.c.l.b16 %v2986
      %v3331 = vunpack.c.l.b16 %v2996
      %v3332 = vunpack.c.l.b16 %v3010
      %v3333 = vunpack.c.l.b16 %v3020
      %v3334 = vunpack.c.l.b16 %v3034
      %v3335 = vunpack.c.l.b16 %v3044
      %v3336 = vunpack.c.l.b16 %v3058
      %v3337 = vunpack.c.l.b16 %v3068
      %v3338 = vunpack.c.l.b16 %v3082
      %v3339 = vunpack.c.l.b16 %v3092
      %v3340 = vunpack.c.l.b16 %v3106
      %v3341 = vunpack.c.l.b16 %v3116
      %v3342 = vunpack.c.l.b16 %v3130
      %v3343 = vunpack.c.l.b16 %v3140
      %v3344 = vunpack.c.l.b16 %v3154
      %v3345 = vunpack.c.l.b16 %v3164
      %v3346 = vunpack.c.l.b16 %v3178
      %v3347 = vunpack.c.l.b16 %v3188
      %v3348 = vunpack.c.l.b16 %v3202
      %v3349 = vunpack.c.l.b16 %v3212
      %v3350 = vunpack.c.l.b16 %v3226
      %v3351 = vunpack.c.l.b16 %v3236
      %v3352 = vunpack.c.l.b16 %v3250
      %v3353 = vunpack.c.l.b16 %v3260
      %v3354 = vunpack.c.l.b16 %v3274
      %v3355 = vunpack.c.l.b16 %v3284
      %v3356 = vunpack.c.l.b16 %v3298
      %v3357 = vunpack.c.l.b16 %v3308
      %v3358 = vpack.c.b16 %v3327, %v3326
      %v3359 = vpack.c.b16 %v3329, %v3328
      %v3360 = vpack.c.b16 %v3331, %v3330
      %v3361 = vpack.c.b16 %v3333, %v3332
      %v3362 = vpack.c.b16 %v3335, %v3334
      %v3363 = vpack.c.b16 %v3337, %v3336
      %v3364 = vpack.c.b16 %v3339, %v3338
      %v3365 = vpack.c.b16 %v3341, %v3340
      %v3366 = vpack.c.b16 %v3343, %v3342
      %v3367 = vpack.c.b16 %v3345, %v3344
      %v3368 = vpack.c.b16 %v3347, %v3346
      %v3369 = vpack.c.b16 %v3349, %v3348
      %v3370 = vpack.c.b16 %v3351, %v3350
      %v3371 = vpack.c.b16 %v3353, %v3352
      %v3372 = vpack.c.b16 %v3355, %v3354
      %v3373 = vpack.c.b16 %v3357, %v3356
      %v3406 = vunpack.c.l.b16 %v3310
      %v3407 = vunpack.c.l.b16 %v3311
      %v3408 = vunpack.c.l.b16 %v3312
      %v3409 = vunpack.c.l.b16 %v3313
      %v3410 = vunpack.c.l.b16 %v3314
      %v3411 = vunpack.c.l.b16 %v3315
      %v3412 = vunpack.c.l.b16 %v3316
      %v3413 = vunpack.c.l.b16 %v3317
      %v3414 = vunpack.c.l.b16 %v3318
      %v3415 = vunpack.c.l.b16 %v3319
      %v3416 = vunpack.c.l.b16 %v3320
      %v3417 = vunpack.c.l.b16 %v3321
      %v3418 = vunpack.c.l.b16 %v3322
      %v3419 = vunpack.c.l.b16 %v3323
      %v3420 = vunpack.c.l.b16 %v3324
      %v3421 = vunpack.c.l.b16 %v3325
      %v3422 = vpack.c.b16 %v3407, %v3406
      %v3423 = vpack.c.b16 %v3409, %v3408
      %v3424 = vpack.c.b16 %v3411, %v3410
      %v3425 = vpack.c.b16 %v3413, %v3412
      %v3426 = vpack.c.b16 %v3415, %v3414
      %v3427 = vpack.c.b16 %v3417, %v3416
      %v3428 = vpack.c.b16 %v3419, %v3418
      %v3429 = vpack.c.b16 %v3421, %v3420
      %3438 = vmatpush.bf16.msra.mxu0 %v3429
      %3439 = vmatpush.bf16.msra.mxu0 %v3428
      %3440 = vmatpush.bf16.msra.mxu0 %v3427
      %3441 = vmatpush.bf16.msra.mxu0 %v3426
      %3442 = vmatpush.bf16.msra.mxu0 %v3425
      %3443 = vmatpush.bf16.msra.mxu0 %v3424
      %3444 = vmatpush.bf16.msra.mxu0 %v3423
      %3445 = vmatpush.bf16.msra.mxu0 %v3422
      %3446 = vmatmul.bf16.gmra.mxu0 %v3358
      %v3447 = vpop.f32.mrf.mxu0
      %v3448 = vadd.f32 0.0, %v3447
      %v3449 = vpop.f32.mrf.mxu0
      %v3450 = vadd.f32 0.0, %v3449
      %3451 = vmatmul.bf16.gmra.mxu0 %v3359
      %v3452 = vpop.f32.mrf.mxu0
      %v3453 = vadd.f32 0.0, %v3452
      %v3454 = vpop.f32.mrf.mxu0
      %v3455 = vadd.f32 0.0, %v3454
      %3456 = vmatmul.bf16.gmra.mxu0 %v3360
      %v3457 = vpop.f32.mrf.mxu0
      %v3458 = vadd.f32 0.0, %v3457
      %v3459 = vpop.f32.mrf.mxu0
      %v3460 = vadd.f32 0.0, %v3459
      %3461 = vmatmul.bf16.gmra.mxu0 %v3361
      %v3462 = vpop.f32.mrf.mxu0
      %v3463 = vadd.f32 0.0, %v3462
      %v3464 = vpop.f32.mrf.mxu0
      %v3465 = vadd.f32 0.0, %v3464
      %3466 = vmatmul.bf16.gmra.mxu0 %v3362
      %v3467 = vpop.f32.mrf.mxu0
      %v3468 = vadd.f32 0.0, %v3467
      %v3469 = vpop.f32.mrf.mxu0
      %v3470 = vadd.f32 0.0, %v3469
      %3471 = vmatmul.bf16.gmra.mxu0 %v3363
      %v3472 = vpop.f32.mrf.mxu0
      %v3473 = vadd.f32 0.0, %v3472
      %v3474 = vpop.f32.mrf.mxu0
      %v3475 = vadd.f32 0.0, %v3474
      %3476 = vmatmul.bf16.gmra.mxu0 %v3364
      %v3477 = vpop.f32.mrf.mxu0
      %v3478 = vadd.f32 0.0, %v3477
      %v3479 = vpop.f32.mrf.mxu0
      %v3480 = vadd.f32 0.0, %v3479
      %3481 = vmatmul.bf16.gmra.mxu0 %v3365
      %v3482 = vpop.f32.mrf.mxu0
      %v3483 = vadd.f32 0.0, %v3482
      %v3484 = vpop.f32.mrf.mxu0
      %v3485 = vadd.f32 0.0, %v3484
      %3486 = vmatmul.bf16.gmra.mxu0 %v3366
      %v3487 = vpop.f32.mrf.mxu0
      %v3488 = vadd.f32 0.0, %v3487
      %v3489 = vpop.f32.mrf.mxu0
      %v3490 = vadd.f32 0.0, %v3489
      %3491 = vmatmul.bf16.gmra.mxu0 %v3367
      %v3492 = vpop.f32.mrf.mxu0
      %v3493 = vadd.f32 0.0, %v3492
      %v3494 = vpop.f32.mrf.mxu0
      %v3495 = vadd.f32 0.0, %v3494
      %3496 = vmatmul.bf16.gmra.mxu0 %v3368
      %v3497 = vpop.f32.mrf.mxu0
      %v3498 = vadd.f32 0.0, %v3497
      %v3499 = vpop.f32.mrf.mxu0
      %v3500 = vadd.f32 0.0, %v3499
      %3501 = vmatmul.bf16.gmra.mxu0 %v3369
      %v3502 = vpop.f32.mrf.mxu0
      %v3503 = vadd.f32 0.0, %v3502
      %v3504 = vpop.f32.mrf.mxu0
      %v3505 = vadd.f32 0.0, %v3504
      %3506 = vmatmul.bf16.gmra.mxu0 %v3370
      %v3507 = vpop.f32.mrf.mxu0
      %v3508 = vadd.f32 0.0, %v3507
      %v3509 = vpop.f32.mrf.mxu0
      %v3510 = vadd.f32 0.0, %v3509
      %3511 = vmatmul.bf16.gmra.mxu0 %v3371
      %v3512 = vpop.f32.mrf.mxu0
      %v3513 = vadd.f32 0.0, %v3512
      %v3514 = vpop.f32.mrf.mxu0
      %v3515 = vadd.f32 0.0, %v3514
      %3516 = vmatmul.bf16.gmra.mxu0 %v3372
      %v3517 = vpop.f32.mrf.mxu0
      %v3518 = vadd.f32 0.0, %v3517
      %v3519 = vpop.f32.mrf.mxu0
      %v3520 = vadd.f32 0.0, %v3519
      %3521 = vmatmul.bf16.gmra.mxu0 %v3373
      %v3522 = vpop.f32.mrf.mxu0
      %v3523 = vadd.f32 0.0, %v3522
      %v3524 = vpop.f32.mrf.mxu0
      %v3525 = vadd.f32 0.0, %v3524
      %3526 = vdwg.mxu0
      %v3527 = vadd.f32 %v2845, %v3448
      %v3528 = vadd.f32 %v2846, %v3450
      %v3529 = vadd.f32 %v2847, %v3453
      %v3530 = vadd.f32 %v2848, %v3455
      %v3531 = vadd.f32 %v2849, %v3458
      %v3532 = vadd.f32 %v2850, %v3460
      %v3533 = vadd.f32 %v2851, %v3463
      %v3534 = vadd.f32 %v2852, %v3465
      %v3535 = vadd.f32 %v2853, %v3468
      %v3536 = vadd.f32 %v2854, %v3470
      %v3537 = vadd.f32 %v2855, %v3473
      %v3538 = vadd.f32 %v2856, %v3475
      %v3539 = vadd.f32 %v2857, %v3478
      %v3540 = vadd.f32 %v2858, %v3480
      %v3541 = vadd.f32 %v2859, %v3483
      %v3542 = vadd.f32 %v2860, %v3485
      %v3543 = vadd.f32 %v2861, %v3488
      %v3544 = vadd.f32 %v2862, %v3490
      %v3545 = vadd.f32 %v2863, %v3493
      %v3546 = vadd.f32 %v2864, %v3495
      %v3547 = vadd.f32 %v2865, %v3498
      %v3548 = vadd.f32 %v2866, %v3500
      %v3549 = vadd.f32 %v2867, %v3503
      %v3550 = vadd.f32 %v2868, %v3505
      %v3551 = vadd.f32 %v2869, %v3508
      %v3552 = vadd.f32 %v2870, %v3510
      %v3553 = vadd.f32 %v2871, %v3513
      %v3554 = vadd.f32 %v2872, %v3515
      %v3555 = vadd.f32 %v2873, %v3518
      %v3556 = vadd.f32 %v2874, %v3520
      %v3557 = vadd.f32 %v2875, %v3523
      %v3558 = vadd.f32 %v2876, %v3525
      %v3559 = vld [vmem:[%s1130] sm:$0xe]
      %v3560 = vld [vmem:[%s1130 + $0xc] sm:$0xe]
      %v3561 = vld [vmem:[%s1130 + $0x18] sm:$0xe]
      %v3562 = vld [vmem:[%s1130 + $0x24] sm:$0xe]
      %v3563 = vld [vmem:[%s1130 + $0x30] sm:$0xe]
      %v3564 = vld [vmem:[%s1130 + $0x3c] sm:$0xe]
      %v3565 = vld [vmem:[%s1130 + $0x48] sm:$0xe]
      %v3566 = vld [vmem:[%s1130 + $0x54] sm:$0xe]
      %v3567 = vld [vmem:[%s1130 + $0x60] sm:$0xe]
      %v3568 = vld [vmem:[%s1130 + $0x6c] sm:$0xe]
      %v3569 = vld [vmem:[%s1130 + $0x78] sm:$0xe]
      %v3570 = vld [vmem:[%s1130 + $0x84] sm:$0xe]
      %v3571 = vld [vmem:[%s1130 + $0x90] sm:$0xe]
      %v3572 = vld [vmem:[%s1130 + $0x9c] sm:$0xe]
      %v3573 = vld [vmem:[%s1130 + $0xa8] sm:$0xe]
      %v3574 = vld [vmem:[%s1130 + $0xb4] sm:$0xe]
      %v3623 = vrot.slane %v3559, 5
      %v3624 = vrot.slane %v3623, 4
      %v3625 = vrot.slane %v2878, 5
      %v3626 = vsel %vm2200, %v3624, %v3625
      %v3627 = vrot.slane %v3625, 4
      %v3628 = vrot.slane %v2879, 5
      %v3629 = vsel %vm2200, %v3627, %v3628
      %v3630 = vrot.slane %v3560, 5
      %v3631 = vrot.slane %v3630, 4
      %v3632 = vrot.slane %v2881, 5
      %v3633 = vsel %vm2200, %v3631, %v3632
      %v3634 = vrot.slane %v3632, 4
      %v3635 = vrot.slane %v2882, 5
      %v3636 = vsel %vm2200, %v3634, %v3635
      %v3637 = vrot.slane %v3561, 5
      %v3638 = vrot.slane %v3637, 4
      %v3639 = vrot.slane %v2884, 5
      %v3640 = vsel %vm2200, %v3638, %v3639
      %v3641 = vrot.slane %v3639, 4
      %v3642 = vrot.slane %v2885, 5
      %v3643 = vsel %vm2200, %v3641, %v3642
      %v3644 = vrot.slane %v3562, 5
      %v3645 = vrot.slane %v3644, 4
      %v3646 = vrot.slane %v2887, 5
      %v3647 = vsel %vm2200, %v3645, %v3646
      %v3648 = vrot.slane %v3646, 4
      %v3649 = vrot.slane %v2888, 5
      %v3650 = vsel %vm2200, %v3648, %v3649
      %v3651 = vrot.slane %v3563, 5
      %v3652 = vrot.slane %v3651, 4
      %v3653 = vrot.slane %v2890, 5
      %v3654 = vsel %vm2200, %v3652, %v3653
      %v3655 = vrot.slane %v3653, 4
      %v3656 = vrot.slane %v2891, 5
      %v3657 = vsel %vm2200, %v3655, %v3656
      %v3658 = vrot.slane %v3564, 5
      %v3659 = vrot.slane %v3658, 4
      %v3660 = vrot.slane %v2893, 5
      %v3661 = vsel %vm2200, %v3659, %v3660
      %v3662 = vrot.slane %v3660, 4
      %v3663 = vrot.slane %v2894, 5
      %v3664 = vsel %vm2200, %v3662, %v3663
      %v3665 = vrot.slane %v3565, 5
      %v3666 = vrot.slane %v3665, 4
      %v3667 = vrot.slane %v2896, 5
      %v3668 = vsel %vm2200, %v3666, %v3667
      %v3669 = vrot.slane %v3667, 4
      %v3670 = vrot.slane %v2897, 5
      %v3671 = vsel %vm2200, %v3669, %v3670
      %v3672 = vrot.slane %v3566, 5
      %v3673 = vrot.slane %v3672, 4
      %v3674 = vrot.slane %v2899, 5
      %v3675 = vsel %vm2200, %v3673, %v3674
      %v3676 = vrot.slane %v3674, 4
      %v3677 = vrot.slane %v2900, 5
      %v3678 = vsel %vm2200, %v3676, %v3677
      %v3679 = vrot.slane %v3567, 5
      %v3680 = vrot.slane %v3679, 4
      %v3681 = vrot.slane %v2902, 5
      %v3682 = vsel %vm2200, %v3680, %v3681
      %v3683 = vrot.slane %v3681, 4
      %v3684 = vrot.slane %v2903, 5
      %v3685 = vsel %vm2200, %v3683, %v3684
      %v3686 = vrot.slane %v3568, 5
      %v3687 = vrot.slane %v3686, 4
      %v3688 = vrot.slane %v2905, 5
      %v3689 = vsel %vm2200, %v3687, %v3688
      %v3690 = vrot.slane %v3688, 4
      %v3691 = vrot.slane %v2906, 5
      %v3692 = vsel %vm2200, %v3690, %v3691
      %v3693 = vrot.slane %v3569, 5
      %v3694 = vrot.slane %v3693, 4
      %v3695 = vrot.slane %v2908, 5
      %v3696 = vsel %vm2200, %v3694, %v3695
      %v3697 = vrot.slane %v3695, 4
      %v3698 = vrot.slane %v2909, 5
      %v3699 = vsel %vm2200, %v3697, %v3698
      %v3700 = vrot.slane %v3570, 5
      %v3701 = vrot.slane %v3700, 4
      %v3702 = vrot.slane %v2911, 5
      %v3703 = vsel %vm2200, %v3701, %v3702
      %v3704 = vrot.slane %v3702, 4
      %v3705 = vrot.slane %v2912, 5
      %v3706 = vsel %vm2200, %v3704, %v3705
      %v3707 = vrot.slane %v3571, 5
      %v3708 = vrot.slane %v3707, 4
      %v3709 = vrot.slane %v2914, 5
      %v3710 = vsel %vm2200, %v3708, %v3709
      %v3711 = vrot.slane %v3709, 4
      %v3712 = vrot.slane %v2915, 5
      %v3713 = vsel %vm2200, %v3711, %v3712
      %v3714 = vrot.slane %v3572, 5
      %v3715 = vrot.slane %v3714, 4
      %v3716 = vrot.slane %v2917, 5
      %v3717 = vsel %vm2200, %v3715, %v3716
      %v3718 = vrot.slane %v3716, 4
      %v3719 = vrot.slane %v2918, 5
      %v3720 = vsel %vm2200, %v3718, %v3719
      %v3721 = vrot.slane %v3573, 5
      %v3722 = vrot.slane %v3721, 4
      %v3723 = vrot.slane %v2920, 5
      %v3724 = vsel %vm2200, %v3722, %v3723
      %v3725 = vrot.slane %v3723, 4
      %v3726 = vrot.slane %v2921, 5
      %v3727 = vsel %vm2200, %v3725, %v3726
      %v3728 = vrot.slane %v3574, 5
      %v3729 = vrot.slane %v3728, 4
      %v3730 = vrot.slane %v2923, 5
      %v3731 = vsel %vm2200, %v3729, %v3730
      %v3732 = vrot.slane %v3730, 4
      %v3733 = vrot.slane %v2924, 5
      %v3734 = vsel %vm2200, %v3732, %v3733
      %s3735 = scalar_lea.vmem %s6, 320
      %v3736 = vld [vmem:[%s3735] sm:$0xf]
      %v3737 = vld [vmem:[%s3735 + $0x4] sm:$0xf]
      %v3738 = vld [vmem:[%s3735 + $0x8] sm:$0xf]
      %v3739 = vld [vmem:[%s3735 + $0xc] sm:$0xf]
      %v3740 = vld [vmem:[%s3735 + $0x10] sm:$0xf]
      %v3741 = vld [vmem:[%s3735 + $0x14] sm:$0xf]
      %v3742 = vld [vmem:[%s3735 + $0x18] sm:$0xf]
      %v3743 = vld [vmem:[%s3735 + $0x1c] sm:$0xf]
      %v3744 = vld [vmem:[%s3735 + $0x20] sm:$0xf]
      %v3745 = vld [vmem:[%s3735 + $0x24] sm:$0xf]
      %v3746 = vld [vmem:[%s3735 + $0x28] sm:$0xf]
      %v3747 = vld [vmem:[%s3735 + $0x2c] sm:$0xf]
      %v3748 = vld [vmem:[%s3735 + $0x30] sm:$0xf]
      %v3749 = vld [vmem:[%s3735 + $0x34] sm:$0xf]
      %v3750 = vld [vmem:[%s3735 + $0x38] sm:$0xf]
      %v3751 = vld [vmem:[%s3735 + $0x3c] sm:$0xf]
      %v3752 = vunpack.c.l.b16 %v3626
      %v3753 = vunpack.c.l.b16 %v3629
      %v3754 = vunpack.c.l.b16 %v3633
      %v3755 = vunpack.c.l.b16 %v3636
      %v3756 = vunpack.c.l.b16 %v3640
      %v3757 = vunpack.c.l.b16 %v3643
      %v3758 = vunpack.c.l.b16 %v3647
      %v3759 = vunpack.c.l.b16 %v3650
      %v3760 = vunpack.c.l.b16 %v3654
      %v3761 = vunpack.c.l.b16 %v3657
      %v3762 = vunpack.c.l.b16 %v3661
      %v3763 = vunpack.c.l.b16 %v3664
      %v3764 = vunpack.c.l.b16 %v3668
      %v3765 = vunpack.c.l.b16 %v3671
      %v3766 = vunpack.c.l.b16 %v3675
      %v3767 = vunpack.c.l.b16 %v3678
      %v3768 = vunpack.c.l.b16 %v3682
      %v3769 = vunpack.c.l.b16 %v3685
      %v3770 = vunpack.c.l.b16 %v3689
      %v3771 = vunpack.c.l.b16 %v3692
      %v3772 = vunpack.c.l.b16 %v3696
      %v3773 = vunpack.c.l.b16 %v3699
      %v3774 = vunpack.c.l.b16 %v3703
      %v3775 = vunpack.c.l.b16 %v3706
      %v3776 = vunpack.c.l.b16 %v3710
      %v3777 = vunpack.c.l.b16 %v3713
      %v3778 = vunpack.c.l.b16 %v3717
      %v3779 = vunpack.c.l.b16 %v3720
      %v3780 = vunpack.c.l.b16 %v3724
      %v3781 = vunpack.c.l.b16 %v3727
      %v3782 = vunpack.c.l.b16 %v3731
      %v3783 = vunpack.c.l.b16 %v3734
      %v3784 = vpack.c.b16 %v3753, %v3752
      %v3785 = vpack.c.b16 %v3755, %v3754
      %v3786 = vpack.c.b16 %v3757, %v3756
      %v3787 = vpack.c.b16 %v3759, %v3758
      %v3788 = vpack.c.b16 %v3761, %v3760
      %v3789 = vpack.c.b16 %v3763, %v3762
      %v3790 = vpack.c.b16 %v3765, %v3764
      %v3791 = vpack.c.b16 %v3767, %v3766
      %v3792 = vpack.c.b16 %v3769, %v3768
      %v3793 = vpack.c.b16 %v3771, %v3770
      %v3794 = vpack.c.b16 %v3773, %v3772
      %v3795 = vpack.c.b16 %v3775, %v3774
      %v3796 = vpack.c.b16 %v3777, %v3776
      %v3797 = vpack.c.b16 %v3779, %v3778
      %v3798 = vpack.c.b16 %v3781, %v3780
      %v3799 = vpack.c.b16 %v3783, %v3782
      %v3832 = vunpack.c.l.b16 %v3736
      %v3833 = vunpack.c.l.b16 %v3737
      %v3834 = vunpack.c.l.b16 %v3738
      %v3835 = vunpack.c.l.b16 %v3739
      %v3836 = vunpack.c.l.b16 %v3740
      %v3837 = vunpack.c.l.b16 %v3741
      %v3838 = vunpack.c.l.b16 %v3742
      %v3839 = vunpack.c.l.b16 %v3743
      %v3840 = vunpack.c.l.b16 %v3744
      %v3841 = vunpack.c.l.b16 %v3745
      %v3842 = vunpack.c.l.b16 %v3746
      %v3843 = vunpack.c.l.b16 %v3747
      %v3844 = vunpack.c.l.b16 %v3748
      %v3845 = vunpack.c.l.b16 %v3749
      %v3846 = vunpack.c.l.b16 %v3750
      %v3847 = vunpack.c.l.b16 %v3751
      %v3848 = vpack.c.b16 %v3833, %v3832
      %v3849 = vpack.c.b16 %v3835, %v3834
      %v3850 = vpack.c.b16 %v3837, %v3836
      %v3851 = vpack.c.b16 %v3839, %v3838
      %v3852 = vpack.c.b16 %v3841, %v3840
      %v3853 = vpack.c.b16 %v3843, %v3842
      %v3854 = vpack.c.b16 %v3845, %v3844
      %v3855 = vpack.c.b16 %v3847, %v3846
      %3864 = vmatpush.bf16.msra.mxu0 %v3855
      %3865 = vmatpush.bf16.msra.mxu0 %v3854
      %3866 = vmatpush.bf16.msra.mxu0 %v3853
      %3867 = vmatpush.bf16.msra.mxu0 %v3852
      %3868 = vmatpush.bf16.msra.mxu0 %v3851
      %3869 = vmatpush.bf16.msra.mxu0 %v3850
      %3870 = vmatpush.bf16.msra.mxu0 %v3849
      %3871 = vmatpush.bf16.msra.mxu0 %v3848
      %3872 = vmatmul.bf16.gmra.mxu0 %v3784
      %v3873 = vpop.f32.mrf.mxu0
      %v3874 = vadd.f32 0.0, %v3873
      %v3875 = vpop.f32.mrf.mxu0
      %v3876 = vadd.f32 0.0, %v3875
      %3877 = vmatmul.bf16.gmra.mxu0 %v3785
      %v3878 = vpop.f32.mrf.mxu0
      %v3879 = vadd.f32 0.0, %v3878
      %v3880 = vpop.f32.mrf.mxu0
      %v3881 = vadd.f32 0.0, %v3880
      %3882 = vmatmul.bf16.gmra.mxu0 %v3786
      %v3883 = vpop.f32.mrf.mxu0
      %v3884 = vadd.f32 0.0, %v3883
      %v3885 = vpop.f32.mrf.mxu0
      %v3886 = vadd.f32 0.0, %v3885
      %3887 = vmatmul.bf16.gmra.mxu0 %v3787
      %v3888 = vpop.f32.mrf.mxu0
      %v3889 = vadd.f32 0.0, %v3888
      %v3890 = vpop.f32.mrf.mxu0
      %v3891 = vadd.f32 0.0, %v3890
      %3892 = vmatmul.bf16.gmra.mxu0 %v3788
      %v3893 = vpop.f32.mrf.mxu0
      %v3894 = vadd.f32 0.0, %v3893
      %v3895 = vpop.f32.mrf.mxu0
      %v3896 = vadd.f32 0.0, %v3895
      %3897 = vmatmul.bf16.gmra.mxu0 %v3789
      %v3898 = vpop.f32.mrf.mxu0
      %v3899 = vadd.f32 0.0, %v3898
      %v3900 = vpop.f32.mrf.mxu0
      %v3901 = vadd.f32 0.0, %v3900
      %3902 = vmatmul.bf16.gmra.mxu0 %v3790
      %v3903 = vpop.f32.mrf.mxu0
      %v3904 = vadd.f32 0.0, %v3903
      %v3905 = vpop.f32.mrf.mxu0
      %v3906 = vadd.f32 0.0, %v3905
      %3907 = vmatmul.bf16.gmra.mxu0 %v3791
      %v3908 = vpop.f32.mrf.mxu0
      %v3909 = vadd.f32 0.0, %v3908
      %v3910 = vpop.f32.mrf.mxu0
      %v3911 = vadd.f32 0.0, %v3910
      %3912 = vmatmul.bf16.gmra.mxu0 %v3792
      %v3913 = vpop.f32.mrf.mxu0
      %v3914 = vadd.f32 0.0, %v3913
      %v3915 = vpop.f32.mrf.mxu0
      %v3916 = vadd.f32 0.0, %v3915
      %3917 = vmatmul.bf16.gmra.mxu0 %v3793
      %v3918 = vpop.f32.mrf.mxu0
      %v3919 = vadd.f32 0.0, %v3918
      %v3920 = vpop.f32.mrf.mxu0
      %v3921 = vadd.f32 0.0, %v3920
      %3922 = vmatmul.bf16.gmra.mxu0 %v3794
      %v3923 = vpop.f32.mrf.mxu0
      %v3924 = vadd.f32 0.0, %v3923
      %v3925 = vpop.f32.mrf.mxu0
      %v3926 = vadd.f32 0.0, %v3925
      %3927 = vmatmul.bf16.gmra.mxu0 %v3795
      %v3928 = vpop.f32.mrf.mxu0
      %v3929 = vadd.f32 0.0, %v3928
      %v3930 = vpop.f32.mrf.mxu0
      %v3931 = vadd.f32 0.0, %v3930
      %3932 = vmatmul.bf16.gmra.mxu0 %v3796
      %v3933 = vpop.f32.mrf.mxu0
      %v3934 = vadd.f32 0.0, %v3933
      %v3935 = vpop.f32.mrf.mxu0
      %v3936 = vadd.f32 0.0, %v3935
      %3937 = vmatmul.bf16.gmra.mxu0 %v3797
      %v3938 = vpop.f32.mrf.mxu0
      %v3939 = vadd.f32 0.0, %v3938
      %v3940 = vpop.f32.mrf.mxu0
      %v3941 = vadd.f32 0.0, %v3940
      %3942 = vmatmul.bf16.gmra.mxu0 %v3798
      %v3943 = vpop.f32.mrf.mxu0
      %v3944 = vadd.f32 0.0, %v3943
      %v3945 = vpop.f32.mrf.mxu0
      %v3946 = vadd.f32 0.0, %v3945
      %3947 = vmatmul.bf16.gmra.mxu0 %v3799
      %v3948 = vpop.f32.mrf.mxu0
      %v3949 = vadd.f32 0.0, %v3948
      %v3950 = vpop.f32.mrf.mxu0
      %v3951 = vadd.f32 0.0, %v3950
      %3952 = vdwg.mxu0
      %v3953 = vadd.f32 %v3527, %v3874
      %v3954 = vadd.f32 %v3528, %v3876
      %v3955 = vadd.f32 %v3529, %v3879
      %v3956 = vadd.f32 %v3530, %v3881
      %v3957 = vadd.f32 %v3531, %v3884
      %v3958 = vadd.f32 %v3532, %v3886
      %v3959 = vadd.f32 %v3533, %v3889
      %v3960 = vadd.f32 %v3534, %v3891
      %v3961 = vadd.f32 %v3535, %v3894
      %v3962 = vadd.f32 %v3536, %v3896
      %v3963 = vadd.f32 %v3537, %v3899
      %v3964 = vadd.f32 %v3538, %v3901
      %v3965 = vadd.f32 %v3539, %v3904
      %v3966 = vadd.f32 %v3540, %v3906
      %v3967 = vadd.f32 %v3541, %v3909
      %v3968 = vadd.f32 %v3542, %v3911
      %v3969 = vadd.f32 %v3543, %v3914
      %v3970 = vadd.f32 %v3544, %v3916
      %v3971 = vadd.f32 %v3545, %v3919
      %v3972 = vadd.f32 %v3546, %v3921
      %v3973 = vadd.f32 %v3547, %v3924
      %v3974 = vadd.f32 %v3548, %v3926
      %v3975 = vadd.f32 %v3549, %v3929
      %v3976 = vadd.f32 %v3550, %v3931
      %v3977 = vadd.f32 %v3551, %v3934
      %v3978 = vadd.f32 %v3552, %v3936
      %v3979 = vadd.f32 %v3553, %v3939
      %v3980 = vadd.f32 %v3554, %v3941
      %v3981 = vadd.f32 %v3555, %v3944
      %v3982 = vadd.f32 %v3556, %v3946
      %v3983 = vadd.f32 %v3557, %v3949
      %v3984 = vadd.f32 %v3558, %v3951
      %s3985 = scalar_lea.vmem [#allocation2], 24
      %v3986 = vld [vmem:[%s3985] sm:$0xf]
      %v3987 = vld [vmem:[%s3985 + $0x4] sm:$0xf]
      %v3988 = vld [vmem:[%s3985 + $0xc] sm:$0xf]
      %v3989 = vld [vmem:[%s3985 + $0x10] sm:$0xf]
      %v3990 = vld [vmem:[%s3985 + $0x18] sm:$0xf]
      %v3991 = vld [vmem:[%s3985 + $0x1c] sm:$0xf]
      %v3992 = vld [vmem:[%s3985 + $0x24] sm:$0xf]
      %v3993 = vld [vmem:[%s3985 + $0x28] sm:$0xf]
      %v3994 = vld [vmem:[%s3985 + $0x30] sm:$0xf]
      %v3995 = vld [vmem:[%s3985 + $0x34] sm:$0xf]
      %v3996 = vld [vmem:[%s3985 + $0x3c] sm:$0xf]
      %v3997 = vld [vmem:[%s3985 + $0x40] sm:$0xf]
      %v3998 = vld [vmem:[%s3985 + $0x48] sm:$0xf]
      %v3999 = vld [vmem:[%s3985 + $0x4c] sm:$0xf]
      %v4000 = vld [vmem:[%s3985 + $0x54] sm:$0xf]
      %v4001 = vld [vmem:[%s3985 + $0x58] sm:$0xf]
      %v4002 = vld [vmem:[%s3985 + $0x60] sm:$0xf]
      %v4003 = vld [vmem:[%s3985 + $0x64] sm:$0xf]
      %v4004 = vld [vmem:[%s3985 + $0x6c] sm:$0xf]
      %v4005 = vld [vmem:[%s3985 + $0x70] sm:$0xf]
      %v4006 = vld [vmem:[%s3985 + $0x78] sm:$0xf]
      %v4007 = vld [vmem:[%s3985 + $0x7c] sm:$0xf]
      %v4008 = vld [vmem:[%s3985 + $0x84] sm:$0xf]
      %v4009 = vld [vmem:[%s3985 + $0x88] sm:$0xf]
      %v4010 = vld [vmem:[%s3985 + $0x90] sm:$0xf]
      %v4011 = vld [vmem:[%s3985 + $0x94] sm:$0xf]
      %v4012 = vld [vmem:[%s3985 + $0x9c] sm:$0xf]
      %v4013 = vld [vmem:[%s3985 + $0xa0] sm:$0xf]
      %v4014 = vld [vmem:[%s3985 + $0xa8] sm:$0xf]
      %v4015 = vld [vmem:[%s3985 + $0xac] sm:$0xf]
      %v4016 = vld [vmem:[%s3985 + $0xb4] sm:$0xf]
      %v4017 = vld [vmem:[%s3985 + $0xb8] sm:$0xf]
      %s4018 = scalar_lea.vmem %s6, 384
      %v4019 = vld [vmem:[%s4018] sm:$0xf]
      %v4020 = vld [vmem:[%s4018 + $0x4] sm:$0xf]
      %v4021 = vld [vmem:[%s4018 + $0x8] sm:$0xf]
      %v4022 = vld [vmem:[%s4018 + $0xc] sm:$0xf]
      %v4023 = vld [vmem:[%s4018 + $0x10] sm:$0xf]
      %v4024 = vld [vmem:[%s4018 + $0x14] sm:$0xf]
      %v4025 = vld [vmem:[%s4018 + $0x18] sm:$0xf]
      %v4026 = vld [vmem:[%s4018 + $0x1c] sm:$0xf]
      %v4027 = vld [vmem:[%s4018 + $0x20] sm:$0xf]
      %v4028 = vld [vmem:[%s4018 + $0x24] sm:$0xf]
      %v4029 = vld [vmem:[%s4018 + $0x28] sm:$0xf]
      %v4030 = vld [vmem:[%s4018 + $0x2c] sm:$0xf]
      %v4031 = vld [vmem:[%s4018 + $0x30] sm:$0xf]
      %v4032 = vld [vmem:[%s4018 + $0x34] sm:$0xf]
      %v4033 = vld [vmem:[%s4018 + $0x38] sm:$0xf]
      %v4034 = vld [vmem:[%s4018 + $0x3c] sm:$0xf]
      %v4067 = vunpack.c.l.b16 %v3986
      %v4068 = vunpack.c.l.b16 %v3987
      %v4069 = vunpack.c.l.b16 %v3988
      %v4070 = vunpack.c.l.b16 %v3989
      %v4071 = vunpack.c.l.b16 %v3990
      %v4072 = vunpack.c.l.b16 %v3991
      %v4073 = vunpack.c.l.b16 %v3992
      %v4074 = vunpack.c.l.b16 %v3993
      %v4075 = vunpack.c.l.b16 %v3994
      %v4076 = vunpack.c.l.b16 %v3995
      %v4077 = vunpack.c.l.b16 %v3996
      %v4078 = vunpack.c.l.b16 %v3997
      %v4079 = vunpack.c.l.b16 %v3998
      %v4080 = vunpack.c.l.b16 %v3999
      %v4081 = vunpack.c.l.b16 %v4000
      %v4082 = vunpack.c.l.b16 %v4001
      %v4083 = vunpack.c.l.b16 %v4002
      %v4084 = vunpack.c.l.b16 %v4003
      %v4085 = vunpack.c.l.b16 %v4004
      %v4086 = vunpack.c.l.b16 %v4005
      %v4087 = vunpack.c.l.b16 %v4006
      %v4088 = vunpack.c.l.b16 %v4007
      %v4089 = vunpack.c.l.b16 %v4008
      %v4090 = vunpack.c.l.b16 %v4009
      %v4091 = vunpack.c.l.b16 %v4010
      %v4092 = vunpack.c.l.b16 %v4011
      %v4093 = vunpack.c.l.b16 %v4012
      %v4094 = vunpack.c.l.b16 %v4013
      %v4095 = vunpack.c.l.b16 %v4014
      %v4096 = vunpack.c.l.b16 %v4015
      %v4097 = vunpack.c.l.b16 %v4016
      %v4098 = vunpack.c.l.b16 %v4017
      %v4099 = vpack.c.b16 %v4068, %v4067
      %v4100 = vpack.c.b16 %v4070, %v4069
      %v4101 = vpack.c.b16 %v4072, %v4071
      %v4102 = vpack.c.b16 %v4074, %v4073
      %v4103 = vpack.c.b16 %v4076, %v4075
      %v4104 = vpack.c.b16 %v4078, %v4077
      %v4105 = vpack.c.b16 %v4080, %v4079
      %v4106 = vpack.c.b16 %v4082, %v4081
      %v4107 = vpack.c.b16 %v4084, %v4083
      %v4108 = vpack.c.b16 %v4086, %v4085
      %v4109 = vpack.c.b16 %v4088, %v4087
      %v4110 = vpack.c.b16 %v4090, %v4089
      %v4111 = vpack.c.b16 %v4092, %v4091
      %v4112 = vpack.c.b16 %v4094, %v4093
      %v4113 = vpack.c.b16 %v4096, %v4095
      %v4114 = vpack.c.b16 %v4098, %v4097
      %v4147 = vunpack.c.l.b16 %v4019
      %v4148 = vunpack.c.l.b16 %v4020
      %v4149 = vunpack.c.l.b16 %v4021
      %v4150 = vunpack.c.l.b16 %v4022
      %v4151 = vunpack.c.l.b16 %v4023
      %v4152 = vunpack.c.l.b16 %v4024
      %v4153 = vunpack.c.l.b16 %v4025
      %v4154 = vunpack.c.l.b16 %v4026
      %v4155 = vunpack.c.l.b16 %v4027
      %v4156 = vunpack.c.l.b16 %v4028
      %v4157 = vunpack.c.l.b16 %v4029
      %v4158 = vunpack.c.l.b16 %v4030
      %v4159 = vunpack.c.l.b16 %v4031
      %v4160 = vunpack.c.l.b16 %v4032
      %v4161 = vunpack.c.l.b16 %v4033
      %v4162 = vunpack.c.l.b16 %v4034
      %v4163 = vpack.c.b16 %v4148, %v4147
      %v4164 = vpack.c.b16 %v4150, %v4149
      %v4165 = vpack.c.b16 %v4152, %v4151
      %v4166 = vpack.c.b16 %v4154, %v4153
      %v4167 = vpack.c.b16 %v4156, %v4155
      %v4168 = vpack.c.b16 %v4158, %v4157
      %v4169 = vpack.c.b16 %v4160, %v4159
      %v4170 = vpack.c.b16 %v4162, %v4161
      %4179 = vmatpush.bf16.msra.mxu0 %v4170
      %4180 = vmatpush.bf16.msra.mxu0 %v4169
      %4181 = vmatpush.bf16.msra.mxu0 %v4168
      %4182 = vmatpush.bf16.msra.mxu0 %v4167
      %4183 = vmatpush.bf16.msra.mxu0 %v4166
      %4184 = vmatpush.bf16.msra.mxu0 %v4165
      %4185 = vmatpush.bf16.msra.mxu0 %v4164
      %4186 = vmatpush.bf16.msra.mxu0 %v4163
      %4187 = vmatmul.bf16.gmra.mxu0 %v4099
      %v4188 = vpop.f32.mrf.mxu0
      %v4189 = vadd.f32 0.0, %v4188
      %v4190 = vpop.f32.mrf.mxu0
      %v4191 = vadd.f32 0.0, %v4190
      %4192 = vmatmul.bf16.gmra.mxu0 %v4100
      %v4193 = vpop.f32.mrf.mxu0
      %v4194 = vadd.f32 0.0, %v4193
      %v4195 = vpop.f32.mrf.mxu0
      %v4196 = vadd.f32 0.0, %v4195
      %4197 = vmatmul.bf16.gmra.mxu0 %v4101
      %v4198 = vpop.f32.mrf.mxu0
      %v4199 = vadd.f32 0.0, %v4198
      %v4200 = vpop.f32.mrf.mxu0
      %v4201 = vadd.f32 0.0, %v4200
      %4202 = vmatmul.bf16.gmra.mxu0 %v4102
      %v4203 = vpop.f32.mrf.mxu0
      %v4204 = vadd.f32 0.0, %v4203
      %v4205 = vpop.f32.mrf.mxu0
      %v4206 = vadd.f32 0.0, %v4205
      %4207 = vmatmul.bf16.gmra.mxu0 %v4103
      %v4208 = vpop.f32.mrf.mxu0
      %v4209 = vadd.f32 0.0, %v4208
      %v4210 = vpop.f32.mrf.mxu0
      %v4211 = vadd.f32 0.0, %v4210
      %4212 = vmatmul.bf16.gmra.mxu0 %v4104
      %v4213 = vpop.f32.mrf.mxu0
      %v4214 = vadd.f32 0.0, %v4213
      %v4215 = vpop.f32.mrf.mxu0
      %v4216 = vadd.f32 0.0, %v4215
      %4217 = vmatmul.bf16.gmra.mxu0 %v4105
      %v4218 = vpop.f32.mrf.mxu0
      %v4219 = vadd.f32 0.0, %v4218
      %v4220 = vpop.f32.mrf.mxu0
      %v4221 = vadd.f32 0.0, %v4220
      %4222 = vmatmul.bf16.gmra.mxu0 %v4106
      %v4223 = vpop.f32.mrf.mxu0
      %v4224 = vadd.f32 0.0, %v4223
      %v4225 = vpop.f32.mrf.mxu0
      %v4226 = vadd.f32 0.0, %v4225
      %4227 = vmatmul.bf16.gmra.mxu0 %v4107
      %v4228 = vpop.f32.mrf.mxu0
      %v4229 = vadd.f32 0.0, %v4228
      %v4230 = vpop.f32.mrf.mxu0
      %v4231 = vadd.f32 0.0, %v4230
      %4232 = vmatmul.bf16.gmra.mxu0 %v4108
      %v4233 = vpop.f32.mrf.mxu0
      %v4234 = vadd.f32 0.0, %v4233
      %v4235 = vpop.f32.mrf.mxu0
      %v4236 = vadd.f32 0.0, %v4235
      %4237 = vmatmul.bf16.gmra.mxu0 %v4109
      %v4238 = vpop.f32.mrf.mxu0
      %v4239 = vadd.f32 0.0, %v4238
      %v4240 = vpop.f32.mrf.mxu0
      %v4241 = vadd.f32 0.0, %v4240
      %4242 = vmatmul.bf16.gmra.mxu0 %v4110
      %v4243 = vpop.f32.mrf.mxu0
      %v4244 = vadd.f32 0.0, %v4243
      %v4245 = vpop.f32.mrf.mxu0
      %v4246 = vadd.f32 0.0, %v4245
      %4247 = vmatmul.bf16.gmra.mxu0 %v4111
      %v4248 = vpop.f32.mrf.mxu0
      %v4249 = vadd.f32 0.0, %v4248
      %v4250 = vpop.f32.mrf.mxu0
      %v4251 = vadd.f32 0.0, %v4250
      %4252 = vmatmul.bf16.gmra.mxu0 %v4112
      %v4253 = vpop.f32.mrf.mxu0
      %v4254 = vadd.f32 0.0, %v4253
      %v4255 = vpop.f32.mrf.mxu0
      %v4256 = vadd.f32 0.0, %v4255
      %4257 = vmatmul.bf16.gmra.mxu0 %v4113
      %v4258 = vpop.f32.mrf.mxu0
      %v4259 = vadd.f32 0.0, %v4258
      %v4260 = vpop.f32.mrf.mxu0
      %v4261 = vadd.f32 0.0, %v4260
      %4262 = vmatmul.bf16.gmra.mxu0 %v4114
      %v4263 = vpop.f32.mrf.mxu0
      %v4264 = vadd.f32 0.0, %v4263
      %v4265 = vpop.f32.mrf.mxu0
      %v4266 = vadd.f32 0.0, %v4265
      %4267 = vdwg.mxu0
      %v4268 = vadd.f32 %v3953, %v4189
      %v4269 = vadd.f32 %v3954, %v4191
      %v4270 = vadd.f32 %v3955, %v4194
      %v4271 = vadd.f32 %v3956, %v4196
      %v4272 = vadd.f32 %v3957, %v4199
      %v4273 = vadd.f32 %v3958, %v4201
      %v4274 = vadd.f32 %v3959, %v4204
      %v4275 = vadd.f32 %v3960, %v4206
      %v4276 = vadd.f32 %v3961, %v4209
      %v4277 = vadd.f32 %v3962, %v4211
      %v4278 = vadd.f32 %v3963, %v4214
      %v4279 = vadd.f32 %v3964, %v4216
      %v4280 = vadd.f32 %v3965, %v4219
      %v4281 = vadd.f32 %v3966, %v4221
      %v4282 = vadd.f32 %v3967, %v4224
      %v4283 = vadd.f32 %v3968, %v4226
      %v4284 = vadd.f32 %v3969, %v4229
      %v4285 = vadd.f32 %v3970, %v4231
      %v4286 = vadd.f32 %v3971, %v4234
      %v4287 = vadd.f32 %v3972, %v4236
      %v4288 = vadd.f32 %v3973, %v4239
      %v4289 = vadd.f32 %v3974, %v4241
      %v4290 = vadd.f32 %v3975, %v4244
      %v4291 = vadd.f32 %v3976, %v4246
      %v4292 = vadd.f32 %v3977, %v4249
      %v4293 = vadd.f32 %v3978, %v4251
      %v4294 = vadd.f32 %v3979, %v4254
      %v4295 = vadd.f32 %v3980, %v4256
      %v4296 = vadd.f32 %v3981, %v4259
      %v4297 = vadd.f32 %v3982, %v4261
      %v4298 = vadd.f32 %v3983, %v4264
      %v4299 = vadd.f32 %v3984, %v4266
      %v4300 = vld [vmem:[%s3985] sm:$0xf]
      %v4301 = vld [vmem:[%s3985 + $0x4] sm:$0xf]
      %v4302 = vld [vmem:[%s3985 + $0x8] sm:$0x1]
      %v4303 = vld [vmem:[%s3985 + $0xc] sm:$0xf]
      %v4304 = vld [vmem:[%s3985 + $0x10] sm:$0xf]
      %v4305 = vld [vmem:[%s3985 + $0x14] sm:$0x1]
      %v4306 = vld [vmem:[%s3985 + $0x18] sm:$0xf]
      %v4307 = vld [vmem:[%s3985 + $0x1c] sm:$0xf]
      %v4308 = vld [vmem:[%s3985 + $0x20] sm:$0x1]
      %v4309 = vld [vmem:[%s3985 + $0x24] sm:$0xf]
      %v4310 = vld [vmem:[%s3985 + $0x28] sm:$0xf]
      %v4311 = vld [vmem:[%s3985 + $0x2c] sm:$0x1]
      %v4312 = vld [vmem:[%s3985 + $0x30] sm:$0xf]
      %v4313 = vld [vmem:[%s3985 + $0x34] sm:$0xf]
      %v4314 = vld [vmem:[%s3985 + $0x38] sm:$0x1]
      %v4315 = vld [vmem:[%s3985 + $0x3c] sm:$0xf]
      %v4316 = vld [vmem:[%s3985 + $0x40] sm:$0xf]
      %v4317 = vld [vmem:[%s3985 + $0x44] sm:$0x1]
      %v4318 = vld [vmem:[%s3985 + $0x48] sm:$0xf]
      %v4319 = vld [vmem:[%s3985 + $0x4c] sm:$0xf]
      %v4320 = vld [vmem:[%s3985 + $0x50] sm:$0x1]
      %v4321 = vld [vmem:[%s3985 + $0x54] sm:$0xf]
      %v4322 = vld [vmem:[%s3985 + $0x58] sm:$0xf]
      %v4323 = vld [vmem:[%s3985 + $0x5c] sm:$0x1]
      %v4324 = vld [vmem:[%s3985 + $0x60] sm:$0xf]
      %v4325 = vld [vmem:[%s3985 + $0x64] sm:$0xf]
      %v4326 = vld [vmem:[%s3985 + $0x68] sm:$0x1]
      %v4327 = vld [vmem:[%s3985 + $0x6c] sm:$0xf]
      %v4328 = vld [vmem:[%s3985 + $0x70] sm:$0xf]
      %v4329 = vld [vmem:[%s3985 + $0x74] sm:$0x1]
      %v4330 = vld [vmem:[%s3985 + $0x78] sm:$0xf]
      %v4331 = vld [vmem:[%s3985 + $0x7c] sm:$0xf]
      %v4332 = vld [vmem:[%s3985 + $0x80] sm:$0x1]
      %v4333 = vld [vmem:[%s3985 + $0x84] sm:$0xf]
      %v4334 = vld [vmem:[%s3985 + $0x88] sm:$0xf]
      %v4335 = vld [vmem:[%s3985 + $0x8c] sm:$0x1]
      %v4336 = vld [vmem:[%s3985 + $0x90] sm:$0xf]
      %v4337 = vld [vmem:[%s3985 + $0x94] sm:$0xf]
      %v4338 = vld [vmem:[%s3985 + $0x98] sm:$0x1]
      %v4339 = vld [vmem:[%s3985 + $0x9c] sm:$0xf]
      %v4340 = vld [vmem:[%s3985 + $0xa0] sm:$0xf]
      %v4341 = vld [vmem:[%s3985 + $0xa4] sm:$0x1]
      %v4342 = vld [vmem:[%s3985 + $0xa8] sm:$0xf]
      %v4343 = vld [vmem:[%s3985 + $0xac] sm:$0xf]
      %v4344 = vld [vmem:[%s3985 + $0xb0] sm:$0x1]
      %v4345 = vld [vmem:[%s3985 + $0xb4] sm:$0xf]
      %v4346 = vld [vmem:[%s3985 + $0xb8] sm:$0xf]
      %v4347 = vld [vmem:[%s3985 + $0xbc] sm:$0x1]
      %v4349 = vshrl.u32 %v4300, 16
      %v4351 = vrot.slane %v4349, 4
      %v4352 = vshll.u32 %v4300, 16
      %v4354 = vrot.slane %v4352, 5
      %v4355 = vor.u32 %v4351, %v4354
      %v4356 = vrot.slane %v4355, 4
      %v4358 = vshll.u32 %v4301, 16
      %v4360 = vrot.slane %v4358, 5
      %v4361 = vsel %vm1314, %v4356, %v4360
      %v4362 = vshrl.u32 %v4301, 16
      %v4364 = vrot.slane %v4362, 4
      %v4365 = vor.u32 %v4364, %v4360
      %v4366 = vrot.slane %v4365, 4
      %v4368 = vshll.u32 %v4302, 16
      %v4370 = vrot.slane %v4368, 5
      %v4371 = vsel %vm1314, %v4366, %v4370
      %v4373 = vshrl.u32 %v4303, 16
      %v4375 = vrot.slane %v4373, 4
      %v4376 = vshll.u32 %v4303, 16
      %v4378 = vrot.slane %v4376, 5
      %v4379 = vor.u32 %v4375, %v4378
      %v4380 = vrot.slane %v4379, 4
      %v4382 = vshll.u32 %v4304, 16
      %v4384 = vrot.slane %v4382, 5
      %v4385 = vsel %vm1314, %v4380, %v4384
      %v4386 = vshrl.u32 %v4304, 16
      %v4388 = vrot.slane %v4386, 4
      %v4389 = vor.u32 %v4388, %v4384
      %v4390 = vrot.slane %v4389, 4
      %v4392 = vshll.u32 %v4305, 16
      %v4394 = vrot.slane %v4392, 5
      %v4395 = vsel %vm1314, %v4390, %v4394
      %v4397 = vshrl.u32 %v4306, 16
      %v4399 = vrot.slane %v4397, 4
      %v4400 = vshll.u32 %v4306, 16
      %v4402 = vrot.slane %v4400, 5
      %v4403 = vor.u32 %v4399, %v4402
      %v4404 = vrot.slane %v4403, 4
      %v4406 = vshll.u32 %v4307, 16
      %v4408 = vrot.slane %v4406, 5
      %v4409 = vsel %vm1314, %v4404, %v4408
      %v4410 = vshrl.u32 %v4307, 16
      %v4412 = vrot.slane %v4410, 4
      %v4413 = vor.u32 %v4412, %v4408
      %v4414 = vrot.slane %v4413, 4
      %v4416 = vshll.u32 %v4308, 16
      %v4418 = vrot.slane %v4416, 5
      %v4419 = vsel %vm1314, %v4414, %v4418
      %v4421 = vshrl.u32 %v4309, 16
      %v4423 = vrot.slane %v4421, 4
      %v4424 = vshll.u32 %v4309, 16
      %v4426 = vrot.slane %v4424, 5
      %v4427 = vor.u32 %v4423, %v4426
      %v4428 = vrot.slane %v4427, 4
      %v4430 = vshll.u32 %v4310, 16
      %v4432 = vrot.slane %v4430, 5
      %v4433 = vsel %vm1314, %v4428, %v4432
      %v4434 = vshrl.u32 %v4310, 16
      %v4436 = vrot.slane %v4434, 4
      %v4437 = vor.u32 %v4436, %v4432
      %v4438 = vrot.slane %v4437, 4
      %v4440 = vshll.u32 %v4311, 16
      %v4442 = vrot.slane %v4440, 5
      %v4443 = vsel %vm1314, %v4438, %v4442
      %v4445 = vshrl.u32 %v4312, 16
      %v4447 = vrot.slane %v4445, 4
      %v4448 = vshll.u32 %v4312, 16
      %v4450 = vrot.slane %v4448, 5
      %v4451 = vor.u32 %v4447, %v4450
      %v4452 = vrot.slane %v4451, 4
      %v4454 = vshll.u32 %v4313, 16
      %v4456 = vrot.slane %v4454, 5
      %v4457 = vsel %vm1314, %v4452, %v4456
      %v4458 = vshrl.u32 %v4313, 16
      %v4460 = vrot.slane %v4458, 4
      %v4461 = vor.u32 %v4460, %v4456
      %v4462 = vrot.slane %v4461, 4
      %v4464 = vshll.u32 %v4314, 16
      %v4466 = vrot.slane %v4464, 5
      %v4467 = vsel %vm1314, %v4462, %v4466
      %v4469 = vshrl.u32 %v4315, 16
      %v4471 = vrot.slane %v4469, 4
      %v4472 = vshll.u32 %v4315, 16
      %v4474 = vrot.slane %v4472, 5
      %v4475 = vor.u32 %v4471, %v4474
      %v4476 = vrot.slane %v4475, 4
      %v4478 = vshll.u32 %v4316, 16
      %v4480 = vrot.slane %v4478, 5
      %v4481 = vsel %vm1314, %v4476, %v4480
      %v4482 = vshrl.u32 %v4316, 16
      %v4484 = vrot.slane %v4482, 4
      %v4485 = vor.u32 %v4484, %v4480
      %v4486 = vrot.slane %v4485, 4
      %v4488 = vshll.u32 %v4317, 16
      %v4490 = vrot.slane %v4488, 5
      %v4491 = vsel %vm1314, %v4486, %v4490
      %v4493 = vshrl.u32 %v4318, 16
      %v4495 = vrot.slane %v4493, 4
      %v4496 = vshll.u32 %v4318, 16
      %v4498 = vrot.slane %v4496, 5
      %v4499 = vor.u32 %v4495, %v4498
      %v4500 = vrot.slane %v4499, 4
      %v4502 = vshll.u32 %v4319, 16
      %v4504 = vrot.slane %v4502, 5
      %v4505 = vsel %vm1314, %v4500, %v4504
      %v4506 = vshrl.u32 %v4319, 16
      %v4508 = vrot.slane %v4506, 4
      %v4509 = vor.u32 %v4508, %v4504
      %v4510 = vrot.slane %v4509, 4
      %v4512 = vshll.u32 %v4320, 16
      %v4514 = vrot.slane %v4512, 5
      %v4515 = vsel %vm1314, %v4510, %v4514
      %v4517 = vshrl.u32 %v4321, 16
      %v4519 = vrot.slane %v4517, 4
      %v4520 = vshll.u32 %v4321, 16
      %v4522 = vrot.slane %v4520, 5
      %v4523 = vor.u32 %v4519, %v4522
      %v4524 = vrot.slane %v4523, 4
      %v4526 = vshll.u32 %v4322, 16
      %v4528 = vrot.slane %v4526, 5
      %v4529 = vsel %vm1314, %v4524, %v4528
      %v4530 = vshrl.u32 %v4322, 16
      %v4532 = vrot.slane %v4530, 4
      %v4533 = vor.u32 %v4532, %v4528
      %v4534 = vrot.slane %v4533, 4
      %v4536 = vshll.u32 %v4323, 16
      %v4538 = vrot.slane %v4536, 5
      %v4539 = vsel %vm1314, %v4534, %v4538
      %v4541 = vshrl.u32 %v4324, 16
      %v4543 = vrot.slane %v4541, 4
      %v4544 = vshll.u32 %v4324, 16
      %v4546 = vrot.slane %v4544, 5
      %v4547 = vor.u32 %v4543, %v4546
      %v4548 = vrot.slane %v4547, 4
      %v4550 = vshll.u32 %v4325, 16
      %v4552 = vrot.slane %v4550, 5
      %v4553 = vsel %vm1314, %v4548, %v4552
      %v4554 = vshrl.u32 %v4325, 16
      %v4556 = vrot.slane %v4554, 4
      %v4557 = vor.u32 %v4556, %v4552
      %v4558 = vrot.slane %v4557, 4
      %v4560 = vshll.u32 %v4326, 16
      %v4562 = vrot.slane %v4560, 5
      %v4563 = vsel %vm1314, %v4558, %v4562
      %v4565 = vshrl.u32 %v4327, 16
      %v4567 = vrot.slane %v4565, 4
      %v4568 = vshll.u32 %v4327, 16
      %v4570 = vrot.slane %v4568, 5
      %v4571 = vor.u32 %v4567, %v4570
      %v4572 = vrot.slane %v4571, 4
      %v4574 = vshll.u32 %v4328, 16
      %v4576 = vrot.slane %v4574, 5
      %v4577 = vsel %vm1314, %v4572, %v4576
      %v4578 = vshrl.u32 %v4328, 16
      %v4580 = vrot.slane %v4578, 4
      %v4581 = vor.u32 %v4580, %v4576
      %v4582 = vrot.slane %v4581, 4
      %v4584 = vshll.u32 %v4329, 16
      %v4586 = vrot.slane %v4584, 5
      %v4587 = vsel %vm1314, %v4582, %v4586
      %v4589 = vshrl.u32 %v4330, 16
      %v4591 = vrot.slane %v4589, 4
      %v4592 = vshll.u32 %v4330, 16
      %v4594 = vrot.slane %v4592, 5
      %v4595 = vor.u32 %v4591, %v4594
      %v4596 = vrot.slane %v4595, 4
      %v4598 = vshll.u32 %v4331, 16
      %v4600 = vrot.slane %v4598, 5
      %v4601 = vsel %vm1314, %v4596, %v4600
      %v4602 = vshrl.u32 %v4331, 16
      %v4604 = vrot.slane %v4602, 4
      %v4605 = vor.u32 %v4604, %v4600
      %v4606 = vrot.slane %v4605, 4
      %v4608 = vshll.u32 %v4332, 16
      %v4610 = vrot.slane %v4608, 5
      %v4611 = vsel %vm1314, %v4606, %v4610
      %v4613 = vshrl.u32 %v4333, 16
      %v4615 = vrot.slane %v4613, 4
      %v4616 = vshll.u32 %v4333, 16
      %v4618 = vrot.slane %v4616, 5
      %v4619 = vor.u32 %v4615, %v4618
      %v4620 = vrot.slane %v4619, 4
      %v4622 = vshll.u32 %v4334, 16
      %v4624 = vrot.slane %v4622, 5
      %v4625 = vsel %vm1314, %v4620, %v4624
      %v4626 = vshrl.u32 %v4334, 16
      %v4628 = vrot.slane %v4626, 4
      %v4629 = vor.u32 %v4628, %v4624
      %v4630 = vrot.slane %v4629, 4
      %v4632 = vshll.u32 %v4335, 16
      %v4634 = vrot.slane %v4632, 5
      %v4635 = vsel %vm1314, %v4630, %v4634
      %v4637 = vshrl.u32 %v4336, 16
      %v4639 = vrot.slane %v4637, 4
      %v4640 = vshll.u32 %v4336, 16
      %v4642 = vrot.slane %v4640, 5
      %v4643 = vor.u32 %v4639, %v4642
      %v4644 = vrot.slane %v4643, 4
      %v4646 = vshll.u32 %v4337, 16
      %v4648 = vrot.slane %v4646, 5
      %v4649 = vsel %vm1314, %v4644, %v4648
      %v4650 = vshrl.u32 %v4337, 16
      %v4652 = vrot.slane %v4650, 4
      %v4653 = vor.u32 %v4652, %v4648
      %v4654 = vrot.slane %v4653, 4
      %v4656 = vshll.u32 %v4338, 16
      %v4658 = vrot.slane %v4656, 5
      %v4659 = vsel %vm1314, %v4654, %v4658
      %v4661 = vshrl.u32 %v4339, 16
      %v4663 = vrot.slane %v4661, 4
      %v4664 = vshll.u32 %v4339, 16
      %v4666 = vrot.slane %v4664, 5
      %v4667 = vor.u32 %v4663, %v4666
      %v4668 = vrot.slane %v4667, 4
      %v4670 = vshll.u32 %v4340, 16
      %v4672 = vrot.slane %v4670, 5
      %v4673 = vsel %vm1314, %v4668, %v4672
      %v4674 = vshrl.u32 %v4340, 16
      %v4676 = vrot.slane %v4674, 4
      %v4677 = vor.u32 %v4676, %v4672
      %v4678 = vrot.slane %v4677, 4
      %v4680 = vshll.u32 %v4341, 16
      %v4682 = vrot.slane %v4680, 5
      %v4683 = vsel %vm1314, %v4678, %v4682
      %v4685 = vshrl.u32 %v4342, 16
      %v4687 = vrot.slane %v4685, 4
      %v4688 = vshll.u32 %v4342, 16
      %v4690 = vrot.slane %v4688, 5
      %v4691 = vor.u32 %v4687, %v4690
      %v4692 = vrot.slane %v4691, 4
      %v4694 = vshll.u32 %v4343, 16
      %v4696 = vrot.slane %v4694, 5
      %v4697 = vsel %vm1314, %v4692, %v4696
      %v4698 = vshrl.u32 %v4343, 16
      %v4700 = vrot.slane %v4698, 4
      %v4701 = vor.u32 %v4700, %v4696
      %v4702 = vrot.slane %v4701, 4
      %v4704 = vshll.u32 %v4344, 16
      %v4706 = vrot.slane %v4704, 5
      %v4707 = vsel %vm1314, %v4702, %v4706
      %v4709 = vshrl.u32 %v4345, 16
      %v4711 = vrot.slane %v4709, 4
      %v4712 = vshll.u32 %v4345, 16
      %v4714 = vrot.slane %v4712, 5
      %v4715 = vor.u32 %v4711, %v4714
      %v4716 = vrot.slane %v4715, 4
      %v4718 = vshll.u32 %v4346, 16
      %v4720 = vrot.slane %v4718, 5
      %v4721 = vsel %vm1314, %v4716, %v4720
      %v4722 = vshrl.u32 %v4346, 16
      %v4724 = vrot.slane %v4722, 4
      %v4725 = vor.u32 %v4724, %v4720
      %v4726 = vrot.slane %v4725, 4
      %v4728 = vshll.u32 %v4347, 16
      %v4730 = vrot.slane %v4728, 5
      %v4731 = vsel %vm1314, %v4726, %v4730
      %s4732 = scalar_lea.vmem %s6, 448
      %v4733 = vld [vmem:[%s4732] sm:$0xf]
      %v4734 = vld [vmem:[%s4732 + $0x4] sm:$0xf]
      %v4735 = vld [vmem:[%s4732 + $0x8] sm:$0xf]
      %v4736 = vld [vmem:[%s4732 + $0xc] sm:$0xf]
      %v4737 = vld [vmem:[%s4732 + $0x10] sm:$0xf]
      %v4738 = vld [vmem:[%s4732 + $0x14] sm:$0xf]
      %v4739 = vld [vmem:[%s4732 + $0x18] sm:$0xf]
      %v4740 = vld [vmem:[%s4732 + $0x1c] sm:$0xf]
      %v4741 = vld [vmem:[%s4732 + $0x20] sm:$0xf]
      %v4742 = vld [vmem:[%s4732 + $0x24] sm:$0xf]
      %v4743 = vld [vmem:[%s4732 + $0x28] sm:$0xf]
      %v4744 = vld [vmem:[%s4732 + $0x2c] sm:$0xf]
      %v4745 = vld [vmem:[%s4732 + $0x30] sm:$0xf]
      %v4746 = vld [vmem:[%s4732 + $0x34] sm:$0xf]
      %v4747 = vld [vmem:[%s4732 + $0x38] sm:$0xf]
      %v4748 = vld [vmem:[%s4732 + $0x3c] sm:$0xf]
      %v4749 = vunpack.c.l.b16 %v4361
      %v4750 = vunpack.c.l.b16 %v4371
      %v4751 = vunpack.c.l.b16 %v4385
      %v4752 = vunpack.c.l.b16 %v4395
      %v4753 = vunpack.c.l.b16 %v4409
      %v4754 = vunpack.c.l.b16 %v4419
      %v4755 = vunpack.c.l.b16 %v4433
      %v4756 = vunpack.c.l.b16 %v4443
      %v4757 = vunpack.c.l.b16 %v4457
      %v4758 = vunpack.c.l.b16 %v4467
      %v4759 = vunpack.c.l.b16 %v4481
      %v4760 = vunpack.c.l.b16 %v4491
      %v4761 = vunpack.c.l.b16 %v4505
      %v4762 = vunpack.c.l.b16 %v4515
      %v4763 = vunpack.c.l.b16 %v4529
      %v4764 = vunpack.c.l.b16 %v4539
      %v4765 = vunpack.c.l.b16 %v4553
      %v4766 = vunpack.c.l.b16 %v4563
      %v4767 = vunpack.c.l.b16 %v4577
      %v4768 = vunpack.c.l.b16 %v4587
      %v4769 = vunpack.c.l.b16 %v4601
      %v4770 = vunpack.c.l.b16 %v4611
      %v4771 = vunpack.c.l.b16 %v4625
      %v4772 = vunpack.c.l.b16 %v4635
      %v4773 = vunpack.c.l.b16 %v4649
      %v4774 = vunpack.c.l.b16 %v4659
      %v4775 = vunpack.c.l.b16 %v4673
      %v4776 = vunpack.c.l.b16 %v4683
      %v4777 = vunpack.c.l.b16 %v4697
      %v4778 = vunpack.c.l.b16 %v4707
      %v4779 = vunpack.c.l.b16 %v4721
      %v4780 = vunpack.c.l.b16 %v4731
      %v4781 = vpack.c.b16 %v4750, %v4749
      %v4782 = vpack.c.b16 %v4752, %v4751
      %v4783 = vpack.c.b16 %v4754, %v4753
      %v4784 = vpack.c.b16 %v4756, %v4755
      %v4785 = vpack.c.b16 %v4758, %v4757
      %v4786 = vpack.c.b16 %v4760, %v4759
      %v4787 = vpack.c.b16 %v4762, %v4761
      %v4788 = vpack.c.b16 %v4764, %v4763
      %v4789 = vpack.c.b16 %v4766, %v4765
      %v4790 = vpack.c.b16 %v4768, %v4767
      %v4791 = vpack.c.b16 %v4770, %v4769
      %v4792 = vpack.c.b16 %v4772, %v4771
      %v4793 = vpack.c.b16 %v4774, %v4773
      %v4794 = vpack.c.b16 %v4776, %v4775
      %v4795 = vpack.c.b16 %v4778, %v4777
      %v4796 = vpack.c.b16 %v4780, %v4779
      %v4829 = vunpack.c.l.b16 %v4733
      %v4830 = vunpack.c.l.b16 %v4734
      %v4831 = vunpack.c.l.b16 %v4735
      %v4832 = vunpack.c.l.b16 %v4736
      %v4833 = vunpack.c.l.b16 %v4737
      %v4834 = vunpack.c.l.b16 %v4738
      %v4835 = vunpack.c.l.b16 %v4739
      %v4836 = vunpack.c.l.b16 %v4740
      %v4837 = vunpack.c.l.b16 %v4741
      %v4838 = vunpack.c.l.b16 %v4742
      %v4839 = vunpack.c.l.b16 %v4743
      %v4840 = vunpack.c.l.b16 %v4744
      %v4841 = vunpack.c.l.b16 %v4745
      %v4842 = vunpack.c.l.b16 %v4746
      %v4843 = vunpack.c.l.b16 %v4747
      %v4844 = vunpack.c.l.b16 %v4748
      %v4845 = vpack.c.b16 %v4830, %v4829
      %v4846 = vpack.c.b16 %v4832, %v4831
      %v4847 = vpack.c.b16 %v4834, %v4833
      %v4848 = vpack.c.b16 %v4836, %v4835
      %v4849 = vpack.c.b16 %v4838, %v4837
      %v4850 = vpack.c.b16 %v4840, %v4839
      %v4851 = vpack.c.b16 %v4842, %v4841
      %v4852 = vpack.c.b16 %v4844, %v4843
      %4861 = vmatpush.bf16.msra.mxu0 %v4852
      %4862 = vmatpush.bf16.msra.mxu0 %v4851
      %4863 = vmatpush.bf16.msra.mxu0 %v4850
      %4864 = vmatpush.bf16.msra.mxu0 %v4849
      %4865 = vmatpush.bf16.msra.mxu0 %v4848
      %4866 = vmatpush.bf16.msra.mxu0 %v4847
      %4867 = vmatpush.bf16.msra.mxu0 %v4846
      %4868 = vmatpush.bf16.msra.mxu0 %v4845
      %4869 = vmatmul.bf16.gmra.mxu0 %v4781
      %v4870 = vpop.f32.mrf.mxu0
      %v4871 = vadd.f32 0.0, %v4870
      %v4872 = vpop.f32.mrf.mxu0
      %v4873 = vadd.f32 0.0, %v4872
      %4874 = vmatmul.bf16.gmra.mxu0 %v4782
      %v4875 = vpop.f32.mrf.mxu0
      %v4876 = vadd.f32 0.0, %v4875
      %v4877 = vpop.f32.mrf.mxu0
      %v4878 = vadd.f32 0.0, %v4877
      %4879 = vmatmul.bf16.gmra.mxu0 %v4783
      %v4880 = vpop.f32.mrf.mxu0
      %v4881 = vadd.f32 0.0, %v4880
      %v4882 = vpop.f32.mrf.mxu0
      %v4883 = vadd.f32 0.0, %v4882
      %4884 = vmatmul.bf16.gmra.mxu0 %v4784
      %v4885 = vpop.f32.mrf.mxu0
      %v4886 = vadd.f32 0.0, %v4885
      %v4887 = vpop.f32.mrf.mxu0
      %v4888 = vadd.f32 0.0, %v4887
      %4889 = vmatmul.bf16.gmra.mxu0 %v4785
      %v4890 = vpop.f32.mrf.mxu0
      %v4891 = vadd.f32 0.0, %v4890
      %v4892 = vpop.f32.mrf.mxu0
      %v4893 = vadd.f32 0.0, %v4892
      %4894 = vmatmul.bf16.gmra.mxu0 %v4786
      %v4895 = vpop.f32.mrf.mxu0
      %v4896 = vadd.f32 0.0, %v4895
      %v4897 = vpop.f32.mrf.mxu0
      %v4898 = vadd.f32 0.0, %v4897
      %4899 = vmatmul.bf16.gmra.mxu0 %v4787
      %v4900 = vpop.f32.mrf.mxu0
      %v4901 = vadd.f32 0.0, %v4900
      %v4902 = vpop.f32.mrf.mxu0
      %v4903 = vadd.f32 0.0, %v4902
      %4904 = vmatmul.bf16.gmra.mxu0 %v4788
      %v4905 = vpop.f32.mrf.mxu0
      %v4906 = vadd.f32 0.0, %v4905
      %v4907 = vpop.f32.mrf.mxu0
      %v4908 = vadd.f32 0.0, %v4907
      %4909 = vmatmul.bf16.gmra.mxu0 %v4789
      %v4910 = vpop.f32.mrf.mxu0
      %v4911 = vadd.f32 0.0, %v4910
      %v4912 = vpop.f32.mrf.mxu0
      %v4913 = vadd.f32 0.0, %v4912
      %4914 = vmatmul.bf16.gmra.mxu0 %v4790
      %v4915 = vpop.f32.mrf.mxu0
      %v4916 = vadd.f32 0.0, %v4915
      %v4917 = vpop.f32.mrf.mxu0
      %v4918 = vadd.f32 0.0, %v4917
      %4919 = vmatmul.bf16.gmra.mxu0 %v4791
      %v4920 = vpop.f32.mrf.mxu0
      %v4921 = vadd.f32 0.0, %v4920
      %v4922 = vpop.f32.mrf.mxu0
      %v4923 = vadd.f32 0.0, %v4922
      %4924 = vmatmul.bf16.gmra.mxu0 %v4792
      %v4925 = vpop.f32.mrf.mxu0
      %v4926 = vadd.f32 0.0, %v4925
      %v4927 = vpop.f32.mrf.mxu0
      %v4928 = vadd.f32 0.0, %v4927
      %4929 = vmatmul.bf16.gmra.mxu0 %v4793
      %v4930 = vpop.f32.mrf.mxu0
      %v4931 = vadd.f32 0.0, %v4930
      %v4932 = vpop.f32.mrf.mxu0
      %v4933 = vadd.f32 0.0, %v4932
      %4934 = vmatmul.bf16.gmra.mxu0 %v4794
      %v4935 = vpop.f32.mrf.mxu0
      %v4936 = vadd.f32 0.0, %v4935
      %v4937 = vpop.f32.mrf.mxu0
      %v4938 = vadd.f32 0.0, %v4937
      %4939 = vmatmul.bf16.gmra.mxu0 %v4795
      %v4940 = vpop.f32.mrf.mxu0
      %v4941 = vadd.f32 0.0, %v4940
      %v4942 = vpop.f32.mrf.mxu0
      %v4943 = vadd.f32 0.0, %v4942
      %4944 = vmatmul.bf16.gmra.mxu0 %v4796
      %v4945 = vpop.f32.mrf.mxu0
      %v4946 = vadd.f32 0.0, %v4945
      %v4947 = vpop.f32.mrf.mxu0
      %v4948 = vadd.f32 0.0, %v4947
      %4949 = vdwg.mxu0
      %v4950 = vadd.f32 %v4268, %v4871
      %v4951 = vadd.f32 %v4269, %v4873
      %v4952 = vadd.f32 %v4270, %v4876
      %v4953 = vadd.f32 %v4271, %v4878
      %v4954 = vadd.f32 %v4272, %v4881
      %v4955 = vadd.f32 %v4273, %v4883
      %v4956 = vadd.f32 %v4274, %v4886
      %v4957 = vadd.f32 %v4275, %v4888
      %v4958 = vadd.f32 %v4276, %v4891
      %v4959 = vadd.f32 %v4277, %v4893
      %v4960 = vadd.f32 %v4278, %v4896
      %v4961 = vadd.f32 %v4279, %v4898
      %v4962 = vadd.f32 %v4280, %v4901
      %v4963 = vadd.f32 %v4281, %v4903
      %v4964 = vadd.f32 %v4282, %v4906
      %v4965 = vadd.f32 %v4283, %v4908
      %v4966 = vadd.f32 %v4284, %v4911
      %v4967 = vadd.f32 %v4285, %v4913
      %v4968 = vadd.f32 %v4286, %v4916
      %v4969 = vadd.f32 %v4287, %v4918
      %v4970 = vadd.f32 %v4288, %v4921
      %v4971 = vadd.f32 %v4289, %v4923
      %v4972 = vadd.f32 %v4290, %v4926
      %v4973 = vadd.f32 %v4291, %v4928
      %v4974 = vadd.f32 %v4292, %v4931
      %v4975 = vadd.f32 %v4293, %v4933
      %v4976 = vadd.f32 %v4294, %v4936
      %v4977 = vadd.f32 %v4295, %v4938
      %v4978 = vadd.f32 %v4296, %v4941
      %v4979 = vadd.f32 %v4297, %v4943
      %v4980 = vadd.f32 %v4298, %v4946
      %v4981 = vadd.f32 %v4299, %v4948
      %v4982 = vld [vmem:[%s3985] sm:$0xe]
      %v4983 = vld [vmem:[%s3985 + $0xc] sm:$0xe]
      %v4984 = vld [vmem:[%s3985 + $0x18] sm:$0xe]
      %v4985 = vld [vmem:[%s3985 + $0x24] sm:$0xe]
      %v4986 = vld [vmem:[%s3985 + $0x30] sm:$0xe]
      %v4987 = vld [vmem:[%s3985 + $0x3c] sm:$0xe]
      %v4988 = vld [vmem:[%s3985 + $0x48] sm:$0xe]
      %v4989 = vld [vmem:[%s3985 + $0x54] sm:$0xe]
      %v4990 = vld [vmem:[%s3985 + $0x60] sm:$0xe]
      %v4991 = vld [vmem:[%s3985 + $0x6c] sm:$0xe]
      %v4992 = vld [vmem:[%s3985 + $0x78] sm:$0xe]
      %v4993 = vld [vmem:[%s3985 + $0x84] sm:$0xe]
      %v4994 = vld [vmem:[%s3985 + $0x90] sm:$0xe]
      %v4995 = vld [vmem:[%s3985 + $0x9c] sm:$0xe]
      %v4996 = vld [vmem:[%s3985 + $0xa8] sm:$0xe]
      %v4997 = vld [vmem:[%s3985 + $0xb4] sm:$0xe]
      %v5046 = vrot.slane %v4982, 5
      %v5047 = vrot.slane %v5046, 4
      %v5048 = vrot.slane %v4301, 5
      %v5049 = vsel %vm2200, %v5047, %v5048
      %v5050 = vrot.slane %v5048, 4
      %v5051 = vrot.slane %v4302, 5
      %v5052 = vsel %vm2200, %v5050, %v5051
      %v5053 = vrot.slane %v4983, 5
      %v5054 = vrot.slane %v5053, 4
      %v5055 = vrot.slane %v4304, 5
      %v5056 = vsel %vm2200, %v5054, %v5055
      %v5057 = vrot.slane %v5055, 4
      %v5058 = vrot.slane %v4305, 5
      %v5059 = vsel %vm2200, %v5057, %v5058
      %v5060 = vrot.slane %v4984, 5
      %v5061 = vrot.slane %v5060, 4
      %v5062 = vrot.slane %v4307, 5
      %v5063 = vsel %vm2200, %v5061, %v5062
      %v5064 = vrot.slane %v5062, 4
      %v5065 = vrot.slane %v4308, 5
      %v5066 = vsel %vm2200, %v5064, %v5065
      %v5067 = vrot.slane %v4985, 5
      %v5068 = vrot.slane %v5067, 4
      %v5069 = vrot.slane %v4310, 5
      %v5070 = vsel %vm2200, %v5068, %v5069
      %v5071 = vrot.slane %v5069, 4
      %v5072 = vrot.slane %v4311, 5
      %v5073 = vsel %vm2200, %v5071, %v5072
      %v5074 = vrot.slane %v4986, 5
      %v5075 = vrot.slane %v5074, 4
      %v5076 = vrot.slane %v4313, 5
      %v5077 = vsel %vm2200, %v5075, %v5076
      %v5078 = vrot.slane %v5076, 4
      %v5079 = vrot.slane %v4314, 5
      %v5080 = vsel %vm2200, %v5078, %v5079
      %v5081 = vrot.slane %v4987, 5
      %v5082 = vrot.slane %v5081, 4
      %v5083 = vrot.slane %v4316, 5
      %v5084 = vsel %vm2200, %v5082, %v5083
      %v5085 = vrot.slane %v5083, 4
      %v5086 = vrot.slane %v4317, 5
      %v5087 = vsel %vm2200, %v5085, %v5086
      %v5088 = vrot.slane %v4988, 5
      %v5089 = vrot.slane %v5088, 4
      %v5090 = vrot.slane %v4319, 5
      %v5091 = vsel %vm2200, %v5089, %v5090
      %v5092 = vrot.slane %v5090, 4
      %v5093 = vrot.slane %v4320, 5
      %v5094 = vsel %vm2200, %v5092, %v5093
      %v5095 = vrot.slane %v4989, 5
      %v5096 = vrot.slane %v5095, 4
      %v5097 = vrot.slane %v4322, 5
      %v5098 = vsel %vm2200, %v5096, %v5097
      %v5099 = vrot.slane %v5097, 4
      %v5100 = vrot.slane %v4323, 5
      %v5101 = vsel %vm2200, %v5099, %v5100
      %v5102 = vrot.slane %v4990, 5
      %v5103 = vrot.slane %v5102, 4
      %v5104 = vrot.slane %v4325, 5
      %v5105 = vsel %vm2200, %v5103, %v5104
      %v5106 = vrot.slane %v5104, 4
      %v5107 = vrot.slane %v4326, 5
      %v5108 = vsel %vm2200, %v5106, %v5107
      %v5109 = vrot.slane %v4991, 5
      %v5110 = vrot.slane %v5109, 4
      %v5111 = vrot.slane %v4328, 5
      %v5112 = vsel %vm2200, %v5110, %v5111
      %v5113 = vrot.slane %v5111, 4
      %v5114 = vrot.slane %v4329, 5
      %v5115 = vsel %vm2200, %v5113, %v5114
      %v5116 = vrot.slane %v4992, 5
      %v5117 = vrot.slane %v5116, 4
      %v5118 = vrot.slane %v4331, 5
      %v5119 = vsel %vm2200, %v5117, %v5118
      %v5120 = vrot.slane %v5118, 4
      %v5121 = vrot.slane %v4332, 5
      %v5122 = vsel %vm2200, %v5120, %v5121
      %v5123 = vrot.slane %v4993, 5
      %v5124 = vrot.slane %v5123, 4
      %v5125 = vrot.slane %v4334, 5
      %v5126 = vsel %vm2200, %v5124, %v5125
      %v5127 = vrot.slane %v5125, 4
      %v5128 = vrot.slane %v4335, 5
      %v5129 = vsel %vm2200, %v5127, %v5128
      %v5130 = vrot.slane %v4994, 5
      %v5131 = vrot.slane %v5130, 4
      %v5132 = vrot.slane %v4337, 5
      %v5133 = vsel %vm2200, %v5131, %v5132
      %v5134 = vrot.slane %v5132, 4
      %v5135 = vrot.slane %v4338, 5
      %v5136 = vsel %vm2200, %v5134, %v5135
      %v5137 = vrot.slane %v4995, 5
      %v5138 = vrot.slane %v5137, 4
      %v5139 = vrot.slane %v4340, 5
      %v5140 = vsel %vm2200, %v5138, %v5139
      %v5141 = vrot.slane %v5139, 4
      %v5142 = vrot.slane %v4341, 5
      %v5143 = vsel %vm2200, %v5141, %v5142
      %v5144 = vrot.slane %v4996, 5
      %v5145 = vrot.slane %v5144, 4
      %v5146 = vrot.slane %v4343, 5
      %v5147 = vsel %vm2200, %v5145, %v5146
      %v5148 = vrot.slane %v5146, 4
      %v5149 = vrot.slane %v4344, 5
      %v5150 = vsel %vm2200, %v5148, %v5149
      %v5151 = vrot.slane %v4997, 5
      %v5152 = vrot.slane %v5151, 4
      %v5153 = vrot.slane %v4346, 5
      %v5154 = vsel %vm2200, %v5152, %v5153
      %v5155 = vrot.slane %v5153, 4
      %v5156 = vrot.slane %v4347, 5
      %v5157 = vsel %vm2200, %v5155, %v5156
      %s5158 = scalar_lea.vmem %s6, 512
      %v5159 = vld [vmem:[%s5158] sm:$0xf]
      %v5160 = vld [vmem:[%s5158 + $0x4] sm:$0xf]
      %v5161 = vld [vmem:[%s5158 + $0x8] sm:$0xf]
      %v5162 = vld [vmem:[%s5158 + $0xc] sm:$0xf]
      %v5163 = vld [vmem:[%s5158 + $0x10] sm:$0xf]
      %v5164 = vld [vmem:[%s5158 + $0x14] sm:$0xf]
      %v5165 = vld [vmem:[%s5158 + $0x18] sm:$0xf]
      %v5166 = vld [vmem:[%s5158 + $0x1c] sm:$0xf]
      %v5167 = vld [vmem:[%s5158 + $0x20] sm:$0xf]
      %v5168 = vld [vmem:[%s5158 + $0x24] sm:$0xf]
      %v5169 = vld [vmem:[%s5158 + $0x28] sm:$0xf]
      %v5170 = vld [vmem:[%s5158 + $0x2c] sm:$0xf]
      %v5171 = vld [vmem:[%s5158 + $0x30] sm:$0xf]
      %v5172 = vld [vmem:[%s5158 + $0x34] sm:$0xf]
      %v5173 = vld [vmem:[%s5158 + $0x38] sm:$0xf]
      %v5174 = vld [vmem:[%s5158 + $0x3c] sm:$0xf]
      %v5175 = vunpack.c.l.b16 %v5049
      %v5176 = vunpack.c.l.b16 %v5052
      %v5177 = vunpack.c.l.b16 %v5056
      %v5178 = vunpack.c.l.b16 %v5059
      %v5179 = vunpack.c.l.b16 %v5063
      %v5180 = vunpack.c.l.b16 %v5066
      %v5181 = vunpack.c.l.b16 %v5070
      %v5182 = vunpack.c.l.b16 %v5073
      %v5183 = vunpack.c.l.b16 %v5077
      %v5184 = vunpack.c.l.b16 %v5080
      %v5185 = vunpack.c.l.b16 %v5084
      %v5186 = vunpack.c.l.b16 %v5087
      %v5187 = vunpack.c.l.b16 %v5091
      %v5188 = vunpack.c.l.b16 %v5094
      %v5189 = vunpack.c.l.b16 %v5098
      %v5190 = vunpack.c.l.b16 %v5101
      %v5191 = vunpack.c.l.b16 %v5105
      %v5192 = vunpack.c.l.b16 %v5108
      %v5193 = vunpack.c.l.b16 %v5112
      %v5194 = vunpack.c.l.b16 %v5115
      %v5195 = vunpack.c.l.b16 %v5119
      %v5196 = vunpack.c.l.b16 %v5122
      %v5197 = vunpack.c.l.b16 %v5126
      %v5198 = vunpack.c.l.b16 %v5129
      %v5199 = vunpack.c.l.b16 %v5133
      %v5200 = vunpack.c.l.b16 %v5136
      %v5201 = vunpack.c.l.b16 %v5140
      %v5202 = vunpack.c.l.b16 %v5143
      %v5203 = vunpack.c.l.b16 %v5147
      %v5204 = vunpack.c.l.b16 %v5150
      %v5205 = vunpack.c.l.b16 %v5154
      %v5206 = vunpack.c.l.b16 %v5157
      %v5207 = vpack.c.b16 %v5176, %v5175
      %v5208 = vpack.c.b16 %v5178, %v5177
      %v5209 = vpack.c.b16 %v5180, %v5179
      %v5210 = vpack.c.b16 %v5182, %v5181
      %v5211 = vpack.c.b16 %v5184, %v5183
      %v5212 = vpack.c.b16 %v5186, %v5185
      %v5213 = vpack.c.b16 %v5188, %v5187
      %v5214 = vpack.c.b16 %v5190, %v5189
      %v5215 = vpack.c.b16 %v5192, %v5191
      %v5216 = vpack.c.b16 %v5194, %v5193
      %v5217 = vpack.c.b16 %v5196, %v5195
      %v5218 = vpack.c.b16 %v5198, %v5197
      %v5219 = vpack.c.b16 %v5200, %v5199
      %v5220 = vpack.c.b16 %v5202, %v5201
      %v5221 = vpack.c.b16 %v5204, %v5203
      %v5222 = vpack.c.b16 %v5206, %v5205
      %v5255 = vunpack.c.l.b16 %v5159
      %v5256 = vunpack.c.l.b16 %v5160
      %v5257 = vunpack.c.l.b16 %v5161
      %v5258 = vunpack.c.l.b16 %v5162
      %v5259 = vunpack.c.l.b16 %v5163
      %v5260 = vunpack.c.l.b16 %v5164
      %v5261 = vunpack.c.l.b16 %v5165
      %v5262 = vunpack.c.l.b16 %v5166
      %v5263 = vunpack.c.l.b16 %v5167
      %v5264 = vunpack.c.l.b16 %v5168
      %v5265 = vunpack.c.l.b16 %v5169
      %v5266 = vunpack.c.l.b16 %v5170
      %v5267 = vunpack.c.l.b16 %v5171
      %v5268 = vunpack.c.l.b16 %v5172
      %v5269 = vunpack.c.l.b16 %v5173
      %v5270 = vunpack.c.l.b16 %v5174
      %v5271 = vpack.c.b16 %v5256, %v5255
      %v5272 = vpack.c.b16 %v5258, %v5257
      %v5273 = vpack.c.b16 %v5260, %v5259
      %v5274 = vpack.c.b16 %v5262, %v5261
      %v5275 = vpack.c.b16 %v5264, %v5263
      %v5276 = vpack.c.b16 %v5266, %v5265
      %v5277 = vpack.c.b16 %v5268, %v5267
      %v5278 = vpack.c.b16 %v5270, %v5269
      %5287 = vmatpush.bf16.msra.mxu0 %v5278
      %5288 = vmatpush.bf16.msra.mxu0 %v5277
      %5289 = vmatpush.bf16.msra.mxu0 %v5276
      %5290 = vmatpush.bf16.msra.mxu0 %v5275
      %5291 = vmatpush.bf16.msra.mxu0 %v5274
      %5292 = vmatpush.bf16.msra.mxu0 %v5273
      %5293 = vmatpush.bf16.msra.mxu0 %v5272
      %5294 = vmatpush.bf16.msra.mxu0 %v5271
      %5295 = vmatmul.bf16.gmra.mxu0 %v5207
      %v5296 = vpop.f32.mrf.mxu0
      %v5297 = vadd.f32 0.0, %v5296
      %v5298 = vpop.f32.mrf.mxu0
      %v5299 = vadd.f32 0.0, %v5298
      %5300 = vmatmul.bf16.gmra.mxu0 %v5208
      %v5301 = vpop.f32.mrf.mxu0
      %v5302 = vadd.f32 0.0, %v5301
      %v5303 = vpop.f32.mrf.mxu0
      %v5304 = vadd.f32 0.0, %v5303
      %5305 = vmatmul.bf16.gmra.mxu0 %v5209
      %v5306 = vpop.f32.mrf.mxu0
      %v5307 = vadd.f32 0.0, %v5306
      %v5308 = vpop.f32.mrf.mxu0
      %v5309 = vadd.f32 0.0, %v5308
      %5310 = vmatmul.bf16.gmra.mxu0 %v5210
      %v5311 = vpop.f32.mrf.mxu0
      %v5312 = vadd.f32 0.0, %v5311
      %v5313 = vpop.f32.mrf.mxu0
      %v5314 = vadd.f32 0.0, %v5313
      %5315 = vmatmul.bf16.gmra.mxu0 %v5211
      %v5316 = vpop.f32.mrf.mxu0
      %v5317 = vadd.f32 0.0, %v5316
      %v5318 = vpop.f32.mrf.mxu0
      %v5319 = vadd.f32 0.0, %v5318
      %5320 = vmatmul.bf16.gmra.mxu0 %v5212
      %v5321 = vpop.f32.mrf.mxu0
      %v5322 = vadd.f32 0.0, %v5321
      %v5323 = vpop.f32.mrf.mxu0
      %v5324 = vadd.f32 0.0, %v5323
      %5325 = vmatmul.bf16.gmra.mxu0 %v5213
      %v5326 = vpop.f32.mrf.mxu0
      %v5327 = vadd.f32 0.0, %v5326
      %v5328 = vpop.f32.mrf.mxu0
      %v5329 = vadd.f32 0.0, %v5328
      %5330 = vmatmul.bf16.gmra.mxu0 %v5214
      %v5331 = vpop.f32.mrf.mxu0
      %v5332 = vadd.f32 0.0, %v5331
      %v5333 = vpop.f32.mrf.mxu0
      %v5334 = vadd.f32 0.0, %v5333
      %5335 = vmatmul.bf16.gmra.mxu0 %v5215
      %v5336 = vpop.f32.mrf.mxu0
      %v5337 = vadd.f32 0.0, %v5336
      %v5338 = vpop.f32.mrf.mxu0
      %v5339 = vadd.f32 0.0, %v5338
      %5340 = vmatmul.bf16.gmra.mxu0 %v5216
      %v5341 = vpop.f32.mrf.mxu0
      %v5342 = vadd.f32 0.0, %v5341
      %v5343 = vpop.f32.mrf.mxu0
      %v5344 = vadd.f32 0.0, %v5343
      %5345 = vmatmul.bf16.gmra.mxu0 %v5217
      %v5346 = vpop.f32.mrf.mxu0
      %v5347 = vadd.f32 0.0, %v5346
      %v5348 = vpop.f32.mrf.mxu0
      %v5349 = vadd.f32 0.0, %v5348
      %5350 = vmatmul.bf16.gmra.mxu0 %v5218
      %v5351 = vpop.f32.mrf.mxu0
      %v5352 = vadd.f32 0.0, %v5351
      %v5353 = vpop.f32.mrf.mxu0
      %v5354 = vadd.f32 0.0, %v5353
      %5355 = vmatmul.bf16.gmra.mxu0 %v5219
      %v5356 = vpop.f32.mrf.mxu0
      %v5357 = vadd.f32 0.0, %v5356
      %v5358 = vpop.f32.mrf.mxu0
      %v5359 = vadd.f32 0.0, %v5358
      %5360 = vmatmul.bf16.gmra.mxu0 %v5220
      %v5361 = vpop.f32.mrf.mxu0
      %v5362 = vadd.f32 0.0, %v5361
      %v5363 = vpop.f32.mrf.mxu0
      %v5364 = vadd.f32 0.0, %v5363
      %5365 = vmatmul.bf16.gmra.mxu0 %v5221
      %v5366 = vpop.f32.mrf.mxu0
      %v5367 = vadd.f32 0.0, %v5366
      %v5368 = vpop.f32.mrf.mxu0
      %v5369 = vadd.f32 0.0, %v5368
      %5370 = vmatmul.bf16.gmra.mxu0 %v5222
      %v5371 = vpop.f32.mrf.mxu0
      %v5372 = vadd.f32 0.0, %v5371
      %v5373 = vpop.f32.mrf.mxu0
      %v5374 = vadd.f32 0.0, %v5373
      %5375 = vdwg.mxu0
      %v5376 = vadd.f32 %v4950, %v5297
      %v5377 = vadd.f32 %v4951, %v5299
      %v5378 = vadd.f32 %v4952, %v5302
      %v5379 = vadd.f32 %v4953, %v5304
      %v5380 = vadd.f32 %v4954, %v5307
      %v5381 = vadd.f32 %v4955, %v5309
      %v5382 = vadd.f32 %v4956, %v5312
      %v5383 = vadd.f32 %v4957, %v5314
      %v5384 = vadd.f32 %v4958, %v5317
      %v5385 = vadd.f32 %v4959, %v5319
      %v5386 = vadd.f32 %v4960, %v5322
      %v5387 = vadd.f32 %v4961, %v5324
      %v5388 = vadd.f32 %v4962, %v5327
      %v5389 = vadd.f32 %v4963, %v5329
      %v5390 = vadd.f32 %v4964, %v5332
      %v5391 = vadd.f32 %v4965, %v5334
      %v5392 = vadd.f32 %v4966, %v5337
      %v5393 = vadd.f32 %v4967, %v5339
      %v5394 = vadd.f32 %v4968, %v5342
      %v5395 = vadd.f32 %v4969, %v5344
      %v5396 = vadd.f32 %v4970, %v5347
      %v5397 = vadd.f32 %v4971, %v5349
      %v5398 = vadd.f32 %v4972, %v5352
      %v5399 = vadd.f32 %v4973, %v5354
      %v5400 = vadd.f32 %v4974, %v5357
      %v5401 = vadd.f32 %v4975, %v5359
      %v5402 = vadd.f32 %v4976, %v5362
      %v5403 = vadd.f32 %v4977, %v5364
      %v5404 = vadd.f32 %v4978, %v5367
      %v5405 = vadd.f32 %v4979, %v5369
      %v5406 = vadd.f32 %v4980, %v5372
      %v5407 = vadd.f32 %v4981, %v5374
      %v5408 = vlaneseq
      %v5409 = vand.u32 %v5408, 127
      %vm5410 = vcmp.ge.s32.totalorder %v5409, 4
      %vm5411 = vcmp.lt.s32.totalorder %v5409, 8
      %vm5412 = vmand %vm5410, %vm5411
      %v5413 = vpack.c.bf16 %v5376, %v5376
      %v5414 = vpack.c.bf16 %v5377, %v5377
      %v5415 = vpack.c.bf16 %v5378, %v5378
      %v5416 = vpack.c.bf16 %v5379, %v5379
      %v5417 = vpack.c.bf16 %v5380, %v5380
      %v5418 = vpack.c.bf16 %v5381, %v5381
      %v5419 = vpack.c.bf16 %v5382, %v5382
      %v5420 = vpack.c.bf16 %v5383, %v5383
      %v5421 = vpack.c.bf16 %v5384, %v5384
      %v5422 = vpack.c.bf16 %v5385, %v5385
      %v5423 = vpack.c.bf16 %v5386, %v5386
      %v5424 = vpack.c.bf16 %v5387, %v5387
      %v5425 = vpack.c.bf16 %v5388, %v5388
      %v5426 = vpack.c.bf16 %v5389, %v5389
      %v5427 = vpack.c.bf16 %v5390, %v5390
      %v5428 = vpack.c.bf16 %v5391, %v5391
      %v5429 = vpack.c.bf16 %v5392, %v5392
      %v5430 = vpack.c.bf16 %v5393, %v5393
      %v5431 = vpack.c.bf16 %v5394, %v5394
      %v5432 = vpack.c.bf16 %v5395, %v5395
      %v5433 = vpack.c.bf16 %v5396, %v5396
      %v5434 = vpack.c.bf16 %v5397, %v5397
      %v5435 = vpack.c.bf16 %v5398, %v5398
      %v5436 = vpack.c.bf16 %v5399, %v5399
      %v5437 = vpack.c.bf16 %v5400, %v5400
      %v5438 = vpack.c.bf16 %v5401, %v5401
      %v5439 = vpack.c.bf16 %v5402, %v5402
      %v5440 = vpack.c.bf16 %v5403, %v5403
      %v5441 = vpack.c.bf16 %v5404, %v5404
      %v5442 = vpack.c.bf16 %v5405, %v5405
      %v5443 = vpack.c.bf16 %v5406, %v5406
      %v5444 = vpack.c.bf16 %v5407, %v5407
      %v5445 = vsel %vm5412, 1, 0
      %vm5446 = vcmp.eq.s32.totalorder %v5445, 1
      %vm5447 = vmpackc.low %vm5446, %vm5446
      %v5448 = vsel %vm5447, %v5413, %v280
      %v5449 = vsel %vm5447, %v5414, %v281
      %v5450 = vsel %vm5447, %v5415, %v282
      %v5451 = vsel %vm5447, %v5416, %v283
      %v5452 = vsel %vm5447, %v5417, %v284
      %v5453 = vsel %vm5447, %v5418, %v285
      %v5454 = vsel %vm5447, %v5419, %v286
      %v5455 = vsel %vm5447, %v5420, %v287
      %v5456 = vsel %vm5447, %v5421, %v288
      %v5457 = vsel %vm5447, %v5422, %v289
      %v5458 = vsel %vm5447, %v5423, %v290
      %v5459 = vsel %vm5447, %v5424, %v291
      %v5460 = vsel %vm5447, %v5425, %v292
      %v5461 = vsel %vm5447, %v5426, %v293
      %v5462 = vsel %vm5447, %v5427, %v294
      %v5463 = vsel %vm5447, %v5428, %v295
      %v5464 = vsel %vm5447, %v5429, %v296
      %v5465 = vsel %vm5447, %v5430, %v297
      %v5466 = vsel %vm5447, %v5431, %v298
      %v5467 = vsel %vm5447, %v5432, %v299
      %v5468 = vsel %vm5447, %v5433, %v300
      %v5469 = vsel %vm5447, %v5434, %v301
      %v5470 = vsel %vm5447, %v5435, %v302
      %v5471 = vsel %vm5447, %v5436, %v303
      %v5472 = vsel %vm5447, %v5437, %v304
      %v5473 = vsel %vm5447, %v5438, %v305
      %v5474 = vsel %vm5447, %v5439, %v306
      %v5475 = vsel %vm5447, %v5440, %v307
      %v5476 = vsel %vm5447, %v5441, %v308
      %v5477 = vsel %vm5447, %v5442, %v309
      %v5478 = vsel %vm5447, %v5443, %v310
      %v5479 = vsel %vm5447, %v5444, %v311
      %5480 = vst [vmem:[%s278] sm:$0xf] %v5448
      %5481 = vst [vmem:[%s278 + $0x4] sm:$0xf] %v5449
      %5482 = vst [vmem:[%s278 + $0x8] sm:$0xf] %v5450
      %5483 = vst [vmem:[%s278 + $0xc] sm:$0xf] %v5451
      %5484 = vst [vmem:[%s278 + $0x10] sm:$0xf] %v5452
      %5485 = vst [vmem:[%s278 + $0x14] sm:$0xf] %v5453
      %5486 = vst [vmem:[%s278 + $0x18] sm:$0xf] %v5454
      %5487 = vst [vmem:[%s278 + $0x1c] sm:$0xf] %v5455
      %5488 = vst [vmem:[%s278 + $0x20] sm:$0xf] %v5456
      %5489 = vst [vmem:[%s278 + $0x24] sm:$0xf] %v5457
      %5490 = vst [vmem:[%s278 + $0x28] sm:$0xf] %v5458
      %5491 = vst [vmem:[%s278 + $0x2c] sm:$0xf] %v5459
      %5492 = vst [vmem:[%s278 + $0x30] sm:$0xf] %v5460
      %5493 = vst [vmem:[%s278 + $0x34] sm:$0xf] %v5461
      %5494 = vst [vmem:[%s278 + $0x38] sm:$0xf] %v5462
      %5495 = vst [vmem:[%s278 + $0x3c] sm:$0xf] %v5463
      %5496 = vst [vmem:[%s278 + $0x40] sm:$0xf] %v5464
      %5497 = vst [vmem:[%s278 + $0x44] sm:$0xf] %v5465
      %5498 = vst [vmem:[%s278 + $0x48] sm:$0xf] %v5466
      %5499 = vst [vmem:[%s278 + $0x4c] sm:$0xf] %v5467
      %5500 = vst [vmem:[%s278 + $0x50] sm:$0xf] %v5468
      %5501 = vst [vmem:[%s278 + $0x54] sm:$0xf] %v5469
      %5502 = vst [vmem:[%s278 + $0x58] sm:$0xf] %v5470
      %5503 = vst [vmem:[%s278 + $0x5c] sm:$0xf] %v5471
      %5504 = vst [vmem:[%s278 + $0x60] sm:$0xf] %v5472
      %5505 = vst [vmem:[%s278 + $0x64] sm:$0xf] %v5473
      %5506 = vst [vmem:[%s278 + $0x68] sm:$0xf] %v5474
      %5507 = vst [vmem:[%s278 + $0x6c] sm:$0xf] %v5475
      %5508 = vst [vmem:[%s278 + $0x70] sm:$0xf] %v5476
      %5509 = vst [vmem:[%s278 + $0x74] sm:$0xf] %v5477
      %5510 = vst [vmem:[%s278 + $0x78] sm:$0xf] %v5478
      %5511 = vst [vmem:[%s278 + $0x7c] sm:$0xf] %v5479
      %p5512 = scmp.lt.s32.totalorder %s18, 1
      %s5513 = scalar_select %p5512, %s18, 1
      %s5514 = smul.addr %s5513, 32
      %s5515 = smul.addr %s5514, 4
      %s5516 = scalar_lea.vmem %s7, %s5515
      // Predicated region
      $region49: #{dense2d_block_forward.2} parent=47 // pred_check
        %p5517 = pneg %p188
      $region50: #{dense2d_block_forward.2} parent=47 // pred_check_branch
        %5519 = sbr.rel (%p5517) target = $region52
      $region51: #{dense2d_block_forward.2} parent=47 // pred_region
        _
      $region52: #{dense2d_block_forward.2} parent=47 // pred_fallthru
        _
    $region48: #{dense2d_block_forward.2} parent=5 // pred_fallthru
      _
    %p5520 = scmp.le.s32.totalorder 2, %s13
    // Predicated region
    $region53: #{dense2d_block_forward.2} parent=5 // pred_check
      %p5521 = pneg %p5520
    $region54: #{dense2d_block_forward.2} parent=5 // pred_check_branch
      %5523 = sbr.rel (%p5521) target = $region56
    $region55: #{dense2d_block_forward.2} parent=5 // pred_region
      %s5524 = ssub.s32 %s13, 2
      // Predicated region
      $region57: #{dense2d_block_forward.2} parent=55 // pred_check
        %p5525 = pneg %p194
      $region58: #{dense2d_block_forward.2} parent=55 // pred_check_branch
        %5527 = sbr.rel (%p5525) target = $region60
      $region59: #{dense2d_block_forward.2} parent=55 // pred_region
        %p5528 = scmp.lt.s32.totalorder %s19, 1
        %s5529 = scalar_select %p5528, %s19, 1
        %s5530 = smul.addr %s5529, 32
        %s5531 = smul.addr %s5530, 4
        %s5532 = scalar_lea.vmem %s7, %s5531
      $region60: #{dense2d_block_forward.2} parent=55 // pred_fallthru
        _
    $region56: #{dense2d_block_forward.2} parent=5 // pred_fallthru
      _
  $region6: #{dense2d_block_forward.2} parent=0 // loop_footer
    %s17 = sadd.s32 1, %s13
  $region7: #{dense2d_block_forward.2} parent=0 // loop_footer_branch
    %12 = sbr.rel target = $region3
  $region8: #{dense2d_block_forward.2} parent=0 // loop_exit
    _

</llo_original>
